<compile_context>
chip_gen: v6e
topology: v6e:2x2x1
jax: 0.10.0
libtpu: 0.0.40
codegen_flags: <defaults>
</compile_context>

<pallas_src>
import math

import jax
import jax.numpy as jnp
from jax.experimental import pallas as pl
from jax.experimental.pallas import tpu as pltpu


# ----------------------------------------------------------------------------
# Static index maps into the packed weight / bias / aux operands.
# ----------------------------------------------------------------------------
# wpack: 12 three-tap conv units + 1 one-tap output conv -> 37 (C_pad,C_pad) mats
W_INC1, W_INC2 = 0, 3
W_D1C1, W_D1C2 = 6, 9
W_D2C1, W_D2C2 = 12, 15
W_U1A, W_U1B, W_U1C2 = 18, 21, 24      # up1 conv1 split (skip | upsampled), conv2
W_U2A, W_U2B, W_U2C2 = 27, 30, 33      # up2 conv1 split (skip | upsampled), conv2
W_OUTC = 36
N_WMATS = 37

# bpack: one (C_pad, 1) bias per conv layer (BN shift folded in)
B_INC1, B_INC2, B_D1C1, B_D1C2, B_D2C1, B_D2C2 = 0, 1, 2, 3, 4, 5
B_U1C1, B_U1C2, B_U2C1, B_U2C2, B_OUTC = 6, 7, 8, 9, 10
N_BIAS = 11

# auxpack: per-level shift matrices (conv "same" padding), maxpool selectors,
# linear-upsample matrices and DFT cos/sin -- all (N, N), block-diagonal over
# batch, zero outside each level's live lanes.
A_SL0, A_SR0, A_SL1, A_SR1, A_SL2, A_SR2 = 0, 1, 2, 3, 4, 5
A_PE0, A_PO0, A_PE1, A_PO1 = 6, 7, 8, 9
A_UP21, A_UP10 = 10, 11
A_DCOS, A_DSIN = 12, 13
N_AUX = 14


# ----------------------------------------------------------------------------
# The fused Pallas kernel: whole LSCSNet1D forward in one invocation.
# ----------------------------------------------------------------------------
def _lscsnet_kernel(x_ref, w_ref, b_ref, aux_ref, keep_ref, yr_ref, yi_ref,
                    xu_ref, or_ref, oi_ref):
    def mm(a, b):
        return jnp.dot(a, b, preferred_element_type=jnp.float32)

    def conv3(x, w0, sl, sr):
        # K=3 "same" conv: shifts realized as lane-mixing matmuls (batch-safe).
        xl = mm(x, aux_ref[sl])                 # x[l-1] at lane l
        xr = mm(x, aux_ref[sr])                 # x[l+1] at lane l
        return mm(w_ref[w0], xl) + mm(w_ref[w0 + 1], x) + mm(w_ref[w0 + 2], xr)

    def bias_relu(acc, b_idx):
        return jnp.maximum(acc + b_ref[b_idx], 0.0)

    x0 = x_ref[...]                             # (C_pad, B*L), level-0 slab

    # ---- encoder ----
    h = bias_relu(conv3(x0, W_INC1, A_SL0, A_SR0), B_INC1)
    x1 = bias_relu(conv3(h, W_INC2, A_SL0, A_SR0), B_INC2)

    p = jnp.maximum(mm(x1, aux_ref[A_PE0]), mm(x1, aux_ref[A_PO0]))   # maxpool /2
    h = bias_relu(conv3(p, W_D1C1, A_SL1, A_SR1), B_D1C1)
    x2 = bias_relu(conv3(h, W_D1C2, A_SL1, A_SR1), B_D1C2)

    p = jnp.maximum(mm(x2, aux_ref[A_PE1]), mm(x2, aux_ref[A_PO1]))   # maxpool /2
    h = bias_relu(conv3(p, W_D2C1, A_SL2, A_SR2), B_D2C1)
    x3 = bias_relu(conv3(h, W_D2C2, A_SL2, A_SR2), B_D2C2)

    # ---- decoder (skip-concat folded into split weights) ----
    u = mm(x3, aux_ref[A_UP21])                                       # upsample x2
    h = bias_relu(conv3(x2, W_U1A, A_SL1, A_SR1)
                  + conv3(u, W_U1B, A_SL1, A_SR1), B_U1C1)
    h = bias_relu(conv3(h, W_U1C2, A_SL1, A_SR1), B_U1C2)

    u = mm(h, aux_ref[A_UP10])                                        # upsample x2
    g = bias_relu(conv3(x1, W_U2A, A_SL0, A_SR0)
                  + conv3(u, W_U2B, A_SL0, A_SR0), B_U2C1)
    g = bias_relu(conv3(g, W_U2C2, A_SL0, A_SR0), B_U2C2)

    # ---- 1x1 output conv (no ReLU) ----
    xu = mm(w_ref[W_OUTC], g) + b_ref[B_OUTC]

    # ---- FFT (real/imag DFT matmuls) + (1 - samp_map) mask + "+ y" ----
    fr = mm(xu, aux_ref[A_DCOS])
    fi = -mm(xu, aux_ref[A_DSIN])
    keep = keep_ref[...]
    xu_ref[...] = xu.astype(xu_ref.dtype)
    or_ref[...] = (fr * keep + yr_ref[...]).astype(or_ref.dtype)
    oi_ref[...] = (fi * keep + yi_ref[...]).astype(oi_ref.dtype)


# ----------------------------------------------------------------------------
# Host-side layout plumbing, constant-matrix construction and parameter packing
# ----------------------------------------------------------------------------
def _to_slab(a, c_pad):
    """(B, C, L) -> zero-padded (c_pad, B*L) lane-stacked slab."""
    B, C, L = a.shape
    s = jnp.transpose(a, (1, 0, 2)).reshape(C, B * L)
    return jnp.pad(s, ((0, c_pad - C), (0, 0)))


def _from_slab(s, B, C, L):
    """(c_pad, B*L) slab -> (B, C, L)."""
    return jnp.transpose(s[:C].reshape(C, B, L), (1, 0, 2))


def _pad_to(m, rows, cols):
    out = jnp.zeros((rows, cols), jnp.float32)
    return out.at[: m.shape[0], : m.shape[1]].set(m.astype(jnp.float32))


def _upsample_matrix(lin):
    """Linear (align_corners=True) x2 upsample as a (lin, 2*lin) matrix."""
    lout = 2 * lin
    pos = jnp.arange(lout) * (lin - 1) / (lout - 1)
    lo = jnp.floor(pos).astype(jnp.int32)
    hi = jnp.minimum(lo + 1, lin - 1)
    w = (pos - lo).astype(jnp.float32)
    u = jnp.zeros((lin, lout), jnp.float32)
    u = u.at[lo, jnp.arange(lout)].add(1.0 - w)
    u = u.at[hi, jnp.arange(lout)].add(w)
    return u


def pack_params(params, *, n_in_c, base, B, L):
    assert L % 4 == 0, "two pooling levels require L divisible by 4"
    C_pad = max(2 * base, n_in_c, 8)
    N = B * L

    def padw(m):  # (C_out, C_in) -> (C_pad, C_pad)
        return _pad_to(m, C_pad, C_pad)

    def padb(v):  # (C_out,) -> (C_pad, 1)
        return _pad_to(v.reshape(-1, 1), C_pad, 1)

    def padn(m):  # lane-mixing matrix -> (N, N)
        return _pad_to(m, N, N)

    # ---- weights (BN scale already folded), per-tap, zero padded ----
    w_list = []

    def add_taps(w):                      # w: (C_out, C_in, K)
        for k in range(w.shape[-1]):
            w_list.append(padw(w[:, :, k]))

    add_taps(params["inc"][0]["w"]);   add_taps(params["inc"][1]["w"])
    add_taps(params["down1"][0]["w"]); add_taps(params["down1"][1]["w"])
    add_taps(params["down2"][0]["w"]); add_taps(params["down2"][1]["w"])
    w_u1 = params["up1"][0]["w"]          # in = cat(skip 2b, upsampled 2b)
    add_taps(w_u1[:, : 2 * base, :]);  add_taps(w_u1[:, 2 * base:, :])
    add_taps(params["up1"][1]["w"])
    w_u2 = params["up2"][0]["w"]          # in = cat(skip b, upsampled b)
    add_taps(w_u2[:, :base, :]);       add_taps(w_u2[:, base:, :])
    add_taps(params["up2"][1]["w"])
    add_taps(params["outc"]["w"])         # k=1
    assert len(w_list) == N_WMATS

    # ---- biases (BN shift) ----
    b_list = []
    for name in ("inc", "down1", "down2", "up1", "up2"):
        b_list.append(padb(params[name][0]["b"]))
        b_list.append(padb(params[name][1]["b"]))
    b_list.append(padb(params["outc"]["b"]))
    assert len(b_list) == N_BIAS

    # ---- aux lane-mixing matrices ----
    eye_b = jnp.eye(B, dtype=jnp.float32)
    aux = []
    for lb in (L, L // 2, L // 4):        # SL / SR per level
        aux.append(padn(jnp.kron(eye_b, jnp.eye(lb, k=1, dtype=jnp.float32))))
        aux.append(padn(jnp.kron(eye_b, jnp.eye(lb, k=-1, dtype=jnp.float32))))
    for lb in (L, L // 2):                # maxpool even/odd selectors
        lo = lb // 2
        idx = jnp.arange(lo)
        pe = jnp.zeros((lb, lo), jnp.float32).at[2 * idx, idx].set(1.0)
        po = jnp.zeros((lb, lo), jnp.float32).at[2 * idx + 1, idx].set(1.0)
        aux.append(padn(jnp.kron(eye_b, pe)))
        aux.append(padn(jnp.kron(eye_b, po)))
    for lin in (L // 4, L // 2):          # linear upsample matrices
        aux.append(padn(jnp.kron(eye_b, _upsample_matrix(lin))))
    n = jnp.arange(L)                     # DFT (angle reduced mod L first)
    ang = 2.0 * jnp.pi * ((n[:, None] * n[None, :]) % L).astype(jnp.float32) / L
    aux.append(padn(jnp.kron(eye_b, jnp.cos(ang))))
    aux.append(padn(jnp.kron(eye_b, jnp.sin(ang))))
    assert len(aux) == N_AUX

    return dict(
        w=jnp.stack(w_list),              # (37, C_pad, C_pad)
        b=jnp.stack(b_list),              # (11, C_pad, 1)
        aux=jnp.stack(aux),               # (14, N, N)
        C_pad=C_pad, N=N,
    )


def _vmem_spec():
    return pl.BlockSpec(memory_space=pltpu.MemorySpace.VMEM)


def lscsnet1d_forward(packed, x, samp_map, y):
    """x, samp_map: (B, C, L) float32; y: (B, C, L) complex64."""
    B, C, L = x.shape
    C_pad, N = packed["C_pad"], packed["N"]
    assert N == B * L

    x_slab = _to_slab(x, C_pad)
    keep_slab = _to_slab(1.0 - samp_map, C_pad)
    yr_slab = _to_slab(jnp.real(y).astype(jnp.float32), C_pad)
    yi_slab = _to_slab(jnp.imag(y).astype(jnp.float32), C_pad)

    out_slab = jax.ShapeDtypeStruct((C_pad, N), jnp.float32)
    xu_s, y2r_s, y2i_s = pl.pallas_call(
        _lscsnet_kernel,
        out_shape=(out_slab, out_slab, out_slab),
        in_specs=[_vmem_spec() for _ in range(7)],
        out_specs=(_vmem_spec(), _vmem_spec(), _vmem_spec()),
    )(x_slab, packed["w"], packed["b"], packed["aux"],
      keep_slab, yr_slab, yi_slab)

    x_unet = _from_slab(xu_s, B, C, L)
    y2 = _from_slab(y2r_s, B, C, L) + 1j * _from_slab(y2i_s, B, C, L)
    return y2, x_unet


# ----------------------------------------------------------------------------
# Parameter init (BN eval-mode folded) and a pure-JAX reference for validation
# ----------------------------------------------------------------------------
def init_params(key, n_in_c=1, base=8):
    keys = iter(jax.random.split(key, 64))

    def conv_w(cin, cout, k):
        return jax.random.normal(next(keys), (cout, cin, k), jnp.float32) / math.sqrt(cin * k)

    def conv_bn(cin, cout, k=3):
        w = conv_w(cin, cout, k)
        gamma = 1.0 + 0.1 * jax.random.normal(next(keys), (cout,), jnp.float32)
        beta = 0.1 * jax.random.normal(next(keys), (cout,), jnp.float32)
        scale = gamma / jnp.sqrt(1.0 + 1e-5)     # eval BN, running_mean=0, var=1
        return dict(w=w * scale[:, None, None], b=beta)

    def dconv(cin, cout):
        return [conv_bn(cin, cout), conv_bn(cout, cout)]

    return dict(
        inc=dconv(n_in_c, base),
        down1=dconv(base, 2 * base),
        down2=dconv(2 * base, 2 * base),
        up1=dconv(4 * base, base),
        up2=dconv(2 * base, base),
        outc=dict(w=conv_w(base, n_in_c, 1),
                  b=0.1 * jax.random.normal(next(keys), (n_in_c,), jnp.float32)),
    )


def _ref_conv(x, w, b, relu=True):
    K, L = w.shape[-1], x.shape[-1]
    pad = (K - 1) // 2
    xp = jnp.pad(x, ((0, 0), (0, 0), (pad, pad)))
    out = sum(jnp.einsum("oc,bcl->bol", w[:, :, k], xp[:, :, k:k + L])
              for k in range(K)) + b[None, :, None]
    return jnp.maximum(out, 0.0) if relu else out


def _ref_pool(x):
    B, C, L = x.shape
    return jnp.max(x.reshape(B, C, L // 2, 2), axis=-1)


def _ref_upsample(x):
    B, C, L = x.shape
    lo_n = 2 * L
    pos = jnp.arange(lo_n) * (L - 1) / (lo_n - 1)
    lo = jnp.floor(pos).astype(jnp.int32)
    hi = jnp.minimum(lo + 1, L - 1)
    w = (pos - lo).astype(jnp.float32)
    return x[..., lo] * (1.0 - w) + x[..., hi] * w


def _ref_dconv(x, layer):
    x = _ref_conv(x, layer[0]["w"], layer[0]["b"])
    return _ref_conv(x, layer[1]["w"], layer[1]["b"])


def ref_forward(params, x, samp_map, y):
    x1 = _ref_dconv(x, params["inc"])
    x2 = _ref_dconv(_ref_pool(x1), params["down1"])
    x3 = _ref_dconv(_ref_pool(x2), params["down2"])
    u = _ref_dconv(jnp.concatenate([x2, _ref_upsample(x3)], axis=1), params["up1"])
    u = _ref_dconv(jnp.concatenate([x1, _ref_upsample(u)], axis=1), params["up2"])
    xu = _ref_conv(u, params["outc"]["w"], params["outc"]["b"], relu=False)
    y2 = jnp.fft.fft(xu.astype(jnp.complex64), axis=-1) * (1.0 - samp_map) + y
    return y2, xu


# ----------------------------------------------------------------------------
if __name__ == "__main__":
    key = jax.random.PRNGKey(0)
    kp, kx, km, kyr, kyi = jax.random.split(key, 5)

    B, Cin, L, base = 2, 1, 16, 8
    params = init_params(kp, n_in_c=Cin, base=base)
    packed = pack_params(params, n_in_c=Cin, base=base, B=B, L=L)

    x = jax.random.normal(kx, (B, Cin, L), jnp.float32)
    samp_map = jax.random.bernoulli(km, 0.5, (B, Cin, L)).astype(jnp.float32)
    y = (0.1 * jax.random.normal(kyr, (B, Cin, L), jnp.float32)
         + 1j * 0.1 * jax.random.normal(kyi, (B, Cin, L), jnp.float32)).astype(jnp.complex64)

    fwd = jax.jit(lambda x, m, y: lscsnet1d_forward(packed, x, m, y))
    y2, x_unet = fwd(x, samp_map, y)
    jax.block_until_ready((y2, x_unet))

    # Sanity check against an independent pure-JAX reference.  Tolerance is
    # sized for MXU f32-accumulation / default matmul-precision differences.
    ref_y2, ref_xu = ref_forward(params, x, samp_map, y)
    assert x_unet.shape == (B, Cin, L) and y2.shape == (B, Cin, L)
    assert jnp.allclose(x_unet, ref_xu, atol=1e-2, rtol=5e-2), "U-Net path mismatch"
    assert jnp.allclose(y2, ref_y2, atol=1e-2, rtol=5e-2), "FFT/data-consistency mismatch"

    print("KERNEL_OK")
</pallas_src>

<mosaic_0001>
module attributes {stable_mosaic.version = 11 : i64} {
  func.func @_lscsnet_kernel(%arg0: memref<16x32xf32, #tpu.memory_space<vmem>>, %arg1: memref<37x16x16xf32, #tpu.memory_space<vmem>>, %arg2: memref<11x16x1xf32, #tpu.memory_space<vmem>>, %arg3: memref<14x32x32xf32, #tpu.memory_space<vmem>>, %arg4: memref<16x32xf32, #tpu.memory_space<vmem>>, %arg5: memref<16x32xf32, #tpu.memory_space<vmem>>, %arg6: memref<16x32xf32, #tpu.memory_space<vmem>>, %arg7: memref<16x32xf32, #tpu.memory_space<vmem>>, %arg8: memref<16x32xf32, #tpu.memory_space<vmem>>, %arg9: memref<16x32xf32, #tpu.memory_space<vmem>>) attributes {dimension_semantics = [], scalar_prefetch = 0 : i64, scratch_operands = 0 : i64, tpu.core_type = #tpu.core_type<tc>} {
    %c0 = arith.constant 0 : index
    %c0_0 = arith.constant 0 : index
    %0 = vector.load %arg0[%c0, %c0_0] : memref<16x32xf32, #tpu.memory_space<vmem>>, vector<16x32xf32>
    %c0_1 = arith.constant 0 : index
    %c0_2 = arith.constant 0 : index
    %c0_3 = arith.constant 0 : index
    %1 = vector.load %arg3[%c0_1, %c0_2, %c0_3] : memref<14x32x32xf32, #tpu.memory_space<vmem>>, vector<1x32x32xf32>
    %2 = vector.shape_cast %1 : vector<1x32x32xf32> to vector<32x32xf32>
    %cst = arith.constant dense<0.000000e+00> : vector<16x32xf32>
    %3 = tpu.matmul %0, %2, %cst {dimension_numbers = #tpu.dot_dimension_numbers<[1], [0], [0], [1], [0, 0, 1, 1], [], []>} : vector<16x32xf32>, vector<32x32xf32>, vector<16x32xf32> -> vector<16x32xf32>
    %c1 = arith.constant 1 : index
    %c0_4 = arith.constant 0 : index
    %c0_5 = arith.constant 0 : index
    %4 = vector.load %arg3[%c1, %c0_4, %c0_5] : memref<14x32x32xf32, #tpu.memory_space<vmem>>, vector<1x32x32xf32>
    %5 = vector.shape_cast %4 : vector<1x32x32xf32> to vector<32x32xf32>
    %cst_6 = arith.constant dense<0.000000e+00> : vector<16x32xf32>
    %6 = tpu.matmul %0, %5, %cst_6 {dimension_numbers = #tpu.dot_dimension_numbers<[1], [0], [0], [1], [0, 0, 1, 1], [], []>} : vector<16x32xf32>, vector<32x32xf32>, vector<16x32xf32> -> vector<16x32xf32>
    %c0_7 = arith.constant 0 : index
    %c0_8 = arith.constant 0 : index
    %c0_9 = arith.constant 0 : index
    %7 = vector.load %arg1[%c0_7, %c0_8, %c0_9] : memref<37x16x16xf32, #tpu.memory_space<vmem>>, vector<1x16x16xf32>
    %8 = vector.shape_cast %7 : vector<1x16x16xf32> to vector<16x16xf32>
    %cst_10 = arith.constant dense<0.000000e+00> : vector<16x32xf32>
    %9 = tpu.matmul %8, %3, %cst_10 {dimension_numbers = #tpu.dot_dimension_numbers<[1], [0], [0], [1], [0, 0, 1, 1], [], []>} : vector<16x16xf32>, vector<16x32xf32>, vector<16x32xf32> -> vector<16x32xf32>
    %c1_11 = arith.constant 1 : index
    %c0_12 = arith.constant 0 : index
    %c0_13 = arith.constant 0 : index
    %10 = vector.load %arg1[%c1_11, %c0_12, %c0_13] : memref<37x16x16xf32, #tpu.memory_space<vmem>>, vector<1x16x16xf32>
    %11 = vector.shape_cast %10 : vector<1x16x16xf32> to vector<16x16xf32>
    %cst_14 = arith.constant dense<0.000000e+00> : vector<16x32xf32>
    %12 = tpu.matmul %11, %0, %cst_14 {dimension_numbers = #tpu.dot_dimension_numbers<[1], [0], [0], [1], [0, 0, 1, 1], [], []>} : vector<16x16xf32>, vector<16x32xf32>, vector<16x32xf32> -> vector<16x32xf32>
    %13 = arith.addf %9, %12 : vector<16x32xf32>
    %c2 = arith.constant 2 : index
    %c0_15 = arith.constant 0 : index
    %c0_16 = arith.constant 0 : index
    %14 = vector.load %arg1[%c2, %c0_15, %c0_16] : memref<37x16x16xf32, #tpu.memory_space<vmem>>, vector<1x16x16xf32>
    %15 = vector.shape_cast %14 : vector<1x16x16xf32> to vector<16x16xf32>
    %cst_17 = arith.constant dense<0.000000e+00> : vector<16x32xf32>
    %16 = tpu.matmul %15, %6, %cst_17 {dimension_numbers = #tpu.dot_dimension_numbers<[1], [0], [0], [1], [0, 0, 1, 1], [], []>} : vector<16x16xf32>, vector<16x32xf32>, vector<16x32xf32> -> vector<16x32xf32>
    %17 = arith.addf %13, %16 : vector<16x32xf32>
    %c0_18 = arith.constant 0 : index
    %c0_19 = arith.constant 0 : index
    %c0_20 = arith.constant 0 : index
    %18 = vector.load %arg2[%c0_18, %c0_19, %c0_20] : memref<11x16x1xf32, #tpu.memory_space<vmem>>, vector<1x16x1xf32>
    %19 = vector.shape_cast %18 : vector<1x16x1xf32> to vector<16x1xf32>
    %20 = vector.broadcast %19 : vector<16x1xf32> to vector<16x32xf32>
    %21 = arith.addf %17, %20 : vector<16x32xf32>
    %cst_21 = arith.constant 0.000000e+00 : f32
    %22 = vector.broadcast %cst_21 : f32 to vector<16x32xf32>
    %23 = arith.maximumf %21, %22 : vector<16x32xf32>
    %c0_22 = arith.constant 0 : index
    %c0_23 = arith.constant 0 : index
    %c0_24 = arith.constant 0 : index
    %24 = vector.load %arg3[%c0_22, %c0_23, %c0_24] : memref<14x32x32xf32, #tpu.memory_space<vmem>>, vector<1x32x32xf32>
    %25 = vector.shape_cast %24 : vector<1x32x32xf32> to vector<32x32xf32>
    %cst_25 = arith.constant dense<0.000000e+00> : vector<16x32xf32>
    %26 = tpu.matmul %23, %25, %cst_25 {dimension_numbers = #tpu.dot_dimension_numbers<[1], [0], [0], [1], [0, 0, 1, 1], [], []>} : vector<16x32xf32>, vector<32x32xf32>, vector<16x32xf32> -> vector<16x32xf32>
    %c1_26 = arith.constant 1 : index
    %c0_27 = arith.constant 0 : index
    %c0_28 = arith.constant 0 : index
    %27 = vector.load %arg3[%c1_26, %c0_27, %c0_28] : memref<14x32x32xf32, #tpu.memory_space<vmem>>, vector<1x32x32xf32>
    %28 = vector.shape_cast %27 : vector<1x32x32xf32> to vector<32x32xf32>
    %cst_29 = arith.constant dense<0.000000e+00> : vector<16x32xf32>
    %29 = tpu.matmul %23, %28, %cst_29 {dimension_numbers = #tpu.dot_dimension_numbers<[1], [0], [0], [1], [0, 0, 1, 1], [], []>} : vector<16x32xf32>, vector<32x32xf32>, vector<16x32xf32> -> vector<16x32xf32>
    %c3 = arith.constant 3 : index
    %c0_30 = arith.constant 0 : index
    %c0_31 = arith.constant 0 : index
    %30 = vector.load %arg1[%c3, %c0_30, %c0_31] : memref<37x16x16xf32, #tpu.memory_space<vmem>>, vector<1x16x16xf32>
    %31 = vector.shape_cast %30 : vector<1x16x16xf32> to vector<16x16xf32>
    %cst_32 = arith.constant dense<0.000000e+00> : vector<16x32xf32>
    %32 = tpu.matmul %31, %26, %cst_32 {dimension_numbers = #tpu.dot_dimension_numbers<[1], [0], [0], [1], [0, 0, 1, 1], [], []>} : vector<16x16xf32>, vector<16x32xf32>, vector<16x32xf32> -> vector<16x32xf32>
    %c4 = arith.constant 4 : index
    %c0_33 = arith.constant 0 : index
    %c0_34 = arith.constant 0 : index
    %33 = vector.load %arg1[%c4, %c0_33, %c0_34] : memref<37x16x16xf32, #tpu.memory_space<vmem>>, vector<1x16x16xf32>
    %34 = vector.shape_cast %33 : vector<1x16x16xf32> to vector<16x16xf32>
    %cst_35 = arith.constant dense<0.000000e+00> : vector<16x32xf32>
    %35 = tpu.matmul %34, %23, %cst_35 {dimension_numbers = #tpu.dot_dimension_numbers<[1], [0], [0], [1], [0, 0, 1, 1], [], []>} : vector<16x16xf32>, vector<16x32xf32>, vector<16x32xf32> -> vector<16x32xf32>
    %36 = arith.addf %32, %35 : vector<16x32xf32>
    %c5 = arith.constant 5 : index
    %c0_36 = arith.constant 0 : index
    %c0_37 = arith.constant 0 : index
    %37 = vector.load %arg1[%c5, %c0_36, %c0_37] : memref<37x16x16xf32, #tpu.memory_space<vmem>>, vector<1x16x16xf32>
    %38 = vector.shape_cast %37 : vector<1x16x16xf32> to vector<16x16xf32>
    %cst_38 = arith.constant dense<0.000000e+00> : vector<16x32xf32>
    %39 = tpu.matmul %38, %29, %cst_38 {dimension_numbers = #tpu.dot_dimension_numbers<[1], [0], [0], [1], [0, 0, 1, 1], [], []>} : vector<16x16xf32>, vector<16x32xf32>, vector<16x32xf32> -> vector<16x32xf32>
    %40 = arith.addf %36, %39 : vector<16x32xf32>
    %c1_39 = arith.constant 1 : index
    %c0_40 = arith.constant 0 : index
    %c0_41 = arith.constant 0 : index
    %41 = vector.load %arg2[%c1_39, %c0_40, %c0_41] : memref<11x16x1xf32, #tpu.memory_space<vmem>>, vector<1x16x1xf32>
    %42 = vector.shape_cast %41 : vector<1x16x1xf32> to vector<16x1xf32>
    %43 = vector.broadcast %42 : vector<16x1xf32> to vector<16x32xf32>
    %44 = arith.addf %40, %43 : vector<16x32xf32>
    %cst_42 = arith.constant 0.000000e+00 : f32
    %45 = vector.broadcast %cst_42 : f32 to vector<16x32xf32>
    %46 = arith.maximumf %44, %45 : vector<16x32xf32>
    %c6 = arith.constant 6 : index
    %c0_43 = arith.constant 0 : index
    %c0_44 = arith.constant 0 : index
    %47 = vector.load %arg3[%c6, %c0_43, %c0_44] : memref<14x32x32xf32, #tpu.memory_space<vmem>>, vector<1x32x32xf32>
    %48 = vector.shape_cast %47 : vector<1x32x32xf32> to vector<32x32xf32>
    %cst_45 = arith.constant dense<0.000000e+00> : vector<16x32xf32>
    %49 = tpu.matmul %46, %48, %cst_45 {dimension_numbers = #tpu.dot_dimension_numbers<[1], [0], [0], [1], [0, 0, 1, 1], [], []>} : vector<16x32xf32>, vector<32x32xf32>, vector<16x32xf32> -> vector<16x32xf32>
    %c7 = arith.constant 7 : index
    %c0_46 = arith.constant 0 : index
    %c0_47 = arith.constant 0 : index
    %50 = vector.load %arg3[%c7, %c0_46, %c0_47] : memref<14x32x32xf32, #tpu.memory_space<vmem>>, vector<1x32x32xf32>
    %51 = vector.shape_cast %50 : vector<1x32x32xf32> to vector<32x32xf32>
    %cst_48 = arith.constant dense<0.000000e+00> : vector<16x32xf32>
    %52 = tpu.matmul %46, %51, %cst_48 {dimension_numbers = #tpu.dot_dimension_numbers<[1], [0], [0], [1], [0, 0, 1, 1], [], []>} : vector<16x32xf32>, vector<32x32xf32>, vector<16x32xf32> -> vector<16x32xf32>
    %53 = arith.maximumf %49, %52 : vector<16x32xf32>
    %c2_49 = arith.constant 2 : index
    %c0_50 = arith.constant 0 : index
    %c0_51 = arith.constant 0 : index
    %54 = vector.load %arg3[%c2_49, %c0_50, %c0_51] : memref<14x32x32xf32, #tpu.memory_space<vmem>>, vector<1x32x32xf32>
    %55 = vector.shape_cast %54 : vector<1x32x32xf32> to vector<32x32xf32>
    %cst_52 = arith.constant dense<0.000000e+00> : vector<16x32xf32>
    %56 = tpu.matmul %53, %55, %cst_52 {dimension_numbers = #tpu.dot_dimension_numbers<[1], [0], [0], [1], [0, 0, 1, 1], [], []>} : vector<16x32xf32>, vector<32x32xf32>, vector<16x32xf32> -> vector<16x32xf32>
    %c3_53 = arith.constant 3 : index
    %c0_54 = arith.constant 0 : index
    %c0_55 = arith.constant 0 : index
    %57 = vector.load %arg3[%c3_53, %c0_54, %c0_55] : memref<14x32x32xf32, #tpu.memory_space<vmem>>, vector<1x32x32xf32>
    %58 = vector.shape_cast %57 : vector<1x32x32xf32> to vector<32x32xf32>
    %cst_56 = arith.constant dense<0.000000e+00> : vector<16x32xf32>
    %59 = tpu.matmul %53, %58, %cst_56 {dimension_numbers = #tpu.dot_dimension_numbers<[1], [0], [0], [1], [0, 0, 1, 1], [], []>} : vector<16x32xf32>, vector<32x32xf32>, vector<16x32xf32> -> vector<16x32xf32>
    %c6_57 = arith.constant 6 : index
    %c0_58 = arith.constant 0 : index
    %c0_59 = arith.constant 0 : index
    %60 = vector.load %arg1[%c6_57, %c0_58, %c0_59] : memref<37x16x16xf32, #tpu.memory_space<vmem>>, vector<1x16x16xf32>
    %61 = vector.shape_cast %60 : vector<1x16x16xf32> to vector<16x16xf32>
    %cst_60 = arith.constant dense<0.000000e+00> : vector<16x32xf32>
    %62 = tpu.matmul %61, %56, %cst_60 {dimension_numbers = #tpu.dot_dimension_numbers<[1], [0], [0], [1], [0, 0, 1, 1], [], []>} : vector<16x16xf32>, vector<16x32xf32>, vector<16x32xf32> -> vector<16x32xf32>
    %c7_61 = arith.constant 7 : index
    %c0_62 = arith.constant 0 : index
    %c0_63 = arith.constant 0 : index
    %63 = vector.load %arg1[%c7_61, %c0_62, %c0_63] : memref<37x16x16xf32, #tpu.memory_space<vmem>>, vector<1x16x16xf32>
    %64 = vector.shape_cast %63 : vector<1x16x16xf32> to vector<16x16xf32>
    %cst_64 = arith.constant dense<0.000000e+00> : vector<16x32xf32>
    %65 = tpu.matmul %64, %53, %cst_64 {dimension_numbers = #tpu.dot_dimension_numbers<[1], [0], [0], [1], [0, 0, 1, 1], [], []>} : vector<16x16xf32>, vector<16x32xf32>, vector<16x32xf32> -> vector<16x32xf32>
    %66 = arith.addf %62, %65 : vector<16x32xf32>
    %c8 = arith.constant 8 : index
    %c0_65 = arith.constant 0 : index
    %c0_66 = arith.constant 0 : index
    %67 = vector.load %arg1[%c8, %c0_65, %c0_66] : memref<37x16x16xf32, #tpu.memory_space<vmem>>, vector<1x16x16xf32>
    %68 = vector.shape_cast %67 : vector<1x16x16xf32> to vector<16x16xf32>
    %cst_67 = arith.constant dense<0.000000e+00> : vector<16x32xf32>
    %69 = tpu.matmul %68, %59, %cst_67 {dimension_numbers = #tpu.dot_dimension_numbers<[1], [0], [0], [1], [0, 0, 1, 1], [], []>} : vector<16x16xf32>, vector<16x32xf32>, vector<16x32xf32> -> vector<16x32xf32>
    %70 = arith.addf %66, %69 : vector<16x32xf32>
    %c2_68 = arith.constant 2 : index
    %c0_69 = arith.constant 0 : index
    %c0_70 = arith.constant 0 : index
    %71 = vector.load %arg2[%c2_68, %c0_69, %c0_70] : memref<11x16x1xf32, #tpu.memory_space<vmem>>, vector<1x16x1xf32>
    %72 = vector.shape_cast %71 : vector<1x16x1xf32> to vector<16x1xf32>
    %73 = vector.broadcast %72 : vector<16x1xf32> to vector<16x32xf32>
    %74 = arith.addf %70, %73 : vector<16x32xf32>
    %cst_71 = arith.constant 0.000000e+00 : f32
    %75 = vector.broadcast %cst_71 : f32 to vector<16x32xf32>
    %76 = arith.maximumf %74, %75 : vector<16x32xf32>
    %c2_72 = arith.constant 2 : index
    %c0_73 = arith.constant 0 : index
    %c0_74 = arith.constant 0 : index
    %77 = vector.load %arg3[%c2_72, %c0_73, %c0_74] : memref<14x32x32xf32, #tpu.memory_space<vmem>>, vector<1x32x32xf32>
    %78 = vector.shape_cast %77 : vector<1x32x32xf32> to vector<32x32xf32>
    %cst_75 = arith.constant dense<0.000000e+00> : vector<16x32xf32>
    %79 = tpu.matmul %76, %78, %cst_75 {dimension_numbers = #tpu.dot_dimension_numbers<[1], [0], [0], [1], [0, 0, 1, 1], [], []>} : vector<16x32xf32>, vector<32x32xf32>, vector<16x32xf32> -> vector<16x32xf32>
    %c3_76 = arith.constant 3 : index
    %c0_77 = arith.constant 0 : index
    %c0_78 = arith.constant 0 : index
    %80 = vector.load %arg3[%c3_76, %c0_77, %c0_78] : memref<14x32x32xf32, #tpu.memory_space<vmem>>, vector<1x32x32xf32>
    %81 = vector.shape_cast %80 : vector<1x32x32xf32> to vector<32x32xf32>
    %cst_79 = arith.constant dense<0.000000e+00> : vector<16x32xf32>
    %82 = tpu.matmul %76, %81, %cst_79 {dimension_numbers = #tpu.dot_dimension_numbers<[1], [0], [0], [1], [0, 0, 1, 1], [], []>} : vector<16x32xf32>, vector<32x32xf32>, vector<16x32xf32> -> vector<16x32xf32>
    %c9 = arith.constant 9 : index
    %c0_80 = arith.constant 0 : index
    %c0_81 = arith.constant 0 : index
    %83 = vector.load %arg1[%c9, %c0_80, %c0_81] : memref<37x16x16xf32, #tpu.memory_space<vmem>>, vector<1x16x16xf32>
    %84 = vector.shape_cast %83 : vector<1x16x16xf32> to vector<16x16xf32>
    %cst_82 = arith.constant dense<0.000000e+00> : vector<16x32xf32>
    %85 = tpu.matmul %84, %79, %cst_82 {dimension_numbers = #tpu.dot_dimension_numbers<[1], [0], [0], [1], [0, 0, 1, 1], [], []>} : vector<16x16xf32>, vector<16x32xf32>, vector<16x32xf32> -> vector<16x32xf32>
    %c10 = arith.constant 10 : index
    %c0_83 = arith.constant 0 : index
    %c0_84 = arith.constant 0 : index
    %86 = vector.load %arg1[%c10, %c0_83, %c0_84] : memref<37x16x16xf32, #tpu.memory_space<vmem>>, vector<1x16x16xf32>
    %87 = vector.shape_cast %86 : vector<1x16x16xf32> to vector<16x16xf32>
    %cst_85 = arith.constant dense<0.000000e+00> : vector<16x32xf32>
    %88 = tpu.matmul %87, %76, %cst_85 {dimension_numbers = #tpu.dot_dimension_numbers<[1], [0], [0], [1], [0, 0, 1, 1], [], []>} : vector<16x16xf32>, vector<16x32xf32>, vector<16x32xf32> -> vector<16x32xf32>
    %89 = arith.addf %85, %88 : vector<16x32xf32>
    %c11 = arith.constant 11 : index
    %c0_86 = arith.constant 0 : index
    %c0_87 = arith.constant 0 : index
    %90 = vector.load %arg1[%c11, %c0_86, %c0_87] : memref<37x16x16xf32, #tpu.memory_space<vmem>>, vector<1x16x16xf32>
    %91 = vector.shape_cast %90 : vector<1x16x16xf32> to vector<16x16xf32>
    %cst_88 = arith.constant dense<0.000000e+00> : vector<16x32xf32>
    %92 = tpu.matmul %91, %82, %cst_88 {dimension_numbers = #tpu.dot_dimension_numbers<[1], [0], [0], [1], [0, 0, 1, 1], [], []>} : vector<16x16xf32>, vector<16x32xf32>, vector<16x32xf32> -> vector<16x32xf32>
    %93 = arith.addf %89, %92 : vector<16x32xf32>
    %c3_89 = arith.constant 3 : index
    %c0_90 = arith.constant 0 : index
    %c0_91 = arith.constant 0 : index
    %94 = vector.load %arg2[%c3_89, %c0_90, %c0_91] : memref<11x16x1xf32, #tpu.memory_space<vmem>>, vector<1x16x1xf32>
    %95 = vector.shape_cast %94 : vector<1x16x1xf32> to vector<16x1xf32>
    %96 = vector.broadcast %95 : vector<16x1xf32> to vector<16x32xf32>
    %97 = arith.addf %93, %96 : vector<16x32xf32>
    %cst_92 = arith.constant 0.000000e+00 : f32
    %98 = vector.broadcast %cst_92 : f32 to vector<16x32xf32>
    %99 = arith.maximumf %97, %98 : vector<16x32xf32>
    %c8_93 = arith.constant 8 : index
    %c0_94 = arith.constant 0 : index
    %c0_95 = arith.constant 0 : index
    %100 = vector.load %arg3[%c8_93, %c0_94, %c0_95] : memref<14x32x32xf32, #tpu.memory_space<vmem>>, vector<1x32x32xf32>
    %101 = vector.shape_cast %100 : vector<1x32x32xf32> to vector<32x32xf32>
    %cst_96 = arith.constant dense<0.000000e+00> : vector<16x32xf32>
    %102 = tpu.matmul %99, %101, %cst_96 {dimension_numbers = #tpu.dot_dimension_numbers<[1], [0], [0], [1], [0, 0, 1, 1], [], []>} : vector<16x32xf32>, vector<32x32xf32>, vector<16x32xf32> -> vector<16x32xf32>
    %c9_97 = arith.constant 9 : index
    %c0_98 = arith.constant 0 : index
    %c0_99 = arith.constant 0 : index
    %103 = vector.load %arg3[%c9_97, %c0_98, %c0_99] : memref<14x32x32xf32, #tpu.memory_space<vmem>>, vector<1x32x32xf32>
    %104 = vector.shape_cast %103 : vector<1x32x32xf32> to vector<32x32xf32>
    %cst_100 = arith.constant dense<0.000000e+00> : vector<16x32xf32>
    %105 = tpu.matmul %99, %104, %cst_100 {dimension_numbers = #tpu.dot_dimension_numbers<[1], [0], [0], [1], [0, 0, 1, 1], [], []>} : vector<16x32xf32>, vector<32x32xf32>, vector<16x32xf32> -> vector<16x32xf32>
    %106 = arith.maximumf %102, %105 : vector<16x32xf32>
    %c4_101 = arith.constant 4 : index
    %c0_102 = arith.constant 0 : index
    %c0_103 = arith.constant 0 : index
    %107 = vector.load %arg3[%c4_101, %c0_102, %c0_103] : memref<14x32x32xf32, #tpu.memory_space<vmem>>, vector<1x32x32xf32>
    %108 = vector.shape_cast %107 : vector<1x32x32xf32> to vector<32x32xf32>
    %cst_104 = arith.constant dense<0.000000e+00> : vector<16x32xf32>
    %109 = tpu.matmul %106, %108, %cst_104 {dimension_numbers = #tpu.dot_dimension_numbers<[1], [0], [0], [1], [0, 0, 1, 1], [], []>} : vector<16x32xf32>, vector<32x32xf32>, vector<16x32xf32> -> vector<16x32xf32>
    %c5_105 = arith.constant 5 : index
    %c0_106 = arith.constant 0 : index
    %c0_107 = arith.constant 0 : index
    %110 = vector.load %arg3[%c5_105, %c0_106, %c0_107] : memref<14x32x32xf32, #tpu.memory_space<vmem>>, vector<1x32x32xf32>
    %111 = vector.shape_cast %110 : vector<1x32x32xf32> to vector<32x32xf32>
    %cst_108 = arith.constant dense<0.000000e+00> : vector<16x32xf32>
    %112 = tpu.matmul %106, %111, %cst_108 {dimension_numbers = #tpu.dot_dimension_numbers<[1], [0], [0], [1], [0, 0, 1, 1], [], []>} : vector<16x32xf32>, vector<32x32xf32>, vector<16x32xf32> -> vector<16x32xf32>
    %c12 = arith.constant 12 : index
    %c0_109 = arith.constant 0 : index
    %c0_110 = arith.constant 0 : index
    %113 = vector.load %arg1[%c12, %c0_109, %c0_110] : memref<37x16x16xf32, #tpu.memory_space<vmem>>, vector<1x16x16xf32>
    %114 = vector.shape_cast %113 : vector<1x16x16xf32> to vector<16x16xf32>
    %cst_111 = arith.constant dense<0.000000e+00> : vector<16x32xf32>
    %115 = tpu.matmul %114, %109, %cst_111 {dimension_numbers = #tpu.dot_dimension_numbers<[1], [0], [0], [1], [0, 0, 1, 1], [], []>} : vector<16x16xf32>, vector<16x32xf32>, vector<16x32xf32> -> vector<16x32xf32>
    %c13 = arith.constant 13 : index
    %c0_112 = arith.constant 0 : index
    %c0_113 = arith.constant 0 : index
    %116 = vector.load %arg1[%c13, %c0_112, %c0_113] : memref<37x16x16xf32, #tpu.memory_space<vmem>>, vector<1x16x16xf32>
    %117 = vector.shape_cast %116 : vector<1x16x16xf32> to vector<16x16xf32>
    %cst_114 = arith.constant dense<0.000000e+00> : vector<16x32xf32>
    %118 = tpu.matmul %117, %106, %cst_114 {dimension_numbers = #tpu.dot_dimension_numbers<[1], [0], [0], [1], [0, 0, 1, 1], [], []>} : vector<16x16xf32>, vector<16x32xf32>, vector<16x32xf32> -> vector<16x32xf32>
    %119 = arith.addf %115, %118 : vector<16x32xf32>
    %c14 = arith.constant 14 : index
    %c0_115 = arith.constant 0 : index
    %c0_116 = arith.constant 0 : index
    %120 = vector.load %arg1[%c14, %c0_115, %c0_116] : memref<37x16x16xf32, #tpu.memory_space<vmem>>, vector<1x16x16xf32>
    %121 = vector.shape_cast %120 : vector<1x16x16xf32> to vector<16x16xf32>
    %cst_117 = arith.constant dense<0.000000e+00> : vector<16x32xf32>
    %122 = tpu.matmul %121, %112, %cst_117 {dimension_numbers = #tpu.dot_dimension_numbers<[1], [0], [0], [1], [0, 0, 1, 1], [], []>} : vector<16x16xf32>, vector<16x32xf32>, vector<16x32xf32> -> vector<16x32xf32>
    %123 = arith.addf %119, %122 : vector<16x32xf32>
    %c4_118 = arith.constant 4 : index
    %c0_119 = arith.constant 0 : index
    %c0_120 = arith.constant 0 : index
    %124 = vector.load %arg2[%c4_118, %c0_119, %c0_120] : memref<11x16x1xf32, #tpu.memory_space<vmem>>, vector<1x16x1xf32>
    %125 = vector.shape_cast %124 : vector<1x16x1xf32> to vector<16x1xf32>
    %126 = vector.broadcast %125 : vector<16x1xf32> to vector<16x32xf32>
    %127 = arith.addf %123, %126 : vector<16x32xf32>
    %cst_121 = arith.constant 0.000000e+00 : f32
    %128 = vector.broadcast %cst_121 : f32 to vector<16x32xf32>
    %129 = arith.maximumf %127, %128 : vector<16x32xf32>
    %c4_122 = arith.constant 4 : index
    %c0_123 = arith.constant 0 : index
    %c0_124 = arith.constant 0 : index
    %130 = vector.load %arg3[%c4_122, %c0_123, %c0_124] : memref<14x32x32xf32, #tpu.memory_space<vmem>>, vector<1x32x32xf32>
    %131 = vector.shape_cast %130 : vector<1x32x32xf32> to vector<32x32xf32>
    %cst_125 = arith.constant dense<0.000000e+00> : vector<16x32xf32>
    %132 = tpu.matmul %129, %131, %cst_125 {dimension_numbers = #tpu.dot_dimension_numbers<[1], [0], [0], [1], [0, 0, 1, 1], [], []>} : vector<16x32xf32>, vector<32x32xf32>, vector<16x32xf32> -> vector<16x32xf32>
    %c5_126 = arith.constant 5 : index
    %c0_127 = arith.constant 0 : index
    %c0_128 = arith.constant 0 : index
    %133 = vector.load %arg3[%c5_126, %c0_127, %c0_128] : memref<14x32x32xf32, #tpu.memory_space<vmem>>, vector<1x32x32xf32>
    %134 = vector.shape_cast %133 : vector<1x32x32xf32> to vector<32x32xf32>
    %cst_129 = arith.constant dense<0.000000e+00> : vector<16x32xf32>
    %135 = tpu.matmul %129, %134, %cst_129 {dimension_numbers = #tpu.dot_dimension_numbers<[1], [0], [0], [1], [0, 0, 1, 1], [], []>} : vector<16x32xf32>, vector<32x32xf32>, vector<16x32xf32> -> vector<16x32xf32>
    %c15 = arith.constant 15 : index
    %c0_130 = arith.constant 0 : index
    %c0_131 = arith.constant 0 : index
    %136 = vector.load %arg1[%c15, %c0_130, %c0_131] : memref<37x16x16xf32, #tpu.memory_space<vmem>>, vector<1x16x16xf32>
    %137 = vector.shape_cast %136 : vector<1x16x16xf32> to vector<16x16xf32>
    %cst_132 = arith.constant dense<0.000000e+00> : vector<16x32xf32>
    %138 = tpu.matmul %137, %132, %cst_132 {dimension_numbers = #tpu.dot_dimension_numbers<[1], [0], [0], [1], [0, 0, 1, 1], [], []>} : vector<16x16xf32>, vector<16x32xf32>, vector<16x32xf32> -> vector<16x32xf32>
    %c16 = arith.constant 16 : index
    %c0_133 = arith.constant 0 : index
    %c0_134 = arith.constant 0 : index
    %139 = vector.load %arg1[%c16, %c0_133, %c0_134] : memref<37x16x16xf32, #tpu.memory_space<vmem>>, vector<1x16x16xf32>
    %140 = vector.shape_cast %139 : vector<1x16x16xf32> to vector<16x16xf32>
    %cst_135 = arith.constant dense<0.000000e+00> : vector<16x32xf32>
    %141 = tpu.matmul %140, %129, %cst_135 {dimension_numbers = #tpu.dot_dimension_numbers<[1], [0], [0], [1], [0, 0, 1, 1], [], []>} : vector<16x16xf32>, vector<16x32xf32>, vector<16x32xf32> -> vector<16x32xf32>
    %142 = arith.addf %138, %141 : vector<16x32xf32>
    %c17 = arith.constant 17 : index
    %c0_136 = arith.constant 0 : index
    %c0_137 = arith.constant 0 : index
    %143 = vector.load %arg1[%c17, %c0_136, %c0_137] : memref<37x16x16xf32, #tpu.memory_space<vmem>>, vector<1x16x16xf32>
    %144 = vector.shape_cast %143 : vector<1x16x16xf32> to vector<16x16xf32>
    %cst_138 = arith.constant dense<0.000000e+00> : vector<16x32xf32>
    %145 = tpu.matmul %144, %135, %cst_138 {dimension_numbers = #tpu.dot_dimension_numbers<[1], [0], [0], [1], [0, 0, 1, 1], [], []>} : vector<16x16xf32>, vector<16x32xf32>, vector<16x32xf32> -> vector<16x32xf32>
    %146 = arith.addf %142, %145 : vector<16x32xf32>
    %c5_139 = arith.constant 5 : index
    %c0_140 = arith.constant 0 : index
    %c0_141 = arith.constant 0 : index
    %147 = vector.load %arg2[%c5_139, %c0_140, %c0_141] : memref<11x16x1xf32, #tpu.memory_space<vmem>>, vector<1x16x1xf32>
    %148 = vector.shape_cast %147 : vector<1x16x1xf32> to vector<16x1xf32>
    %149 = vector.broadcast %148 : vector<16x1xf32> to vector<16x32xf32>
    %150 = arith.addf %146, %149 : vector<16x32xf32>
    %cst_142 = arith.constant 0.000000e+00 : f32
    %151 = vector.broadcast %cst_142 : f32 to vector<16x32xf32>
    %152 = arith.maximumf %150, %151 : vector<16x32xf32>
    %c10_143 = arith.constant 10 : index
    %c0_144 = arith.constant 0 : index
    %c0_145 = arith.constant 0 : index
    %153 = vector.load %arg3[%c10_143, %c0_144, %c0_145] : memref<14x32x32xf32, #tpu.memory_space<vmem>>, vector<1x32x32xf32>
    %154 = vector.shape_cast %153 : vector<1x32x32xf32> to vector<32x32xf32>
    %cst_146 = arith.constant dense<0.000000e+00> : vector<16x32xf32>
    %155 = tpu.matmul %152, %154, %cst_146 {dimension_numbers = #tpu.dot_dimension_numbers<[1], [0], [0], [1], [0, 0, 1, 1], [], []>} : vector<16x32xf32>, vector<32x32xf32>, vector<16x32xf32> -> vector<16x32xf32>
    %c2_147 = arith.constant 2 : index
    %c0_148 = arith.constant 0 : index
    %c0_149 = arith.constant 0 : index
    %156 = vector.load %arg3[%c2_147, %c0_148, %c0_149] : memref<14x32x32xf32, #tpu.memory_space<vmem>>, vector<1x32x32xf32>
    %157 = vector.shape_cast %156 : vector<1x32x32xf32> to vector<32x32xf32>
    %cst_150 = arith.constant dense<0.000000e+00> : vector<16x32xf32>
    %158 = tpu.matmul %99, %157, %cst_150 {dimension_numbers = #tpu.dot_dimension_numbers<[1], [0], [0], [1], [0, 0, 1, 1], [], []>} : vector<16x32xf32>, vector<32x32xf32>, vector<16x32xf32> -> vector<16x32xf32>
    %c3_151 = arith.constant 3 : index
    %c0_152 = arith.constant 0 : index
    %c0_153 = arith.constant 0 : index
    %159 = vector.load %arg3[%c3_151, %c0_152, %c0_153] : memref<14x32x32xf32, #tpu.memory_space<vmem>>, vector<1x32x32xf32>
    %160 = vector.shape_cast %159 : vector<1x32x32xf32> to vector<32x32xf32>
    %cst_154 = arith.constant dense<0.000000e+00> : vector<16x32xf32>
    %161 = tpu.matmul %99, %160, %cst_154 {dimension_numbers = #tpu.dot_dimension_numbers<[1], [0], [0], [1], [0, 0, 1, 1], [], []>} : vector<16x32xf32>, vector<32x32xf32>, vector<16x32xf32> -> vector<16x32xf32>
    %c18 = arith.constant 18 : index
    %c0_155 = arith.constant 0 : index
    %c0_156 = arith.constant 0 : index
    %162 = vector.load %arg1[%c18, %c0_155, %c0_156] : memref<37x16x16xf32, #tpu.memory_space<vmem>>, vector<1x16x16xf32>
    %163 = vector.shape_cast %162 : vector<1x16x16xf32> to vector<16x16xf32>
    %cst_157 = arith.constant dense<0.000000e+00> : vector<16x32xf32>
    %164 = tpu.matmul %163, %158, %cst_157 {dimension_numbers = #tpu.dot_dimension_numbers<[1], [0], [0], [1], [0, 0, 1, 1], [], []>} : vector<16x16xf32>, vector<16x32xf32>, vector<16x32xf32> -> vector<16x32xf32>
    %c19 = arith.constant 19 : index
    %c0_158 = arith.constant 0 : index
    %c0_159 = arith.constant 0 : index
    %165 = vector.load %arg1[%c19, %c0_158, %c0_159] : memref<37x16x16xf32, #tpu.memory_space<vmem>>, vector<1x16x16xf32>
    %166 = vector.shape_cast %165 : vector<1x16x16xf32> to vector<16x16xf32>
    %cst_160 = arith.constant dense<0.000000e+00> : vector<16x32xf32>
    %167 = tpu.matmul %166, %99, %cst_160 {dimension_numbers = #tpu.dot_dimension_numbers<[1], [0], [0], [1], [0, 0, 1, 1], [], []>} : vector<16x16xf32>, vector<16x32xf32>, vector<16x32xf32> -> vector<16x32xf32>
    %168 = arith.addf %164, %167 : vector<16x32xf32>
    %c20 = arith.constant 20 : index
    %c0_161 = arith.constant 0 : index
    %c0_162 = arith.constant 0 : index
    %169 = vector.load %arg1[%c20, %c0_161, %c0_162] : memref<37x16x16xf32, #tpu.memory_space<vmem>>, vector<1x16x16xf32>
    %170 = vector.shape_cast %169 : vector<1x16x16xf32> to vector<16x16xf32>
    %cst_163 = arith.constant dense<0.000000e+00> : vector<16x32xf32>
    %171 = tpu.matmul %170, %161, %cst_163 {dimension_numbers = #tpu.dot_dimension_numbers<[1], [0], [0], [1], [0, 0, 1, 1], [], []>} : vector<16x16xf32>, vector<16x32xf32>, vector<16x32xf32> -> vector<16x32xf32>
    %172 = arith.addf %168, %171 : vector<16x32xf32>
    %c2_164 = arith.constant 2 : index
    %c0_165 = arith.constant 0 : index
    %c0_166 = arith.constant 0 : index
    %173 = vector.load %arg3[%c2_164, %c0_165, %c0_166] : memref<14x32x32xf32, #tpu.memory_space<vmem>>, vector<1x32x32xf32>
    %174 = vector.shape_cast %173 : vector<1x32x32xf32> to vector<32x32xf32>
    %cst_167 = arith.constant dense<0.000000e+00> : vector<16x32xf32>
    %175 = tpu.matmul %155, %174, %cst_167 {dimension_numbers = #tpu.dot_dimension_numbers<[1], [0], [0], [1], [0, 0, 1, 1], [], []>} : vector<16x32xf32>, vector<32x32xf32>, vector<16x32xf32> -> vector<16x32xf32>
    %c3_168 = arith.constant 3 : index
    %c0_169 = arith.constant 0 : index
    %c0_170 = arith.constant 0 : index
    %176 = vector.load %arg3[%c3_168, %c0_169, %c0_170] : memref<14x32x32xf32, #tpu.memory_space<vmem>>, vector<1x32x32xf32>
    %177 = vector.shape_cast %176 : vector<1x32x32xf32> to vector<32x32xf32>
    %cst_171 = arith.constant dense<0.000000e+00> : vector<16x32xf32>
    %178 = tpu.matmul %155, %177, %cst_171 {dimension_numbers = #tpu.dot_dimension_numbers<[1], [0], [0], [1], [0, 0, 1, 1], [], []>} : vector<16x32xf32>, vector<32x32xf32>, vector<16x32xf32> -> vector<16x32xf32>
    %c21 = arith.constant 21 : index
    %c0_172 = arith.constant 0 : index
    %c0_173 = arith.constant 0 : index
    %179 = vector.load %arg1[%c21, %c0_172, %c0_173] : memref<37x16x16xf32, #tpu.memory_space<vmem>>, vector<1x16x16xf32>
    %180 = vector.shape_cast %179 : vector<1x16x16xf32> to vector<16x16xf32>
    %cst_174 = arith.constant dense<0.000000e+00> : vector<16x32xf32>
    %181 = tpu.matmul %180, %175, %cst_174 {dimension_numbers = #tpu.dot_dimension_numbers<[1], [0], [0], [1], [0, 0, 1, 1], [], []>} : vector<16x16xf32>, vector<16x32xf32>, vector<16x32xf32> -> vector<16x32xf32>
    %c22 = arith.constant 22 : index
    %c0_175 = arith.constant 0 : index
    %c0_176 = arith.constant 0 : index
    %182 = vector.load %arg1[%c22, %c0_175, %c0_176] : memref<37x16x16xf32, #tpu.memory_space<vmem>>, vector<1x16x16xf32>
    %183 = vector.shape_cast %182 : vector<1x16x16xf32> to vector<16x16xf32>
    %cst_177 = arith.constant dense<0.000000e+00> : vector<16x32xf32>
    %184 = tpu.matmul %183, %155, %cst_177 {dimension_numbers = #tpu.dot_dimension_numbers<[1], [0], [0], [1], [0, 0, 1, 1], [], []>} : vector<16x16xf32>, vector<16x32xf32>, vector<16x32xf32> -> vector<16x32xf32>
    %185 = arith.addf %181, %184 : vector<16x32xf32>
    %c23 = arith.constant 23 : index
    %c0_178 = arith.constant 0 : index
    %c0_179 = arith.constant 0 : index
    %186 = vector.load %arg1[%c23, %c0_178, %c0_179] : memref<37x16x16xf32, #tpu.memory_space<vmem>>, vector<1x16x16xf32>
    %187 = vector.shape_cast %186 : vector<1x16x16xf32> to vector<16x16xf32>
    %cst_180 = arith.constant dense<0.000000e+00> : vector<16x32xf32>
    %188 = tpu.matmul %187, %178, %cst_180 {dimension_numbers = #tpu.dot_dimension_numbers<[1], [0], [0], [1], [0, 0, 1, 1], [], []>} : vector<16x16xf32>, vector<16x32xf32>, vector<16x32xf32> -> vector<16x32xf32>
    %189 = arith.addf %185, %188 : vector<16x32xf32>
    %190 = arith.addf %172, %189 : vector<16x32xf32>
    %c6_181 = arith.constant 6 : index
    %c0_182 = arith.constant 0 : index
    %c0_183 = arith.constant 0 : index
    %191 = vector.load %arg2[%c6_181, %c0_182, %c0_183] : memref<11x16x1xf32, #tpu.memory_space<vmem>>, vector<1x16x1xf32>
    %192 = vector.shape_cast %191 : vector<1x16x1xf32> to vector<16x1xf32>
    %193 = vector.broadcast %192 : vector<16x1xf32> to vector<16x32xf32>
    %194 = arith.addf %190, %193 : vector<16x32xf32>
    %cst_184 = arith.constant 0.000000e+00 : f32
    %195 = vector.broadcast %cst_184 : f32 to vector<16x32xf32>
    %196 = arith.maximumf %194, %195 : vector<16x32xf32>
    %c2_185 = arith.constant 2 : index
    %c0_186 = arith.constant 0 : index
    %c0_187 = arith.constant 0 : index
    %197 = vector.load %arg3[%c2_185, %c0_186, %c0_187] : memref<14x32x32xf32, #tpu.memory_space<vmem>>, vector<1x32x32xf32>
    %198 = vector.shape_cast %197 : vector<1x32x32xf32> to vector<32x32xf32>
    %cst_188 = arith.constant dense<0.000000e+00> : vector<16x32xf32>
    %199 = tpu.matmul %196, %198, %cst_188 {dimension_numbers = #tpu.dot_dimension_numbers<[1], [0], [0], [1], [0, 0, 1, 1], [], []>} : vector<16x32xf32>, vector<32x32xf32>, vector<16x32xf32> -> vector<16x32xf32>
    %c3_189 = arith.constant 3 : index
    %c0_190 = arith.constant 0 : index
    %c0_191 = arith.constant 0 : index
    %200 = vector.load %arg3[%c3_189, %c0_190, %c0_191] : memref<14x32x32xf32, #tpu.memory_space<vmem>>, vector<1x32x32xf32>
    %201 = vector.shape_cast %200 : vector<1x32x32xf32> to vector<32x32xf32>
    %cst_192 = arith.constant dense<0.000000e+00> : vector<16x32xf32>
    %202 = tpu.matmul %196, %201, %cst_192 {dimension_numbers = #tpu.dot_dimension_numbers<[1], [0], [0], [1], [0, 0, 1, 1], [], []>} : vector<16x32xf32>, vector<32x32xf32>, vector<16x32xf32> -> vector<16x32xf32>
    %c24 = arith.constant 24 : index
    %c0_193 = arith.constant 0 : index
    %c0_194 = arith.constant 0 : index
    %203 = vector.load %arg1[%c24, %c0_193, %c0_194] : memref<37x16x16xf32, #tpu.memory_space<vmem>>, vector<1x16x16xf32>
    %204 = vector.shape_cast %203 : vector<1x16x16xf32> to vector<16x16xf32>
    %cst_195 = arith.constant dense<0.000000e+00> : vector<16x32xf32>
    %205 = tpu.matmul %204, %199, %cst_195 {dimension_numbers = #tpu.dot_dimension_numbers<[1], [0], [0], [1], [0, 0, 1, 1], [], []>} : vector<16x16xf32>, vector<16x32xf32>, vector<16x32xf32> -> vector<16x32xf32>
    %c25 = arith.constant 25 : index
    %c0_196 = arith.constant 0 : index
    %c0_197 = arith.constant 0 : index
    %206 = vector.load %arg1[%c25, %c0_196, %c0_197] : memref<37x16x16xf32, #tpu.memory_space<vmem>>, vector<1x16x16xf32>
    %207 = vector.shape_cast %206 : vector<1x16x16xf32> to vector<16x16xf32>
    %cst_198 = arith.constant dense<0.000000e+00> : vector<16x32xf32>
    %208 = tpu.matmul %207, %196, %cst_198 {dimension_numbers = #tpu.dot_dimension_numbers<[1], [0], [0], [1], [0, 0, 1, 1], [], []>} : vector<16x16xf32>, vector<16x32xf32>, vector<16x32xf32> -> vector<16x32xf32>
    %209 = arith.addf %205, %208 : vector<16x32xf32>
    %c26 = arith.constant 26 : index
    %c0_199 = arith.constant 0 : index
    %c0_200 = arith.constant 0 : index
    %210 = vector.load %arg1[%c26, %c0_199, %c0_200] : memref<37x16x16xf32, #tpu.memory_space<vmem>>, vector<1x16x16xf32>
    %211 = vector.shape_cast %210 : vector<1x16x16xf32> to vector<16x16xf32>
    %cst_201 = arith.constant dense<0.000000e+00> : vector<16x32xf32>
    %212 = tpu.matmul %211, %202, %cst_201 {dimension_numbers = #tpu.dot_dimension_numbers<[1], [0], [0], [1], [0, 0, 1, 1], [], []>} : vector<16x16xf32>, vector<16x32xf32>, vector<16x32xf32> -> vector<16x32xf32>
    %213 = arith.addf %209, %212 : vector<16x32xf32>
    %c7_202 = arith.constant 7 : index
    %c0_203 = arith.constant 0 : index
    %c0_204 = arith.constant 0 : index
    %214 = vector.load %arg2[%c7_202, %c0_203, %c0_204] : memref<11x16x1xf32, #tpu.memory_space<vmem>>, vector<1x16x1xf32>
    %215 = vector.shape_cast %214 : vector<1x16x1xf32> to vector<16x1xf32>
    %216 = vector.broadcast %215 : vector<16x1xf32> to vector<16x32xf32>
    %217 = arith.addf %213, %216 : vector<16x32xf32>
    %cst_205 = arith.constant 0.000000e+00 : f32
    %218 = vector.broadcast %cst_205 : f32 to vector<16x32xf32>
    %219 = arith.maximumf %217, %218 : vector<16x32xf32>
    %c11_206 = arith.constant 11 : index
    %c0_207 = arith.constant 0 : index
    %c0_208 = arith.constant 0 : index
    %220 = vector.load %arg3[%c11_206, %c0_207, %c0_208] : memref<14x32x32xf32, #tpu.memory_space<vmem>>, vector<1x32x32xf32>
    %221 = vector.shape_cast %220 : vector<1x32x32xf32> to vector<32x32xf32>
    %cst_209 = arith.constant dense<0.000000e+00> : vector<16x32xf32>
    %222 = tpu.matmul %219, %221, %cst_209 {dimension_numbers = #tpu.dot_dimension_numbers<[1], [0], [0], [1], [0, 0, 1, 1], [], []>} : vector<16x32xf32>, vector<32x32xf32>, vector<16x32xf32> -> vector<16x32xf32>
    %c0_210 = arith.constant 0 : index
    %c0_211 = arith.constant 0 : index
    %c0_212 = arith.constant 0 : index
    %223 = vector.load %arg3[%c0_210, %c0_211, %c0_212] : memref<14x32x32xf32, #tpu.memory_space<vmem>>, vector<1x32x32xf32>
    %224 = vector.shape_cast %223 : vector<1x32x32xf32> to vector<32x32xf32>
    %cst_213 = arith.constant dense<0.000000e+00> : vector<16x32xf32>
    %225 = tpu.matmul %46, %224, %cst_213 {dimension_numbers = #tpu.dot_dimension_numbers<[1], [0], [0], [1], [0, 0, 1, 1], [], []>} : vector<16x32xf32>, vector<32x32xf32>, vector<16x32xf32> -> vector<16x32xf32>
    %c1_214 = arith.constant 1 : index
    %c0_215 = arith.constant 0 : index
    %c0_216 = arith.constant 0 : index
    %226 = vector.load %arg3[%c1_214, %c0_215, %c0_216] : memref<14x32x32xf32, #tpu.memory_space<vmem>>, vector<1x32x32xf32>
    %227 = vector.shape_cast %226 : vector<1x32x32xf32> to vector<32x32xf32>
    %cst_217 = arith.constant dense<0.000000e+00> : vector<16x32xf32>
    %228 = tpu.matmul %46, %227, %cst_217 {dimension_numbers = #tpu.dot_dimension_numbers<[1], [0], [0], [1], [0, 0, 1, 1], [], []>} : vector<16x32xf32>, vector<32x32xf32>, vector<16x32xf32> -> vector<16x32xf32>
    %c27 = arith.constant 27 : index
    %c0_218 = arith.constant 0 : index
    %c0_219 = arith.constant 0 : index
    %229 = vector.load %arg1[%c27, %c0_218, %c0_219] : memref<37x16x16xf32, #tpu.memory_space<vmem>>, vector<1x16x16xf32>
    %230 = vector.shape_cast %229 : vector<1x16x16xf32> to vector<16x16xf32>
    %cst_220 = arith.constant dense<0.000000e+00> : vector<16x32xf32>
    %231 = tpu.matmul %230, %225, %cst_220 {dimension_numbers = #tpu.dot_dimension_numbers<[1], [0], [0], [1], [0, 0, 1, 1], [], []>} : vector<16x16xf32>, vector<16x32xf32>, vector<16x32xf32> -> vector<16x32xf32>
    %c28 = arith.constant 28 : index
    %c0_221 = arith.constant 0 : index
    %c0_222 = arith.constant 0 : index
    %232 = vector.load %arg1[%c28, %c0_221, %c0_222] : memref<37x16x16xf32, #tpu.memory_space<vmem>>, vector<1x16x16xf32>
    %233 = vector.shape_cast %232 : vector<1x16x16xf32> to vector<16x16xf32>
    %cst_223 = arith.constant dense<0.000000e+00> : vector<16x32xf32>
    %234 = tpu.matmul %233, %46, %cst_223 {dimension_numbers = #tpu.dot_dimension_numbers<[1], [0], [0], [1], [0, 0, 1, 1], [], []>} : vector<16x16xf32>, vector<16x32xf32>, vector<16x32xf32> -> vector<16x32xf32>
    %235 = arith.addf %231, %234 : vector<16x32xf32>
    %c29 = arith.constant 29 : index
    %c0_224 = arith.constant 0 : index
    %c0_225 = arith.constant 0 : index
    %236 = vector.load %arg1[%c29, %c0_224, %c0_225] : memref<37x16x16xf32, #tpu.memory_space<vmem>>, vector<1x16x16xf32>
    %237 = vector.shape_cast %236 : vector<1x16x16xf32> to vector<16x16xf32>
    %cst_226 = arith.constant dense<0.000000e+00> : vector<16x32xf32>
    %238 = tpu.matmul %237, %228, %cst_226 {dimension_numbers = #tpu.dot_dimension_numbers<[1], [0], [0], [1], [0, 0, 1, 1], [], []>} : vector<16x16xf32>, vector<16x32xf32>, vector<16x32xf32> -> vector<16x32xf32>
    %239 = arith.addf %235, %238 : vector<16x32xf32>
    %c0_227 = arith.constant 0 : index
    %c0_228 = arith.constant 0 : index
    %c0_229 = arith.constant 0 : index
    %240 = vector.load %arg3[%c0_227, %c0_228, %c0_229] : memref<14x32x32xf32, #tpu.memory_space<vmem>>, vector<1x32x32xf32>
    %241 = vector.shape_cast %240 : vector<1x32x32xf32> to vector<32x32xf32>
    %cst_230 = arith.constant dense<0.000000e+00> : vector<16x32xf32>
    %242 = tpu.matmul %222, %241, %cst_230 {dimension_numbers = #tpu.dot_dimension_numbers<[1], [0], [0], [1], [0, 0, 1, 1], [], []>} : vector<16x32xf32>, vector<32x32xf32>, vector<16x32xf32> -> vector<16x32xf32>
    %c1_231 = arith.constant 1 : index
    %c0_232 = arith.constant 0 : index
    %c0_233 = arith.constant 0 : index
    %243 = vector.load %arg3[%c1_231, %c0_232, %c0_233] : memref<14x32x32xf32, #tpu.memory_space<vmem>>, vector<1x32x32xf32>
    %244 = vector.shape_cast %243 : vector<1x32x32xf32> to vector<32x32xf32>
    %cst_234 = arith.constant dense<0.000000e+00> : vector<16x32xf32>
    %245 = tpu.matmul %222, %244, %cst_234 {dimension_numbers = #tpu.dot_dimension_numbers<[1], [0], [0], [1], [0, 0, 1, 1], [], []>} : vector<16x32xf32>, vector<32x32xf32>, vector<16x32xf32> -> vector<16x32xf32>
    %c30 = arith.constant 30 : index
    %c0_235 = arith.constant 0 : index
    %c0_236 = arith.constant 0 : index
    %246 = vector.load %arg1[%c30, %c0_235, %c0_236] : memref<37x16x16xf32, #tpu.memory_space<vmem>>, vector<1x16x16xf32>
    %247 = vector.shape_cast %246 : vector<1x16x16xf32> to vector<16x16xf32>
    %cst_237 = arith.constant dense<0.000000e+00> : vector<16x32xf32>
    %248 = tpu.matmul %247, %242, %cst_237 {dimension_numbers = #tpu.dot_dimension_numbers<[1], [0], [0], [1], [0, 0, 1, 1], [], []>} : vector<16x16xf32>, vector<16x32xf32>, vector<16x32xf32> -> vector<16x32xf32>
    %c31 = arith.constant 31 : index
    %c0_238 = arith.constant 0 : index
    %c0_239 = arith.constant 0 : index
    %249 = vector.load %arg1[%c31, %c0_238, %c0_239] : memref<37x16x16xf32, #tpu.memory_space<vmem>>, vector<1x16x16xf32>
    %250 = vector.shape_cast %249 : vector<1x16x16xf32> to vector<16x16xf32>
    %cst_240 = arith.constant dense<0.000000e+00> : vector<16x32xf32>
    %251 = tpu.matmul %250, %222, %cst_240 {dimension_numbers = #tpu.dot_dimension_numbers<[1], [0], [0], [1], [0, 0, 1, 1], [], []>} : vector<16x16xf32>, vector<16x32xf32>, vector<16x32xf32> -> vector<16x32xf32>
    %252 = arith.addf %248, %251 : vector<16x32xf32>
    %c32 = arith.constant 32 : index
    %c0_241 = arith.constant 0 : index
    %c0_242 = arith.constant 0 : index
    %253 = vector.load %arg1[%c32, %c0_241, %c0_242] : memref<37x16x16xf32, #tpu.memory_space<vmem>>, vector<1x16x16xf32>
    %254 = vector.shape_cast %253 : vector<1x16x16xf32> to vector<16x16xf32>
    %cst_243 = arith.constant dense<0.000000e+00> : vector<16x32xf32>
    %255 = tpu.matmul %254, %245, %cst_243 {dimension_numbers = #tpu.dot_dimension_numbers<[1], [0], [0], [1], [0, 0, 1, 1], [], []>} : vector<16x16xf32>, vector<16x32xf32>, vector<16x32xf32> -> vector<16x32xf32>
    %256 = arith.addf %252, %255 : vector<16x32xf32>
    %257 = arith.addf %239, %256 : vector<16x32xf32>
    %c8_244 = arith.constant 8 : index
    %c0_245 = arith.constant 0 : index
    %c0_246 = arith.constant 0 : index
    %258 = vector.load %arg2[%c8_244, %c0_245, %c0_246] : memref<11x16x1xf32, #tpu.memory_space<vmem>>, vector<1x16x1xf32>
    %259 = vector.shape_cast %258 : vector<1x16x1xf32> to vector<16x1xf32>
    %260 = vector.broadcast %259 : vector<16x1xf32> to vector<16x32xf32>
    %261 = arith.addf %257, %260 : vector<16x32xf32>
    %cst_247 = arith.constant 0.000000e+00 : f32
    %262 = vector.broadcast %cst_247 : f32 to vector<16x32xf32>
    %263 = arith.maximumf %261, %262 : vector<16x32xf32>
    %c0_248 = arith.constant 0 : index
    %c0_249 = arith.constant 0 : index
    %c0_250 = arith.constant 0 : index
    %264 = vector.load %arg3[%c0_248, %c0_249, %c0_250] : memref<14x32x32xf32, #tpu.memory_space<vmem>>, vector<1x32x32xf32>
    %265 = vector.shape_cast %264 : vector<1x32x32xf32> to vector<32x32xf32>
    %cst_251 = arith.constant dense<0.000000e+00> : vector<16x32xf32>
    %266 = tpu.matmul %263, %265, %cst_251 {dimension_numbers = #tpu.dot_dimension_numbers<[1], [0], [0], [1], [0, 0, 1, 1], [], []>} : vector<16x32xf32>, vector<32x32xf32>, vector<16x32xf32> -> vector<16x32xf32>
    %c1_252 = arith.constant 1 : index
    %c0_253 = arith.constant 0 : index
    %c0_254 = arith.constant 0 : index
    %267 = vector.load %arg3[%c1_252, %c0_253, %c0_254] : memref<14x32x32xf32, #tpu.memory_space<vmem>>, vector<1x32x32xf32>
    %268 = vector.shape_cast %267 : vector<1x32x32xf32> to vector<32x32xf32>
    %cst_255 = arith.constant dense<0.000000e+00> : vector<16x32xf32>
    %269 = tpu.matmul %263, %268, %cst_255 {dimension_numbers = #tpu.dot_dimension_numbers<[1], [0], [0], [1], [0, 0, 1, 1], [], []>} : vector<16x32xf32>, vector<32x32xf32>, vector<16x32xf32> -> vector<16x32xf32>
    %c33 = arith.constant 33 : index
    %c0_256 = arith.constant 0 : index
    %c0_257 = arith.constant 0 : index
    %270 = vector.load %arg1[%c33, %c0_256, %c0_257] : memref<37x16x16xf32, #tpu.memory_space<vmem>>, vector<1x16x16xf32>
    %271 = vector.shape_cast %270 : vector<1x16x16xf32> to vector<16x16xf32>
    %cst_258 = arith.constant dense<0.000000e+00> : vector<16x32xf32>
    %272 = tpu.matmul %271, %266, %cst_258 {dimension_numbers = #tpu.dot_dimension_numbers<[1], [0], [0], [1], [0, 0, 1, 1], [], []>} : vector<16x16xf32>, vector<16x32xf32>, vector<16x32xf32> -> vector<16x32xf32>
    %c34 = arith.constant 34 : index
    %c0_259 = arith.constant 0 : index
    %c0_260 = arith.constant 0 : index
    %273 = vector.load %arg1[%c34, %c0_259, %c0_260] : memref<37x16x16xf32, #tpu.memory_space<vmem>>, vector<1x16x16xf32>
    %274 = vector.shape_cast %273 : vector<1x16x16xf32> to vector<16x16xf32>
    %cst_261 = arith.constant dense<0.000000e+00> : vector<16x32xf32>
    %275 = tpu.matmul %274, %263, %cst_261 {dimension_numbers = #tpu.dot_dimension_numbers<[1], [0], [0], [1], [0, 0, 1, 1], [], []>} : vector<16x16xf32>, vector<16x32xf32>, vector<16x32xf32> -> vector<16x32xf32>
    %276 = arith.addf %272, %275 : vector<16x32xf32>
    %c35 = arith.constant 35 : index
    %c0_262 = arith.constant 0 : index
    %c0_263 = arith.constant 0 : index
    %277 = vector.load %arg1[%c35, %c0_262, %c0_263] : memref<37x16x16xf32, #tpu.memory_space<vmem>>, vector<1x16x16xf32>
    %278 = vector.shape_cast %277 : vector<1x16x16xf32> to vector<16x16xf32>
    %cst_264 = arith.constant dense<0.000000e+00> : vector<16x32xf32>
    %279 = tpu.matmul %278, %269, %cst_264 {dimension_numbers = #tpu.dot_dimension_numbers<[1], [0], [0], [1], [0, 0, 1, 1], [], []>} : vector<16x16xf32>, vector<16x32xf32>, vector<16x32xf32> -> vector<16x32xf32>
    %280 = arith.addf %276, %279 : vector<16x32xf32>
    %c9_265 = arith.constant 9 : index
    %c0_266 = arith.constant 0 : index
    %c0_267 = arith.constant 0 : index
    %281 = vector.load %arg2[%c9_265, %c0_266, %c0_267] : memref<11x16x1xf32, #tpu.memory_space<vmem>>, vector<1x16x1xf32>
    %282 = vector.shape_cast %281 : vector<1x16x1xf32> to vector<16x1xf32>
    %283 = vector.broadcast %282 : vector<16x1xf32> to vector<16x32xf32>
    %284 = arith.addf %280, %283 : vector<16x32xf32>
    %cst_268 = arith.constant 0.000000e+00 : f32
    %285 = vector.broadcast %cst_268 : f32 to vector<16x32xf32>
    %286 = arith.maximumf %284, %285 : vector<16x32xf32>
    %c36 = arith.constant 36 : index
    %c0_269 = arith.constant 0 : index
    %c0_270 = arith.constant 0 : index
    %287 = vector.load %arg1[%c36, %c0_269, %c0_270] : memref<37x16x16xf32, #tpu.memory_space<vmem>>, vector<1x16x16xf32>
    %288 = vector.shape_cast %287 : vector<1x16x16xf32> to vector<16x16xf32>
    %cst_271 = arith.constant dense<0.000000e+00> : vector<16x32xf32>
    %289 = tpu.matmul %288, %286, %cst_271 {dimension_numbers = #tpu.dot_dimension_numbers<[1], [0], [0], [1], [0, 0, 1, 1], [], []>} : vector<16x16xf32>, vector<16x32xf32>, vector<16x32xf32> -> vector<16x32xf32>
    %c10_272 = arith.constant 10 : index
    %c0_273 = arith.constant 0 : index
    %c0_274 = arith.constant 0 : index
    %290 = vector.load %arg2[%c10_272, %c0_273, %c0_274] : memref<11x16x1xf32, #tpu.memory_space<vmem>>, vector<1x16x1xf32>
    %291 = vector.shape_cast %290 : vector<1x16x1xf32> to vector<16x1xf32>
    %292 = vector.broadcast %291 : vector<16x1xf32> to vector<16x32xf32>
    %293 = arith.addf %289, %292 : vector<16x32xf32>
    %c12_275 = arith.constant 12 : index
    %c0_276 = arith.constant 0 : index
    %c0_277 = arith.constant 0 : index
    %294 = vector.load %arg3[%c12_275, %c0_276, %c0_277] : memref<14x32x32xf32, #tpu.memory_space<vmem>>, vector<1x32x32xf32>
    %295 = vector.shape_cast %294 : vector<1x32x32xf32> to vector<32x32xf32>
    %cst_278 = arith.constant dense<0.000000e+00> : vector<16x32xf32>
    %296 = tpu.matmul %293, %295, %cst_278 {dimension_numbers = #tpu.dot_dimension_numbers<[1], [0], [0], [1], [0, 0, 1, 1], [], []>} : vector<16x32xf32>, vector<32x32xf32>, vector<16x32xf32> -> vector<16x32xf32>
    %c13_279 = arith.constant 13 : index
    %c0_280 = arith.constant 0 : index
    %c0_281 = arith.constant 0 : index
    %297 = vector.load %arg3[%c13_279, %c0_280, %c0_281] : memref<14x32x32xf32, #tpu.memory_space<vmem>>, vector<1x32x32xf32>
    %298 = vector.shape_cast %297 : vector<1x32x32xf32> to vector<32x32xf32>
    %cst_282 = arith.constant dense<0.000000e+00> : vector<16x32xf32>
    %299 = tpu.matmul %293, %298, %cst_282 {dimension_numbers = #tpu.dot_dimension_numbers<[1], [0], [0], [1], [0, 0, 1, 1], [], []>} : vector<16x32xf32>, vector<32x32xf32>, vector<16x32xf32> -> vector<16x32xf32>
    %cst_283 = arith.constant 0.000000e+00 : f32
    %300 = vector.broadcast %cst_283 : f32 to vector<16x32xf32>
    %301 = arith.subf %300, %299 : vector<16x32xf32>
    %c0_284 = arith.constant 0 : index
    %c0_285 = arith.constant 0 : index
    %302 = vector.load %arg4[%c0_284, %c0_285] : memref<16x32xf32, #tpu.memory_space<vmem>>, vector<16x32xf32>
    %c0_286 = arith.constant 0 : index
    %c0_287 = arith.constant 0 : index
    %303 = vector.load %arg7[%c0_286, %c0_287] : memref<16x32xf32, #tpu.memory_space<vmem>>, vector<16x32xf32>
    tpu.vector_store %arg7[%c0_286, %c0_287], %293 {strides = array<i32>} : memref<16x32xf32, #tpu.memory_space<vmem>>, vector<16x32xf32>,
    %304 = arith.mulf %296, %302 : vector<16x32xf32>
    %c0_288 = arith.constant 0 : index
    %c0_289 = arith.constant 0 : index
    %305 = vector.load %arg5[%c0_288, %c0_289] : memref<16x32xf32, #tpu.memory_space<vmem>>, vector<16x32xf32>
    %306 = arith.addf %304, %305 : vector<16x32xf32>
    %c0_290 = arith.constant 0 : index
    %c0_291 = arith.constant 0 : index
    %307 = vector.load %arg8[%c0_290, %c0_291] : memref<16x32xf32, #tpu.memory_space<vmem>>, vector<16x32xf32>
    tpu.vector_store %arg8[%c0_290, %c0_291], %306 {strides = array<i32>} : memref<16x32xf32, #tpu.memory_space<vmem>>, vector<16x32xf32>,
    %308 = arith.mulf %301, %302 : vector<16x32xf32>
    %c0_292 = arith.constant 0 : index
    %c0_293 = arith.constant 0 : index
    %309 = vector.load %arg6[%c0_292, %c0_293] : memref<16x32xf32, #tpu.memory_space<vmem>>, vector<16x32xf32>
    %310 = arith.addf %308, %309 : vector<16x32xf32>
    %c0_294 = arith.constant 0 : index
    %c0_295 = arith.constant 0 : index
    %311 = vector.load %arg9[%c0_294, %c0_295] : memref<16x32xf32, #tpu.memory_space<vmem>>, vector<16x32xf32>
    tpu.vector_store %arg9[%c0_294, %c0_295], %310 {strides = array<i32>} : memref<16x32xf32, #tpu.memory_space<vmem>>, vector<16x32xf32>,
    return
  }
}

</mosaic_0001>

<llo_original>
// kernel: custom-call
$region0: #{custom-call}
  %s0 = inlined_call_operand.hbm [shape: c64[2,1,16], index: 0, kind: input, shape index: {}]
  %s1 = inlined_call_operand.vmem [shape: f32[2,1,16], index: 1, kind: output, shape index: {}]
  $region1: #{custom-call} parent=0
    #allocation0 [shape = 's32[1]{0}', space=sflag, size = 0x4, scoped, tag = 'scoped memory for custom-call']
    %2 = vsyncpa [#allocation0], 0
    %s3 = sshll.u32 %s1, 4
    %s4 = int_to_ptr.vmem [resolvable:$true] %s3
    %6 = dma.hbm_to_vmem [thread:$0]  %s0, 32, %s4, [#allocation0]
    %7 = dma.done [#allocation0], 32
    %8 = vsyncpa [#allocation0], 1

// kernel: custom-call.1
$region0: #{custom-call.1}
  %s0 = inlined_call_operand.hbm [shape: c64[2,1,16], index: 0, kind: input, shape index: {}]
  %s1 = inlined_call_operand.vmem [shape: f32[2,1,16], index: 1, kind: output, shape index: {}]
  %s2 = scalar_lea.hbm %s0, 32
  $region1: #{custom-call.1} parent=0
    #allocation0 [shape = 's32[1]{0}', space=sflag, size = 0x4, scoped, tag = 'scoped memory for custom-call.1']
    %3 = vsyncpa [#allocation0], 0
    %s4 = sshll.u32 %s1, 4
    %s5 = int_to_ptr.vmem [resolvable:$true] %s4
    %7 = dma.hbm_to_vmem [thread:$0]  %s2, 32, %s5, [#allocation0]
    %8 = dma.done [#allocation0], 32
    %9 = vsyncpa [#allocation0], 1

// kernel: custom-call.2
$region0: #{custom-call.2}
  %s0 = inlined_call_operand.vmem [shape: f32[2,1,16], index: 0, kind: input, shape index: {}]
  %s1 = inlined_call_operand.vmem [shape: f32[2,1,16], index: 1, kind: input, shape index: {}]
  %s2 = inlined_call_operand.hbm [shape: c64[2,1,16], index: 2, kind: output, shape index: {}]
  %s3 = scalar_lea.hbm %s2, 32
  $region1: #{custom-call.2} parent=0
    #allocation0 [shape = 's32[1]{0}', space=sflag, size = 0x4, scoped, tag = 'scoped memory for custom-call.2']
    %4 = vsyncpa [#allocation0], 0
    %s5 = sshll.u32 %s0, 4
    %s6 = int_to_ptr.vmem [resolvable:$true] %s5
    %8 = dma.vmem_to_hbm [thread:$0]  %s6, 32, %s2, [#allocation0]
    %9 = dma.done [#allocation0], 32
    %10 = vsyncpa [#allocation0], 1
  $region2: #{custom-call.2} parent=0
    #allocation1 [shape = 's32[1]{0}', space=sflag, size = 0x4, scoped, tag = 'scoped memory for custom-call.2']
    %11 = vsyncpa [#allocation1], 0
    %s12 = sshll.u32 %s1, 4
    %s13 = int_to_ptr.vmem [resolvable:$true] %s12
    %15 = dma.vmem_to_hbm [thread:$0]  %s13, 32, %s3, [#allocation1]
    %16 = dma.done [#allocation1], 32
    %17 = vsyncpa [#allocation1], 1

// kernel: _lambda_.1
$region0: #{_lambda_.1}
  #allocation0 [shape = 'u32[]', space=smem, size = 0x4, offset = 0x4, fixed_abs, tag = 'smem constant byte address 0x4 - core index']
  #allocation1 [shape = 'u32[144,128]{1,0:T(1,128)}', space=vmem, size = 0x12000, scoped, tag = 'internal scratch']
  %s0 = inlined_call_operand.vmem [shape: f32[16,32], index: 0, kind: input, shape index: {}]
  %s1 = inlined_call_operand.hbm [shape: f32[37,16,16], index: 1, kind: input, shape index: {}]
  %s2 = inlined_call_operand.hbm [shape: f32[11,16,1], index: 2, kind: input, shape index: {}]
  %s3 = inlined_call_operand.hbm [shape: f32[14,32,32], index: 3, kind: input, shape index: {}]
  %s4 = inlined_call_operand.vmem [shape: f32[16,32], index: 4, kind: input, shape index: {}]
  %s5 = inlined_call_operand.vmem [shape: f32[16,32], index: 5, kind: input, shape index: {}]
  %s6 = inlined_call_operand.vmem [shape: f32[16,32], index: 6, kind: input, shape index: {}]
  %s7 = inlined_call_operand.vmem [shape: f32[16,32], index: 7, kind: output, shape index: {0}]
  %s8 = inlined_call_operand.vmem [shape: f32[16,32], index: 8, kind: output, shape index: {1}]
  %s9 = inlined_call_operand.vmem [shape: f32[16,32], index: 9, kind: output, shape index: {2}]
  %10 = xla_tuple %s7, %s8, %s9
  %s11 = sld [smem:[#allocation0]]
  $region66: #{_lambda_.1} parent=0
    _
  %s13 = ssub.s32 1, %s11
  %s14 = scalar_select 0, %s13, %s11
  $region1: #{_lambda_.1} parent=0
    #allocation2 [shape = 'u8[303104]{0}', space=vmem, size = 0x4a000, scoped, tag = 'input window, operand 1, single buffered']
    #allocation3 [shape = 's32[1]{0}', space=sflag, size = 0x4, scoped, tag = 'scoped memory for _lambda_.1']
    #allocation4 [shape = 'u8[90112]{0}', space=vmem, size = 0x16000, scoped, tag = 'input window, operand 2, single buffered']
    #allocation5 [shape = 's32[1]{0}', space=sflag, size = 0x4, scoped, tag = 'scoped memory for _lambda_.1']
    #allocation6 [shape = 'u8[229376]{0}', space=vmem, size = 0x38000, scoped, tag = 'input window, operand 3, single buffered']
    %15 = vsyncpa [#allocation3], 0
    %16 = vsyncpa [#allocation5], 0
    // Predicated region
    $region2: #{_lambda_.1} parent=1 // pred_check
      _
    $region3: #{_lambda_.1} parent=1 // pred_check_branch
      %18 = sbr.rel (0) target = $region5
    $region4: #{_lambda_.1} parent=1 // pred_region
      _
    $region5: #{_lambda_.1} parent=1 // pred_fallthru
      _
    // Predicated region
    $region6: #{_lambda_.1} parent=1 // pred_check
      _
    $region7: #{_lambda_.1} parent=1 // pred_check_branch
      %20 = sbr.rel (0) target = $region9
    $region8: #{_lambda_.1} parent=1 // pred_region
      %s22 = ssub.s32 9472, 9472
      %23 = vsyncadd [#allocation3], %s22
      %s24 = sshll.u32 [#allocation2], 4
      %s25 = int_to_ptr.vmem [resolvable:$true] %s24
      %30 = dma.hbm_to_vmem [thread:$0]  %s1, 9472, %s25, [#allocation3], 128, 128, 8
    $region9: #{_lambda_.1} parent=1 // pred_fallthru
      _
    // Predicated region
    $region10: #{_lambda_.1} parent=1 // pred_check
      _
    $region11: #{_lambda_.1} parent=1 // pred_check_branch
      %32 = sbr.rel (0) target = $region13
    $region12: #{_lambda_.1} parent=1 // pred_region
      %s34 = ssub.s32 2816, 2816
      %35 = vsyncadd [#allocation5], %s34
      %s36 = sshll.u32 [#allocation4], 4
      %s37 = int_to_ptr.vmem [resolvable:$true] %s36
      %42 = dma.hbm_to_vmem [thread:$0]  %s2, 2816, %s37, [#allocation5], 128, 128, 8
    $region13: #{_lambda_.1} parent=1 // pred_fallthru
      _
    // Predicated region
    $region14: #{_lambda_.1} parent=1 // pred_check
      _
    $region15: #{_lambda_.1} parent=1 // pred_check_branch
      %44 = sbr.rel (0) target = $region17
    $region16: #{_lambda_.1} parent=1 // pred_region
      %s46 = ssub.s32 7168, 7168
      %47 = vsyncadd [#allocation5], %s46
      %s48 = sshll.u32 [#allocation6], 4
      %s49 = int_to_ptr.vmem [resolvable:$true] %s48
      %54 = dma.hbm_to_vmem [thread:$0]  %s3, 7168, %s49, [#allocation5], 128, 128, 8
    $region17: #{_lambda_.1} parent=1 // pred_fallthru
      _
    // Predicated region
    $region18: #{_lambda_.1} parent=1 // pred_check
      _
    $region19: #{_lambda_.1} parent=1 // pred_check_branch
      %56 = sbr.rel (0) target = $region21
    $region20: #{_lambda_.1} parent=1 // pred_region
      _
    $region21: #{_lambda_.1} parent=1 // pred_fallthru
      _
    // Predicated region
    $region22: #{_lambda_.1} parent=1 // pred_check
      _
    $region23: #{_lambda_.1} parent=1 // pred_check_branch
      %58 = sbr.rel (0) target = $region25
    $region24: #{_lambda_.1} parent=1 // pred_region
      _
    $region25: #{_lambda_.1} parent=1 // pred_fallthru
      _
    // Predicated region
    $region26: #{_lambda_.1} parent=1 // pred_check
      _
    $region27: #{_lambda_.1} parent=1 // pred_check_branch
      %60 = sbr.rel (0) target = $region29
    $region28: #{_lambda_.1} parent=1 // pred_region
      _
    $region29: #{_lambda_.1} parent=1 // pred_fallthru
      _
    // Predicated region
    $region30: #{_lambda_.1} parent=1 // pred_check
      _
    $region31: #{_lambda_.1} parent=1 // pred_check_branch
      %62 = sbr.rel (0) target = $region33
    $region32: #{_lambda_.1} parent=1 // pred_region
      %63 = dma.done [#allocation3], 9472
    $region33: #{_lambda_.1} parent=1 // pred_fallthru
      _
    // Predicated region
    $region34: #{_lambda_.1} parent=1 // pred_check
      _
    $region35: #{_lambda_.1} parent=1 // pred_check_branch
      %65 = sbr.rel (0) target = $region37
    $region36: #{_lambda_.1} parent=1 // pred_region
      %66 = dma.done [#allocation5], 2816
    $region37: #{_lambda_.1} parent=1 // pred_fallthru
      _
    // Predicated region
    $region38: #{_lambda_.1} parent=1 // pred_check
      _
    $region39: #{_lambda_.1} parent=1 // pred_check_branch
      %68 = sbr.rel (0) target = $region41
    $region40: #{_lambda_.1} parent=1 // pred_region
      %69 = dma.done [#allocation5], 7168
    $region41: #{_lambda_.1} parent=1 // pred_fallthru
      _
    %v70 = vld [vmem:[%s0] sm:$0xff]
    %v71 = vld [vmem:[%s0 + $0x8] sm:$0xff]
    %v72 = vld [vmem:[#allocation6] sm:$0xff]
    %v73 = vld [vmem:[#allocation6 + $0x8] sm:$0xff]
    %v74 = vld [vmem:[#allocation6 + $0x10] sm:$0xff]
    %v75 = vld [vmem:[#allocation6 + $0x18] sm:$0xff]
    %vm76 = vcmask 261120
    %v78 = vsel %vm76, %v70, 0
    %v81 = vsel %vm76, %v71, 0
    %83 = vmatprep.subr.mxu0 0.0
    %84 = vmatpush1.msra.mxu0 0.0
    %85 = vmatprep.subr.mxu0 0.0
    %86 = vmatpush1.msra.mxu0 0.0
    %87 = vmatprep.subr.mxu0 0.0
    %88 = vmatpush1.msra.mxu0 0.0
    %89 = vmatprep.subr.mxu0 0.0
    %90 = vmatpush1.msra.mxu0 0.0
    %91 = vmatprep.subr.mxu0 0.0
    %92 = vmatpush1.msra.mxu0 0.0
    %93 = vmatprep.subr.mxu0 0.0
    %94 = vmatpush1.msra.mxu0 0.0
    %95 = vmatprep.subr.mxu0 0.0
    %96 = vmatpush1.msra.mxu0 0.0
    %97 = vmatprep.subr.mxu0 0.0
    %98 = vmatpush1.msra.mxu0 0.0
    %99 = vmatprep.subr.mxu0 0.0
    %100 = vmatpush1.msra.mxu0 0.0
    %101 = vmatprep.subr.mxu0 0.0
    %102 = vmatpush1.msra.mxu0 0.0
    %103 = vmatprep.subr.mxu0 0.0
    %104 = vmatpush1.msra.mxu0 0.0
    %105 = vmatprep.subr.mxu0 0.0
    %106 = vmatpush1.msra.mxu0 0.0
    %107 = vmatprep.subr.mxu0 0.0
    %108 = vmatpush1.msra.mxu0 %v75
    %109 = vmatprep.subr.mxu0 0.0
    %110 = vmatpush1.msra.mxu0 %v74
    %111 = vmatprep.subr.mxu0 0.0
    %112 = vmatpush1.msra.mxu0 %v73
    %113 = vmatprep.subr.mxu0 0.0
    %114 = vmatpush1.msra.mxu0 %v72
    %115 = vmatprep.subr.mxu0 0.0
    %116 = vmatpush2.msra.mxu0 0.0
    %117 = vmatprep.subr.mxu0 0.0
    %118 = vmatpush2.msra.mxu0 0.0
    %119 = vmatprep.subr.mxu0 0.0
    %120 = vmatpush2.msra.mxu0 0.0
    %121 = vmatprep.subr.mxu0 0.0
    %122 = vmatpush2.msra.mxu0 0.0
    %123 = vmatprep.subr.mxu0 0.0
    %124 = vmatpush2.msra.mxu0 0.0
    %125 = vmatprep.subr.mxu0 0.0
    %126 = vmatpush2.msra.mxu0 0.0
    %127 = vmatprep.subr.mxu0 0.0
    %128 = vmatpush2.msra.mxu0 0.0
    %129 = vmatprep.subr.mxu0 0.0
    %130 = vmatpush2.msra.mxu0 0.0
    %131 = vmatprep.subr.mxu0 0.0
    %132 = vmatpush2.msra.mxu0 0.0
    %133 = vmatprep.subr.mxu0 0.0
    %134 = vmatpush2.msra.mxu0 0.0
    %135 = vmatprep.subr.mxu0 0.0
    %136 = vmatpush2.msra.mxu0 0.0
    %137 = vmatprep.subr.mxu0 0.0
    %138 = vmatpush2.msra.mxu0 0.0
    %139 = vmatprep.subr.mxu0 0.0
    %140 = vmatpush2.msra.mxu0 0.0
    %141 = vmatprep.subr.mxu0 0.0
    %142 = vmatpush2.msra.mxu0 0.0
    %143 = vmatprep.subr.mxu0 0.0
    %144 = vmatpush2.msra.mxu0 0.0
    %145 = vmatprep.subr.mxu0 0.0
    %146 = vmatpush2.msra.mxu0 0.0
    %147 = vmatprep.mubr.f32.mxu0 0.0
    %148 = vmatmul.mubr.f32.gmra.mxu0 %v78
    %v149 = vpop.f32.mrf.mxu0
    %v150 = vadd.f32 0.0, %v149
    %v151 = vpop.f32.mrf.mxu0
    %152 = vmatprep.mubr.f32.mxu0 0.0
    %153 = vmatmul.mubr.f32.gmra.mxu0 %v81
    %v154 = vpop.f32.mrf.mxu0
    %v155 = vadd.f32 0.0, %v154
    %v156 = vpop.f32.mrf.mxu0
    %157 = vdwg.mxu0
    %s158 = scalar_lea.vmem [#allocation6], 32
    %v159 = vld [vmem:[%s158] sm:$0xff]
    %v160 = vld [vmem:[%s158 + $0x8] sm:$0xff]
    %v161 = vld [vmem:[%s158 + $0x10] sm:$0xff]
    %v162 = vld [vmem:[%s158 + $0x18] sm:$0xff]
    %163 = vmatprep.subr.mxu0 0.0
    %164 = vmatpush1.msra.mxu0 0.0
    %165 = vmatprep.subr.mxu0 0.0
    %166 = vmatpush1.msra.mxu0 0.0
    %167 = vmatprep.subr.mxu0 0.0
    %168 = vmatpush1.msra.mxu0 0.0
    %169 = vmatprep.subr.mxu0 0.0
    %170 = vmatpush1.msra.mxu0 0.0
    %171 = vmatprep.subr.mxu0 0.0
    %172 = vmatpush1.msra.mxu0 0.0
    %173 = vmatprep.subr.mxu0 0.0
    %174 = vmatpush1.msra.mxu0 0.0
    %175 = vmatprep.subr.mxu0 0.0
    %176 = vmatpush1.msra.mxu0 0.0
    %177 = vmatprep.subr.mxu0 0.0
    %178 = vmatpush1.msra.mxu0 0.0
    %179 = vmatprep.subr.mxu0 0.0
    %180 = vmatpush1.msra.mxu0 0.0
    %181 = vmatprep.subr.mxu0 0.0
    %182 = vmatpush1.msra.mxu0 0.0
    %183 = vmatprep.subr.mxu0 0.0
    %184 = vmatpush1.msra.mxu0 0.0
    %185 = vmatprep.subr.mxu0 0.0
    %186 = vmatpush1.msra.mxu0 0.0
    %187 = vmatprep.subr.mxu0 0.0
    %188 = vmatpush1.msra.mxu0 %v162
    %189 = vmatprep.subr.mxu0 0.0
    %190 = vmatpush1.msra.mxu0 %v161
    %191 = vmatprep.subr.mxu0 0.0
    %192 = vmatpush1.msra.mxu0 %v160
    %193 = vmatprep.subr.mxu0 0.0
    %194 = vmatpush1.msra.mxu0 %v159
    %195 = vmatprep.subr.mxu0 0.0
    %196 = vmatpush2.msra.mxu0 0.0
    %197 = vmatprep.subr.mxu0 0.0
    %198 = vmatpush2.msra.mxu0 0.0
    %199 = vmatprep.subr.mxu0 0.0
    %200 = vmatpush2.msra.mxu0 0.0
    %201 = vmatprep.subr.mxu0 0.0
    %202 = vmatpush2.msra.mxu0 0.0
    %203 = vmatprep.subr.mxu0 0.0
    %204 = vmatpush2.msra.mxu0 0.0
    %205 = vmatprep.subr.mxu0 0.0
    %206 = vmatpush2.msra.mxu0 0.0
    %207 = vmatprep.subr.mxu0 0.0
    %208 = vmatpush2.msra.mxu0 0.0
    %209 = vmatprep.subr.mxu0 0.0
    %210 = vmatpush2.msra.mxu0 0.0
    %211 = vmatprep.subr.mxu0 0.0
    %212 = vmatpush2.msra.mxu0 0.0
    %213 = vmatprep.subr.mxu0 0.0
    %214 = vmatpush2.msra.mxu0 0.0
    %215 = vmatprep.subr.mxu0 0.0
    %216 = vmatpush2.msra.mxu0 0.0
    %217 = vmatprep.subr.mxu0 0.0
    %218 = vmatpush2.msra.mxu0 0.0
    %219 = vmatprep.subr.mxu0 0.0
    %220 = vmatpush2.msra.mxu0 0.0
    %221 = vmatprep.subr.mxu0 0.0
    %222 = vmatpush2.msra.mxu0 0.0
    %223 = vmatprep.subr.mxu0 0.0
    %224 = vmatpush2.msra.mxu0 0.0
    %225 = vmatprep.subr.mxu0 0.0
    %226 = vmatpush2.msra.mxu0 0.0
    %227 = vmatprep.mubr.f32.mxu0 0.0
    %228 = vmatmul.mubr.f32.gmra.mxu0 %v78
    %v229 = vpop.f32.mrf.mxu0
    %v230 = vadd.f32 0.0, %v229
    %v231 = vpop.f32.mrf.mxu0
    %232 = vmatprep.mubr.f32.mxu0 0.0
    %233 = vmatmul.mubr.f32.gmra.mxu0 %v81
    %v234 = vpop.f32.mrf.mxu0
    %v235 = vadd.f32 0.0, %v234
    %v236 = vpop.f32.mrf.mxu0
    %237 = vdwg.mxu0
    %v238 = vld [vmem:[#allocation2] sm:$0xff]
    %v239 = vld [vmem:[#allocation2 + $0x8] sm:$0xff]
    %s240 = scalar_lea.vmem [#allocation2], 16
    %v241 = vld [vmem:[%s240] sm:$0xff]
    %v242 = vld [vmem:[%s240 + $0x8] sm:$0xff]
    %vm243 = vcmask 130048
    %v245 = vsel %vm243, %v241, 0
    %v248 = vsel %vm243, %v242, 0
    %250 = vmatprep.subr.mxu0 0.0
    %251 = vmatpush1.msra.mxu0 0.0
    %252 = vmatprep.subr.mxu0 0.0
    %253 = vmatpush1.msra.mxu0 0.0
    %254 = vmatprep.subr.mxu0 0.0
    %255 = vmatpush1.msra.mxu0 0.0
    %256 = vmatprep.subr.mxu0 0.0
    %257 = vmatpush1.msra.mxu0 0.0
    %258 = vmatprep.subr.mxu0 0.0
    %259 = vmatpush1.msra.mxu0 0.0
    %260 = vmatprep.subr.mxu0 0.0
    %261 = vmatpush1.msra.mxu0 0.0
    %262 = vmatprep.subr.mxu0 0.0
    %263 = vmatpush1.msra.mxu0 0.0
    %264 = vmatprep.subr.mxu0 0.0
    %265 = vmatpush1.msra.mxu0 0.0
    %266 = vmatprep.subr.mxu0 0.0
    %267 = vmatpush1.msra.mxu0 0.0
    %268 = vmatprep.subr.mxu0 0.0
    %269 = vmatpush1.msra.mxu0 0.0
    %270 = vmatprep.subr.mxu0 0.0
    %271 = vmatpush1.msra.mxu0 0.0
    %272 = vmatprep.subr.mxu0 0.0
    %273 = vmatpush1.msra.mxu0 0.0
    %274 = vmatprep.subr.mxu0 0.0
    %275 = vmatpush1.msra.mxu0 0.0
    %276 = vmatprep.subr.mxu0 0.0
    %277 = vmatpush1.msra.mxu0 0.0
    %278 = vmatprep.subr.mxu0 0.0
    %279 = vmatpush1.msra.mxu0 %v71
    %280 = vmatprep.subr.mxu0 0.0
    %281 = vmatpush1.msra.mxu0 %v70
    %282 = vmatprep.subr.mxu0 0.0
    %283 = vmatpush2.msra.mxu0 0.0
    %284 = vmatprep.subr.mxu0 0.0
    %285 = vmatpush2.msra.mxu0 0.0
    %286 = vmatprep.subr.mxu0 0.0
    %287 = vmatpush2.msra.mxu0 0.0
    %288 = vmatprep.subr.mxu0 0.0
    %289 = vmatpush2.msra.mxu0 0.0
    %290 = vmatprep.subr.mxu0 0.0
    %291 = vmatpush2.msra.mxu0 0.0
    %292 = vmatprep.subr.mxu0 0.0
    %293 = vmatpush2.msra.mxu0 0.0
    %294 = vmatprep.subr.mxu0 0.0
    %295 = vmatpush2.msra.mxu0 0.0
    %296 = vmatprep.subr.mxu0 0.0
    %297 = vmatpush2.msra.mxu0 0.0
    %298 = vmatprep.subr.mxu0 0.0
    %299 = vmatpush2.msra.mxu0 0.0
    %300 = vmatprep.subr.mxu0 0.0
    %301 = vmatpush2.msra.mxu0 0.0
    %302 = vmatprep.subr.mxu0 0.0
    %303 = vmatpush2.msra.mxu0 0.0
    %304 = vmatprep.subr.mxu0 0.0
    %305 = vmatpush2.msra.mxu0 0.0
    %306 = vmatprep.subr.mxu0 0.0
    %307 = vmatpush2.msra.mxu0 0.0
    %308 = vmatprep.subr.mxu0 0.0
    %309 = vmatpush2.msra.mxu0 0.0
    %310 = vmatprep.subr.mxu0 0.0
    %311 = vmatpush2.msra.mxu0 0.0
    %312 = vmatprep.subr.mxu0 0.0
    %313 = vmatpush2.msra.mxu0 0.0
    %314 = vmatprep.mubr.f32.mxu0 0.0
    %315 = vmatmul.mubr.f32.gmra.mxu0 %v245
    %v316 = vpop.f32.mrf.mxu0
    %v317 = vadd.f32 0.0, %v316
    %v318 = vpop.f32.mrf.mxu0
    %319 = vmatprep.mubr.f32.mxu0 0.0
    %320 = vmatmul.mubr.f32.gmra.mxu0 %v248
    %v321 = vpop.f32.mrf.mxu0
    %v322 = vadd.f32 0.0, %v321
    %v323 = vpop.f32.mrf.mxu0
    %324 = vdwg.mxu0
    %v326 = vsel %vm243, %v238, 0
    %v329 = vsel %vm243, %v239, 0
    %331 = vmatprep.subr.mxu0 0.0
    %332 = vmatpush1.msra.mxu0 0.0
    %333 = vmatprep.subr.mxu0 0.0
    %334 = vmatpush1.msra.mxu0 0.0
    %335 = vmatprep.subr.mxu0 0.0
    %336 = vmatpush1.msra.mxu0 0.0
    %337 = vmatprep.subr.mxu0 0.0
    %338 = vmatpush1.msra.mxu0 0.0
    %339 = vmatprep.subr.mxu0 0.0
    %340 = vmatpush1.msra.mxu0 0.0
    %341 = vmatprep.subr.mxu0 0.0
    %342 = vmatpush1.msra.mxu0 0.0
    %343 = vmatprep.subr.mxu0 0.0
    %344 = vmatpush1.msra.mxu0 0.0
    %345 = vmatprep.subr.mxu0 0.0
    %346 = vmatpush1.msra.mxu0 0.0
    %347 = vmatprep.subr.mxu0 0.0
    %348 = vmatpush1.msra.mxu0 0.0
    %349 = vmatprep.subr.mxu0 0.0
    %350 = vmatpush1.msra.mxu0 0.0
    %351 = vmatprep.subr.mxu0 0.0
    %352 = vmatpush1.msra.mxu0 0.0
    %353 = vmatprep.subr.mxu0 0.0
    %354 = vmatpush1.msra.mxu0 0.0
    %355 = vmatprep.subr.mxu0 0.0
    %356 = vmatpush1.msra.mxu0 0.0
    %357 = vmatprep.subr.mxu0 0.0
    %358 = vmatpush1.msra.mxu0 0.0
    %359 = vmatprep.subr.mxu0 0.0
    %360 = vmatpush1.msra.mxu0 %v155
    %361 = vmatprep.subr.mxu0 0.0
    %362 = vmatpush1.msra.mxu0 %v150
    %363 = vmatprep.subr.mxu0 0.0
    %364 = vmatpush2.msra.mxu0 0.0
    %365 = vmatprep.subr.mxu0 0.0
    %366 = vmatpush2.msra.mxu0 0.0
    %367 = vmatprep.subr.mxu0 0.0
    %368 = vmatpush2.msra.mxu0 0.0
    %369 = vmatprep.subr.mxu0 0.0
    %370 = vmatpush2.msra.mxu0 0.0
    %371 = vmatprep.subr.mxu0 0.0
    %372 = vmatpush2.msra.mxu0 0.0
    %373 = vmatprep.subr.mxu0 0.0
    %374 = vmatpush2.msra.mxu0 0.0
    %375 = vmatprep.subr.mxu0 0.0
    %376 = vmatpush2.msra.mxu0 0.0
    %377 = vmatprep.subr.mxu0 0.0
    %378 = vmatpush2.msra.mxu0 0.0
    %379 = vmatprep.subr.mxu0 0.0
    %380 = vmatpush2.msra.mxu0 0.0
    %381 = vmatprep.subr.mxu0 0.0
    %382 = vmatpush2.msra.mxu0 0.0
    %383 = vmatprep.subr.mxu0 0.0
    %384 = vmatpush2.msra.mxu0 0.0
    %385 = vmatprep.subr.mxu0 0.0
    %386 = vmatpush2.msra.mxu0 0.0
    %387 = vmatprep.subr.mxu0 0.0
    %388 = vmatpush2.msra.mxu0 0.0
    %389 = vmatprep.subr.mxu0 0.0
    %390 = vmatpush2.msra.mxu0 0.0
    %391 = vmatprep.subr.mxu0 0.0
    %392 = vmatpush2.msra.mxu0 0.0
    %393 = vmatprep.subr.mxu0 0.0
    %394 = vmatpush2.msra.mxu0 0.0
    %395 = vmatprep.mubr.f32.mxu0 0.0
    %396 = vmatmul.mubr.f32.gmra.mxu0 %v326
    %v397 = vpop.f32.mrf.mxu0
    %v398 = vadd.f32 %v317, %v397
    %v399 = vpop.f32.mrf.mxu0
    %400 = vmatprep.mubr.f32.mxu0 0.0
    %401 = vmatmul.mubr.f32.gmra.mxu0 %v329
    %v402 = vpop.f32.mrf.mxu0
    %v403 = vadd.f32 %v322, %v402
    %v404 = vpop.f32.mrf.mxu0
    %405 = vdwg.mxu0
    %s406 = scalar_lea.vmem [#allocation2], 32
    %v407 = vld [vmem:[%s406] sm:$0xff]
    %v408 = vld [vmem:[%s406 + $0x8] sm:$0xff]
    %v410 = vsel %vm243, %v407, 0
    %v413 = vsel %vm243, %v408, 0
    %415 = vmatprep.subr.mxu0 0.0
    %416 = vmatpush1.msra.mxu0 0.0
    %417 = vmatprep.subr.mxu0 0.0
    %418 = vmatpush1.msra.mxu0 0.0
    %419 = vmatprep.subr.mxu0 0.0
    %420 = vmatpush1.msra.mxu0 0.0
    %421 = vmatprep.subr.mxu0 0.0
    %422 = vmatpush1.msra.mxu0 0.0
    %423 = vmatprep.subr.mxu0 0.0
    %424 = vmatpush1.msra.mxu0 0.0
    %425 = vmatprep.subr.mxu0 0.0
    %426 = vmatpush1.msra.mxu0 0.0
    %427 = vmatprep.subr.mxu0 0.0
    %428 = vmatpush1.msra.mxu0 0.0
    %429 = vmatprep.subr.mxu0 0.0
    %430 = vmatpush1.msra.mxu0 0.0
    %431 = vmatprep.subr.mxu0 0.0
    %432 = vmatpush1.msra.mxu0 0.0
    %433 = vmatprep.subr.mxu0 0.0
    %434 = vmatpush1.msra.mxu0 0.0
    %435 = vmatprep.subr.mxu0 0.0
    %436 = vmatpush1.msra.mxu0 0.0
    %437 = vmatprep.subr.mxu0 0.0
    %438 = vmatpush1.msra.mxu0 0.0
    %439 = vmatprep.subr.mxu0 0.0
    %440 = vmatpush1.msra.mxu0 0.0
    %441 = vmatprep.subr.mxu0 0.0
    %442 = vmatpush1.msra.mxu0 0.0
    %443 = vmatprep.subr.mxu0 0.0
    %444 = vmatpush1.msra.mxu0 %v235
    %445 = vmatprep.subr.mxu0 0.0
    %446 = vmatpush1.msra.mxu0 %v230
    %447 = vmatprep.subr.mxu0 0.0
    %448 = vmatpush2.msra.mxu0 0.0
    %449 = vmatprep.subr.mxu0 0.0
    %450 = vmatpush2.msra.mxu0 0.0
    %451 = vmatprep.subr.mxu0 0.0
    %452 = vmatpush2.msra.mxu0 0.0
    %453 = vmatprep.subr.mxu0 0.0
    %454 = vmatpush2.msra.mxu0 0.0
    %455 = vmatprep.subr.mxu0 0.0
    %456 = vmatpush2.msra.mxu0 0.0
    %457 = vmatprep.subr.mxu0 0.0
    %458 = vmatpush2.msra.mxu0 0.0
    %459 = vmatprep.subr.mxu0 0.0
    %460 = vmatpush2.msra.mxu0 0.0
    %461 = vmatprep.subr.mxu0 0.0
    %462 = vmatpush2.msra.mxu0 0.0
    %463 = vmatprep.subr.mxu0 0.0
    %464 = vmatpush2.msra.mxu0 0.0
    %465 = vmatprep.subr.mxu0 0.0
    %466 = vmatpush2.msra.mxu0 0.0
    %467 = vmatprep.subr.mxu0 0.0
    %468 = vmatpush2.msra.mxu0 0.0
    %469 = vmatprep.subr.mxu0 0.0
    %470 = vmatpush2.msra.mxu0 0.0
    %471 = vmatprep.subr.mxu0 0.0
    %472 = vmatpush2.msra.mxu0 0.0
    %473 = vmatprep.subr.mxu0 0.0
    %474 = vmatpush2.msra.mxu0 0.0
    %475 = vmatprep.subr.mxu0 0.0
    %476 = vmatpush2.msra.mxu0 0.0
    %477 = vmatprep.subr.mxu0 0.0
    %478 = vmatpush2.msra.mxu0 0.0
    %479 = vmatprep.mubr.f32.mxu0 0.0
    %480 = vmatmul.mubr.f32.gmra.mxu0 %v410
    %v481 = vpop.f32.mrf.mxu0
    %v482 = vadd.f32 0.0, %v481
    %v483 = vpop.f32.mrf.mxu0
    %484 = vmatprep.mubr.f32.mxu0 0.0
    %485 = vmatmul.mubr.f32.gmra.mxu0 %v413
    %v486 = vpop.f32.mrf.mxu0
    %v487 = vadd.f32 0.0, %v486
    %v488 = vpop.f32.mrf.mxu0
    %489 = vdwg.mxu0
    %v490 = vadd.f32 %v398, %v482
    %v491 = vadd.f32 %v403, %v487
    %v492 = vld [vmem:[#allocation4] sm:$0xff]
    %v493 = vld [vmem:[#allocation4 + $0x8] sm:$0xff]
    %495 = vset.pattern.permute.xlu0 0
    %496 = vperm.xlu0 %495, %v492
    %v497 = vpop.permute.xlu0 %496
    %500 = vset.pattern.permute.xlu0 0
    %501 = vperm.xlu0 %500, %v493
    %v502 = vpop.permute.xlu0 %501
    %v504 = vadd.f32 %v490, %v497
    %v505 = vadd.f32 %v491, %v502
    %v506 = vmax.f32 %v504, 0.0
    %v507 = vmax.f32 %v505, 0.0
    %v509 = vsel %vm76, %v506, 0
    %v512 = vsel %vm76, %v507, 0
    %514 = vmatprep.subr.mxu0 0.0
    %515 = vmatpush1.msra.mxu0 0.0
    %516 = vmatprep.subr.mxu0 0.0
    %517 = vmatpush1.msra.mxu0 0.0
    %518 = vmatprep.subr.mxu0 0.0
    %519 = vmatpush1.msra.mxu0 0.0
    %520 = vmatprep.subr.mxu0 0.0
    %521 = vmatpush1.msra.mxu0 0.0
    %522 = vmatprep.subr.mxu0 0.0
    %523 = vmatpush1.msra.mxu0 0.0
    %524 = vmatprep.subr.mxu0 0.0
    %525 = vmatpush1.msra.mxu0 0.0
    %526 = vmatprep.subr.mxu0 0.0
    %527 = vmatpush1.msra.mxu0 0.0
    %528 = vmatprep.subr.mxu0 0.0
    %529 = vmatpush1.msra.mxu0 0.0
    %530 = vmatprep.subr.mxu0 0.0
    %531 = vmatpush1.msra.mxu0 0.0
    %532 = vmatprep.subr.mxu0 0.0
    %533 = vmatpush1.msra.mxu0 0.0
    %534 = vmatprep.subr.mxu0 0.0
    %535 = vmatpush1.msra.mxu0 0.0
    %536 = vmatprep.subr.mxu0 0.0
    %537 = vmatpush1.msra.mxu0 0.0
    %538 = vmatprep.subr.mxu0 0.0
    %539 = vmatpush1.msra.mxu0 %v75
    %540 = vmatprep.subr.mxu0 0.0
    %541 = vmatpush1.msra.mxu0 %v74
    %542 = vmatprep.subr.mxu0 0.0
    %543 = vmatpush1.msra.mxu0 %v73
    %544 = vmatprep.subr.mxu0 0.0
    %545 = vmatpush1.msra.mxu0 %v72
    %546 = vmatprep.subr.mxu0 0.0
    %547 = vmatpush2.msra.mxu0 0.0
    %548 = vmatprep.subr.mxu0 0.0
    %549 = vmatpush2.msra.mxu0 0.0
    %550 = vmatprep.subr.mxu0 0.0
    %551 = vmatpush2.msra.mxu0 0.0
    %552 = vmatprep.subr.mxu0 0.0
    %553 = vmatpush2.msra.mxu0 0.0
    %554 = vmatprep.subr.mxu0 0.0
    %555 = vmatpush2.msra.mxu0 0.0
    %556 = vmatprep.subr.mxu0 0.0
    %557 = vmatpush2.msra.mxu0 0.0
    %558 = vmatprep.subr.mxu0 0.0
    %559 = vmatpush2.msra.mxu0 0.0
    %560 = vmatprep.subr.mxu0 0.0
    %561 = vmatpush2.msra.mxu0 0.0
    %562 = vmatprep.subr.mxu0 0.0
    %563 = vmatpush2.msra.mxu0 0.0
    %564 = vmatprep.subr.mxu0 0.0
    %565 = vmatpush2.msra.mxu0 0.0
    %566 = vmatprep.subr.mxu0 0.0
    %567 = vmatpush2.msra.mxu0 0.0
    %568 = vmatprep.subr.mxu0 0.0
    %569 = vmatpush2.msra.mxu0 0.0
    %570 = vmatprep.subr.mxu0 0.0
    %571 = vmatpush2.msra.mxu0 0.0
    %572 = vmatprep.subr.mxu0 0.0
    %573 = vmatpush2.msra.mxu0 0.0
    %574 = vmatprep.subr.mxu0 0.0
    %575 = vmatpush2.msra.mxu0 0.0
    %576 = vmatprep.subr.mxu0 0.0
    %577 = vmatpush2.msra.mxu0 0.0
    %578 = vmatprep.mubr.f32.mxu0 0.0
    %579 = vmatmul.mubr.f32.gmra.mxu0 %v509
    %v580 = vpop.f32.mrf.mxu0
    %v581 = vadd.f32 0.0, %v580
    %v582 = vpop.f32.mrf.mxu0
    %583 = vmatprep.mubr.f32.mxu0 0.0
    %584 = vmatmul.mubr.f32.gmra.mxu0 %v512
    %v585 = vpop.f32.mrf.mxu0
    %v586 = vadd.f32 0.0, %v585
    %v587 = vpop.f32.mrf.mxu0
    %588 = vdwg.mxu0
    %589 = vmatprep.subr.mxu0 0.0
    %590 = vmatpush1.msra.mxu0 0.0
    %591 = vmatprep.subr.mxu0 0.0
    %592 = vmatpush1.msra.mxu0 0.0
    %593 = vmatprep.subr.mxu0 0.0
    %594 = vmatpush1.msra.mxu0 0.0
    %595 = vmatprep.subr.mxu0 0.0
    %596 = vmatpush1.msra.mxu0 0.0
    %597 = vmatprep.subr.mxu0 0.0
    %598 = vmatpush1.msra.mxu0 0.0
    %599 = vmatprep.subr.mxu0 0.0
    %600 = vmatpush1.msra.mxu0 0.0
    %601 = vmatprep.subr.mxu0 0.0
    %602 = vmatpush1.msra.mxu0 0.0
    %603 = vmatprep.subr.mxu0 0.0
    %604 = vmatpush1.msra.mxu0 0.0
    %605 = vmatprep.subr.mxu0 0.0
    %606 = vmatpush1.msra.mxu0 0.0
    %607 = vmatprep.subr.mxu0 0.0
    %608 = vmatpush1.msra.mxu0 0.0
    %609 = vmatprep.subr.mxu0 0.0
    %610 = vmatpush1.msra.mxu0 0.0
    %611 = vmatprep.subr.mxu0 0.0
    %612 = vmatpush1.msra.mxu0 0.0
    %613 = vmatprep.subr.mxu0 0.0
    %614 = vmatpush1.msra.mxu0 %v162
    %615 = vmatprep.subr.mxu0 0.0
    %616 = vmatpush1.msra.mxu0 %v161
    %617 = vmatprep.subr.mxu0 0.0
    %618 = vmatpush1.msra.mxu0 %v160
    %619 = vmatprep.subr.mxu0 0.0
    %620 = vmatpush1.msra.mxu0 %v159
    %621 = vmatprep.subr.mxu0 0.0
    %622 = vmatpush2.msra.mxu0 0.0
    %623 = vmatprep.subr.mxu0 0.0
    %624 = vmatpush2.msra.mxu0 0.0
    %625 = vmatprep.subr.mxu0 0.0
    %626 = vmatpush2.msra.mxu0 0.0
    %627 = vmatprep.subr.mxu0 0.0
    %628 = vmatpush2.msra.mxu0 0.0
    %629 = vmatprep.subr.mxu0 0.0
    %630 = vmatpush2.msra.mxu0 0.0
    %631 = vmatprep.subr.mxu0 0.0
    %632 = vmatpush2.msra.mxu0 0.0
    %633 = vmatprep.subr.mxu0 0.0
    %634 = vmatpush2.msra.mxu0 0.0
    %635 = vmatprep.subr.mxu0 0.0
    %636 = vmatpush2.msra.mxu0 0.0
    %637 = vmatprep.subr.mxu0 0.0
    %638 = vmatpush2.msra.mxu0 0.0
    %639 = vmatprep.subr.mxu0 0.0
    %640 = vmatpush2.msra.mxu0 0.0
    %641 = vmatprep.subr.mxu0 0.0
    %642 = vmatpush2.msra.mxu0 0.0
    %643 = vmatprep.subr.mxu0 0.0
    %644 = vmatpush2.msra.mxu0 0.0
    %645 = vmatprep.subr.mxu0 0.0
    %646 = vmatpush2.msra.mxu0 0.0
    %647 = vmatprep.subr.mxu0 0.0
    %648 = vmatpush2.msra.mxu0 0.0
    %649 = vmatprep.subr.mxu0 0.0
    %650 = vmatpush2.msra.mxu0 0.0
    %651 = vmatprep.subr.mxu0 0.0
    %652 = vmatpush2.msra.mxu0 0.0
    %653 = vmatprep.mubr.f32.mxu0 0.0
    %654 = vmatmul.mubr.f32.gmra.mxu0 %v509
    %v655 = vpop.f32.mrf.mxu0
    %v656 = vadd.f32 0.0, %v655
    %v657 = vpop.f32.mrf.mxu0
    %658 = vmatprep.mubr.f32.mxu0 0.0
    %659 = vmatmul.mubr.f32.gmra.mxu0 %v512
    %v660 = vpop.f32.mrf.mxu0
    %v661 = vadd.f32 0.0, %v660
    %v662 = vpop.f32.mrf.mxu0
    %663 = vdwg.mxu0
    %s664 = scalar_lea.vmem [#allocation2], 48
    %v665 = vld [vmem:[%s664] sm:$0xff]
    %v666 = vld [vmem:[%s664 + $0x8] sm:$0xff]
    %s667 = scalar_lea.vmem [#allocation2], 64
    %v668 = vld [vmem:[%s667] sm:$0xff]
    %v669 = vld [vmem:[%s667 + $0x8] sm:$0xff]
    %v671 = vsel %vm243, %v668, 0
    %v674 = vsel %vm243, %v669, 0
    %676 = vmatprep.subr.mxu0 0.0
    %677 = vmatpush1.msra.mxu0 0.0
    %678 = vmatprep.subr.mxu0 0.0
    %679 = vmatpush1.msra.mxu0 0.0
    %680 = vmatprep.subr.mxu0 0.0
    %681 = vmatpush1.msra.mxu0 0.0
    %682 = vmatprep.subr.mxu0 0.0
    %683 = vmatpush1.msra.mxu0 0.0
    %684 = vmatprep.subr.mxu0 0.0
    %685 = vmatpush1.msra.mxu0 0.0
    %686 = vmatprep.subr.mxu0 0.0
    %687 = vmatpush1.msra.mxu0 0.0
    %688 = vmatprep.subr.mxu0 0.0
    %689 = vmatpush1.msra.mxu0 0.0
    %690 = vmatprep.subr.mxu0 0.0
    %691 = vmatpush1.msra.mxu0 0.0
    %692 = vmatprep.subr.mxu0 0.0
    %693 = vmatpush1.msra.mxu0 0.0
    %694 = vmatprep.subr.mxu0 0.0
    %695 = vmatpush1.msra.mxu0 0.0
    %696 = vmatprep.subr.mxu0 0.0
    %697 = vmatpush1.msra.mxu0 0.0
    %698 = vmatprep.subr.mxu0 0.0
    %699 = vmatpush1.msra.mxu0 0.0
    %700 = vmatprep.subr.mxu0 0.0
    %701 = vmatpush1.msra.mxu0 0.0
    %702 = vmatprep.subr.mxu0 0.0
    %703 = vmatpush1.msra.mxu0 0.0
    %704 = vmatprep.subr.mxu0 0.0
    %705 = vmatpush1.msra.mxu0 %v507
    %706 = vmatprep.subr.mxu0 0.0
    %707 = vmatpush1.msra.mxu0 %v506
    %708 = vmatprep.subr.mxu0 0.0
    %709 = vmatpush2.msra.mxu0 0.0
    %710 = vmatprep.subr.mxu0 0.0
    %711 = vmatpush2.msra.mxu0 0.0
    %712 = vmatprep.subr.mxu0 0.0
    %713 = vmatpush2.msra.mxu0 0.0
    %714 = vmatprep.subr.mxu0 0.0
    %715 = vmatpush2.msra.mxu0 0.0
    %716 = vmatprep.subr.mxu0 0.0
    %717 = vmatpush2.msra.mxu0 0.0
    %718 = vmatprep.subr.mxu0 0.0
    %719 = vmatpush2.msra.mxu0 0.0
    %720 = vmatprep.subr.mxu0 0.0
    %721 = vmatpush2.msra.mxu0 0.0
    %722 = vmatprep.subr.mxu0 0.0
    %723 = vmatpush2.msra.mxu0 0.0
    %724 = vmatprep.subr.mxu0 0.0
    %725 = vmatpush2.msra.mxu0 0.0
    %726 = vmatprep.subr.mxu0 0.0
    %727 = vmatpush2.msra.mxu0 0.0
    %728 = vmatprep.subr.mxu0 0.0
    %729 = vmatpush2.msra.mxu0 0.0
    %730 = vmatprep.subr.mxu0 0.0
    %731 = vmatpush2.msra.mxu0 0.0
    %732 = vmatprep.subr.mxu0 0.0
    %733 = vmatpush2.msra.mxu0 0.0
    %734 = vmatprep.subr.mxu0 0.0
    %735 = vmatpush2.msra.mxu0 0.0
    %736 = vmatprep.subr.mxu0 0.0
    %737 = vmatpush2.msra.mxu0 0.0
    %738 = vmatprep.subr.mxu0 0.0
    %739 = vmatpush2.msra.mxu0 0.0
    %740 = vmatprep.mubr.f32.mxu0 0.0
    %741 = vmatmul.mubr.f32.gmra.mxu0 %v671
    %v742 = vpop.f32.mrf.mxu0
    %v743 = vadd.f32 0.0, %v742
    %v744 = vpop.f32.mrf.mxu0
    %745 = vmatprep.mubr.f32.mxu0 0.0
    %746 = vmatmul.mubr.f32.gmra.mxu0 %v674
    %v747 = vpop.f32.mrf.mxu0
    %v748 = vadd.f32 0.0, %v747
    %v749 = vpop.f32.mrf.mxu0
    %750 = vdwg.mxu0
    %v752 = vsel %vm243, %v665, 0
    %v755 = vsel %vm243, %v666, 0
    %757 = vmatprep.subr.mxu0 0.0
    %758 = vmatpush1.msra.mxu0 0.0
    %759 = vmatprep.subr.mxu0 0.0
    %760 = vmatpush1.msra.mxu0 0.0
    %761 = vmatprep.subr.mxu0 0.0
    %762 = vmatpush1.msra.mxu0 0.0
    %763 = vmatprep.subr.mxu0 0.0
    %764 = vmatpush1.msra.mxu0 0.0
    %765 = vmatprep.subr.mxu0 0.0
    %766 = vmatpush1.msra.mxu0 0.0
    %767 = vmatprep.subr.mxu0 0.0
    %768 = vmatpush1.msra.mxu0 0.0
    %769 = vmatprep.subr.mxu0 0.0
    %770 = vmatpush1.msra.mxu0 0.0
    %771 = vmatprep.subr.mxu0 0.0
    %772 = vmatpush1.msra.mxu0 0.0
    %773 = vmatprep.subr.mxu0 0.0
    %774 = vmatpush1.msra.mxu0 0.0
    %775 = vmatprep.subr.mxu0 0.0
    %776 = vmatpush1.msra.mxu0 0.0
    %777 = vmatprep.subr.mxu0 0.0
    %778 = vmatpush1.msra.mxu0 0.0
    %779 = vmatprep.subr.mxu0 0.0
    %780 = vmatpush1.msra.mxu0 0.0
    %781 = vmatprep.subr.mxu0 0.0
    %782 = vmatpush1.msra.mxu0 0.0
    %783 = vmatprep.subr.mxu0 0.0
    %784 = vmatpush1.msra.mxu0 0.0
    %785 = vmatprep.subr.mxu0 0.0
    %786 = vmatpush1.msra.mxu0 %v586
    %787 = vmatprep.subr.mxu0 0.0
    %788 = vmatpush1.msra.mxu0 %v581
    %789 = vmatprep.subr.mxu0 0.0
    %790 = vmatpush2.msra.mxu0 0.0
    %791 = vmatprep.subr.mxu0 0.0
    %792 = vmatpush2.msra.mxu0 0.0
    %793 = vmatprep.subr.mxu0 0.0
    %794 = vmatpush2.msra.mxu0 0.0
    %795 = vmatprep.subr.mxu0 0.0
    %796 = vmatpush2.msra.mxu0 0.0
    %797 = vmatprep.subr.mxu0 0.0
    %798 = vmatpush2.msra.mxu0 0.0
    %799 = vmatprep.subr.mxu0 0.0
    %800 = vmatpush2.msra.mxu0 0.0
    %801 = vmatprep.subr.mxu0 0.0
    %802 = vmatpush2.msra.mxu0 0.0
    %803 = vmatprep.subr.mxu0 0.0
    %804 = vmatpush2.msra.mxu0 0.0
    %805 = vmatprep.subr.mxu0 0.0
    %806 = vmatpush2.msra.mxu0 0.0
    %807 = vmatprep.subr.mxu0 0.0
    %808 = vmatpush2.msra.mxu0 0.0
    %809 = vmatprep.subr.mxu0 0.0
    %810 = vmatpush2.msra.mxu0 0.0
    %811 = vmatprep.subr.mxu0 0.0
    %812 = vmatpush2.msra.mxu0 0.0
    %813 = vmatprep.subr.mxu0 0.0
    %814 = vmatpush2.msra.mxu0 0.0
    %815 = vmatprep.subr.mxu0 0.0
    %816 = vmatpush2.msra.mxu0 0.0
    %817 = vmatprep.subr.mxu0 0.0
    %818 = vmatpush2.msra.mxu0 0.0
    %819 = vmatprep.subr.mxu0 0.0
    %820 = vmatpush2.msra.mxu0 0.0
    %821 = vmatprep.mubr.f32.mxu0 0.0
    %822 = vmatmul.mubr.f32.gmra.mxu0 %v752
    %v823 = vpop.f32.mrf.mxu0
    %v824 = vadd.f32 %v743, %v823
    %v825 = vpop.f32.mrf.mxu0
    %826 = vmatprep.mubr.f32.mxu0 0.0
    %827 = vmatmul.mubr.f32.gmra.mxu0 %v755
    %v828 = vpop.f32.mrf.mxu0
    %v829 = vadd.f32 %v748, %v828
    %v830 = vpop.f32.mrf.mxu0
    %831 = vdwg.mxu0
    %s832 = scalar_lea.vmem [#allocation2], 80
    %v833 = vld [vmem:[%s832] sm:$0xff]
    %v834 = vld [vmem:[%s832 + $0x8] sm:$0xff]
    %v836 = vsel %vm243, %v833, 0
    %v839 = vsel %vm243, %v834, 0
    %841 = vmatprep.subr.mxu0 0.0
    %842 = vmatpush1.msra.mxu0 0.0
    %843 = vmatprep.subr.mxu0 0.0
    %844 = vmatpush1.msra.mxu0 0.0
    %845 = vmatprep.subr.mxu0 0.0
    %846 = vmatpush1.msra.mxu0 0.0
    %847 = vmatprep.subr.mxu0 0.0
    %848 = vmatpush1.msra.mxu0 0.0
    %849 = vmatprep.subr.mxu0 0.0
    %850 = vmatpush1.msra.mxu0 0.0
    %851 = vmatprep.subr.mxu0 0.0
    %852 = vmatpush1.msra.mxu0 0.0
    %853 = vmatprep.subr.mxu0 0.0
    %854 = vmatpush1.msra.mxu0 0.0
    %855 = vmatprep.subr.mxu0 0.0
    %856 = vmatpush1.msra.mxu0 0.0
    %857 = vmatprep.subr.mxu0 0.0
    %858 = vmatpush1.msra.mxu0 0.0
    %859 = vmatprep.subr.mxu0 0.0
    %860 = vmatpush1.msra.mxu0 0.0
    %861 = vmatprep.subr.mxu0 0.0
    %862 = vmatpush1.msra.mxu0 0.0
    %863 = vmatprep.subr.mxu0 0.0
    %864 = vmatpush1.msra.mxu0 0.0
    %865 = vmatprep.subr.mxu0 0.0
    %866 = vmatpush1.msra.mxu0 0.0
    %867 = vmatprep.subr.mxu0 0.0
    %868 = vmatpush1.msra.mxu0 0.0
    %869 = vmatprep.subr.mxu0 0.0
    %870 = vmatpush1.msra.mxu0 %v661
    %871 = vmatprep.subr.mxu0 0.0
    %872 = vmatpush1.msra.mxu0 %v656
    %873 = vmatprep.subr.mxu0 0.0
    %874 = vmatpush2.msra.mxu0 0.0
    %875 = vmatprep.subr.mxu0 0.0
    %876 = vmatpush2.msra.mxu0 0.0
    %877 = vmatprep.subr.mxu0 0.0
    %878 = vmatpush2.msra.mxu0 0.0
    %879 = vmatprep.subr.mxu0 0.0
    %880 = vmatpush2.msra.mxu0 0.0
    %881 = vmatprep.subr.mxu0 0.0
    %882 = vmatpush2.msra.mxu0 0.0
    %883 = vmatprep.subr.mxu0 0.0
    %884 = vmatpush2.msra.mxu0 0.0
    %885 = vmatprep.subr.mxu0 0.0
    %886 = vmatpush2.msra.mxu0 0.0
    %887 = vmatprep.subr.mxu0 0.0
    %888 = vmatpush2.msra.mxu0 0.0
    %889 = vmatprep.subr.mxu0 0.0
    %890 = vmatpush2.msra.mxu0 0.0
    %891 = vmatprep.subr.mxu0 0.0
    %892 = vmatpush2.msra.mxu0 0.0
    %893 = vmatprep.subr.mxu0 0.0
    %894 = vmatpush2.msra.mxu0 0.0
    %895 = vmatprep.subr.mxu0 0.0
    %896 = vmatpush2.msra.mxu0 0.0
    %897 = vmatprep.subr.mxu0 0.0
    %898 = vmatpush2.msra.mxu0 0.0
    %899 = vmatprep.subr.mxu0 0.0
    %900 = vmatpush2.msra.mxu0 0.0
    %901 = vmatprep.subr.mxu0 0.0
    %902 = vmatpush2.msra.mxu0 0.0
    %903 = vmatprep.subr.mxu0 0.0
    %904 = vmatpush2.msra.mxu0 0.0
    %905 = vmatprep.mubr.f32.mxu0 0.0
    %906 = vmatmul.mubr.f32.gmra.mxu0 %v836
    %v907 = vpop.f32.mrf.mxu0
    %v908 = vadd.f32 0.0, %v907
    %v909 = vpop.f32.mrf.mxu0
    %910 = vmatprep.mubr.f32.mxu0 0.0
    %911 = vmatmul.mubr.f32.gmra.mxu0 %v839
    %v912 = vpop.f32.mrf.mxu0
    %v913 = vadd.f32 0.0, %v912
    %v914 = vpop.f32.mrf.mxu0
    %915 = vdwg.mxu0
    %v916 = vadd.f32 %v824, %v908
    %v917 = vadd.f32 %v829, %v913
    %s918 = scalar_lea.vmem [#allocation4], 16
    %v919 = vld [vmem:[%s918] sm:$0xff]
    %v920 = vld [vmem:[%s918 + $0x8] sm:$0xff]
    %922 = vset.pattern.permute.xlu0 0
    %923 = vperm.xlu0 %922, %v919
    %v924 = vpop.permute.xlu0 %923
    %927 = vset.pattern.permute.xlu0 0
    %928 = vperm.xlu0 %927, %v920
    %v929 = vpop.permute.xlu0 %928
    %v931 = vadd.f32 %v916, %v924
    %v932 = vadd.f32 %v917, %v929
    %v933 = vmax.f32 %v931, 0.0
    %v934 = vmax.f32 %v932, 0.0
    %s935 = scalar_lea.vmem [#allocation6], 192
    %v936 = vld [vmem:[%s935] sm:$0xff]
    %v937 = vld [vmem:[%s935 + $0x8] sm:$0xff]
    %v938 = vld [vmem:[%s935 + $0x10] sm:$0xff]
    %v939 = vld [vmem:[%s935 + $0x18] sm:$0xff]
    %v941 = vsel %vm76, %v933, 0
    %v944 = vsel %vm76, %v934, 0
    %946 = vmatprep.subr.mxu0 0.0
    %947 = vmatpush1.msra.mxu0 0.0
    %948 = vmatprep.subr.mxu0 0.0
    %949 = vmatpush1.msra.mxu0 0.0
    %950 = vmatprep.subr.mxu0 0.0
    %951 = vmatpush1.msra.mxu0 0.0
    %952 = vmatprep.subr.mxu0 0.0
    %953 = vmatpush1.msra.mxu0 0.0
    %954 = vmatprep.subr.mxu0 0.0
    %955 = vmatpush1.msra.mxu0 0.0
    %956 = vmatprep.subr.mxu0 0.0
    %957 = vmatpush1.msra.mxu0 0.0
    %958 = vmatprep.subr.mxu0 0.0
    %959 = vmatpush1.msra.mxu0 0.0
    %960 = vmatprep.subr.mxu0 0.0
    %961 = vmatpush1.msra.mxu0 0.0
    %962 = vmatprep.subr.mxu0 0.0
    %963 = vmatpush1.msra.mxu0 0.0
    %964 = vmatprep.subr.mxu0 0.0
    %965 = vmatpush1.msra.mxu0 0.0
    %966 = vmatprep.subr.mxu0 0.0
    %967 = vmatpush1.msra.mxu0 0.0
    %968 = vmatprep.subr.mxu0 0.0
    %969 = vmatpush1.msra.mxu0 0.0
    %970 = vmatprep.subr.mxu0 0.0
    %971 = vmatpush1.msra.mxu0 %v939
    %972 = vmatprep.subr.mxu0 0.0
    %973 = vmatpush1.msra.mxu0 %v938
    %974 = vmatprep.subr.mxu0 0.0
    %975 = vmatpush1.msra.mxu0 %v937
    %976 = vmatprep.subr.mxu0 0.0
    %977 = vmatpush1.msra.mxu0 %v936
    %978 = vmatprep.subr.mxu0 0.0
    %979 = vmatpush2.msra.mxu0 0.0
    %980 = vmatprep.subr.mxu0 0.0
    %981 = vmatpush2.msra.mxu0 0.0
    %982 = vmatprep.subr.mxu0 0.0
    %983 = vmatpush2.msra.mxu0 0.0
    %984 = vmatprep.subr.mxu0 0.0
    %985 = vmatpush2.msra.mxu0 0.0
    %986 = vmatprep.subr.mxu0 0.0
    %987 = vmatpush2.msra.mxu0 0.0
    %988 = vmatprep.subr.mxu0 0.0
    %989 = vmatpush2.msra.mxu0 0.0
    %990 = vmatprep.subr.mxu0 0.0
    %991 = vmatpush2.msra.mxu0 0.0
    %992 = vmatprep.subr.mxu0 0.0
    %993 = vmatpush2.msra.mxu0 0.0
    %994 = vmatprep.subr.mxu0 0.0
    %995 = vmatpush2.msra.mxu0 0.0
    %996 = vmatprep.subr.mxu0 0.0
    %997 = vmatpush2.msra.mxu0 0.0
    %998 = vmatprep.subr.mxu0 0.0
    %999 = vmatpush2.msra.mxu0 0.0
    %1000 = vmatprep.subr.mxu0 0.0
    %1001 = vmatpush2.msra.mxu0 0.0
    %1002 = vmatprep.subr.mxu0 0.0
    %1003 = vmatpush2.msra.mxu0 0.0
    %1004 = vmatprep.subr.mxu0 0.0
    %1005 = vmatpush2.msra.mxu0 0.0
    %1006 = vmatprep.subr.mxu0 0.0
    %1007 = vmatpush2.msra.mxu0 0.0
    %1008 = vmatprep.subr.mxu0 0.0
    %1009 = vmatpush2.msra.mxu0 0.0
    %1010 = vmatprep.mubr.f32.mxu0 0.0
    %1011 = vmatmul.mubr.f32.gmra.mxu0 %v941
    %v1012 = vpop.f32.mrf.mxu0
    %v1013 = vadd.f32 0.0, %v1012
    %v1014 = vpop.f32.mrf.mxu0
    %1015 = vmatprep.mubr.f32.mxu0 0.0
    %1016 = vmatmul.mubr.f32.gmra.mxu0 %v944
    %v1017 = vpop.f32.mrf.mxu0
    %v1018 = vadd.f32 0.0, %v1017
    %v1019 = vpop.f32.mrf.mxu0
    %1020 = vdwg.mxu0
    %s1021 = scalar_lea.vmem [#allocation6], 224
    %v1022 = vld [vmem:[%s1021] sm:$0xff]
    %v1023 = vld [vmem:[%s1021 + $0x8] sm:$0xff]
    %v1024 = vld [vmem:[%s1021 + $0x10] sm:$0xff]
    %v1025 = vld [vmem:[%s1021 + $0x18] sm:$0xff]
    %1026 = vmatprep.subr.mxu0 0.0
    %1027 = vmatpush1.msra.mxu0 0.0
    %1028 = vmatprep.subr.mxu0 0.0
    %1029 = vmatpush1.msra.mxu0 0.0
    %1030 = vmatprep.subr.mxu0 0.0
    %1031 = vmatpush1.msra.mxu0 0.0
    %1032 = vmatprep.subr.mxu0 0.0
    %1033 = vmatpush1.msra.mxu0 0.0
    %1034 = vmatprep.subr.mxu0 0.0
    %1035 = vmatpush1.msra.mxu0 0.0
    %1036 = vmatprep.subr.mxu0 0.0
    %1037 = vmatpush1.msra.mxu0 0.0
    %1038 = vmatprep.subr.mxu0 0.0
    %1039 = vmatpush1.msra.mxu0 0.0
    %1040 = vmatprep.subr.mxu0 0.0
    %1041 = vmatpush1.msra.mxu0 0.0
    %1042 = vmatprep.subr.mxu0 0.0
    %1043 = vmatpush1.msra.mxu0 0.0
    %1044 = vmatprep.subr.mxu0 0.0
    %1045 = vmatpush1.msra.mxu0 0.0
    %1046 = vmatprep.subr.mxu0 0.0
    %1047 = vmatpush1.msra.mxu0 0.0
    %1048 = vmatprep.subr.mxu0 0.0
    %1049 = vmatpush1.msra.mxu0 0.0
    %1050 = vmatprep.subr.mxu0 0.0
    %1051 = vmatpush1.msra.mxu0 %v1025
    %1052 = vmatprep.subr.mxu0 0.0
    %1053 = vmatpush1.msra.mxu0 %v1024
    %1054 = vmatprep.subr.mxu0 0.0
    %1055 = vmatpush1.msra.mxu0 %v1023
    %1056 = vmatprep.subr.mxu0 0.0
    %1057 = vmatpush1.msra.mxu0 %v1022
    %1058 = vmatprep.subr.mxu0 0.0
    %1059 = vmatpush2.msra.mxu0 0.0
    %1060 = vmatprep.subr.mxu0 0.0
    %1061 = vmatpush2.msra.mxu0 0.0
    %1062 = vmatprep.subr.mxu0 0.0
    %1063 = vmatpush2.msra.mxu0 0.0
    %1064 = vmatprep.subr.mxu0 0.0
    %1065 = vmatpush2.msra.mxu0 0.0
    %1066 = vmatprep.subr.mxu0 0.0
    %1067 = vmatpush2.msra.mxu0 0.0
    %1068 = vmatprep.subr.mxu0 0.0
    %1069 = vmatpush2.msra.mxu0 0.0
    %1070 = vmatprep.subr.mxu0 0.0
    %1071 = vmatpush2.msra.mxu0 0.0
    %1072 = vmatprep.subr.mxu0 0.0
    %1073 = vmatpush2.msra.mxu0 0.0
    %1074 = vmatprep.subr.mxu0 0.0
    %1075 = vmatpush2.msra.mxu0 0.0
    %1076 = vmatprep.subr.mxu0 0.0
    %1077 = vmatpush2.msra.mxu0 0.0
    %1078 = vmatprep.subr.mxu0 0.0
    %1079 = vmatpush2.msra.mxu0 0.0
    %1080 = vmatprep.subr.mxu0 0.0
    %1081 = vmatpush2.msra.mxu0 0.0
    %1082 = vmatprep.subr.mxu0 0.0
    %1083 = vmatpush2.msra.mxu0 0.0
    %1084 = vmatprep.subr.mxu0 0.0
    %1085 = vmatpush2.msra.mxu0 0.0
    %1086 = vmatprep.subr.mxu0 0.0
    %1087 = vmatpush2.msra.mxu0 0.0
    %1088 = vmatprep.subr.mxu0 0.0
    %1089 = vmatpush2.msra.mxu0 0.0
    %1090 = vmatprep.mubr.f32.mxu0 0.0
    %1091 = vmatmul.mubr.f32.gmra.mxu0 %v941
    %v1092 = vpop.f32.mrf.mxu0
    %v1093 = vadd.f32 0.0, %v1092
    %v1094 = vpop.f32.mrf.mxu0
    %1095 = vmatprep.mubr.f32.mxu0 0.0
    %1096 = vmatmul.mubr.f32.gmra.mxu0 %v944
    %v1097 = vpop.f32.mrf.mxu0
    %v1098 = vadd.f32 0.0, %v1097
    %v1099 = vpop.f32.mrf.mxu0
    %1100 = vdwg.mxu0
    %v1101 = vmax.f32 %v1013, %v1093
    %v1102 = vmax.f32 %v1018, %v1098
    %s1103 = scalar_lea.vmem [#allocation6], 64
    %v1104 = vld [vmem:[%s1103] sm:$0xff]
    %v1105 = vld [vmem:[%s1103 + $0x8] sm:$0xff]
    %v1106 = vld [vmem:[%s1103 + $0x10] sm:$0xff]
    %v1107 = vld [vmem:[%s1103 + $0x18] sm:$0xff]
    %v1109 = vsel %vm76, %v1101, 0
    %v1112 = vsel %vm76, %v1102, 0
    %1114 = vmatprep.subr.mxu0 0.0
    %1115 = vmatpush1.msra.mxu0 0.0
    %1116 = vmatprep.subr.mxu0 0.0
    %1117 = vmatpush1.msra.mxu0 0.0
    %1118 = vmatprep.subr.mxu0 0.0
    %1119 = vmatpush1.msra.mxu0 0.0
    %1120 = vmatprep.subr.mxu0 0.0
    %1121 = vmatpush1.msra.mxu0 0.0
    %1122 = vmatprep.subr.mxu0 0.0
    %1123 = vmatpush1.msra.mxu0 0.0
    %1124 = vmatprep.subr.mxu0 0.0
    %1125 = vmatpush1.msra.mxu0 0.0
    %1126 = vmatprep.subr.mxu0 0.0
    %1127 = vmatpush1.msra.mxu0 0.0
    %1128 = vmatprep.subr.mxu0 0.0
    %1129 = vmatpush1.msra.mxu0 0.0
    %1130 = vmatprep.subr.mxu0 0.0
    %1131 = vmatpush1.msra.mxu0 0.0
    %1132 = vmatprep.subr.mxu0 0.0
    %1133 = vmatpush1.msra.mxu0 0.0
    %1134 = vmatprep.subr.mxu0 0.0
    %1135 = vmatpush1.msra.mxu0 0.0
    %1136 = vmatprep.subr.mxu0 0.0
    %1137 = vmatpush1.msra.mxu0 0.0
    %1138 = vmatprep.subr.mxu0 0.0
    %1139 = vmatpush1.msra.mxu0 %v1107
    %1140 = vmatprep.subr.mxu0 0.0
    %1141 = vmatpush1.msra.mxu0 %v1106
    %1142 = vmatprep.subr.mxu0 0.0
    %1143 = vmatpush1.msra.mxu0 %v1105
    %1144 = vmatprep.subr.mxu0 0.0
    %1145 = vmatpush1.msra.mxu0 %v1104
    %1146 = vmatprep.subr.mxu0 0.0
    %1147 = vmatpush2.msra.mxu0 0.0
    %1148 = vmatprep.subr.mxu0 0.0
    %1149 = vmatpush2.msra.mxu0 0.0
    %1150 = vmatprep.subr.mxu0 0.0
    %1151 = vmatpush2.msra.mxu0 0.0
    %1152 = vmatprep.subr.mxu0 0.0
    %1153 = vmatpush2.msra.mxu0 0.0
    %1154 = vmatprep.subr.mxu0 0.0
    %1155 = vmatpush2.msra.mxu0 0.0
    %1156 = vmatprep.subr.mxu0 0.0
    %1157 = vmatpush2.msra.mxu0 0.0
    %1158 = vmatprep.subr.mxu0 0.0
    %1159 = vmatpush2.msra.mxu0 0.0
    %1160 = vmatprep.subr.mxu0 0.0
    %1161 = vmatpush2.msra.mxu0 0.0
    %1162 = vmatprep.subr.mxu0 0.0
    %1163 = vmatpush2.msra.mxu0 0.0
    %1164 = vmatprep.subr.mxu0 0.0
    %1165 = vmatpush2.msra.mxu0 0.0
    %1166 = vmatprep.subr.mxu0 0.0
    %1167 = vmatpush2.msra.mxu0 0.0
    %1168 = vmatprep.subr.mxu0 0.0
    %1169 = vmatpush2.msra.mxu0 0.0
    %1170 = vmatprep.subr.mxu0 0.0
    %1171 = vmatpush2.msra.mxu0 0.0
    %1172 = vmatprep.subr.mxu0 0.0
    %1173 = vmatpush2.msra.mxu0 0.0
    %1174 = vmatprep.subr.mxu0 0.0
    %1175 = vmatpush2.msra.mxu0 0.0
    %1176 = vmatprep.subr.mxu0 0.0
    %1177 = vmatpush2.msra.mxu0 0.0
    %1178 = vmatprep.mubr.f32.mxu0 0.0
    %1179 = vmatmul.mubr.f32.gmra.mxu0 %v1109
    %v1180 = vpop.f32.mrf.mxu0
    %v1181 = vadd.f32 0.0, %v1180
    %v1182 = vpop.f32.mrf.mxu0
    %1183 = vmatprep.mubr.f32.mxu0 0.0
    %1184 = vmatmul.mubr.f32.gmra.mxu0 %v1112
    %v1185 = vpop.f32.mrf.mxu0
    %v1186 = vadd.f32 0.0, %v1185
    %v1187 = vpop.f32.mrf.mxu0
    %1188 = vdwg.mxu0
    %s1189 = scalar_lea.vmem [#allocation6], 96
    %v1190 = vld [vmem:[%s1189] sm:$0xff]
    %v1191 = vld [vmem:[%s1189 + $0x8] sm:$0xff]
    %v1192 = vld [vmem:[%s1189 + $0x10] sm:$0xff]
    %v1193 = vld [vmem:[%s1189 + $0x18] sm:$0xff]
    %1194 = vmatprep.subr.mxu0 0.0
    %1195 = vmatpush1.msra.mxu0 0.0
    %1196 = vmatprep.subr.mxu0 0.0
    %1197 = vmatpush1.msra.mxu0 0.0
    %1198 = vmatprep.subr.mxu0 0.0
    %1199 = vmatpush1.msra.mxu0 0.0
    %1200 = vmatprep.subr.mxu0 0.0
    %1201 = vmatpush1.msra.mxu0 0.0
    %1202 = vmatprep.subr.mxu0 0.0
    %1203 = vmatpush1.msra.mxu0 0.0
    %1204 = vmatprep.subr.mxu0 0.0
    %1205 = vmatpush1.msra.mxu0 0.0
    %1206 = vmatprep.subr.mxu0 0.0
    %1207 = vmatpush1.msra.mxu0 0.0
    %1208 = vmatprep.subr.mxu0 0.0
    %1209 = vmatpush1.msra.mxu0 0.0
    %1210 = vmatprep.subr.mxu0 0.0
    %1211 = vmatpush1.msra.mxu0 0.0
    %1212 = vmatprep.subr.mxu0 0.0
    %1213 = vmatpush1.msra.mxu0 0.0
    %1214 = vmatprep.subr.mxu0 0.0
    %1215 = vmatpush1.msra.mxu0 0.0
    %1216 = vmatprep.subr.mxu0 0.0
    %1217 = vmatpush1.msra.mxu0 0.0
    %1218 = vmatprep.subr.mxu0 0.0
    %1219 = vmatpush1.msra.mxu0 %v1193
    %1220 = vmatprep.subr.mxu0 0.0
    %1221 = vmatpush1.msra.mxu0 %v1192
    %1222 = vmatprep.subr.mxu0 0.0
    %1223 = vmatpush1.msra.mxu0 %v1191
    %1224 = vmatprep.subr.mxu0 0.0
    %1225 = vmatpush1.msra.mxu0 %v1190
    %1226 = vmatprep.subr.mxu0 0.0
    %1227 = vmatpush2.msra.mxu0 0.0
    %1228 = vmatprep.subr.mxu0 0.0
    %1229 = vmatpush2.msra.mxu0 0.0
    %1230 = vmatprep.subr.mxu0 0.0
    %1231 = vmatpush2.msra.mxu0 0.0
    %1232 = vmatprep.subr.mxu0 0.0
    %1233 = vmatpush2.msra.mxu0 0.0
    %1234 = vmatprep.subr.mxu0 0.0
    %1235 = vmatpush2.msra.mxu0 0.0
    %1236 = vmatprep.subr.mxu0 0.0
    %1237 = vmatpush2.msra.mxu0 0.0
    %1238 = vmatprep.subr.mxu0 0.0
    %1239 = vmatpush2.msra.mxu0 0.0
    %1240 = vmatprep.subr.mxu0 0.0
    %1241 = vmatpush2.msra.mxu0 0.0
    %1242 = vmatprep.subr.mxu0 0.0
    %1243 = vmatpush2.msra.mxu0 0.0
    %1244 = vmatprep.subr.mxu0 0.0
    %1245 = vmatpush2.msra.mxu0 0.0
    %1246 = vmatprep.subr.mxu0 0.0
    %1247 = vmatpush2.msra.mxu0 0.0
    %1248 = vmatprep.subr.mxu0 0.0
    %1249 = vmatpush2.msra.mxu0 0.0
    %1250 = vmatprep.subr.mxu0 0.0
    %1251 = vmatpush2.msra.mxu0 0.0
    %1252 = vmatprep.subr.mxu0 0.0
    %1253 = vmatpush2.msra.mxu0 0.0
    %1254 = vmatprep.subr.mxu0 0.0
    %1255 = vmatpush2.msra.mxu0 0.0
    %1256 = vmatprep.subr.mxu0 0.0
    %1257 = vmatpush2.msra.mxu0 0.0
    %1258 = vmatprep.mubr.f32.mxu0 0.0
    %1259 = vmatmul.mubr.f32.gmra.mxu0 %v1109
    %v1260 = vpop.f32.mrf.mxu0
    %v1261 = vadd.f32 0.0, %v1260
    %v1262 = vpop.f32.mrf.mxu0
    %1263 = vmatprep.mubr.f32.mxu0 0.0
    %1264 = vmatmul.mubr.f32.gmra.mxu0 %v1112
    %v1265 = vpop.f32.mrf.mxu0
    %v1266 = vadd.f32 0.0, %v1265
    %v1267 = vpop.f32.mrf.mxu0
    %1268 = vdwg.mxu0
    %s1269 = scalar_lea.vmem [#allocation2], 96
    %v1270 = vld [vmem:[%s1269] sm:$0xff]
    %v1271 = vld [vmem:[%s1269 + $0x8] sm:$0xff]
    %s1272 = scalar_lea.vmem [#allocation2], 112
    %v1273 = vld [vmem:[%s1272] sm:$0xff]
    %v1274 = vld [vmem:[%s1272 + $0x8] sm:$0xff]
    %v1276 = vsel %vm243, %v1273, 0
    %v1279 = vsel %vm243, %v1274, 0
    %1281 = vmatprep.subr.mxu0 0.0
    %1282 = vmatpush1.msra.mxu0 0.0
    %1283 = vmatprep.subr.mxu0 0.0
    %1284 = vmatpush1.msra.mxu0 0.0
    %1285 = vmatprep.subr.mxu0 0.0
    %1286 = vmatpush1.msra.mxu0 0.0
    %1287 = vmatprep.subr.mxu0 0.0
    %1288 = vmatpush1.msra.mxu0 0.0
    %1289 = vmatprep.subr.mxu0 0.0
    %1290 = vmatpush1.msra.mxu0 0.0
    %1291 = vmatprep.subr.mxu0 0.0
    %1292 = vmatpush1.msra.mxu0 0.0
    %1293 = vmatprep.subr.mxu0 0.0
    %1294 = vmatpush1.msra.mxu0 0.0
    %1295 = vmatprep.subr.mxu0 0.0
    %1296 = vmatpush1.msra.mxu0 0.0
    %1297 = vmatprep.subr.mxu0 0.0
    %1298 = vmatpush1.msra.mxu0 0.0
    %1299 = vmatprep.subr.mxu0 0.0
    %1300 = vmatpush1.msra.mxu0 0.0
    %1301 = vmatprep.subr.mxu0 0.0
    %1302 = vmatpush1.msra.mxu0 0.0
    %1303 = vmatprep.subr.mxu0 0.0
    %1304 = vmatpush1.msra.mxu0 0.0
    %1305 = vmatprep.subr.mxu0 0.0
    %1306 = vmatpush1.msra.mxu0 0.0
    %1307 = vmatprep.subr.mxu0 0.0
    %1308 = vmatpush1.msra.mxu0 0.0
    %1309 = vmatprep.subr.mxu0 0.0
    %1310 = vmatpush1.msra.mxu0 %v1102
    %1311 = vmatprep.subr.mxu0 0.0
    %1312 = vmatpush1.msra.mxu0 %v1101
    %1313 = vmatprep.subr.mxu0 0.0
    %1314 = vmatpush2.msra.mxu0 0.0
    %1315 = vmatprep.subr.mxu0 0.0
    %1316 = vmatpush2.msra.mxu0 0.0
    %1317 = vmatprep.subr.mxu0 0.0
    %1318 = vmatpush2.msra.mxu0 0.0
    %1319 = vmatprep.subr.mxu0 0.0
    %1320 = vmatpush2.msra.mxu0 0.0
    %1321 = vmatprep.subr.mxu0 0.0
    %1322 = vmatpush2.msra.mxu0 0.0
    %1323 = vmatprep.subr.mxu0 0.0
    %1324 = vmatpush2.msra.mxu0 0.0
    %1325 = vmatprep.subr.mxu0 0.0
    %1326 = vmatpush2.msra.mxu0 0.0
    %1327 = vmatprep.subr.mxu0 0.0
    %1328 = vmatpush2.msra.mxu0 0.0
    %1329 = vmatprep.subr.mxu0 0.0
    %1330 = vmatpush2.msra.mxu0 0.0
    %1331 = vmatprep.subr.mxu0 0.0
    %1332 = vmatpush2.msra.mxu0 0.0
    %1333 = vmatprep.subr.mxu0 0.0
    %1334 = vmatpush2.msra.mxu0 0.0
    %1335 = vmatprep.subr.mxu0 0.0
    %1336 = vmatpush2.msra.mxu0 0.0
    %1337 = vmatprep.subr.mxu0 0.0
    %1338 = vmatpush2.msra.mxu0 0.0
    %1339 = vmatprep.subr.mxu0 0.0
    %1340 = vmatpush2.msra.mxu0 0.0
    %1341 = vmatprep.subr.mxu0 0.0
    %1342 = vmatpush2.msra.mxu0 0.0
    %1343 = vmatprep.subr.mxu0 0.0
    %1344 = vmatpush2.msra.mxu0 0.0
    %1345 = vmatprep.mubr.f32.mxu0 0.0
    %1346 = vmatmul.mubr.f32.gmra.mxu0 %v1276
    %v1347 = vpop.f32.mrf.mxu0
    %v1348 = vadd.f32 0.0, %v1347
    %v1349 = vpop.f32.mrf.mxu0
    %1350 = vmatprep.mubr.f32.mxu0 0.0
    %1351 = vmatmul.mubr.f32.gmra.mxu0 %v1279
    %v1352 = vpop.f32.mrf.mxu0
    %v1353 = vadd.f32 0.0, %v1352
    %v1354 = vpop.f32.mrf.mxu0
    %1355 = vdwg.mxu0
    %v1357 = vsel %vm243, %v1270, 0
    %v1360 = vsel %vm243, %v1271, 0
    %1362 = vmatprep.subr.mxu0 0.0
    %1363 = vmatpush1.msra.mxu0 0.0
    %1364 = vmatprep.subr.mxu0 0.0
    %1365 = vmatpush1.msra.mxu0 0.0
    %1366 = vmatprep.subr.mxu0 0.0
    %1367 = vmatpush1.msra.mxu0 0.0
    %1368 = vmatprep.subr.mxu0 0.0
    %1369 = vmatpush1.msra.mxu0 0.0
    %1370 = vmatprep.subr.mxu0 0.0
    %1371 = vmatpush1.msra.mxu0 0.0
    %1372 = vmatprep.subr.mxu0 0.0
    %1373 = vmatpush1.msra.mxu0 0.0
    %1374 = vmatprep.subr.mxu0 0.0
    %1375 = vmatpush1.msra.mxu0 0.0
    %1376 = vmatprep.subr.mxu0 0.0
    %1377 = vmatpush1.msra.mxu0 0.0
    %1378 = vmatprep.subr.mxu0 0.0
    %1379 = vmatpush1.msra.mxu0 0.0
    %1380 = vmatprep.subr.mxu0 0.0
    %1381 = vmatpush1.msra.mxu0 0.0
    %1382 = vmatprep.subr.mxu0 0.0
    %1383 = vmatpush1.msra.mxu0 0.0
    %1384 = vmatprep.subr.mxu0 0.0
    %1385 = vmatpush1.msra.mxu0 0.0
    %1386 = vmatprep.subr.mxu0 0.0
    %1387 = vmatpush1.msra.mxu0 0.0
    %1388 = vmatprep.subr.mxu0 0.0
    %1389 = vmatpush1.msra.mxu0 0.0
    %1390 = vmatprep.subr.mxu0 0.0
    %1391 = vmatpush1.msra.mxu0 %v1186
    %1392 = vmatprep.subr.mxu0 0.0
    %1393 = vmatpush1.msra.mxu0 %v1181
    %1394 = vmatprep.subr.mxu0 0.0
    %1395 = vmatpush2.msra.mxu0 0.0
    %1396 = vmatprep.subr.mxu0 0.0
    %1397 = vmatpush2.msra.mxu0 0.0
    %1398 = vmatprep.subr.mxu0 0.0
    %1399 = vmatpush2.msra.mxu0 0.0
    %1400 = vmatprep.subr.mxu0 0.0
    %1401 = vmatpush2.msra.mxu0 0.0
    %1402 = vmatprep.subr.mxu0 0.0
    %1403 = vmatpush2.msra.mxu0 0.0
    %1404 = vmatprep.subr.mxu0 0.0
    %1405 = vmatpush2.msra.mxu0 0.0
    %1406 = vmatprep.subr.mxu0 0.0
    %1407 = vmatpush2.msra.mxu0 0.0
    %1408 = vmatprep.subr.mxu0 0.0
    %1409 = vmatpush2.msra.mxu0 0.0
    %1410 = vmatprep.subr.mxu0 0.0
    %1411 = vmatpush2.msra.mxu0 0.0
    %1412 = vmatprep.subr.mxu0 0.0
    %1413 = vmatpush2.msra.mxu0 0.0
    %1414 = vmatprep.subr.mxu0 0.0
    %1415 = vmatpush2.msra.mxu0 0.0
    %1416 = vmatprep.subr.mxu0 0.0
    %1417 = vmatpush2.msra.mxu0 0.0
    %1418 = vmatprep.subr.mxu0 0.0
    %1419 = vmatpush2.msra.mxu0 0.0
    %1420 = vmatprep.subr.mxu0 0.0
    %1421 = vmatpush2.msra.mxu0 0.0
    %1422 = vmatprep.subr.mxu0 0.0
    %1423 = vmatpush2.msra.mxu0 0.0
    %1424 = vmatprep.subr.mxu0 0.0
    %1425 = vmatpush2.msra.mxu0 0.0
    %1426 = vmatprep.mubr.f32.mxu0 0.0
    %1427 = vmatmul.mubr.f32.gmra.mxu0 %v1357
    %v1428 = vpop.f32.mrf.mxu0
    %v1429 = vadd.f32 %v1348, %v1428
    %v1430 = vpop.f32.mrf.mxu0
    %1431 = vmatprep.mubr.f32.mxu0 0.0
    %1432 = vmatmul.mubr.f32.gmra.mxu0 %v1360
    %v1433 = vpop.f32.mrf.mxu0
    %v1434 = vadd.f32 %v1353, %v1433
    %v1435 = vpop.f32.mrf.mxu0
    %1436 = vdwg.mxu0
    %s1437 = scalar_lea.vmem [#allocation2], 128
    %v1438 = vld [vmem:[%s1437] sm:$0xff]
    %v1439 = vld [vmem:[%s1437 + $0x8] sm:$0xff]
    %v1441 = vsel %vm243, %v1438, 0
    %v1444 = vsel %vm243, %v1439, 0
    %1446 = vmatprep.subr.mxu0 0.0
    %1447 = vmatpush1.msra.mxu0 0.0
    %1448 = vmatprep.subr.mxu0 0.0
    %1449 = vmatpush1.msra.mxu0 0.0
    %1450 = vmatprep.subr.mxu0 0.0
    %1451 = vmatpush1.msra.mxu0 0.0
    %1452 = vmatprep.subr.mxu0 0.0
    %1453 = vmatpush1.msra.mxu0 0.0
    %1454 = vmatprep.subr.mxu0 0.0
    %1455 = vmatpush1.msra.mxu0 0.0
    %1456 = vmatprep.subr.mxu0 0.0
    %1457 = vmatpush1.msra.mxu0 0.0
    %1458 = vmatprep.subr.mxu0 0.0
    %1459 = vmatpush1.msra.mxu0 0.0
    %1460 = vmatprep.subr.mxu0 0.0
    %1461 = vmatpush1.msra.mxu0 0.0
    %1462 = vmatprep.subr.mxu0 0.0
    %1463 = vmatpush1.msra.mxu0 0.0
    %1464 = vmatprep.subr.mxu0 0.0
    %1465 = vmatpush1.msra.mxu0 0.0
    %1466 = vmatprep.subr.mxu0 0.0
    %1467 = vmatpush1.msra.mxu0 0.0
    %1468 = vmatprep.subr.mxu0 0.0
    %1469 = vmatpush1.msra.mxu0 0.0
    %1470 = vmatprep.subr.mxu0 0.0
    %1471 = vmatpush1.msra.mxu0 0.0
    %1472 = vmatprep.subr.mxu0 0.0
    %1473 = vmatpush1.msra.mxu0 0.0
    %1474 = vmatprep.subr.mxu0 0.0
    %1475 = vmatpush1.msra.mxu0 %v1266
    %1476 = vmatprep.subr.mxu0 0.0
    %1477 = vmatpush1.msra.mxu0 %v1261
    %1478 = vmatprep.subr.mxu0 0.0
    %1479 = vmatpush2.msra.mxu0 0.0
    %1480 = vmatprep.subr.mxu0 0.0
    %1481 = vmatpush2.msra.mxu0 0.0
    %1482 = vmatprep.subr.mxu0 0.0
    %1483 = vmatpush2.msra.mxu0 0.0
    %1484 = vmatprep.subr.mxu0 0.0
    %1485 = vmatpush2.msra.mxu0 0.0
    %1486 = vmatprep.subr.mxu0 0.0
    %1487 = vmatpush2.msra.mxu0 0.0
    %1488 = vmatprep.subr.mxu0 0.0
    %1489 = vmatpush2.msra.mxu0 0.0
    %1490 = vmatprep.subr.mxu0 0.0
    %1491 = vmatpush2.msra.mxu0 0.0
    %1492 = vmatprep.subr.mxu0 0.0
    %1493 = vmatpush2.msra.mxu0 0.0
    %1494 = vmatprep.subr.mxu0 0.0
    %1495 = vmatpush2.msra.mxu0 0.0
    %1496 = vmatprep.subr.mxu0 0.0
    %1497 = vmatpush2.msra.mxu0 0.0
    %1498 = vmatprep.subr.mxu0 0.0
    %1499 = vmatpush2.msra.mxu0 0.0
    %1500 = vmatprep.subr.mxu0 0.0
    %1501 = vmatpush2.msra.mxu0 0.0
    %1502 = vmatprep.subr.mxu0 0.0
    %1503 = vmatpush2.msra.mxu0 0.0
    %1504 = vmatprep.subr.mxu0 0.0
    %1505 = vmatpush2.msra.mxu0 0.0
    %1506 = vmatprep.subr.mxu0 0.0
    %1507 = vmatpush2.msra.mxu0 0.0
    %1508 = vmatprep.subr.mxu0 0.0
    %1509 = vmatpush2.msra.mxu0 0.0
    %1510 = vmatprep.mubr.f32.mxu0 0.0
    %1511 = vmatmul.mubr.f32.gmra.mxu0 %v1441
    %v1512 = vpop.f32.mrf.mxu0
    %v1513 = vadd.f32 0.0, %v1512
    %v1514 = vpop.f32.mrf.mxu0
    %1515 = vmatprep.mubr.f32.mxu0 0.0
    %1516 = vmatmul.mubr.f32.gmra.mxu0 %v1444
    %v1517 = vpop.f32.mrf.mxu0
    %v1518 = vadd.f32 0.0, %v1517
    %v1519 = vpop.f32.mrf.mxu0
    %1520 = vdwg.mxu0
    %v1521 = vadd.f32 %v1429, %v1513
    %v1522 = vadd.f32 %v1434, %v1518
    %s1523 = scalar_lea.vmem [#allocation4], 32
    %v1524 = vld [vmem:[%s1523] sm:$0xff]
    %v1525 = vld [vmem:[%s1523 + $0x8] sm:$0xff]
    %1527 = vset.pattern.permute.xlu0 0
    %1528 = vperm.xlu0 %1527, %v1524
    %v1529 = vpop.permute.xlu0 %1528
    %1532 = vset.pattern.permute.xlu0 0
    %1533 = vperm.xlu0 %1532, %v1525
    %v1534 = vpop.permute.xlu0 %1533
    %v1536 = vadd.f32 %v1521, %v1529
    %v1537 = vadd.f32 %v1522, %v1534
    %v1538 = vmax.f32 %v1536, 0.0
    %v1539 = vmax.f32 %v1537, 0.0
    %v1541 = vsel %vm76, %v1538, 0
    %v1544 = vsel %vm76, %v1539, 0
    %1546 = vmatprep.subr.mxu0 0.0
    %1547 = vmatpush1.msra.mxu0 0.0
    %1548 = vmatprep.subr.mxu0 0.0
    %1549 = vmatpush1.msra.mxu0 0.0
    %1550 = vmatprep.subr.mxu0 0.0
    %1551 = vmatpush1.msra.mxu0 0.0
    %1552 = vmatprep.subr.mxu0 0.0
    %1553 = vmatpush1.msra.mxu0 0.0
    %1554 = vmatprep.subr.mxu0 0.0
    %1555 = vmatpush1.msra.mxu0 0.0
    %1556 = vmatprep.subr.mxu0 0.0
    %1557 = vmatpush1.msra.mxu0 0.0
    %1558 = vmatprep.subr.mxu0 0.0
    %1559 = vmatpush1.msra.mxu0 0.0
    %1560 = vmatprep.subr.mxu0 0.0
    %1561 = vmatpush1.msra.mxu0 0.0
    %1562 = vmatprep.subr.mxu0 0.0
    %1563 = vmatpush1.msra.mxu0 0.0
    %1564 = vmatprep.subr.mxu0 0.0
    %1565 = vmatpush1.msra.mxu0 0.0
    %1566 = vmatprep.subr.mxu0 0.0
    %1567 = vmatpush1.msra.mxu0 0.0
    %1568 = vmatprep.subr.mxu0 0.0
    %1569 = vmatpush1.msra.mxu0 0.0
    %1570 = vmatprep.subr.mxu0 0.0
    %1571 = vmatpush1.msra.mxu0 %v1107
    %1572 = vmatprep.subr.mxu0 0.0
    %1573 = vmatpush1.msra.mxu0 %v1106
    %1574 = vmatprep.subr.mxu0 0.0
    %1575 = vmatpush1.msra.mxu0 %v1105
    %1576 = vmatprep.subr.mxu0 0.0
    %1577 = vmatpush1.msra.mxu0 %v1104
    %1578 = vmatprep.subr.mxu0 0.0
    %1579 = vmatpush2.msra.mxu0 0.0
    %1580 = vmatprep.subr.mxu0 0.0
    %1581 = vmatpush2.msra.mxu0 0.0
    %1582 = vmatprep.subr.mxu0 0.0
    %1583 = vmatpush2.msra.mxu0 0.0
    %1584 = vmatprep.subr.mxu0 0.0
    %1585 = vmatpush2.msra.mxu0 0.0
    %1586 = vmatprep.subr.mxu0 0.0
    %1587 = vmatpush2.msra.mxu0 0.0
    %1588 = vmatprep.subr.mxu0 0.0
    %1589 = vmatpush2.msra.mxu0 0.0
    %1590 = vmatprep.subr.mxu0 0.0
    %1591 = vmatpush2.msra.mxu0 0.0
    %1592 = vmatprep.subr.mxu0 0.0
    %1593 = vmatpush2.msra.mxu0 0.0
    %1594 = vmatprep.subr.mxu0 0.0
    %1595 = vmatpush2.msra.mxu0 0.0
    %1596 = vmatprep.subr.mxu0 0.0
    %1597 = vmatpush2.msra.mxu0 0.0
    %1598 = vmatprep.subr.mxu0 0.0
    %1599 = vmatpush2.msra.mxu0 0.0
    %1600 = vmatprep.subr.mxu0 0.0
    %1601 = vmatpush2.msra.mxu0 0.0
    %1602 = vmatprep.subr.mxu0 0.0
    %1603 = vmatpush2.msra.mxu0 0.0
    %1604 = vmatprep.subr.mxu0 0.0
    %1605 = vmatpush2.msra.mxu0 0.0
    %1606 = vmatprep.subr.mxu0 0.0
    %1607 = vmatpush2.msra.mxu0 0.0
    %1608 = vmatprep.subr.mxu0 0.0
    %1609 = vmatpush2.msra.mxu0 0.0
    %1610 = vmatprep.mubr.f32.mxu0 0.0
    %1611 = vmatmul.mubr.f32.gmra.mxu0 %v1541
    %v1612 = vpop.f32.mrf.mxu0
    %v1613 = vadd.f32 0.0, %v1612
    %v1614 = vpop.f32.mrf.mxu0
    %1615 = vmatprep.mubr.f32.mxu0 0.0
    %1616 = vmatmul.mubr.f32.gmra.mxu0 %v1544
    %v1617 = vpop.f32.mrf.mxu0
    %v1618 = vadd.f32 0.0, %v1617
    %v1619 = vpop.f32.mrf.mxu0
    %1620 = vdwg.mxu0
    %1621 = vmatprep.subr.mxu0 0.0
    %1622 = vmatpush1.msra.mxu0 0.0
    %1623 = vmatprep.subr.mxu0 0.0
    %1624 = vmatpush1.msra.mxu0 0.0
    %1625 = vmatprep.subr.mxu0 0.0
    %1626 = vmatpush1.msra.mxu0 0.0
    %1627 = vmatprep.subr.mxu0 0.0
    %1628 = vmatpush1.msra.mxu0 0.0
    %1629 = vmatprep.subr.mxu0 0.0
    %1630 = vmatpush1.msra.mxu0 0.0
    %1631 = vmatprep.subr.mxu0 0.0
    %1632 = vmatpush1.msra.mxu0 0.0
    %1633 = vmatprep.subr.mxu0 0.0
    %1634 = vmatpush1.msra.mxu0 0.0
    %1635 = vmatprep.subr.mxu0 0.0
    %1636 = vmatpush1.msra.mxu0 0.0
    %1637 = vmatprep.subr.mxu0 0.0
    %1638 = vmatpush1.msra.mxu0 0.0
    %1639 = vmatprep.subr.mxu0 0.0
    %1640 = vmatpush1.msra.mxu0 0.0
    %1641 = vmatprep.subr.mxu0 0.0
    %1642 = vmatpush1.msra.mxu0 0.0
    %1643 = vmatprep.subr.mxu0 0.0
    %1644 = vmatpush1.msra.mxu0 0.0
    %1645 = vmatprep.subr.mxu0 0.0
    %1646 = vmatpush1.msra.mxu0 %v1193
    %1647 = vmatprep.subr.mxu0 0.0
    %1648 = vmatpush1.msra.mxu0 %v1192
    %1649 = vmatprep.subr.mxu0 0.0
    %1650 = vmatpush1.msra.mxu0 %v1191
    %1651 = vmatprep.subr.mxu0 0.0
    %1652 = vmatpush1.msra.mxu0 %v1190
    %1653 = vmatprep.subr.mxu0 0.0
    %1654 = vmatpush2.msra.mxu0 0.0
    %1655 = vmatprep.subr.mxu0 0.0
    %1656 = vmatpush2.msra.mxu0 0.0
    %1657 = vmatprep.subr.mxu0 0.0
    %1658 = vmatpush2.msra.mxu0 0.0
    %1659 = vmatprep.subr.mxu0 0.0
    %1660 = vmatpush2.msra.mxu0 0.0
    %1661 = vmatprep.subr.mxu0 0.0
    %1662 = vmatpush2.msra.mxu0 0.0
    %1663 = vmatprep.subr.mxu0 0.0
    %1664 = vmatpush2.msra.mxu0 0.0
    %1665 = vmatprep.subr.mxu0 0.0
    %1666 = vmatpush2.msra.mxu0 0.0
    %1667 = vmatprep.subr.mxu0 0.0
    %1668 = vmatpush2.msra.mxu0 0.0
    %1669 = vmatprep.subr.mxu0 0.0
    %1670 = vmatpush2.msra.mxu0 0.0
    %1671 = vmatprep.subr.mxu0 0.0
    %1672 = vmatpush2.msra.mxu0 0.0
    %1673 = vmatprep.subr.mxu0 0.0
    %1674 = vmatpush2.msra.mxu0 0.0
    %1675 = vmatprep.subr.mxu0 0.0
    %1676 = vmatpush2.msra.mxu0 0.0
    %1677 = vmatprep.subr.mxu0 0.0
    %1678 = vmatpush2.msra.mxu0 0.0
    %1679 = vmatprep.subr.mxu0 0.0
    %1680 = vmatpush2.msra.mxu0 0.0
    %1681 = vmatprep.subr.mxu0 0.0
    %1682 = vmatpush2.msra.mxu0 0.0
    %1683 = vmatprep.subr.mxu0 0.0
    %1684 = vmatpush2.msra.mxu0 0.0
    %1685 = vmatprep.mubr.f32.mxu0 0.0
    %1686 = vmatmul.mubr.f32.gmra.mxu0 %v1541
    %v1687 = vpop.f32.mrf.mxu0
    %v1688 = vadd.f32 0.0, %v1687
    %v1689 = vpop.f32.mrf.mxu0
    %1690 = vmatprep.mubr.f32.mxu0 0.0
    %1691 = vmatmul.mubr.f32.gmra.mxu0 %v1544
    %v1692 = vpop.f32.mrf.mxu0
    %v1693 = vadd.f32 0.0, %v1692
    %v1694 = vpop.f32.mrf.mxu0
    %1695 = vdwg.mxu0
    %s1696 = scalar_lea.vmem [#allocation2], 144
    %v1697 = vld [vmem:[%s1696] sm:$0xff]
    %v1698 = vld [vmem:[%s1696 + $0x8] sm:$0xff]
    %s1699 = scalar_lea.vmem [#allocation2], 160
    %v1700 = vld [vmem:[%s1699] sm:$0xff]
    %v1701 = vld [vmem:[%s1699 + $0x8] sm:$0xff]
    %v1703 = vsel %vm243, %v1700, 0
    %v1706 = vsel %vm243, %v1701, 0
    %1708 = vmatprep.subr.mxu0 0.0
    %1709 = vmatpush1.msra.mxu0 0.0
    %1710 = vmatprep.subr.mxu0 0.0
    %1711 = vmatpush1.msra.mxu0 0.0
    %1712 = vmatprep.subr.mxu0 0.0
    %1713 = vmatpush1.msra.mxu0 0.0
    %1714 = vmatprep.subr.mxu0 0.0
    %1715 = vmatpush1.msra.mxu0 0.0
    %1716 = vmatprep.subr.mxu0 0.0
    %1717 = vmatpush1.msra.mxu0 0.0
    %1718 = vmatprep.subr.mxu0 0.0
    %1719 = vmatpush1.msra.mxu0 0.0
    %1720 = vmatprep.subr.mxu0 0.0
    %1721 = vmatpush1.msra.mxu0 0.0
    %1722 = vmatprep.subr.mxu0 0.0
    %1723 = vmatpush1.msra.mxu0 0.0
    %1724 = vmatprep.subr.mxu0 0.0
    %1725 = vmatpush1.msra.mxu0 0.0
    %1726 = vmatprep.subr.mxu0 0.0
    %1727 = vmatpush1.msra.mxu0 0.0
    %1728 = vmatprep.subr.mxu0 0.0
    %1729 = vmatpush1.msra.mxu0 0.0
    %1730 = vmatprep.subr.mxu0 0.0
    %1731 = vmatpush1.msra.mxu0 0.0
    %1732 = vmatprep.subr.mxu0 0.0
    %1733 = vmatpush1.msra.mxu0 0.0
    %1734 = vmatprep.subr.mxu0 0.0
    %1735 = vmatpush1.msra.mxu0 0.0
    %1736 = vmatprep.subr.mxu0 0.0
    %1737 = vmatpush1.msra.mxu0 %v1539
    %1738 = vmatprep.subr.mxu0 0.0
    %1739 = vmatpush1.msra.mxu0 %v1538
    %1740 = vmatprep.subr.mxu0 0.0
    %1741 = vmatpush2.msra.mxu0 0.0
    %1742 = vmatprep.subr.mxu0 0.0
    %1743 = vmatpush2.msra.mxu0 0.0
    %1744 = vmatprep.subr.mxu0 0.0
    %1745 = vmatpush2.msra.mxu0 0.0
    %1746 = vmatprep.subr.mxu0 0.0
    %1747 = vmatpush2.msra.mxu0 0.0
    %1748 = vmatprep.subr.mxu0 0.0
    %1749 = vmatpush2.msra.mxu0 0.0
    %1750 = vmatprep.subr.mxu0 0.0
    %1751 = vmatpush2.msra.mxu0 0.0
    %1752 = vmatprep.subr.mxu0 0.0
    %1753 = vmatpush2.msra.mxu0 0.0
    %1754 = vmatprep.subr.mxu0 0.0
    %1755 = vmatpush2.msra.mxu0 0.0
    %1756 = vmatprep.subr.mxu0 0.0
    %1757 = vmatpush2.msra.mxu0 0.0
    %1758 = vmatprep.subr.mxu0 0.0
    %1759 = vmatpush2.msra.mxu0 0.0
    %1760 = vmatprep.subr.mxu0 0.0
    %1761 = vmatpush2.msra.mxu0 0.0
    %1762 = vmatprep.subr.mxu0 0.0
    %1763 = vmatpush2.msra.mxu0 0.0
    %1764 = vmatprep.subr.mxu0 0.0
    %1765 = vmatpush2.msra.mxu0 0.0
    %1766 = vmatprep.subr.mxu0 0.0
    %1767 = vmatpush2.msra.mxu0 0.0
    %1768 = vmatprep.subr.mxu0 0.0
    %1769 = vmatpush2.msra.mxu0 0.0
    %1770 = vmatprep.subr.mxu0 0.0
    %1771 = vmatpush2.msra.mxu0 0.0
    %1772 = vmatprep.mubr.f32.mxu0 0.0
    %1773 = vmatmul.mubr.f32.gmra.mxu0 %v1703
    %v1774 = vpop.f32.mrf.mxu0
    %v1775 = vadd.f32 0.0, %v1774
    %v1776 = vpop.f32.mrf.mxu0
    %1777 = vmatprep.mubr.f32.mxu0 0.0
    %1778 = vmatmul.mubr.f32.gmra.mxu0 %v1706
    %v1779 = vpop.f32.mrf.mxu0
    %v1780 = vadd.f32 0.0, %v1779
    %v1781 = vpop.f32.mrf.mxu0
    %1782 = vdwg.mxu0
    %v1784 = vsel %vm243, %v1697, 0
    %v1787 = vsel %vm243, %v1698, 0
    %1789 = vmatprep.subr.mxu0 0.0
    %1790 = vmatpush1.msra.mxu0 0.0
    %1791 = vmatprep.subr.mxu0 0.0
    %1792 = vmatpush1.msra.mxu0 0.0
    %1793 = vmatprep.subr.mxu0 0.0
    %1794 = vmatpush1.msra.mxu0 0.0
    %1795 = vmatprep.subr.mxu0 0.0
    %1796 = vmatpush1.msra.mxu0 0.0
    %1797 = vmatprep.subr.mxu0 0.0
    %1798 = vmatpush1.msra.mxu0 0.0
    %1799 = vmatprep.subr.mxu0 0.0
    %1800 = vmatpush1.msra.mxu0 0.0
    %1801 = vmatprep.subr.mxu0 0.0
    %1802 = vmatpush1.msra.mxu0 0.0
    %1803 = vmatprep.subr.mxu0 0.0
    %1804 = vmatpush1.msra.mxu0 0.0
    %1805 = vmatprep.subr.mxu0 0.0
    %1806 = vmatpush1.msra.mxu0 0.0
    %1807 = vmatprep.subr.mxu0 0.0
    %1808 = vmatpush1.msra.mxu0 0.0
    %1809 = vmatprep.subr.mxu0 0.0
    %1810 = vmatpush1.msra.mxu0 0.0
    %1811 = vmatprep.subr.mxu0 0.0
    %1812 = vmatpush1.msra.mxu0 0.0
    %1813 = vmatprep.subr.mxu0 0.0
    %1814 = vmatpush1.msra.mxu0 0.0
    %1815 = vmatprep.subr.mxu0 0.0
    %1816 = vmatpush1.msra.mxu0 0.0
    %1817 = vmatprep.subr.mxu0 0.0
    %1818 = vmatpush1.msra.mxu0 %v1618
    %1819 = vmatprep.subr.mxu0 0.0
    %1820 = vmatpush1.msra.mxu0 %v1613
    %1821 = vmatprep.subr.mxu0 0.0
    %1822 = vmatpush2.msra.mxu0 0.0
    %1823 = vmatprep.subr.mxu0 0.0
    %1824 = vmatpush2.msra.mxu0 0.0
    %1825 = vmatprep.subr.mxu0 0.0
    %1826 = vmatpush2.msra.mxu0 0.0
    %1827 = vmatprep.subr.mxu0 0.0
    %1828 = vmatpush2.msra.mxu0 0.0
    %1829 = vmatprep.subr.mxu0 0.0
    %1830 = vmatpush2.msra.mxu0 0.0
    %1831 = vmatprep.subr.mxu0 0.0
    %1832 = vmatpush2.msra.mxu0 0.0
    %1833 = vmatprep.subr.mxu0 0.0
    %1834 = vmatpush2.msra.mxu0 0.0
    %1835 = vmatprep.subr.mxu0 0.0
    %1836 = vmatpush2.msra.mxu0 0.0
    %1837 = vmatprep.subr.mxu0 0.0
    %1838 = vmatpush2.msra.mxu0 0.0
    %1839 = vmatprep.subr.mxu0 0.0
    %1840 = vmatpush2.msra.mxu0 0.0
    %1841 = vmatprep.subr.mxu0 0.0
    %1842 = vmatpush2.msra.mxu0 0.0
    %1843 = vmatprep.subr.mxu0 0.0
    %1844 = vmatpush2.msra.mxu0 0.0
    %1845 = vmatprep.subr.mxu0 0.0
    %1846 = vmatpush2.msra.mxu0 0.0
    %1847 = vmatprep.subr.mxu0 0.0
    %1848 = vmatpush2.msra.mxu0 0.0
    %1849 = vmatprep.subr.mxu0 0.0
    %1850 = vmatpush2.msra.mxu0 0.0
    %1851 = vmatprep.subr.mxu0 0.0
    %1852 = vmatpush2.msra.mxu0 0.0
    %1853 = vmatprep.mubr.f32.mxu0 0.0
    %1854 = vmatmul.mubr.f32.gmra.mxu0 %v1784
    %v1855 = vpop.f32.mrf.mxu0
    %v1856 = vadd.f32 %v1775, %v1855
    %v1857 = vpop.f32.mrf.mxu0
    %1858 = vmatprep.mubr.f32.mxu0 0.0
    %1859 = vmatmul.mubr.f32.gmra.mxu0 %v1787
    %v1860 = vpop.f32.mrf.mxu0
    %v1861 = vadd.f32 %v1780, %v1860
    %v1862 = vpop.f32.mrf.mxu0
    %1863 = vdwg.mxu0
    %s1864 = scalar_lea.vmem [#allocation2], 176
    %v1865 = vld [vmem:[%s1864] sm:$0xff]
    %v1866 = vld [vmem:[%s1864 + $0x8] sm:$0xff]
    %v1868 = vsel %vm243, %v1865, 0
    %v1871 = vsel %vm243, %v1866, 0
    %1873 = vmatprep.subr.mxu0 0.0
    %1874 = vmatpush1.msra.mxu0 0.0
    %1875 = vmatprep.subr.mxu0 0.0
    %1876 = vmatpush1.msra.mxu0 0.0
    %1877 = vmatprep.subr.mxu0 0.0
    %1878 = vmatpush1.msra.mxu0 0.0
    %1879 = vmatprep.subr.mxu0 0.0
    %1880 = vmatpush1.msra.mxu0 0.0
    %1881 = vmatprep.subr.mxu0 0.0
    %1882 = vmatpush1.msra.mxu0 0.0
    %1883 = vmatprep.subr.mxu0 0.0
    %1884 = vmatpush1.msra.mxu0 0.0
    %1885 = vmatprep.subr.mxu0 0.0
    %1886 = vmatpush1.msra.mxu0 0.0
    %1887 = vmatprep.subr.mxu0 0.0
    %1888 = vmatpush1.msra.mxu0 0.0
    %1889 = vmatprep.subr.mxu0 0.0
    %1890 = vmatpush1.msra.mxu0 0.0
    %1891 = vmatprep.subr.mxu0 0.0
    %1892 = vmatpush1.msra.mxu0 0.0
    %1893 = vmatprep.subr.mxu0 0.0
    %1894 = vmatpush1.msra.mxu0 0.0
    %1895 = vmatprep.subr.mxu0 0.0
    %1896 = vmatpush1.msra.mxu0 0.0
    %1897 = vmatprep.subr.mxu0 0.0
    %1898 = vmatpush1.msra.mxu0 0.0
    %1899 = vmatprep.subr.mxu0 0.0
    %1900 = vmatpush1.msra.mxu0 0.0
    %1901 = vmatprep.subr.mxu0 0.0
    %1902 = vmatpush1.msra.mxu0 %v1693
    %1903 = vmatprep.subr.mxu0 0.0
    %1904 = vmatpush1.msra.mxu0 %v1688
    %1905 = vmatprep.subr.mxu0 0.0
    %1906 = vmatpush2.msra.mxu0 0.0
    %1907 = vmatprep.subr.mxu0 0.0
    %1908 = vmatpush2.msra.mxu0 0.0
    %1909 = vmatprep.subr.mxu0 0.0
    %1910 = vmatpush2.msra.mxu0 0.0
    %1911 = vmatprep.subr.mxu0 0.0
    %1912 = vmatpush2.msra.mxu0 0.0
    %1913 = vmatprep.subr.mxu0 0.0
    %1914 = vmatpush2.msra.mxu0 0.0
    %1915 = vmatprep.subr.mxu0 0.0
    %1916 = vmatpush2.msra.mxu0 0.0
    %1917 = vmatprep.subr.mxu0 0.0
    %1918 = vmatpush2.msra.mxu0 0.0
    %1919 = vmatprep.subr.mxu0 0.0
    %1920 = vmatpush2.msra.mxu0 0.0
    %1921 = vmatprep.subr.mxu0 0.0
    %1922 = vmatpush2.msra.mxu0 0.0
    %1923 = vmatprep.subr.mxu0 0.0
    %1924 = vmatpush2.msra.mxu0 0.0
    %1925 = vmatprep.subr.mxu0 0.0
    %1926 = vmatpush2.msra.mxu0 0.0
    %1927 = vmatprep.subr.mxu0 0.0
    %1928 = vmatpush2.msra.mxu0 0.0
    %1929 = vmatprep.subr.mxu0 0.0
    %1930 = vmatpush2.msra.mxu0 0.0
    %1931 = vmatprep.subr.mxu0 0.0
    %1932 = vmatpush2.msra.mxu0 0.0
    %1933 = vmatprep.subr.mxu0 0.0
    %1934 = vmatpush2.msra.mxu0 0.0
    %1935 = vmatprep.subr.mxu0 0.0
    %1936 = vmatpush2.msra.mxu0 0.0
    %1937 = vmatprep.mubr.f32.mxu0 0.0
    %1938 = vmatmul.mubr.f32.gmra.mxu0 %v1868
    %v1939 = vpop.f32.mrf.mxu0
    %v1940 = vadd.f32 0.0, %v1939
    %v1941 = vpop.f32.mrf.mxu0
    %1942 = vmatprep.mubr.f32.mxu0 0.0
    %1943 = vmatmul.mubr.f32.gmra.mxu0 %v1871
    %v1944 = vpop.f32.mrf.mxu0
    %v1945 = vadd.f32 0.0, %v1944
    %v1946 = vpop.f32.mrf.mxu0
    %1947 = vdwg.mxu0
    %v1948 = vadd.f32 %v1856, %v1940
    %v1949 = vadd.f32 %v1861, %v1945
    %s1950 = scalar_lea.vmem [#allocation4], 48
    %v1951 = vld [vmem:[%s1950] sm:$0xff]
    %v1952 = vld [vmem:[%s1950 + $0x8] sm:$0xff]
    %1954 = vset.pattern.permute.xlu0 0
    %1955 = vperm.xlu0 %1954, %v1951
    %v1956 = vpop.permute.xlu0 %1955
    %1959 = vset.pattern.permute.xlu0 0
    %1960 = vperm.xlu0 %1959, %v1952
    %v1961 = vpop.permute.xlu0 %1960
    %v1963 = vadd.f32 %v1948, %v1956
    %v1964 = vadd.f32 %v1949, %v1961
    %v1965 = vmax.f32 %v1963, 0.0
    %v1966 = vmax.f32 %v1964, 0.0
    %s1967 = scalar_lea.vmem [#allocation6], 256
    %v1968 = vld [vmem:[%s1967] sm:$0xff]
    %v1969 = vld [vmem:[%s1967 + $0x8] sm:$0xff]
    %v1970 = vld [vmem:[%s1967 + $0x10] sm:$0xff]
    %v1971 = vld [vmem:[%s1967 + $0x18] sm:$0xff]
    %v1973 = vsel %vm76, %v1965, 0
    %v1976 = vsel %vm76, %v1966, 0
    %1978 = vmatprep.subr.mxu0 0.0
    %1979 = vmatpush1.msra.mxu0 0.0
    %1980 = vmatprep.subr.mxu0 0.0
    %1981 = vmatpush1.msra.mxu0 0.0
    %1982 = vmatprep.subr.mxu0 0.0
    %1983 = vmatpush1.msra.mxu0 0.0
    %1984 = vmatprep.subr.mxu0 0.0
    %1985 = vmatpush1.msra.mxu0 0.0
    %1986 = vmatprep.subr.mxu0 0.0
    %1987 = vmatpush1.msra.mxu0 0.0
    %1988 = vmatprep.subr.mxu0 0.0
    %1989 = vmatpush1.msra.mxu0 0.0
    %1990 = vmatprep.subr.mxu0 0.0
    %1991 = vmatpush1.msra.mxu0 0.0
    %1992 = vmatprep.subr.mxu0 0.0
    %1993 = vmatpush1.msra.mxu0 0.0
    %1994 = vmatprep.subr.mxu0 0.0
    %1995 = vmatpush1.msra.mxu0 0.0
    %1996 = vmatprep.subr.mxu0 0.0
    %1997 = vmatpush1.msra.mxu0 0.0
    %1998 = vmatprep.subr.mxu0 0.0
    %1999 = vmatpush1.msra.mxu0 0.0
    %2000 = vmatprep.subr.mxu0 0.0
    %2001 = vmatpush1.msra.mxu0 0.0
    %2002 = vmatprep.subr.mxu0 0.0
    %2003 = vmatpush1.msra.mxu0 %v1971
    %2004 = vmatprep.subr.mxu0 0.0
    %2005 = vmatpush1.msra.mxu0 %v1970
    %2006 = vmatprep.subr.mxu0 0.0
    %2007 = vmatpush1.msra.mxu0 %v1969
    %2008 = vmatprep.subr.mxu0 0.0
    %2009 = vmatpush1.msra.mxu0 %v1968
    %2010 = vmatprep.subr.mxu0 0.0
    %2011 = vmatpush2.msra.mxu0 0.0
    %2012 = vmatprep.subr.mxu0 0.0
    %2013 = vmatpush2.msra.mxu0 0.0
    %2014 = vmatprep.subr.mxu0 0.0
    %2015 = vmatpush2.msra.mxu0 0.0
    %2016 = vmatprep.subr.mxu0 0.0
    %2017 = vmatpush2.msra.mxu0 0.0
    %2018 = vmatprep.subr.mxu0 0.0
    %2019 = vmatpush2.msra.mxu0 0.0
    %2020 = vmatprep.subr.mxu0 0.0
    %2021 = vmatpush2.msra.mxu0 0.0
    %2022 = vmatprep.subr.mxu0 0.0
    %2023 = vmatpush2.msra.mxu0 0.0
    %2024 = vmatprep.subr.mxu0 0.0
    %2025 = vmatpush2.msra.mxu0 0.0
    %2026 = vmatprep.subr.mxu0 0.0
    %2027 = vmatpush2.msra.mxu0 0.0
    %2028 = vmatprep.subr.mxu0 0.0
    %2029 = vmatpush2.msra.mxu0 0.0
    %2030 = vmatprep.subr.mxu0 0.0
    %2031 = vmatpush2.msra.mxu0 0.0
    %2032 = vmatprep.subr.mxu0 0.0
    %2033 = vmatpush2.msra.mxu0 0.0
    %2034 = vmatprep.subr.mxu0 0.0
    %2035 = vmatpush2.msra.mxu0 0.0
    %2036 = vmatprep.subr.mxu0 0.0
    %2037 = vmatpush2.msra.mxu0 0.0
    %2038 = vmatprep.subr.mxu0 0.0
    %2039 = vmatpush2.msra.mxu0 0.0
    %2040 = vmatprep.subr.mxu0 0.0
    %2041 = vmatpush2.msra.mxu0 0.0
    %2042 = vmatprep.mubr.f32.mxu0 0.0
    %2043 = vmatmul.mubr.f32.gmra.mxu0 %v1973
    %v2044 = vpop.f32.mrf.mxu0
    %v2045 = vadd.f32 0.0, %v2044
    %v2046 = vpop.f32.mrf.mxu0
    %2047 = vmatprep.mubr.f32.mxu0 0.0
    %2048 = vmatmul.mubr.f32.gmra.mxu0 %v1976
    %v2049 = vpop.f32.mrf.mxu0
    %v2050 = vadd.f32 0.0, %v2049
    %v2051 = vpop.f32.mrf.mxu0
    %2052 = vdwg.mxu0
    %s2053 = scalar_lea.vmem [#allocation6], 288
    %v2054 = vld [vmem:[%s2053] sm:$0xff]
    %v2055 = vld [vmem:[%s2053 + $0x8] sm:$0xff]
    %v2056 = vld [vmem:[%s2053 + $0x10] sm:$0xff]
    %v2057 = vld [vmem:[%s2053 + $0x18] sm:$0xff]
    %2058 = vmatprep.subr.mxu0 0.0
    %2059 = vmatpush1.msra.mxu0 0.0
    %2060 = vmatprep.subr.mxu0 0.0
    %2061 = vmatpush1.msra.mxu0 0.0
    %2062 = vmatprep.subr.mxu0 0.0
    %2063 = vmatpush1.msra.mxu0 0.0
    %2064 = vmatprep.subr.mxu0 0.0
    %2065 = vmatpush1.msra.mxu0 0.0
    %2066 = vmatprep.subr.mxu0 0.0
    %2067 = vmatpush1.msra.mxu0 0.0
    %2068 = vmatprep.subr.mxu0 0.0
    %2069 = vmatpush1.msra.mxu0 0.0
    %2070 = vmatprep.subr.mxu0 0.0
    %2071 = vmatpush1.msra.mxu0 0.0
    %2072 = vmatprep.subr.mxu0 0.0
    %2073 = vmatpush1.msra.mxu0 0.0
    %2074 = vmatprep.subr.mxu0 0.0
    %2075 = vmatpush1.msra.mxu0 0.0
    %2076 = vmatprep.subr.mxu0 0.0
    %2077 = vmatpush1.msra.mxu0 0.0
    %2078 = vmatprep.subr.mxu0 0.0
    %2079 = vmatpush1.msra.mxu0 0.0
    %2080 = vmatprep.subr.mxu0 0.0
    %2081 = vmatpush1.msra.mxu0 0.0
    %2082 = vmatprep.subr.mxu0 0.0
    %2083 = vmatpush1.msra.mxu0 %v2057
    %2084 = vmatprep.subr.mxu0 0.0
    %2085 = vmatpush1.msra.mxu0 %v2056
    %2086 = vmatprep.subr.mxu0 0.0
    %2087 = vmatpush1.msra.mxu0 %v2055
    %2088 = vmatprep.subr.mxu0 0.0
    %2089 = vmatpush1.msra.mxu0 %v2054
    %2090 = vmatprep.subr.mxu0 0.0
    %2091 = vmatpush2.msra.mxu0 0.0
    %2092 = vmatprep.subr.mxu0 0.0
    %2093 = vmatpush2.msra.mxu0 0.0
    %2094 = vmatprep.subr.mxu0 0.0
    %2095 = vmatpush2.msra.mxu0 0.0
    %2096 = vmatprep.subr.mxu0 0.0
    %2097 = vmatpush2.msra.mxu0 0.0
    %2098 = vmatprep.subr.mxu0 0.0
    %2099 = vmatpush2.msra.mxu0 0.0
    %2100 = vmatprep.subr.mxu0 0.0
    %2101 = vmatpush2.msra.mxu0 0.0
    %2102 = vmatprep.subr.mxu0 0.0
    %2103 = vmatpush2.msra.mxu0 0.0
    %2104 = vmatprep.subr.mxu0 0.0
    %2105 = vmatpush2.msra.mxu0 0.0
    %2106 = vmatprep.subr.mxu0 0.0
    %2107 = vmatpush2.msra.mxu0 0.0
    %2108 = vmatprep.subr.mxu0 0.0
    %2109 = vmatpush2.msra.mxu0 0.0
    %2110 = vmatprep.subr.mxu0 0.0
    %2111 = vmatpush2.msra.mxu0 0.0
    %2112 = vmatprep.subr.mxu0 0.0
    %2113 = vmatpush2.msra.mxu0 0.0
    %2114 = vmatprep.subr.mxu0 0.0
    %2115 = vmatpush2.msra.mxu0 0.0
    %2116 = vmatprep.subr.mxu0 0.0
    %2117 = vmatpush2.msra.mxu0 0.0
    %2118 = vmatprep.subr.mxu0 0.0
    %2119 = vmatpush2.msra.mxu0 0.0
    %2120 = vmatprep.subr.mxu0 0.0
    %2121 = vmatpush2.msra.mxu0 0.0
    %2122 = vmatprep.mubr.f32.mxu0 0.0
    %2123 = vmatmul.mubr.f32.gmra.mxu0 %v1973
    %v2124 = vpop.f32.mrf.mxu0
    %v2125 = vadd.f32 0.0, %v2124
    %v2126 = vpop.f32.mrf.mxu0
    %2127 = vmatprep.mubr.f32.mxu0 0.0
    %2128 = vmatmul.mubr.f32.gmra.mxu0 %v1976
    %v2129 = vpop.f32.mrf.mxu0
    %v2130 = vadd.f32 0.0, %v2129
    %v2131 = vpop.f32.mrf.mxu0
    %2132 = vdwg.mxu0
    %v2133 = vmax.f32 %v2045, %v2125
    %v2134 = vmax.f32 %v2050, %v2130
    %s2135 = scalar_lea.vmem [#allocation6], 128
    %v2136 = vld [vmem:[%s2135] sm:$0xff]
    %v2137 = vld [vmem:[%s2135 + $0x8] sm:$0xff]
    %v2138 = vld [vmem:[%s2135 + $0x10] sm:$0xff]
    %v2139 = vld [vmem:[%s2135 + $0x18] sm:$0xff]
    %v2141 = vsel %vm76, %v2133, 0
    %v2144 = vsel %vm76, %v2134, 0
    %2146 = vmatprep.subr.mxu0 0.0
    %2147 = vmatpush1.msra.mxu0 0.0
    %2148 = vmatprep.subr.mxu0 0.0
    %2149 = vmatpush1.msra.mxu0 0.0
    %2150 = vmatprep.subr.mxu0 0.0
    %2151 = vmatpush1.msra.mxu0 0.0
    %2152 = vmatprep.subr.mxu0 0.0
    %2153 = vmatpush1.msra.mxu0 0.0
    %2154 = vmatprep.subr.mxu0 0.0
    %2155 = vmatpush1.msra.mxu0 0.0
    %2156 = vmatprep.subr.mxu0 0.0
    %2157 = vmatpush1.msra.mxu0 0.0
    %2158 = vmatprep.subr.mxu0 0.0
    %2159 = vmatpush1.msra.mxu0 0.0
    %2160 = vmatprep.subr.mxu0 0.0
    %2161 = vmatpush1.msra.mxu0 0.0
    %2162 = vmatprep.subr.mxu0 0.0
    %2163 = vmatpush1.msra.mxu0 0.0
    %2164 = vmatprep.subr.mxu0 0.0
    %2165 = vmatpush1.msra.mxu0 0.0
    %2166 = vmatprep.subr.mxu0 0.0
    %2167 = vmatpush1.msra.mxu0 0.0
    %2168 = vmatprep.subr.mxu0 0.0
    %2169 = vmatpush1.msra.mxu0 0.0
    %2170 = vmatprep.subr.mxu0 0.0
    %2171 = vmatpush1.msra.mxu0 %v2139
    %2172 = vmatprep.subr.mxu0 0.0
    %2173 = vmatpush1.msra.mxu0 %v2138
    %2174 = vmatprep.subr.mxu0 0.0
    %2175 = vmatpush1.msra.mxu0 %v2137
    %2176 = vmatprep.subr.mxu0 0.0
    %2177 = vmatpush1.msra.mxu0 %v2136
    %2178 = vmatprep.subr.mxu0 0.0
    %2179 = vmatpush2.msra.mxu0 0.0
    %2180 = vmatprep.subr.mxu0 0.0
    %2181 = vmatpush2.msra.mxu0 0.0
    %2182 = vmatprep.subr.mxu0 0.0
    %2183 = vmatpush2.msra.mxu0 0.0
    %2184 = vmatprep.subr.mxu0 0.0
    %2185 = vmatpush2.msra.mxu0 0.0
    %2186 = vmatprep.subr.mxu0 0.0
    %2187 = vmatpush2.msra.mxu0 0.0
    %2188 = vmatprep.subr.mxu0 0.0
    %2189 = vmatpush2.msra.mxu0 0.0
    %2190 = vmatprep.subr.mxu0 0.0
    %2191 = vmatpush2.msra.mxu0 0.0
    %2192 = vmatprep.subr.mxu0 0.0
    %2193 = vmatpush2.msra.mxu0 0.0
    %2194 = vmatprep.subr.mxu0 0.0
    %2195 = vmatpush2.msra.mxu0 0.0
    %2196 = vmatprep.subr.mxu0 0.0
    %2197 = vmatpush2.msra.mxu0 0.0
    %2198 = vmatprep.subr.mxu0 0.0
    %2199 = vmatpush2.msra.mxu0 0.0
    %2200 = vmatprep.subr.mxu0 0.0
    %2201 = vmatpush2.msra.mxu0 0.0
    %2202 = vmatprep.subr.mxu0 0.0
    %2203 = vmatpush2.msra.mxu0 0.0
    %2204 = vmatprep.subr.mxu0 0.0
    %2205 = vmatpush2.msra.mxu0 0.0
    %2206 = vmatprep.subr.mxu0 0.0
    %2207 = vmatpush2.msra.mxu0 0.0
    %2208 = vmatprep.subr.mxu0 0.0
    %2209 = vmatpush2.msra.mxu0 0.0
    %2210 = vmatprep.mubr.f32.mxu0 0.0
    %2211 = vmatmul.mubr.f32.gmra.mxu0 %v2141
    %v2212 = vpop.f32.mrf.mxu0
    %v2213 = vadd.f32 0.0, %v2212
    %v2214 = vpop.f32.mrf.mxu0
    %2215 = vmatprep.mubr.f32.mxu0 0.0
    %2216 = vmatmul.mubr.f32.gmra.mxu0 %v2144
    %v2217 = vpop.f32.mrf.mxu0
    %v2218 = vadd.f32 0.0, %v2217
    %v2219 = vpop.f32.mrf.mxu0
    %2220 = vdwg.mxu0
    %s2221 = scalar_lea.vmem [#allocation6], 160
    %v2222 = vld [vmem:[%s2221] sm:$0xff]
    %v2223 = vld [vmem:[%s2221 + $0x8] sm:$0xff]
    %v2224 = vld [vmem:[%s2221 + $0x10] sm:$0xff]
    %v2225 = vld [vmem:[%s2221 + $0x18] sm:$0xff]
    %2226 = vmatprep.subr.mxu0 0.0
    %2227 = vmatpush1.msra.mxu0 0.0
    %2228 = vmatprep.subr.mxu0 0.0
    %2229 = vmatpush1.msra.mxu0 0.0
    %2230 = vmatprep.subr.mxu0 0.0
    %2231 = vmatpush1.msra.mxu0 0.0
    %2232 = vmatprep.subr.mxu0 0.0
    %2233 = vmatpush1.msra.mxu0 0.0
    %2234 = vmatprep.subr.mxu0 0.0
    %2235 = vmatpush1.msra.mxu0 0.0
    %2236 = vmatprep.subr.mxu0 0.0
    %2237 = vmatpush1.msra.mxu0 0.0
    %2238 = vmatprep.subr.mxu0 0.0
    %2239 = vmatpush1.msra.mxu0 0.0
    %2240 = vmatprep.subr.mxu0 0.0
    %2241 = vmatpush1.msra.mxu0 0.0
    %2242 = vmatprep.subr.mxu0 0.0
    %2243 = vmatpush1.msra.mxu0 0.0
    %2244 = vmatprep.subr.mxu0 0.0
    %2245 = vmatpush1.msra.mxu0 0.0
    %2246 = vmatprep.subr.mxu0 0.0
    %2247 = vmatpush1.msra.mxu0 0.0
    %2248 = vmatprep.subr.mxu0 0.0
    %2249 = vmatpush1.msra.mxu0 0.0
    %2250 = vmatprep.subr.mxu0 0.0
    %2251 = vmatpush1.msra.mxu0 %v2225
    %2252 = vmatprep.subr.mxu0 0.0
    %2253 = vmatpush1.msra.mxu0 %v2224
    %2254 = vmatprep.subr.mxu0 0.0
    %2255 = vmatpush1.msra.mxu0 %v2223
    %2256 = vmatprep.subr.mxu0 0.0
    %2257 = vmatpush1.msra.mxu0 %v2222
    %2258 = vmatprep.subr.mxu0 0.0
    %2259 = vmatpush2.msra.mxu0 0.0
    %2260 = vmatprep.subr.mxu0 0.0
    %2261 = vmatpush2.msra.mxu0 0.0
    %2262 = vmatprep.subr.mxu0 0.0
    %2263 = vmatpush2.msra.mxu0 0.0
    %2264 = vmatprep.subr.mxu0 0.0
    %2265 = vmatpush2.msra.mxu0 0.0
    %2266 = vmatprep.subr.mxu0 0.0
    %2267 = vmatpush2.msra.mxu0 0.0
    %2268 = vmatprep.subr.mxu0 0.0
    %2269 = vmatpush2.msra.mxu0 0.0
    %2270 = vmatprep.subr.mxu0 0.0
    %2271 = vmatpush2.msra.mxu0 0.0
    %2272 = vmatprep.subr.mxu0 0.0
    %2273 = vmatpush2.msra.mxu0 0.0
    %2274 = vmatprep.subr.mxu0 0.0
    %2275 = vmatpush2.msra.mxu0 0.0
    %2276 = vmatprep.subr.mxu0 0.0
    %2277 = vmatpush2.msra.mxu0 0.0
    %2278 = vmatprep.subr.mxu0 0.0
    %2279 = vmatpush2.msra.mxu0 0.0
    %2280 = vmatprep.subr.mxu0 0.0
    %2281 = vmatpush2.msra.mxu0 0.0
    %2282 = vmatprep.subr.mxu0 0.0
    %2283 = vmatpush2.msra.mxu0 0.0
    %2284 = vmatprep.subr.mxu0 0.0
    %2285 = vmatpush2.msra.mxu0 0.0
    %2286 = vmatprep.subr.mxu0 0.0
    %2287 = vmatpush2.msra.mxu0 0.0
    %2288 = vmatprep.subr.mxu0 0.0
    %2289 = vmatpush2.msra.mxu0 0.0
    %2290 = vmatprep.mubr.f32.mxu0 0.0
    %2291 = vmatmul.mubr.f32.gmra.mxu0 %v2141
    %v2292 = vpop.f32.mrf.mxu0
    %v2293 = vadd.f32 0.0, %v2292
    %v2294 = vpop.f32.mrf.mxu0
    %2295 = vmatprep.mubr.f32.mxu0 0.0
    %2296 = vmatmul.mubr.f32.gmra.mxu0 %v2144
    %v2297 = vpop.f32.mrf.mxu0
    %v2298 = vadd.f32 0.0, %v2297
    %v2299 = vpop.f32.mrf.mxu0
    %2300 = vdwg.mxu0
    %s2301 = scalar_lea.vmem [#allocation2], 192
    %v2302 = vld [vmem:[%s2301] sm:$0xff]
    %v2303 = vld [vmem:[%s2301 + $0x8] sm:$0xff]
    %s2304 = scalar_lea.vmem [#allocation2], 208
    %v2305 = vld [vmem:[%s2304] sm:$0xff]
    %v2306 = vld [vmem:[%s2304 + $0x8] sm:$0xff]
    %v2308 = vsel %vm243, %v2305, 0
    %v2311 = vsel %vm243, %v2306, 0
    %2313 = vmatprep.subr.mxu0 0.0
    %2314 = vmatpush1.msra.mxu0 0.0
    %2315 = vmatprep.subr.mxu0 0.0
    %2316 = vmatpush1.msra.mxu0 0.0
    %2317 = vmatprep.subr.mxu0 0.0
    %2318 = vmatpush1.msra.mxu0 0.0
    %2319 = vmatprep.subr.mxu0 0.0
    %2320 = vmatpush1.msra.mxu0 0.0
    %2321 = vmatprep.subr.mxu0 0.0
    %2322 = vmatpush1.msra.mxu0 0.0
    %2323 = vmatprep.subr.mxu0 0.0
    %2324 = vmatpush1.msra.mxu0 0.0
    %2325 = vmatprep.subr.mxu0 0.0
    %2326 = vmatpush1.msra.mxu0 0.0
    %2327 = vmatprep.subr.mxu0 0.0
    %2328 = vmatpush1.msra.mxu0 0.0
    %2329 = vmatprep.subr.mxu0 0.0
    %2330 = vmatpush1.msra.mxu0 0.0
    %2331 = vmatprep.subr.mxu0 0.0
    %2332 = vmatpush1.msra.mxu0 0.0
    %2333 = vmatprep.subr.mxu0 0.0
    %2334 = vmatpush1.msra.mxu0 0.0
    %2335 = vmatprep.subr.mxu0 0.0
    %2336 = vmatpush1.msra.mxu0 0.0
    %2337 = vmatprep.subr.mxu0 0.0
    %2338 = vmatpush1.msra.mxu0 0.0
    %2339 = vmatprep.subr.mxu0 0.0
    %2340 = vmatpush1.msra.mxu0 0.0
    %2341 = vmatprep.subr.mxu0 0.0
    %2342 = vmatpush1.msra.mxu0 %v2134
    %2343 = vmatprep.subr.mxu0 0.0
    %2344 = vmatpush1.msra.mxu0 %v2133
    %2345 = vmatprep.subr.mxu0 0.0
    %2346 = vmatpush2.msra.mxu0 0.0
    %2347 = vmatprep.subr.mxu0 0.0
    %2348 = vmatpush2.msra.mxu0 0.0
    %2349 = vmatprep.subr.mxu0 0.0
    %2350 = vmatpush2.msra.mxu0 0.0
    %2351 = vmatprep.subr.mxu0 0.0
    %2352 = vmatpush2.msra.mxu0 0.0
    %2353 = vmatprep.subr.mxu0 0.0
    %2354 = vmatpush2.msra.mxu0 0.0
    %2355 = vmatprep.subr.mxu0 0.0
    %2356 = vmatpush2.msra.mxu0 0.0
    %2357 = vmatprep.subr.mxu0 0.0
    %2358 = vmatpush2.msra.mxu0 0.0
    %2359 = vmatprep.subr.mxu0 0.0
    %2360 = vmatpush2.msra.mxu0 0.0
    %2361 = vmatprep.subr.mxu0 0.0
    %2362 = vmatpush2.msra.mxu0 0.0
    %2363 = vmatprep.subr.mxu0 0.0
    %2364 = vmatpush2.msra.mxu0 0.0
    %2365 = vmatprep.subr.mxu0 0.0
    %2366 = vmatpush2.msra.mxu0 0.0
    %2367 = vmatprep.subr.mxu0 0.0
    %2368 = vmatpush2.msra.mxu0 0.0
    %2369 = vmatprep.subr.mxu0 0.0
    %2370 = vmatpush2.msra.mxu0 0.0
    %2371 = vmatprep.subr.mxu0 0.0
    %2372 = vmatpush2.msra.mxu0 0.0
    %2373 = vmatprep.subr.mxu0 0.0
    %2374 = vmatpush2.msra.mxu0 0.0
    %2375 = vmatprep.subr.mxu0 0.0
    %2376 = vmatpush2.msra.mxu0 0.0
    %2377 = vmatprep.mubr.f32.mxu0 0.0
    %2378 = vmatmul.mubr.f32.gmra.mxu0 %v2308
    %v2379 = vpop.f32.mrf.mxu0
    %v2380 = vadd.f32 0.0, %v2379
    %v2381 = vpop.f32.mrf.mxu0
    %2382 = vmatprep.mubr.f32.mxu0 0.0
    %2383 = vmatmul.mubr.f32.gmra.mxu0 %v2311
    %v2384 = vpop.f32.mrf.mxu0
    %v2385 = vadd.f32 0.0, %v2384
    %v2386 = vpop.f32.mrf.mxu0
    %2387 = vdwg.mxu0
    %v2389 = vsel %vm243, %v2302, 0
    %v2392 = vsel %vm243, %v2303, 0
    %2394 = vmatprep.subr.mxu0 0.0
    %2395 = vmatpush1.msra.mxu0 0.0
    %2396 = vmatprep.subr.mxu0 0.0
    %2397 = vmatpush1.msra.mxu0 0.0
    %2398 = vmatprep.subr.mxu0 0.0
    %2399 = vmatpush1.msra.mxu0 0.0
    %2400 = vmatprep.subr.mxu0 0.0
    %2401 = vmatpush1.msra.mxu0 0.0
    %2402 = vmatprep.subr.mxu0 0.0
    %2403 = vmatpush1.msra.mxu0 0.0
    %2404 = vmatprep.subr.mxu0 0.0
    %2405 = vmatpush1.msra.mxu0 0.0
    %2406 = vmatprep.subr.mxu0 0.0
    %2407 = vmatpush1.msra.mxu0 0.0
    %2408 = vmatprep.subr.mxu0 0.0
    %2409 = vmatpush1.msra.mxu0 0.0
    %2410 = vmatprep.subr.mxu0 0.0
    %2411 = vmatpush1.msra.mxu0 0.0
    %2412 = vmatprep.subr.mxu0 0.0
    %2413 = vmatpush1.msra.mxu0 0.0
    %2414 = vmatprep.subr.mxu0 0.0
    %2415 = vmatpush1.msra.mxu0 0.0
    %2416 = vmatprep.subr.mxu0 0.0
    %2417 = vmatpush1.msra.mxu0 0.0
    %2418 = vmatprep.subr.mxu0 0.0
    %2419 = vmatpush1.msra.mxu0 0.0
    %2420 = vmatprep.subr.mxu0 0.0
    %2421 = vmatpush1.msra.mxu0 0.0
    %2422 = vmatprep.subr.mxu0 0.0
    %2423 = vmatpush1.msra.mxu0 %v2218
    %2424 = vmatprep.subr.mxu0 0.0
    %2425 = vmatpush1.msra.mxu0 %v2213
    %2426 = vmatprep.subr.mxu0 0.0
    %2427 = vmatpush2.msra.mxu0 0.0
    %2428 = vmatprep.subr.mxu0 0.0
    %2429 = vmatpush2.msra.mxu0 0.0
    %2430 = vmatprep.subr.mxu0 0.0
    %2431 = vmatpush2.msra.mxu0 0.0
    %2432 = vmatprep.subr.mxu0 0.0
    %2433 = vmatpush2.msra.mxu0 0.0
    %2434 = vmatprep.subr.mxu0 0.0
    %2435 = vmatpush2.msra.mxu0 0.0
    %2436 = vmatprep.subr.mxu0 0.0
    %2437 = vmatpush2.msra.mxu0 0.0
    %2438 = vmatprep.subr.mxu0 0.0
    %2439 = vmatpush2.msra.mxu0 0.0
    %2440 = vmatprep.subr.mxu0 0.0
    %2441 = vmatpush2.msra.mxu0 0.0
    %2442 = vmatprep.subr.mxu0 0.0
    %2443 = vmatpush2.msra.mxu0 0.0
    %2444 = vmatprep.subr.mxu0 0.0
    %2445 = vmatpush2.msra.mxu0 0.0
    %2446 = vmatprep.subr.mxu0 0.0
    %2447 = vmatpush2.msra.mxu0 0.0
    %2448 = vmatprep.subr.mxu0 0.0
    %2449 = vmatpush2.msra.mxu0 0.0
    %2450 = vmatprep.subr.mxu0 0.0
    %2451 = vmatpush2.msra.mxu0 0.0
    %2452 = vmatprep.subr.mxu0 0.0
    %2453 = vmatpush2.msra.mxu0 0.0
    %2454 = vmatprep.subr.mxu0 0.0
    %2455 = vmatpush2.msra.mxu0 0.0
    %2456 = vmatprep.subr.mxu0 0.0
    %2457 = vmatpush2.msra.mxu0 0.0
    %2458 = vmatprep.mubr.f32.mxu0 0.0
    %2459 = vmatmul.mubr.f32.gmra.mxu0 %v2389
    %v2460 = vpop.f32.mrf.mxu0
    %v2461 = vadd.f32 %v2380, %v2460
    %v2462 = vpop.f32.mrf.mxu0
    %2463 = vmatprep.mubr.f32.mxu0 0.0
    %2464 = vmatmul.mubr.f32.gmra.mxu0 %v2392
    %v2465 = vpop.f32.mrf.mxu0
    %v2466 = vadd.f32 %v2385, %v2465
    %v2467 = vpop.f32.mrf.mxu0
    %2468 = vdwg.mxu0
    %s2469 = scalar_lea.vmem [#allocation2], 224
    %v2470 = vld [vmem:[%s2469] sm:$0xff]
    %v2471 = vld [vmem:[%s2469 + $0x8] sm:$0xff]
    %v2473 = vsel %vm243, %v2470, 0
    %v2476 = vsel %vm243, %v2471, 0
    %2478 = vmatprep.subr.mxu0 0.0
    %2479 = vmatpush1.msra.mxu0 0.0
    %2480 = vmatprep.subr.mxu0 0.0
    %2481 = vmatpush1.msra.mxu0 0.0
    %2482 = vmatprep.subr.mxu0 0.0
    %2483 = vmatpush1.msra.mxu0 0.0
    %2484 = vmatprep.subr.mxu0 0.0
    %2485 = vmatpush1.msra.mxu0 0.0
    %2486 = vmatprep.subr.mxu0 0.0
    %2487 = vmatpush1.msra.mxu0 0.0
    %2488 = vmatprep.subr.mxu0 0.0
    %2489 = vmatpush1.msra.mxu0 0.0
    %2490 = vmatprep.subr.mxu0 0.0
    %2491 = vmatpush1.msra.mxu0 0.0
    %2492 = vmatprep.subr.mxu0 0.0
    %2493 = vmatpush1.msra.mxu0 0.0
    %2494 = vmatprep.subr.mxu0 0.0
    %2495 = vmatpush1.msra.mxu0 0.0
    %2496 = vmatprep.subr.mxu0 0.0
    %2497 = vmatpush1.msra.mxu0 0.0
    %2498 = vmatprep.subr.mxu0 0.0
    %2499 = vmatpush1.msra.mxu0 0.0
    %2500 = vmatprep.subr.mxu0 0.0
    %2501 = vmatpush1.msra.mxu0 0.0
    %2502 = vmatprep.subr.mxu0 0.0
    %2503 = vmatpush1.msra.mxu0 0.0
    %2504 = vmatprep.subr.mxu0 0.0
    %2505 = vmatpush1.msra.mxu0 0.0
    %2506 = vmatprep.subr.mxu0 0.0
    %2507 = vmatpush1.msra.mxu0 %v2298
    %2508 = vmatprep.subr.mxu0 0.0
    %2509 = vmatpush1.msra.mxu0 %v2293
    %2510 = vmatprep.subr.mxu0 0.0
    %2511 = vmatpush2.msra.mxu0 0.0
    %2512 = vmatprep.subr.mxu0 0.0
    %2513 = vmatpush2.msra.mxu0 0.0
    %2514 = vmatprep.subr.mxu0 0.0
    %2515 = vmatpush2.msra.mxu0 0.0
    %2516 = vmatprep.subr.mxu0 0.0
    %2517 = vmatpush2.msra.mxu0 0.0
    %2518 = vmatprep.subr.mxu0 0.0
    %2519 = vmatpush2.msra.mxu0 0.0
    %2520 = vmatprep.subr.mxu0 0.0
    %2521 = vmatpush2.msra.mxu0 0.0
    %2522 = vmatprep.subr.mxu0 0.0
    %2523 = vmatpush2.msra.mxu0 0.0
    %2524 = vmatprep.subr.mxu0 0.0
    %2525 = vmatpush2.msra.mxu0 0.0
    %2526 = vmatprep.subr.mxu0 0.0
    %2527 = vmatpush2.msra.mxu0 0.0
    %2528 = vmatprep.subr.mxu0 0.0
    %2529 = vmatpush2.msra.mxu0 0.0
    %2530 = vmatprep.subr.mxu0 0.0
    %2531 = vmatpush2.msra.mxu0 0.0
    %2532 = vmatprep.subr.mxu0 0.0
    %2533 = vmatpush2.msra.mxu0 0.0
    %2534 = vmatprep.subr.mxu0 0.0
    %2535 = vmatpush2.msra.mxu0 0.0
    %2536 = vmatprep.subr.mxu0 0.0
    %2537 = vmatpush2.msra.mxu0 0.0
    %2538 = vmatprep.subr.mxu0 0.0
    %2539 = vmatpush2.msra.mxu0 0.0
    %2540 = vmatprep.subr.mxu0 0.0
    %2541 = vmatpush2.msra.mxu0 0.0
    %2542 = vmatprep.mubr.f32.mxu0 0.0
    %2543 = vmatmul.mubr.f32.gmra.mxu0 %v2473
    %v2544 = vpop.f32.mrf.mxu0
    %v2545 = vadd.f32 0.0, %v2544
    %v2546 = vpop.f32.mrf.mxu0
    %2547 = vmatprep.mubr.f32.mxu0 0.0
    %2548 = vmatmul.mubr.f32.gmra.mxu0 %v2476
    %v2549 = vpop.f32.mrf.mxu0
    %v2550 = vadd.f32 0.0, %v2549
    %v2551 = vpop.f32.mrf.mxu0
    %2552 = vdwg.mxu0
    %v2553 = vadd.f32 %v2461, %v2545
    %v2554 = vadd.f32 %v2466, %v2550
    %s2555 = scalar_lea.vmem [#allocation4], 64
    %v2556 = vld [vmem:[%s2555] sm:$0xff]
    %v2557 = vld [vmem:[%s2555 + $0x8] sm:$0xff]
    %2559 = vset.pattern.permute.xlu0 0
    %2560 = vperm.xlu0 %2559, %v2556
    %v2561 = vpop.permute.xlu0 %2560
    %2564 = vset.pattern.permute.xlu0 0
    %2565 = vperm.xlu0 %2564, %v2557
    %v2566 = vpop.permute.xlu0 %2565
    %v2568 = vadd.f32 %v2553, %v2561
    %v2569 = vadd.f32 %v2554, %v2566
    %v2570 = vmax.f32 %v2568, 0.0
    %v2571 = vmax.f32 %v2569, 0.0
    %v2573 = vsel %vm76, %v2570, 0
    %v2576 = vsel %vm76, %v2571, 0
    %2578 = vmatprep.subr.mxu0 0.0
    %2579 = vmatpush1.msra.mxu0 0.0
    %2580 = vmatprep.subr.mxu0 0.0
    %2581 = vmatpush1.msra.mxu0 0.0
    %2582 = vmatprep.subr.mxu0 0.0
    %2583 = vmatpush1.msra.mxu0 0.0
    %2584 = vmatprep.subr.mxu0 0.0
    %2585 = vmatpush1.msra.mxu0 0.0
    %2586 = vmatprep.subr.mxu0 0.0
    %2587 = vmatpush1.msra.mxu0 0.0
    %2588 = vmatprep.subr.mxu0 0.0
    %2589 = vmatpush1.msra.mxu0 0.0
    %2590 = vmatprep.subr.mxu0 0.0
    %2591 = vmatpush1.msra.mxu0 0.0
    %2592 = vmatprep.subr.mxu0 0.0
    %2593 = vmatpush1.msra.mxu0 0.0
    %2594 = vmatprep.subr.mxu0 0.0
    %2595 = vmatpush1.msra.mxu0 0.0
    %2596 = vmatprep.subr.mxu0 0.0
    %2597 = vmatpush1.msra.mxu0 0.0
    %2598 = vmatprep.subr.mxu0 0.0
    %2599 = vmatpush1.msra.mxu0 0.0
    %2600 = vmatprep.subr.mxu0 0.0
    %2601 = vmatpush1.msra.mxu0 0.0
    %2602 = vmatprep.subr.mxu0 0.0
    %2603 = vmatpush1.msra.mxu0 %v2139
    %2604 = vmatprep.subr.mxu0 0.0
    %2605 = vmatpush1.msra.mxu0 %v2138
    %2606 = vmatprep.subr.mxu0 0.0
    %2607 = vmatpush1.msra.mxu0 %v2137
    %2608 = vmatprep.subr.mxu0 0.0
    %2609 = vmatpush1.msra.mxu0 %v2136
    %2610 = vmatprep.subr.mxu0 0.0
    %2611 = vmatpush2.msra.mxu0 0.0
    %2612 = vmatprep.subr.mxu0 0.0
    %2613 = vmatpush2.msra.mxu0 0.0
    %2614 = vmatprep.subr.mxu0 0.0
    %2615 = vmatpush2.msra.mxu0 0.0
    %2616 = vmatprep.subr.mxu0 0.0
    %2617 = vmatpush2.msra.mxu0 0.0
    %2618 = vmatprep.subr.mxu0 0.0
    %2619 = vmatpush2.msra.mxu0 0.0
    %2620 = vmatprep.subr.mxu0 0.0
    %2621 = vmatpush2.msra.mxu0 0.0
    %2622 = vmatprep.subr.mxu0 0.0
    %2623 = vmatpush2.msra.mxu0 0.0
    %2624 = vmatprep.subr.mxu0 0.0
    %2625 = vmatpush2.msra.mxu0 0.0
    %2626 = vmatprep.subr.mxu0 0.0
    %2627 = vmatpush2.msra.mxu0 0.0
    %2628 = vmatprep.subr.mxu0 0.0
    %2629 = vmatpush2.msra.mxu0 0.0
    %2630 = vmatprep.subr.mxu0 0.0
    %2631 = vmatpush2.msra.mxu0 0.0
    %2632 = vmatprep.subr.mxu0 0.0
    %2633 = vmatpush2.msra.mxu0 0.0
    %2634 = vmatprep.subr.mxu0 0.0
    %2635 = vmatpush2.msra.mxu0 0.0
    %2636 = vmatprep.subr.mxu0 0.0
    %2637 = vmatpush2.msra.mxu0 0.0
    %2638 = vmatprep.subr.mxu0 0.0
    %2639 = vmatpush2.msra.mxu0 0.0
    %2640 = vmatprep.subr.mxu0 0.0
    %2641 = vmatpush2.msra.mxu0 0.0
    %2642 = vmatprep.mubr.f32.mxu0 0.0
    %2643 = vmatmul.mubr.f32.gmra.mxu0 %v2573
    %v2644 = vpop.f32.mrf.mxu0
    %v2645 = vadd.f32 0.0, %v2644
    %v2646 = vpop.f32.mrf.mxu0
    %2647 = vmatprep.mubr.f32.mxu0 0.0
    %2648 = vmatmul.mubr.f32.gmra.mxu0 %v2576
    %v2649 = vpop.f32.mrf.mxu0
    %v2650 = vadd.f32 0.0, %v2649
    %v2651 = vpop.f32.mrf.mxu0
    %2652 = vdwg.mxu0
    %2653 = vmatprep.subr.mxu0 0.0
    %2654 = vmatpush1.msra.mxu0 0.0
    %2655 = vmatprep.subr.mxu0 0.0
    %2656 = vmatpush1.msra.mxu0 0.0
    %2657 = vmatprep.subr.mxu0 0.0
    %2658 = vmatpush1.msra.mxu0 0.0
    %2659 = vmatprep.subr.mxu0 0.0
    %2660 = vmatpush1.msra.mxu0 0.0
    %2661 = vmatprep.subr.mxu0 0.0
    %2662 = vmatpush1.msra.mxu0 0.0
    %2663 = vmatprep.subr.mxu0 0.0
    %2664 = vmatpush1.msra.mxu0 0.0
    %2665 = vmatprep.subr.mxu0 0.0
    %2666 = vmatpush1.msra.mxu0 0.0
    %2667 = vmatprep.subr.mxu0 0.0
    %2668 = vmatpush1.msra.mxu0 0.0
    %2669 = vmatprep.subr.mxu0 0.0
    %2670 = vmatpush1.msra.mxu0 0.0
    %2671 = vmatprep.subr.mxu0 0.0
    %2672 = vmatpush1.msra.mxu0 0.0
    %2673 = vmatprep.subr.mxu0 0.0
    %2674 = vmatpush1.msra.mxu0 0.0
    %2675 = vmatprep.subr.mxu0 0.0
    %2676 = vmatpush1.msra.mxu0 0.0
    %2677 = vmatprep.subr.mxu0 0.0
    %2678 = vmatpush1.msra.mxu0 %v2225
    %2679 = vmatprep.subr.mxu0 0.0
    %2680 = vmatpush1.msra.mxu0 %v2224
    %2681 = vmatprep.subr.mxu0 0.0
    %2682 = vmatpush1.msra.mxu0 %v2223
    %2683 = vmatprep.subr.mxu0 0.0
    %2684 = vmatpush1.msra.mxu0 %v2222
    %2685 = vmatprep.subr.mxu0 0.0
    %2686 = vmatpush2.msra.mxu0 0.0
    %2687 = vmatprep.subr.mxu0 0.0
    %2688 = vmatpush2.msra.mxu0 0.0
    %2689 = vmatprep.subr.mxu0 0.0
    %2690 = vmatpush2.msra.mxu0 0.0
    %2691 = vmatprep.subr.mxu0 0.0
    %2692 = vmatpush2.msra.mxu0 0.0
    %2693 = vmatprep.subr.mxu0 0.0
    %2694 = vmatpush2.msra.mxu0 0.0
    %2695 = vmatprep.subr.mxu0 0.0
    %2696 = vmatpush2.msra.mxu0 0.0
    %2697 = vmatprep.subr.mxu0 0.0
    %2698 = vmatpush2.msra.mxu0 0.0
    %2699 = vmatprep.subr.mxu0 0.0
    %2700 = vmatpush2.msra.mxu0 0.0
    %2701 = vmatprep.subr.mxu0 0.0
    %2702 = vmatpush2.msra.mxu0 0.0
    %2703 = vmatprep.subr.mxu0 0.0
    %2704 = vmatpush2.msra.mxu0 0.0
    %2705 = vmatprep.subr.mxu0 0.0
    %2706 = vmatpush2.msra.mxu0 0.0
    %2707 = vmatprep.subr.mxu0 0.0
    %2708 = vmatpush2.msra.mxu0 0.0
    %2709 = vmatprep.subr.mxu0 0.0
    %2710 = vmatpush2.msra.mxu0 0.0
    %2711 = vmatprep.subr.mxu0 0.0
    %2712 = vmatpush2.msra.mxu0 0.0
    %2713 = vmatprep.subr.mxu0 0.0
    %2714 = vmatpush2.msra.mxu0 0.0
    %2715 = vmatprep.subr.mxu0 0.0
    %2716 = vmatpush2.msra.mxu0 0.0
    %2717 = vmatprep.mubr.f32.mxu0 0.0
    %2718 = vmatmul.mubr.f32.gmra.mxu0 %v2573
    %v2719 = vpop.f32.mrf.mxu0
    %v2720 = vadd.f32 0.0, %v2719
    %v2721 = vpop.f32.mrf.mxu0
    %2722 = vmatprep.mubr.f32.mxu0 0.0
    %2723 = vmatmul.mubr.f32.gmra.mxu0 %v2576
    %v2724 = vpop.f32.mrf.mxu0
    %v2725 = vadd.f32 0.0, %v2724
    %v2726 = vpop.f32.mrf.mxu0
    %2727 = vdwg.mxu0
    %s2728 = scalar_lea.vmem [#allocation2], 240
    %v2729 = vld [vmem:[%s2728] sm:$0xff]
    %v2730 = vld [vmem:[%s2728 + $0x8] sm:$0xff]
    %s2731 = scalar_lea.vmem [#allocation2], 256
    %v2732 = vld [vmem:[%s2731] sm:$0xff]
    %v2733 = vld [vmem:[%s2731 + $0x8] sm:$0xff]
    %v2735 = vsel %vm243, %v2732, 0
    %v2738 = vsel %vm243, %v2733, 0
    %2740 = vmatprep.subr.mxu0 0.0
    %2741 = vmatpush1.msra.mxu0 0.0
    %2742 = vmatprep.subr.mxu0 0.0
    %2743 = vmatpush1.msra.mxu0 0.0
    %2744 = vmatprep.subr.mxu0 0.0
    %2745 = vmatpush1.msra.mxu0 0.0
    %2746 = vmatprep.subr.mxu0 0.0
    %2747 = vmatpush1.msra.mxu0 0.0
    %2748 = vmatprep.subr.mxu0 0.0
    %2749 = vmatpush1.msra.mxu0 0.0
    %2750 = vmatprep.subr.mxu0 0.0
    %2751 = vmatpush1.msra.mxu0 0.0
    %2752 = vmatprep.subr.mxu0 0.0
    %2753 = vmatpush1.msra.mxu0 0.0
    %2754 = vmatprep.subr.mxu0 0.0
    %2755 = vmatpush1.msra.mxu0 0.0
    %2756 = vmatprep.subr.mxu0 0.0
    %2757 = vmatpush1.msra.mxu0 0.0
    %2758 = vmatprep.subr.mxu0 0.0
    %2759 = vmatpush1.msra.mxu0 0.0
    %2760 = vmatprep.subr.mxu0 0.0
    %2761 = vmatpush1.msra.mxu0 0.0
    %2762 = vmatprep.subr.mxu0 0.0
    %2763 = vmatpush1.msra.mxu0 0.0
    %2764 = vmatprep.subr.mxu0 0.0
    %2765 = vmatpush1.msra.mxu0 0.0
    %2766 = vmatprep.subr.mxu0 0.0
    %2767 = vmatpush1.msra.mxu0 0.0
    %2768 = vmatprep.subr.mxu0 0.0
    %2769 = vmatpush1.msra.mxu0 %v2571
    %2770 = vmatprep.subr.mxu0 0.0
    %2771 = vmatpush1.msra.mxu0 %v2570
    %2772 = vmatprep.subr.mxu0 0.0
    %2773 = vmatpush2.msra.mxu0 0.0
    %2774 = vmatprep.subr.mxu0 0.0
    %2775 = vmatpush2.msra.mxu0 0.0
    %2776 = vmatprep.subr.mxu0 0.0
    %2777 = vmatpush2.msra.mxu0 0.0
    %2778 = vmatprep.subr.mxu0 0.0
    %2779 = vmatpush2.msra.mxu0 0.0
    %2780 = vmatprep.subr.mxu0 0.0
    %2781 = vmatpush2.msra.mxu0 0.0
    %2782 = vmatprep.subr.mxu0 0.0
    %2783 = vmatpush2.msra.mxu0 0.0
    %2784 = vmatprep.subr.mxu0 0.0
    %2785 = vmatpush2.msra.mxu0 0.0
    %2786 = vmatprep.subr.mxu0 0.0
    %2787 = vmatpush2.msra.mxu0 0.0
    %2788 = vmatprep.subr.mxu0 0.0
    %2789 = vmatpush2.msra.mxu0 0.0
    %2790 = vmatprep.subr.mxu0 0.0
    %2791 = vmatpush2.msra.mxu0 0.0
    %2792 = vmatprep.subr.mxu0 0.0
    %2793 = vmatpush2.msra.mxu0 0.0
    %2794 = vmatprep.subr.mxu0 0.0
    %2795 = vmatpush2.msra.mxu0 0.0
    %2796 = vmatprep.subr.mxu0 0.0
    %2797 = vmatpush2.msra.mxu0 0.0
    %2798 = vmatprep.subr.mxu0 0.0
    %2799 = vmatpush2.msra.mxu0 0.0
    %2800 = vmatprep.subr.mxu0 0.0
    %2801 = vmatpush2.msra.mxu0 0.0
    %2802 = vmatprep.subr.mxu0 0.0
    %2803 = vmatpush2.msra.mxu0 0.0
    %2804 = vmatprep.mubr.f32.mxu0 0.0
    %2805 = vmatmul.mubr.f32.gmra.mxu0 %v2735
    %v2806 = vpop.f32.mrf.mxu0
    %v2807 = vadd.f32 0.0, %v2806
    %v2808 = vpop.f32.mrf.mxu0
    %2809 = vmatprep.mubr.f32.mxu0 0.0
    %2810 = vmatmul.mubr.f32.gmra.mxu0 %v2738
    %v2811 = vpop.f32.mrf.mxu0
    %v2812 = vadd.f32 0.0, %v2811
    %v2813 = vpop.f32.mrf.mxu0
    %2814 = vdwg.mxu0
    %v2816 = vsel %vm243, %v2729, 0
    %v2819 = vsel %vm243, %v2730, 0
    %2821 = vmatprep.subr.mxu0 0.0
    %2822 = vmatpush1.msra.mxu0 0.0
    %2823 = vmatprep.subr.mxu0 0.0
    %2824 = vmatpush1.msra.mxu0 0.0
    %2825 = vmatprep.subr.mxu0 0.0
    %2826 = vmatpush1.msra.mxu0 0.0
    %2827 = vmatprep.subr.mxu0 0.0
    %2828 = vmatpush1.msra.mxu0 0.0
    %2829 = vmatprep.subr.mxu0 0.0
    %2830 = vmatpush1.msra.mxu0 0.0
    %2831 = vmatprep.subr.mxu0 0.0
    %2832 = vmatpush1.msra.mxu0 0.0
    %2833 = vmatprep.subr.mxu0 0.0
    %2834 = vmatpush1.msra.mxu0 0.0
    %2835 = vmatprep.subr.mxu0 0.0
    %2836 = vmatpush1.msra.mxu0 0.0
    %2837 = vmatprep.subr.mxu0 0.0
    %2838 = vmatpush1.msra.mxu0 0.0
    %2839 = vmatprep.subr.mxu0 0.0
    %2840 = vmatpush1.msra.mxu0 0.0
    %2841 = vmatprep.subr.mxu0 0.0
    %2842 = vmatpush1.msra.mxu0 0.0
    %2843 = vmatprep.subr.mxu0 0.0
    %2844 = vmatpush1.msra.mxu0 0.0
    %2845 = vmatprep.subr.mxu0 0.0
    %2846 = vmatpush1.msra.mxu0 0.0
    %2847 = vmatprep.subr.mxu0 0.0
    %2848 = vmatpush1.msra.mxu0 0.0
    %2849 = vmatprep.subr.mxu0 0.0
    %2850 = vmatpush1.msra.mxu0 %v2650
    %2851 = vmatprep.subr.mxu0 0.0
    %2852 = vmatpush1.msra.mxu0 %v2645
    %2853 = vmatprep.subr.mxu0 0.0
    %2854 = vmatpush2.msra.mxu0 0.0
    %2855 = vmatprep.subr.mxu0 0.0
    %2856 = vmatpush2.msra.mxu0 0.0
    %2857 = vmatprep.subr.mxu0 0.0
    %2858 = vmatpush2.msra.mxu0 0.0
    %2859 = vmatprep.subr.mxu0 0.0
    %2860 = vmatpush2.msra.mxu0 0.0
    %2861 = vmatprep.subr.mxu0 0.0
    %2862 = vmatpush2.msra.mxu0 0.0
    %2863 = vmatprep.subr.mxu0 0.0
    %2864 = vmatpush2.msra.mxu0 0.0
    %2865 = vmatprep.subr.mxu0 0.0
    %2866 = vmatpush2.msra.mxu0 0.0
    %2867 = vmatprep.subr.mxu0 0.0
    %2868 = vmatpush2.msra.mxu0 0.0
    %2869 = vmatprep.subr.mxu0 0.0
    %2870 = vmatpush2.msra.mxu0 0.0
    %2871 = vmatprep.subr.mxu0 0.0
    %2872 = vmatpush2.msra.mxu0 0.0
    %2873 = vmatprep.subr.mxu0 0.0
    %2874 = vmatpush2.msra.mxu0 0.0
    %2875 = vmatprep.subr.mxu0 0.0
    %2876 = vmatpush2.msra.mxu0 0.0
    %2877 = vmatprep.subr.mxu0 0.0
    %2878 = vmatpush2.msra.mxu0 0.0
    %2879 = vmatprep.subr.mxu0 0.0
    %2880 = vmatpush2.msra.mxu0 0.0
    %2881 = vmatprep.subr.mxu0 0.0
    %2882 = vmatpush2.msra.mxu0 0.0
    %2883 = vmatprep.subr.mxu0 0.0
    %2884 = vmatpush2.msra.mxu0 0.0
    %2885 = vmatprep.mubr.f32.mxu0 0.0
    %2886 = vmatmul.mubr.f32.gmra.mxu0 %v2816
    %v2887 = vpop.f32.mrf.mxu0
    %v2888 = vadd.f32 %v2807, %v2887
    %v2889 = vpop.f32.mrf.mxu0
    %2890 = vmatprep.mubr.f32.mxu0 0.0
    %2891 = vmatmul.mubr.f32.gmra.mxu0 %v2819
    %v2892 = vpop.f32.mrf.mxu0
    %v2893 = vadd.f32 %v2812, %v2892
    %v2894 = vpop.f32.mrf.mxu0
    %2895 = vdwg.mxu0
    %s2896 = scalar_lea.vmem [#allocation2], 272
    %v2897 = vld [vmem:[%s2896] sm:$0xff]
    %v2898 = vld [vmem:[%s2896 + $0x8] sm:$0xff]
    %v2900 = vsel %vm243, %v2897, 0
    %v2903 = vsel %vm243, %v2898, 0
    %2905 = vmatprep.subr.mxu0 0.0
    %2906 = vmatpush1.msra.mxu0 0.0
    %2907 = vmatprep.subr.mxu0 0.0
    %2908 = vmatpush1.msra.mxu0 0.0
    %2909 = vmatprep.subr.mxu0 0.0
    %2910 = vmatpush1.msra.mxu0 0.0
    %2911 = vmatprep.subr.mxu0 0.0
    %2912 = vmatpush1.msra.mxu0 0.0
    %2913 = vmatprep.subr.mxu0 0.0
    %2914 = vmatpush1.msra.mxu0 0.0
    %2915 = vmatprep.subr.mxu0 0.0
    %2916 = vmatpush1.msra.mxu0 0.0
    %2917 = vmatprep.subr.mxu0 0.0
    %2918 = vmatpush1.msra.mxu0 0.0
    %2919 = vmatprep.subr.mxu0 0.0
    %2920 = vmatpush1.msra.mxu0 0.0
    %2921 = vmatprep.subr.mxu0 0.0
    %2922 = vmatpush1.msra.mxu0 0.0
    %2923 = vmatprep.subr.mxu0 0.0
    %2924 = vmatpush1.msra.mxu0 0.0
    %2925 = vmatprep.subr.mxu0 0.0
    %2926 = vmatpush1.msra.mxu0 0.0
    %2927 = vmatprep.subr.mxu0 0.0
    %2928 = vmatpush1.msra.mxu0 0.0
    %2929 = vmatprep.subr.mxu0 0.0
    %2930 = vmatpush1.msra.mxu0 0.0
    %2931 = vmatprep.subr.mxu0 0.0
    %2932 = vmatpush1.msra.mxu0 0.0
    %2933 = vmatprep.subr.mxu0 0.0
    %2934 = vmatpush1.msra.mxu0 %v2725
    %2935 = vmatprep.subr.mxu0 0.0
    %2936 = vmatpush1.msra.mxu0 %v2720
    %2937 = vmatprep.subr.mxu0 0.0
    %2938 = vmatpush2.msra.mxu0 0.0
    %2939 = vmatprep.subr.mxu0 0.0
    %2940 = vmatpush2.msra.mxu0 0.0
    %2941 = vmatprep.subr.mxu0 0.0
    %2942 = vmatpush2.msra.mxu0 0.0
    %2943 = vmatprep.subr.mxu0 0.0
    %2944 = vmatpush2.msra.mxu0 0.0
    %2945 = vmatprep.subr.mxu0 0.0
    %2946 = vmatpush2.msra.mxu0 0.0
    %2947 = vmatprep.subr.mxu0 0.0
    %2948 = vmatpush2.msra.mxu0 0.0
    %2949 = vmatprep.subr.mxu0 0.0
    %2950 = vmatpush2.msra.mxu0 0.0
    %2951 = vmatprep.subr.mxu0 0.0
    %2952 = vmatpush2.msra.mxu0 0.0
    %2953 = vmatprep.subr.mxu0 0.0
    %2954 = vmatpush2.msra.mxu0 0.0
    %2955 = vmatprep.subr.mxu0 0.0
    %2956 = vmatpush2.msra.mxu0 0.0
    %2957 = vmatprep.subr.mxu0 0.0
    %2958 = vmatpush2.msra.mxu0 0.0
    %2959 = vmatprep.subr.mxu0 0.0
    %2960 = vmatpush2.msra.mxu0 0.0
    %2961 = vmatprep.subr.mxu0 0.0
    %2962 = vmatpush2.msra.mxu0 0.0
    %2963 = vmatprep.subr.mxu0 0.0
    %2964 = vmatpush2.msra.mxu0 0.0
    %2965 = vmatprep.subr.mxu0 0.0
    %2966 = vmatpush2.msra.mxu0 0.0
    %2967 = vmatprep.subr.mxu0 0.0
    %2968 = vmatpush2.msra.mxu0 0.0
    %2969 = vmatprep.mubr.f32.mxu0 0.0
    %2970 = vmatmul.mubr.f32.gmra.mxu0 %v2900
    %v2971 = vpop.f32.mrf.mxu0
    %v2972 = vadd.f32 0.0, %v2971
    %v2973 = vpop.f32.mrf.mxu0
    %2974 = vmatprep.mubr.f32.mxu0 0.0
    %2975 = vmatmul.mubr.f32.gmra.mxu0 %v2903
    %v2976 = vpop.f32.mrf.mxu0
    %v2977 = vadd.f32 0.0, %v2976
    %v2978 = vpop.f32.mrf.mxu0
    %2979 = vdwg.mxu0
    %v2980 = vadd.f32 %v2888, %v2972
    %v2981 = vadd.f32 %v2893, %v2977
    %s2982 = scalar_lea.vmem [#allocation4], 80
    %v2983 = vld [vmem:[%s2982] sm:$0xff]
    %v2984 = vld [vmem:[%s2982 + $0x8] sm:$0xff]
    %2986 = vset.pattern.permute.xlu0 0
    %2987 = vperm.xlu0 %2986, %v2983
    %v2988 = vpop.permute.xlu0 %2987
    %2991 = vset.pattern.permute.xlu0 0
    %2992 = vperm.xlu0 %2991, %v2984
    %v2993 = vpop.permute.xlu0 %2992
    %v2995 = vadd.f32 %v2980, %v2988
    %v2996 = vadd.f32 %v2981, %v2993
    %v2997 = vmax.f32 %v2995, 0.0
    %v2998 = vmax.f32 %v2996, 0.0
    %s2999 = scalar_lea.vmem [#allocation6], 320
    %v3000 = vld [vmem:[%s2999] sm:$0xff]
    %v3001 = vld [vmem:[%s2999 + $0x8] sm:$0xff]
    %v3002 = vld [vmem:[%s2999 + $0x10] sm:$0xff]
    %v3003 = vld [vmem:[%s2999 + $0x18] sm:$0xff]
    %v3005 = vsel %vm76, %v2997, 0
    %v3008 = vsel %vm76, %v2998, 0
    %3010 = vmatprep.subr.mxu0 0.0
    %3011 = vmatpush1.msra.mxu0 0.0
    %3012 = vmatprep.subr.mxu0 0.0
    %3013 = vmatpush1.msra.mxu0 0.0
    %3014 = vmatprep.subr.mxu0 0.0
    %3015 = vmatpush1.msra.mxu0 0.0
    %3016 = vmatprep.subr.mxu0 0.0
    %3017 = vmatpush1.msra.mxu0 0.0
    %3018 = vmatprep.subr.mxu0 0.0
    %3019 = vmatpush1.msra.mxu0 0.0
    %3020 = vmatprep.subr.mxu0 0.0
    %3021 = vmatpush1.msra.mxu0 0.0
    %3022 = vmatprep.subr.mxu0 0.0
    %3023 = vmatpush1.msra.mxu0 0.0
    %3024 = vmatprep.subr.mxu0 0.0
    %3025 = vmatpush1.msra.mxu0 0.0
    %3026 = vmatprep.subr.mxu0 0.0
    %3027 = vmatpush1.msra.mxu0 0.0
    %3028 = vmatprep.subr.mxu0 0.0
    %3029 = vmatpush1.msra.mxu0 0.0
    %3030 = vmatprep.subr.mxu0 0.0
    %3031 = vmatpush1.msra.mxu0 0.0
    %3032 = vmatprep.subr.mxu0 0.0
    %3033 = vmatpush1.msra.mxu0 0.0
    %3034 = vmatprep.subr.mxu0 0.0
    %3035 = vmatpush1.msra.mxu0 %v3003
    %3036 = vmatprep.subr.mxu0 0.0
    %3037 = vmatpush1.msra.mxu0 %v3002
    %3038 = vmatprep.subr.mxu0 0.0
    %3039 = vmatpush1.msra.mxu0 %v3001
    %3040 = vmatprep.subr.mxu0 0.0
    %3041 = vmatpush1.msra.mxu0 %v3000
    %3042 = vmatprep.subr.mxu0 0.0
    %3043 = vmatpush2.msra.mxu0 0.0
    %3044 = vmatprep.subr.mxu0 0.0
    %3045 = vmatpush2.msra.mxu0 0.0
    %3046 = vmatprep.subr.mxu0 0.0
    %3047 = vmatpush2.msra.mxu0 0.0
    %3048 = vmatprep.subr.mxu0 0.0
    %3049 = vmatpush2.msra.mxu0 0.0
    %3050 = vmatprep.subr.mxu0 0.0
    %3051 = vmatpush2.msra.mxu0 0.0
    %3052 = vmatprep.subr.mxu0 0.0
    %3053 = vmatpush2.msra.mxu0 0.0
    %3054 = vmatprep.subr.mxu0 0.0
    %3055 = vmatpush2.msra.mxu0 0.0
    %3056 = vmatprep.subr.mxu0 0.0
    %3057 = vmatpush2.msra.mxu0 0.0
    %3058 = vmatprep.subr.mxu0 0.0
    %3059 = vmatpush2.msra.mxu0 0.0
    %3060 = vmatprep.subr.mxu0 0.0
    %3061 = vmatpush2.msra.mxu0 0.0
    %3062 = vmatprep.subr.mxu0 0.0
    %3063 = vmatpush2.msra.mxu0 0.0
    %3064 = vmatprep.subr.mxu0 0.0
    %3065 = vmatpush2.msra.mxu0 0.0
    %3066 = vmatprep.subr.mxu0 0.0
    %3067 = vmatpush2.msra.mxu0 0.0
    %3068 = vmatprep.subr.mxu0 0.0
    %3069 = vmatpush2.msra.mxu0 0.0
    %3070 = vmatprep.subr.mxu0 0.0
    %3071 = vmatpush2.msra.mxu0 0.0
    %3072 = vmatprep.subr.mxu0 0.0
    %3073 = vmatpush2.msra.mxu0 0.0
    %3074 = vmatprep.mubr.f32.mxu0 0.0
    %3075 = vmatmul.mubr.f32.gmra.mxu0 %v3005
    %v3076 = vpop.f32.mrf.mxu0
    %v3077 = vadd.f32 0.0, %v3076
    %v3078 = vpop.f32.mrf.mxu0
    %3079 = vmatprep.mubr.f32.mxu0 0.0
    %3080 = vmatmul.mubr.f32.gmra.mxu0 %v3008
    %v3081 = vpop.f32.mrf.mxu0
    %v3082 = vadd.f32 0.0, %v3081
    %v3083 = vpop.f32.mrf.mxu0
    %3084 = vdwg.mxu0
    %3085 = vmatprep.subr.mxu0 0.0
    %3086 = vmatpush1.msra.mxu0 0.0
    %3087 = vmatprep.subr.mxu0 0.0
    %3088 = vmatpush1.msra.mxu0 0.0
    %3089 = vmatprep.subr.mxu0 0.0
    %3090 = vmatpush1.msra.mxu0 0.0
    %3091 = vmatprep.subr.mxu0 0.0
    %3092 = vmatpush1.msra.mxu0 0.0
    %3093 = vmatprep.subr.mxu0 0.0
    %3094 = vmatpush1.msra.mxu0 0.0
    %3095 = vmatprep.subr.mxu0 0.0
    %3096 = vmatpush1.msra.mxu0 0.0
    %3097 = vmatprep.subr.mxu0 0.0
    %3098 = vmatpush1.msra.mxu0 0.0
    %3099 = vmatprep.subr.mxu0 0.0
    %3100 = vmatpush1.msra.mxu0 0.0
    %3101 = vmatprep.subr.mxu0 0.0
    %3102 = vmatpush1.msra.mxu0 0.0
    %3103 = vmatprep.subr.mxu0 0.0
    %3104 = vmatpush1.msra.mxu0 0.0
    %3105 = vmatprep.subr.mxu0 0.0
    %3106 = vmatpush1.msra.mxu0 0.0
    %3107 = vmatprep.subr.mxu0 0.0
    %3108 = vmatpush1.msra.mxu0 0.0
    %3109 = vmatprep.subr.mxu0 0.0
    %3110 = vmatpush1.msra.mxu0 %v1107
    %3111 = vmatprep.subr.mxu0 0.0
    %3112 = vmatpush1.msra.mxu0 %v1106
    %3113 = vmatprep.subr.mxu0 0.0
    %3114 = vmatpush1.msra.mxu0 %v1105
    %3115 = vmatprep.subr.mxu0 0.0
    %3116 = vmatpush1.msra.mxu0 %v1104
    %3117 = vmatprep.subr.mxu0 0.0
    %3118 = vmatpush2.msra.mxu0 0.0
    %3119 = vmatprep.subr.mxu0 0.0
    %3120 = vmatpush2.msra.mxu0 0.0
    %3121 = vmatprep.subr.mxu0 0.0
    %3122 = vmatpush2.msra.mxu0 0.0
    %3123 = vmatprep.subr.mxu0 0.0
    %3124 = vmatpush2.msra.mxu0 0.0
    %3125 = vmatprep.subr.mxu0 0.0
    %3126 = vmatpush2.msra.mxu0 0.0
    %3127 = vmatprep.subr.mxu0 0.0
    %3128 = vmatpush2.msra.mxu0 0.0
    %3129 = vmatprep.subr.mxu0 0.0
    %3130 = vmatpush2.msra.mxu0 0.0
    %3131 = vmatprep.subr.mxu0 0.0
    %3132 = vmatpush2.msra.mxu0 0.0
    %3133 = vmatprep.subr.mxu0 0.0
    %3134 = vmatpush2.msra.mxu0 0.0
    %3135 = vmatprep.subr.mxu0 0.0
    %3136 = vmatpush2.msra.mxu0 0.0
    %3137 = vmatprep.subr.mxu0 0.0
    %3138 = vmatpush2.msra.mxu0 0.0
    %3139 = vmatprep.subr.mxu0 0.0
    %3140 = vmatpush2.msra.mxu0 0.0
    %3141 = vmatprep.subr.mxu0 0.0
    %3142 = vmatpush2.msra.mxu0 0.0
    %3143 = vmatprep.subr.mxu0 0.0
    %3144 = vmatpush2.msra.mxu0 0.0
    %3145 = vmatprep.subr.mxu0 0.0
    %3146 = vmatpush2.msra.mxu0 0.0
    %3147 = vmatprep.subr.mxu0 0.0
    %3148 = vmatpush2.msra.mxu0 0.0
    %3149 = vmatprep.mubr.f32.mxu0 0.0
    %3150 = vmatmul.mubr.f32.gmra.mxu0 %v1973
    %v3151 = vpop.f32.mrf.mxu0
    %v3152 = vadd.f32 0.0, %v3151
    %v3153 = vpop.f32.mrf.mxu0
    %3154 = vmatprep.mubr.f32.mxu0 0.0
    %3155 = vmatmul.mubr.f32.gmra.mxu0 %v1976
    %v3156 = vpop.f32.mrf.mxu0
    %v3157 = vadd.f32 0.0, %v3156
    %v3158 = vpop.f32.mrf.mxu0
    %3159 = vdwg.mxu0
    %3160 = vmatprep.subr.mxu0 0.0
    %3161 = vmatpush1.msra.mxu0 0.0
    %3162 = vmatprep.subr.mxu0 0.0
    %3163 = vmatpush1.msra.mxu0 0.0
    %3164 = vmatprep.subr.mxu0 0.0
    %3165 = vmatpush1.msra.mxu0 0.0
    %3166 = vmatprep.subr.mxu0 0.0
    %3167 = vmatpush1.msra.mxu0 0.0
    %3168 = vmatprep.subr.mxu0 0.0
    %3169 = vmatpush1.msra.mxu0 0.0
    %3170 = vmatprep.subr.mxu0 0.0
    %3171 = vmatpush1.msra.mxu0 0.0
    %3172 = vmatprep.subr.mxu0 0.0
    %3173 = vmatpush1.msra.mxu0 0.0
    %3174 = vmatprep.subr.mxu0 0.0
    %3175 = vmatpush1.msra.mxu0 0.0
    %3176 = vmatprep.subr.mxu0 0.0
    %3177 = vmatpush1.msra.mxu0 0.0
    %3178 = vmatprep.subr.mxu0 0.0
    %3179 = vmatpush1.msra.mxu0 0.0
    %3180 = vmatprep.subr.mxu0 0.0
    %3181 = vmatpush1.msra.mxu0 0.0
    %3182 = vmatprep.subr.mxu0 0.0
    %3183 = vmatpush1.msra.mxu0 0.0
    %3184 = vmatprep.subr.mxu0 0.0
    %3185 = vmatpush1.msra.mxu0 %v1193
    %3186 = vmatprep.subr.mxu0 0.0
    %3187 = vmatpush1.msra.mxu0 %v1192
    %3188 = vmatprep.subr.mxu0 0.0
    %3189 = vmatpush1.msra.mxu0 %v1191
    %3190 = vmatprep.subr.mxu0 0.0
    %3191 = vmatpush1.msra.mxu0 %v1190
    %3192 = vmatprep.subr.mxu0 0.0
    %3193 = vmatpush2.msra.mxu0 0.0
    %3194 = vmatprep.subr.mxu0 0.0
    %3195 = vmatpush2.msra.mxu0 0.0
    %3196 = vmatprep.subr.mxu0 0.0
    %3197 = vmatpush2.msra.mxu0 0.0
    %3198 = vmatprep.subr.mxu0 0.0
    %3199 = vmatpush2.msra.mxu0 0.0
    %3200 = vmatprep.subr.mxu0 0.0
    %3201 = vmatpush2.msra.mxu0 0.0
    %3202 = vmatprep.subr.mxu0 0.0
    %3203 = vmatpush2.msra.mxu0 0.0
    %3204 = vmatprep.subr.mxu0 0.0
    %3205 = vmatpush2.msra.mxu0 0.0
    %3206 = vmatprep.subr.mxu0 0.0
    %3207 = vmatpush2.msra.mxu0 0.0
    %3208 = vmatprep.subr.mxu0 0.0
    %3209 = vmatpush2.msra.mxu0 0.0
    %3210 = vmatprep.subr.mxu0 0.0
    %3211 = vmatpush2.msra.mxu0 0.0
    %3212 = vmatprep.subr.mxu0 0.0
    %3213 = vmatpush2.msra.mxu0 0.0
    %3214 = vmatprep.subr.mxu0 0.0
    %3215 = vmatpush2.msra.mxu0 0.0
    %3216 = vmatprep.subr.mxu0 0.0
    %3217 = vmatpush2.msra.mxu0 0.0
    %3218 = vmatprep.subr.mxu0 0.0
    %3219 = vmatpush2.msra.mxu0 0.0
    %3220 = vmatprep.subr.mxu0 0.0
    %3221 = vmatpush2.msra.mxu0 0.0
    %3222 = vmatprep.subr.mxu0 0.0
    %3223 = vmatpush2.msra.mxu0 0.0
    %3224 = vmatprep.mubr.f32.mxu0 0.0
    %3225 = vmatmul.mubr.f32.gmra.mxu0 %v1973
    %v3226 = vpop.f32.mrf.mxu0
    %v3227 = vadd.f32 0.0, %v3226
    %v3228 = vpop.f32.mrf.mxu0
    %3229 = vmatprep.mubr.f32.mxu0 0.0
    %3230 = vmatmul.mubr.f32.gmra.mxu0 %v1976
    %v3231 = vpop.f32.mrf.mxu0
    %v3232 = vadd.f32 0.0, %v3231
    %v3233 = vpop.f32.mrf.mxu0
    %3234 = vdwg.mxu0
    %s3235 = scalar_lea.vmem [#allocation2], 288
    %v3236 = vld [vmem:[%s3235] sm:$0xff]
    %v3237 = vld [vmem:[%s3235 + $0x8] sm:$0xff]
    %s3238 = scalar_lea.vmem [#allocation2], 304
    %v3239 = vld [vmem:[%s3238] sm:$0xff]
    %v3240 = vld [vmem:[%s3238 + $0x8] sm:$0xff]
    %v3242 = vsel %vm243, %v3239, 0
    %v3245 = vsel %vm243, %v3240, 0
    %3247 = vmatprep.subr.mxu0 0.0
    %3248 = vmatpush1.msra.mxu0 0.0
    %3249 = vmatprep.subr.mxu0 0.0
    %3250 = vmatpush1.msra.mxu0 0.0
    %3251 = vmatprep.subr.mxu0 0.0
    %3252 = vmatpush1.msra.mxu0 0.0
    %3253 = vmatprep.subr.mxu0 0.0
    %3254 = vmatpush1.msra.mxu0 0.0
    %3255 = vmatprep.subr.mxu0 0.0
    %3256 = vmatpush1.msra.mxu0 0.0
    %3257 = vmatprep.subr.mxu0 0.0
    %3258 = vmatpush1.msra.mxu0 0.0
    %3259 = vmatprep.subr.mxu0 0.0
    %3260 = vmatpush1.msra.mxu0 0.0
    %3261 = vmatprep.subr.mxu0 0.0
    %3262 = vmatpush1.msra.mxu0 0.0
    %3263 = vmatprep.subr.mxu0 0.0
    %3264 = vmatpush1.msra.mxu0 0.0
    %3265 = vmatprep.subr.mxu0 0.0
    %3266 = vmatpush1.msra.mxu0 0.0
    %3267 = vmatprep.subr.mxu0 0.0
    %3268 = vmatpush1.msra.mxu0 0.0
    %3269 = vmatprep.subr.mxu0 0.0
    %3270 = vmatpush1.msra.mxu0 0.0
    %3271 = vmatprep.subr.mxu0 0.0
    %3272 = vmatpush1.msra.mxu0 0.0
    %3273 = vmatprep.subr.mxu0 0.0
    %3274 = vmatpush1.msra.mxu0 0.0
    %3275 = vmatprep.subr.mxu0 0.0
    %3276 = vmatpush1.msra.mxu0 %v1966
    %3277 = vmatprep.subr.mxu0 0.0
    %3278 = vmatpush1.msra.mxu0 %v1965
    %3279 = vmatprep.subr.mxu0 0.0
    %3280 = vmatpush2.msra.mxu0 0.0
    %3281 = vmatprep.subr.mxu0 0.0
    %3282 = vmatpush2.msra.mxu0 0.0
    %3283 = vmatprep.subr.mxu0 0.0
    %3284 = vmatpush2.msra.mxu0 0.0
    %3285 = vmatprep.subr.mxu0 0.0
    %3286 = vmatpush2.msra.mxu0 0.0
    %3287 = vmatprep.subr.mxu0 0.0
    %3288 = vmatpush2.msra.mxu0 0.0
    %3289 = vmatprep.subr.mxu0 0.0
    %3290 = vmatpush2.msra.mxu0 0.0
    %3291 = vmatprep.subr.mxu0 0.0
    %3292 = vmatpush2.msra.mxu0 0.0
    %3293 = vmatprep.subr.mxu0 0.0
    %3294 = vmatpush2.msra.mxu0 0.0
    %3295 = vmatprep.subr.mxu0 0.0
    %3296 = vmatpush2.msra.mxu0 0.0
    %3297 = vmatprep.subr.mxu0 0.0
    %3298 = vmatpush2.msra.mxu0 0.0
    %3299 = vmatprep.subr.mxu0 0.0
    %3300 = vmatpush2.msra.mxu0 0.0
    %3301 = vmatprep.subr.mxu0 0.0
    %3302 = vmatpush2.msra.mxu0 0.0
    %3303 = vmatprep.subr.mxu0 0.0
    %3304 = vmatpush2.msra.mxu0 0.0
    %3305 = vmatprep.subr.mxu0 0.0
    %3306 = vmatpush2.msra.mxu0 0.0
    %3307 = vmatprep.subr.mxu0 0.0
    %3308 = vmatpush2.msra.mxu0 0.0
    %3309 = vmatprep.subr.mxu0 0.0
    %3310 = vmatpush2.msra.mxu0 0.0
    %3311 = vmatprep.mubr.f32.mxu0 0.0
    %3312 = vmatmul.mubr.f32.gmra.mxu0 %v3242
    %v3313 = vpop.f32.mrf.mxu0
    %v3314 = vadd.f32 0.0, %v3313
    %v3315 = vpop.f32.mrf.mxu0
    %3316 = vmatprep.mubr.f32.mxu0 0.0
    %3317 = vmatmul.mubr.f32.gmra.mxu0 %v3245
    %v3318 = vpop.f32.mrf.mxu0
    %v3319 = vadd.f32 0.0, %v3318
    %v3320 = vpop.f32.mrf.mxu0
    %3321 = vdwg.mxu0
    %v3323 = vsel %vm243, %v3236, 0
    %v3326 = vsel %vm243, %v3237, 0
    %3328 = vmatprep.subr.mxu0 0.0
    %3329 = vmatpush1.msra.mxu0 0.0
    %3330 = vmatprep.subr.mxu0 0.0
    %3331 = vmatpush1.msra.mxu0 0.0
    %3332 = vmatprep.subr.mxu0 0.0
    %3333 = vmatpush1.msra.mxu0 0.0
    %3334 = vmatprep.subr.mxu0 0.0
    %3335 = vmatpush1.msra.mxu0 0.0
    %3336 = vmatprep.subr.mxu0 0.0
    %3337 = vmatpush1.msra.mxu0 0.0
    %3338 = vmatprep.subr.mxu0 0.0
    %3339 = vmatpush1.msra.mxu0 0.0
    %3340 = vmatprep.subr.mxu0 0.0
    %3341 = vmatpush1.msra.mxu0 0.0
    %3342 = vmatprep.subr.mxu0 0.0
    %3343 = vmatpush1.msra.mxu0 0.0
    %3344 = vmatprep.subr.mxu0 0.0
    %3345 = vmatpush1.msra.mxu0 0.0
    %3346 = vmatprep.subr.mxu0 0.0
    %3347 = vmatpush1.msra.mxu0 0.0
    %3348 = vmatprep.subr.mxu0 0.0
    %3349 = vmatpush1.msra.mxu0 0.0
    %3350 = vmatprep.subr.mxu0 0.0
    %3351 = vmatpush1.msra.mxu0 0.0
    %3352 = vmatprep.subr.mxu0 0.0
    %3353 = vmatpush1.msra.mxu0 0.0
    %3354 = vmatprep.subr.mxu0 0.0
    %3355 = vmatpush1.msra.mxu0 0.0
    %3356 = vmatprep.subr.mxu0 0.0
    %3357 = vmatpush1.msra.mxu0 %v3157
    %3358 = vmatprep.subr.mxu0 0.0
    %3359 = vmatpush1.msra.mxu0 %v3152
    %3360 = vmatprep.subr.mxu0 0.0
    %3361 = vmatpush2.msra.mxu0 0.0
    %3362 = vmatprep.subr.mxu0 0.0
    %3363 = vmatpush2.msra.mxu0 0.0
    %3364 = vmatprep.subr.mxu0 0.0
    %3365 = vmatpush2.msra.mxu0 0.0
    %3366 = vmatprep.subr.mxu0 0.0
    %3367 = vmatpush2.msra.mxu0 0.0
    %3368 = vmatprep.subr.mxu0 0.0
    %3369 = vmatpush2.msra.mxu0 0.0
    %3370 = vmatprep.subr.mxu0 0.0
    %3371 = vmatpush2.msra.mxu0 0.0
    %3372 = vmatprep.subr.mxu0 0.0
    %3373 = vmatpush2.msra.mxu0 0.0
    %3374 = vmatprep.subr.mxu0 0.0
    %3375 = vmatpush2.msra.mxu0 0.0
    %3376 = vmatprep.subr.mxu0 0.0
    %3377 = vmatpush2.msra.mxu0 0.0
    %3378 = vmatprep.subr.mxu0 0.0
    %3379 = vmatpush2.msra.mxu0 0.0
    %3380 = vmatprep.subr.mxu0 0.0
    %3381 = vmatpush2.msra.mxu0 0.0
    %3382 = vmatprep.subr.mxu0 0.0
    %3383 = vmatpush2.msra.mxu0 0.0
    %3384 = vmatprep.subr.mxu0 0.0
    %3385 = vmatpush2.msra.mxu0 0.0
    %3386 = vmatprep.subr.mxu0 0.0
    %3387 = vmatpush2.msra.mxu0 0.0
    %3388 = vmatprep.subr.mxu0 0.0
    %3389 = vmatpush2.msra.mxu0 0.0
    %3390 = vmatprep.subr.mxu0 0.0
    %3391 = vmatpush2.msra.mxu0 0.0
    %3392 = vmatprep.mubr.f32.mxu0 0.0
    %3393 = vmatmul.mubr.f32.gmra.mxu0 %v3323
    %v3394 = vpop.f32.mrf.mxu0
    %v3395 = vadd.f32 %v3314, %v3394
    %v3396 = vpop.f32.mrf.mxu0
    %3397 = vmatprep.mubr.f32.mxu0 0.0
    %3398 = vmatmul.mubr.f32.gmra.mxu0 %v3326
    %v3399 = vpop.f32.mrf.mxu0
    %v3400 = vadd.f32 %v3319, %v3399
    %v3401 = vpop.f32.mrf.mxu0
    %3402 = vdwg.mxu0
    %s3403 = scalar_lea.vmem [#allocation2], 320
    %v3404 = vld [vmem:[%s3403] sm:$0xff]
    %v3405 = vld [vmem:[%s3403 + $0x8] sm:$0xff]
    %v3407 = vsel %vm243, %v3404, 0
    %v3410 = vsel %vm243, %v3405, 0
    %3412 = vmatprep.subr.mxu0 0.0
    %3413 = vmatpush1.msra.mxu0 0.0
    %3414 = vmatprep.subr.mxu0 0.0
    %3415 = vmatpush1.msra.mxu0 0.0
    %3416 = vmatprep.subr.mxu0 0.0
    %3417 = vmatpush1.msra.mxu0 0.0
    %3418 = vmatprep.subr.mxu0 0.0
    %3419 = vmatpush1.msra.mxu0 0.0
    %3420 = vmatprep.subr.mxu0 0.0
    %3421 = vmatpush1.msra.mxu0 0.0
    %3422 = vmatprep.subr.mxu0 0.0
    %3423 = vmatpush1.msra.mxu0 0.0
    %3424 = vmatprep.subr.mxu0 0.0
    %3425 = vmatpush1.msra.mxu0 0.0
    %3426 = vmatprep.subr.mxu0 0.0
    %3427 = vmatpush1.msra.mxu0 0.0
    %3428 = vmatprep.subr.mxu0 0.0
    %3429 = vmatpush1.msra.mxu0 0.0
    %3430 = vmatprep.subr.mxu0 0.0
    %3431 = vmatpush1.msra.mxu0 0.0
    %3432 = vmatprep.subr.mxu0 0.0
    %3433 = vmatpush1.msra.mxu0 0.0
    %3434 = vmatprep.subr.mxu0 0.0
    %3435 = vmatpush1.msra.mxu0 0.0
    %3436 = vmatprep.subr.mxu0 0.0
    %3437 = vmatpush1.msra.mxu0 0.0
    %3438 = vmatprep.subr.mxu0 0.0
    %3439 = vmatpush1.msra.mxu0 0.0
    %3440 = vmatprep.subr.mxu0 0.0
    %3441 = vmatpush1.msra.mxu0 %v3232
    %3442 = vmatprep.subr.mxu0 0.0
    %3443 = vmatpush1.msra.mxu0 %v3227
    %3444 = vmatprep.subr.mxu0 0.0
    %3445 = vmatpush2.msra.mxu0 0.0
    %3446 = vmatprep.subr.mxu0 0.0
    %3447 = vmatpush2.msra.mxu0 0.0
    %3448 = vmatprep.subr.mxu0 0.0
    %3449 = vmatpush2.msra.mxu0 0.0
    %3450 = vmatprep.subr.mxu0 0.0
    %3451 = vmatpush2.msra.mxu0 0.0
    %3452 = vmatprep.subr.mxu0 0.0
    %3453 = vmatpush2.msra.mxu0 0.0
    %3454 = vmatprep.subr.mxu0 0.0
    %3455 = vmatpush2.msra.mxu0 0.0
    %3456 = vmatprep.subr.mxu0 0.0
    %3457 = vmatpush2.msra.mxu0 0.0
    %3458 = vmatprep.subr.mxu0 0.0
    %3459 = vmatpush2.msra.mxu0 0.0
    %3460 = vmatprep.subr.mxu0 0.0
    %3461 = vmatpush2.msra.mxu0 0.0
    %3462 = vmatprep.subr.mxu0 0.0
    %3463 = vmatpush2.msra.mxu0 0.0
    %3464 = vmatprep.subr.mxu0 0.0
    %3465 = vmatpush2.msra.mxu0 0.0
    %3466 = vmatprep.subr.mxu0 0.0
    %3467 = vmatpush2.msra.mxu0 0.0
    %3468 = vmatprep.subr.mxu0 0.0
    %3469 = vmatpush2.msra.mxu0 0.0
    %3470 = vmatprep.subr.mxu0 0.0
    %3471 = vmatpush2.msra.mxu0 0.0
    %3472 = vmatprep.subr.mxu0 0.0
    %3473 = vmatpush2.msra.mxu0 0.0
    %3474 = vmatprep.subr.mxu0 0.0
    %3475 = vmatpush2.msra.mxu0 0.0
    %3476 = vmatprep.mubr.f32.mxu0 0.0
    %3477 = vmatmul.mubr.f32.gmra.mxu0 %v3407
    %v3478 = vpop.f32.mrf.mxu0
    %v3479 = vadd.f32 0.0, %v3478
    %v3480 = vpop.f32.mrf.mxu0
    %3481 = vmatprep.mubr.f32.mxu0 0.0
    %3482 = vmatmul.mubr.f32.gmra.mxu0 %v3410
    %v3483 = vpop.f32.mrf.mxu0
    %v3484 = vadd.f32 0.0, %v3483
    %v3485 = vpop.f32.mrf.mxu0
    %3486 = vdwg.mxu0
    %v3487 = vadd.f32 %v3395, %v3479
    %v3488 = vadd.f32 %v3400, %v3484
    %v3490 = vsel %vm76, %v3077, 0
    %v3493 = vsel %vm76, %v3082, 0
    %3495 = vmatprep.subr.mxu0 0.0
    %3496 = vmatpush1.msra.mxu0 0.0
    %3497 = vmatprep.subr.mxu0 0.0
    %3498 = vmatpush1.msra.mxu0 0.0
    %3499 = vmatprep.subr.mxu0 0.0
    %3500 = vmatpush1.msra.mxu0 0.0
    %3501 = vmatprep.subr.mxu0 0.0
    %3502 = vmatpush1.msra.mxu0 0.0
    %3503 = vmatprep.subr.mxu0 0.0
    %3504 = vmatpush1.msra.mxu0 0.0
    %3505 = vmatprep.subr.mxu0 0.0
    %3506 = vmatpush1.msra.mxu0 0.0
    %3507 = vmatprep.subr.mxu0 0.0
    %3508 = vmatpush1.msra.mxu0 0.0
    %3509 = vmatprep.subr.mxu0 0.0
    %3510 = vmatpush1.msra.mxu0 0.0
    %3511 = vmatprep.subr.mxu0 0.0
    %3512 = vmatpush1.msra.mxu0 0.0
    %3513 = vmatprep.subr.mxu0 0.0
    %3514 = vmatpush1.msra.mxu0 0.0
    %3515 = vmatprep.subr.mxu0 0.0
    %3516 = vmatpush1.msra.mxu0 0.0
    %3517 = vmatprep.subr.mxu0 0.0
    %3518 = vmatpush1.msra.mxu0 0.0
    %3519 = vmatprep.subr.mxu0 0.0
    %3520 = vmatpush1.msra.mxu0 %v1107
    %3521 = vmatprep.subr.mxu0 0.0
    %3522 = vmatpush1.msra.mxu0 %v1106
    %3523 = vmatprep.subr.mxu0 0.0
    %3524 = vmatpush1.msra.mxu0 %v1105
    %3525 = vmatprep.subr.mxu0 0.0
    %3526 = vmatpush1.msra.mxu0 %v1104
    %3527 = vmatprep.subr.mxu0 0.0
    %3528 = vmatpush2.msra.mxu0 0.0
    %3529 = vmatprep.subr.mxu0 0.0
    %3530 = vmatpush2.msra.mxu0 0.0
    %3531 = vmatprep.subr.mxu0 0.0
    %3532 = vmatpush2.msra.mxu0 0.0
    %3533 = vmatprep.subr.mxu0 0.0
    %3534 = vmatpush2.msra.mxu0 0.0
    %3535 = vmatprep.subr.mxu0 0.0
    %3536 = vmatpush2.msra.mxu0 0.0
    %3537 = vmatprep.subr.mxu0 0.0
    %3538 = vmatpush2.msra.mxu0 0.0
    %3539 = vmatprep.subr.mxu0 0.0
    %3540 = vmatpush2.msra.mxu0 0.0
    %3541 = vmatprep.subr.mxu0 0.0
    %3542 = vmatpush2.msra.mxu0 0.0
    %3543 = vmatprep.subr.mxu0 0.0
    %3544 = vmatpush2.msra.mxu0 0.0
    %3545 = vmatprep.subr.mxu0 0.0
    %3546 = vmatpush2.msra.mxu0 0.0
    %3547 = vmatprep.subr.mxu0 0.0
    %3548 = vmatpush2.msra.mxu0 0.0
    %3549 = vmatprep.subr.mxu0 0.0
    %3550 = vmatpush2.msra.mxu0 0.0
    %3551 = vmatprep.subr.mxu0 0.0
    %3552 = vmatpush2.msra.mxu0 0.0
    %3553 = vmatprep.subr.mxu0 0.0
    %3554 = vmatpush2.msra.mxu0 0.0
    %3555 = vmatprep.subr.mxu0 0.0
    %3556 = vmatpush2.msra.mxu0 0.0
    %3557 = vmatprep.subr.mxu0 0.0
    %3558 = vmatpush2.msra.mxu0 0.0
    %3559 = vmatprep.mubr.f32.mxu0 0.0
    %3560 = vmatmul.mubr.f32.gmra.mxu0 %v3490
    %v3561 = vpop.f32.mrf.mxu0
    %v3562 = vadd.f32 0.0, %v3561
    %v3563 = vpop.f32.mrf.mxu0
    %3564 = vmatprep.mubr.f32.mxu0 0.0
    %3565 = vmatmul.mubr.f32.gmra.mxu0 %v3493
    %v3566 = vpop.f32.mrf.mxu0
    %v3567 = vadd.f32 0.0, %v3566
    %v3568 = vpop.f32.mrf.mxu0
    %3569 = vdwg.mxu0
    %3570 = vmatprep.subr.mxu0 0.0
    %3571 = vmatpush1.msra.mxu0 0.0
    %3572 = vmatprep.subr.mxu0 0.0
    %3573 = vmatpush1.msra.mxu0 0.0
    %3574 = vmatprep.subr.mxu0 0.0
    %3575 = vmatpush1.msra.mxu0 0.0
    %3576 = vmatprep.subr.mxu0 0.0
    %3577 = vmatpush1.msra.mxu0 0.0
    %3578 = vmatprep.subr.mxu0 0.0
    %3579 = vmatpush1.msra.mxu0 0.0
    %3580 = vmatprep.subr.mxu0 0.0
    %3581 = vmatpush1.msra.mxu0 0.0
    %3582 = vmatprep.subr.mxu0 0.0
    %3583 = vmatpush1.msra.mxu0 0.0
    %3584 = vmatprep.subr.mxu0 0.0
    %3585 = vmatpush1.msra.mxu0 0.0
    %3586 = vmatprep.subr.mxu0 0.0
    %3587 = vmatpush1.msra.mxu0 0.0
    %3588 = vmatprep.subr.mxu0 0.0
    %3589 = vmatpush1.msra.mxu0 0.0
    %3590 = vmatprep.subr.mxu0 0.0
    %3591 = vmatpush1.msra.mxu0 0.0
    %3592 = vmatprep.subr.mxu0 0.0
    %3593 = vmatpush1.msra.mxu0 0.0
    %3594 = vmatprep.subr.mxu0 0.0
    %3595 = vmatpush1.msra.mxu0 %v1193
    %3596 = vmatprep.subr.mxu0 0.0
    %3597 = vmatpush1.msra.mxu0 %v1192
    %3598 = vmatprep.subr.mxu0 0.0
    %3599 = vmatpush1.msra.mxu0 %v1191
    %3600 = vmatprep.subr.mxu0 0.0
    %3601 = vmatpush1.msra.mxu0 %v1190
    %3602 = vmatprep.subr.mxu0 0.0
    %3603 = vmatpush2.msra.mxu0 0.0
    %3604 = vmatprep.subr.mxu0 0.0
    %3605 = vmatpush2.msra.mxu0 0.0
    %3606 = vmatprep.subr.mxu0 0.0
    %3607 = vmatpush2.msra.mxu0 0.0
    %3608 = vmatprep.subr.mxu0 0.0
    %3609 = vmatpush2.msra.mxu0 0.0
    %3610 = vmatprep.subr.mxu0 0.0
    %3611 = vmatpush2.msra.mxu0 0.0
    %3612 = vmatprep.subr.mxu0 0.0
    %3613 = vmatpush2.msra.mxu0 0.0
    %3614 = vmatprep.subr.mxu0 0.0
    %3615 = vmatpush2.msra.mxu0 0.0
    %3616 = vmatprep.subr.mxu0 0.0
    %3617 = vmatpush2.msra.mxu0 0.0
    %3618 = vmatprep.subr.mxu0 0.0
    %3619 = vmatpush2.msra.mxu0 0.0
    %3620 = vmatprep.subr.mxu0 0.0
    %3621 = vmatpush2.msra.mxu0 0.0
    %3622 = vmatprep.subr.mxu0 0.0
    %3623 = vmatpush2.msra.mxu0 0.0
    %3624 = vmatprep.subr.mxu0 0.0
    %3625 = vmatpush2.msra.mxu0 0.0
    %3626 = vmatprep.subr.mxu0 0.0
    %3627 = vmatpush2.msra.mxu0 0.0
    %3628 = vmatprep.subr.mxu0 0.0
    %3629 = vmatpush2.msra.mxu0 0.0
    %3630 = vmatprep.subr.mxu0 0.0
    %3631 = vmatpush2.msra.mxu0 0.0
    %3632 = vmatprep.subr.mxu0 0.0
    %3633 = vmatpush2.msra.mxu0 0.0
    %3634 = vmatprep.mubr.f32.mxu0 0.0
    %3635 = vmatmul.mubr.f32.gmra.mxu0 %v3490
    %v3636 = vpop.f32.mrf.mxu0
    %v3637 = vadd.f32 0.0, %v3636
    %v3638 = vpop.f32.mrf.mxu0
    %3639 = vmatprep.mubr.f32.mxu0 0.0
    %3640 = vmatmul.mubr.f32.gmra.mxu0 %v3493
    %v3641 = vpop.f32.mrf.mxu0
    %v3642 = vadd.f32 0.0, %v3641
    %v3643 = vpop.f32.mrf.mxu0
    %3644 = vdwg.mxu0
    %s3645 = scalar_lea.vmem [#allocation2], 336
    %v3646 = vld [vmem:[%s3645] sm:$0xff]
    %v3647 = vld [vmem:[%s3645 + $0x8] sm:$0xff]
    %s3648 = scalar_lea.vmem [#allocation2], 352
    %v3649 = vld [vmem:[%s3648] sm:$0xff]
    %v3650 = vld [vmem:[%s3648 + $0x8] sm:$0xff]
    %v3652 = vsel %vm243, %v3649, 0
    %v3655 = vsel %vm243, %v3650, 0
    %3657 = vmatprep.subr.mxu0 0.0
    %3658 = vmatpush1.msra.mxu0 0.0
    %3659 = vmatprep.subr.mxu0 0.0
    %3660 = vmatpush1.msra.mxu0 0.0
    %3661 = vmatprep.subr.mxu0 0.0
    %3662 = vmatpush1.msra.mxu0 0.0
    %3663 = vmatprep.subr.mxu0 0.0
    %3664 = vmatpush1.msra.mxu0 0.0
    %3665 = vmatprep.subr.mxu0 0.0
    %3666 = vmatpush1.msra.mxu0 0.0
    %3667 = vmatprep.subr.mxu0 0.0
    %3668 = vmatpush1.msra.mxu0 0.0
    %3669 = vmatprep.subr.mxu0 0.0
    %3670 = vmatpush1.msra.mxu0 0.0
    %3671 = vmatprep.subr.mxu0 0.0
    %3672 = vmatpush1.msra.mxu0 0.0
    %3673 = vmatprep.subr.mxu0 0.0
    %3674 = vmatpush1.msra.mxu0 0.0
    %3675 = vmatprep.subr.mxu0 0.0
    %3676 = vmatpush1.msra.mxu0 0.0
    %3677 = vmatprep.subr.mxu0 0.0
    %3678 = vmatpush1.msra.mxu0 0.0
    %3679 = vmatprep.subr.mxu0 0.0
    %3680 = vmatpush1.msra.mxu0 0.0
    %3681 = vmatprep.subr.mxu0 0.0
    %3682 = vmatpush1.msra.mxu0 0.0
    %3683 = vmatprep.subr.mxu0 0.0
    %3684 = vmatpush1.msra.mxu0 0.0
    %3685 = vmatprep.subr.mxu0 0.0
    %3686 = vmatpush1.msra.mxu0 %v3082
    %3687 = vmatprep.subr.mxu0 0.0
    %3688 = vmatpush1.msra.mxu0 %v3077
    %3689 = vmatprep.subr.mxu0 0.0
    %3690 = vmatpush2.msra.mxu0 0.0
    %3691 = vmatprep.subr.mxu0 0.0
    %3692 = vmatpush2.msra.mxu0 0.0
    %3693 = vmatprep.subr.mxu0 0.0
    %3694 = vmatpush2.msra.mxu0 0.0
    %3695 = vmatprep.subr.mxu0 0.0
    %3696 = vmatpush2.msra.mxu0 0.0
    %3697 = vmatprep.subr.mxu0 0.0
    %3698 = vmatpush2.msra.mxu0 0.0
    %3699 = vmatprep.subr.mxu0 0.0
    %3700 = vmatpush2.msra.mxu0 0.0
    %3701 = vmatprep.subr.mxu0 0.0
    %3702 = vmatpush2.msra.mxu0 0.0
    %3703 = vmatprep.subr.mxu0 0.0
    %3704 = vmatpush2.msra.mxu0 0.0
    %3705 = vmatprep.subr.mxu0 0.0
    %3706 = vmatpush2.msra.mxu0 0.0
    %3707 = vmatprep.subr.mxu0 0.0
    %3708 = vmatpush2.msra.mxu0 0.0
    %3709 = vmatprep.subr.mxu0 0.0
    %3710 = vmatpush2.msra.mxu0 0.0
    %3711 = vmatprep.subr.mxu0 0.0
    %3712 = vmatpush2.msra.mxu0 0.0
    %3713 = vmatprep.subr.mxu0 0.0
    %3714 = vmatpush2.msra.mxu0 0.0
    %3715 = vmatprep.subr.mxu0 0.0
    %3716 = vmatpush2.msra.mxu0 0.0
    %3717 = vmatprep.subr.mxu0 0.0
    %3718 = vmatpush2.msra.mxu0 0.0
    %3719 = vmatprep.subr.mxu0 0.0
    %3720 = vmatpush2.msra.mxu0 0.0
    %3721 = vmatprep.mubr.f32.mxu0 0.0
    %3722 = vmatmul.mubr.f32.gmra.mxu0 %v3652
    %v3723 = vpop.f32.mrf.mxu0
    %v3724 = vadd.f32 0.0, %v3723
    %v3725 = vpop.f32.mrf.mxu0
    %3726 = vmatprep.mubr.f32.mxu0 0.0
    %3727 = vmatmul.mubr.f32.gmra.mxu0 %v3655
    %v3728 = vpop.f32.mrf.mxu0
    %v3729 = vadd.f32 0.0, %v3728
    %v3730 = vpop.f32.mrf.mxu0
    %3731 = vdwg.mxu0
    %v3733 = vsel %vm243, %v3646, 0
    %v3736 = vsel %vm243, %v3647, 0
    %3738 = vmatprep.subr.mxu0 0.0
    %3739 = vmatpush1.msra.mxu0 0.0
    %3740 = vmatprep.subr.mxu0 0.0
    %3741 = vmatpush1.msra.mxu0 0.0
    %3742 = vmatprep.subr.mxu0 0.0
    %3743 = vmatpush1.msra.mxu0 0.0
    %3744 = vmatprep.subr.mxu0 0.0
    %3745 = vmatpush1.msra.mxu0 0.0
    %3746 = vmatprep.subr.mxu0 0.0
    %3747 = vmatpush1.msra.mxu0 0.0
    %3748 = vmatprep.subr.mxu0 0.0
    %3749 = vmatpush1.msra.mxu0 0.0
    %3750 = vmatprep.subr.mxu0 0.0
    %3751 = vmatpush1.msra.mxu0 0.0
    %3752 = vmatprep.subr.mxu0 0.0
    %3753 = vmatpush1.msra.mxu0 0.0
    %3754 = vmatprep.subr.mxu0 0.0
    %3755 = vmatpush1.msra.mxu0 0.0
    %3756 = vmatprep.subr.mxu0 0.0
    %3757 = vmatpush1.msra.mxu0 0.0
    %3758 = vmatprep.subr.mxu0 0.0
    %3759 = vmatpush1.msra.mxu0 0.0
    %3760 = vmatprep.subr.mxu0 0.0
    %3761 = vmatpush1.msra.mxu0 0.0
    %3762 = vmatprep.subr.mxu0 0.0
    %3763 = vmatpush1.msra.mxu0 0.0
    %3764 = vmatprep.subr.mxu0 0.0
    %3765 = vmatpush1.msra.mxu0 0.0
    %3766 = vmatprep.subr.mxu0 0.0
    %3767 = vmatpush1.msra.mxu0 %v3567
    %3768 = vmatprep.subr.mxu0 0.0
    %3769 = vmatpush1.msra.mxu0 %v3562
    %3770 = vmatprep.subr.mxu0 0.0
    %3771 = vmatpush2.msra.mxu0 0.0
    %3772 = vmatprep.subr.mxu0 0.0
    %3773 = vmatpush2.msra.mxu0 0.0
    %3774 = vmatprep.subr.mxu0 0.0
    %3775 = vmatpush2.msra.mxu0 0.0
    %3776 = vmatprep.subr.mxu0 0.0
    %3777 = vmatpush2.msra.mxu0 0.0
    %3778 = vmatprep.subr.mxu0 0.0
    %3779 = vmatpush2.msra.mxu0 0.0
    %3780 = vmatprep.subr.mxu0 0.0
    %3781 = vmatpush2.msra.mxu0 0.0
    %3782 = vmatprep.subr.mxu0 0.0
    %3783 = vmatpush2.msra.mxu0 0.0
    %3784 = vmatprep.subr.mxu0 0.0
    %3785 = vmatpush2.msra.mxu0 0.0
    %3786 = vmatprep.subr.mxu0 0.0
    %3787 = vmatpush2.msra.mxu0 0.0
    %3788 = vmatprep.subr.mxu0 0.0
    %3789 = vmatpush2.msra.mxu0 0.0
    %3790 = vmatprep.subr.mxu0 0.0
    %3791 = vmatpush2.msra.mxu0 0.0
    %3792 = vmatprep.subr.mxu0 0.0
    %3793 = vmatpush2.msra.mxu0 0.0
    %3794 = vmatprep.subr.mxu0 0.0
    %3795 = vmatpush2.msra.mxu0 0.0
    %3796 = vmatprep.subr.mxu0 0.0
    %3797 = vmatpush2.msra.mxu0 0.0
    %3798 = vmatprep.subr.mxu0 0.0
    %3799 = vmatpush2.msra.mxu0 0.0
    %3800 = vmatprep.subr.mxu0 0.0
    %3801 = vmatpush2.msra.mxu0 0.0
    %3802 = vmatprep.mubr.f32.mxu0 0.0
    %3803 = vmatmul.mubr.f32.gmra.mxu0 %v3733
    %v3804 = vpop.f32.mrf.mxu0
    %v3805 = vadd.f32 %v3724, %v3804
    %v3806 = vpop.f32.mrf.mxu0
    %3807 = vmatprep.mubr.f32.mxu0 0.0
    %3808 = vmatmul.mubr.f32.gmra.mxu0 %v3736
    %v3809 = vpop.f32.mrf.mxu0
    %v3810 = vadd.f32 %v3729, %v3809
    %v3811 = vpop.f32.mrf.mxu0
    %3812 = vdwg.mxu0
    %s3813 = scalar_lea.vmem [#allocation2], 368
    %v3814 = vld [vmem:[%s3813] sm:$0xff]
    %v3815 = vld [vmem:[%s3813 + $0x8] sm:$0xff]
    %v3817 = vsel %vm243, %v3814, 0
    %v3820 = vsel %vm243, %v3815, 0
    %3822 = vmatprep.subr.mxu0 0.0
    %3823 = vmatpush1.msra.mxu0 0.0
    %3824 = vmatprep.subr.mxu0 0.0
    %3825 = vmatpush1.msra.mxu0 0.0
    %3826 = vmatprep.subr.mxu0 0.0
    %3827 = vmatpush1.msra.mxu0 0.0
    %3828 = vmatprep.subr.mxu0 0.0
    %3829 = vmatpush1.msra.mxu0 0.0
    %3830 = vmatprep.subr.mxu0 0.0
    %3831 = vmatpush1.msra.mxu0 0.0
    %3832 = vmatprep.subr.mxu0 0.0
    %3833 = vmatpush1.msra.mxu0 0.0
    %3834 = vmatprep.subr.mxu0 0.0
    %3835 = vmatpush1.msra.mxu0 0.0
    %3836 = vmatprep.subr.mxu0 0.0
    %3837 = vmatpush1.msra.mxu0 0.0
    %3838 = vmatprep.subr.mxu0 0.0
    %3839 = vmatpush1.msra.mxu0 0.0
    %3840 = vmatprep.subr.mxu0 0.0
    %3841 = vmatpush1.msra.mxu0 0.0
    %3842 = vmatprep.subr.mxu0 0.0
    %3843 = vmatpush1.msra.mxu0 0.0
    %3844 = vmatprep.subr.mxu0 0.0
    %3845 = vmatpush1.msra.mxu0 0.0
    %3846 = vmatprep.subr.mxu0 0.0
    %3847 = vmatpush1.msra.mxu0 0.0
    %3848 = vmatprep.subr.mxu0 0.0
    %3849 = vmatpush1.msra.mxu0 0.0
    %3850 = vmatprep.subr.mxu0 0.0
    %3851 = vmatpush1.msra.mxu0 %v3642
    %3852 = vmatprep.subr.mxu0 0.0
    %3853 = vmatpush1.msra.mxu0 %v3637
    %3854 = vmatprep.subr.mxu0 0.0
    %3855 = vmatpush2.msra.mxu0 0.0
    %3856 = vmatprep.subr.mxu0 0.0
    %3857 = vmatpush2.msra.mxu0 0.0
    %3858 = vmatprep.subr.mxu0 0.0
    %3859 = vmatpush2.msra.mxu0 0.0
    %3860 = vmatprep.subr.mxu0 0.0
    %3861 = vmatpush2.msra.mxu0 0.0
    %3862 = vmatprep.subr.mxu0 0.0
    %3863 = vmatpush2.msra.mxu0 0.0
    %3864 = vmatprep.subr.mxu0 0.0
    %3865 = vmatpush2.msra.mxu0 0.0
    %3866 = vmatprep.subr.mxu0 0.0
    %3867 = vmatpush2.msra.mxu0 0.0
    %3868 = vmatprep.subr.mxu0 0.0
    %3869 = vmatpush2.msra.mxu0 0.0
    %3870 = vmatprep.subr.mxu0 0.0
    %3871 = vmatpush2.msra.mxu0 0.0
    %3872 = vmatprep.subr.mxu0 0.0
    %3873 = vmatpush2.msra.mxu0 0.0
    %3874 = vmatprep.subr.mxu0 0.0
    %3875 = vmatpush2.msra.mxu0 0.0
    %3876 = vmatprep.subr.mxu0 0.0
    %3877 = vmatpush2.msra.mxu0 0.0
    %3878 = vmatprep.subr.mxu0 0.0
    %3879 = vmatpush2.msra.mxu0 0.0
    %3880 = vmatprep.subr.mxu0 0.0
    %3881 = vmatpush2.msra.mxu0 0.0
    %3882 = vmatprep.subr.mxu0 0.0
    %3883 = vmatpush2.msra.mxu0 0.0
    %3884 = vmatprep.subr.mxu0 0.0
    %3885 = vmatpush2.msra.mxu0 0.0
    %3886 = vmatprep.mubr.f32.mxu0 0.0
    %3887 = vmatmul.mubr.f32.gmra.mxu0 %v3817
    %v3888 = vpop.f32.mrf.mxu0
    %v3889 = vadd.f32 0.0, %v3888
    %v3890 = vpop.f32.mrf.mxu0
    %3891 = vmatprep.mubr.f32.mxu0 0.0
    %3892 = vmatmul.mubr.f32.gmra.mxu0 %v3820
    %v3893 = vpop.f32.mrf.mxu0
    %v3894 = vadd.f32 0.0, %v3893
    %v3895 = vpop.f32.mrf.mxu0
    %3896 = vdwg.mxu0
    %v3897 = vadd.f32 %v3805, %v3889
    %v3898 = vadd.f32 %v3810, %v3894
    %v3899 = vadd.f32 %v3487, %v3897
    %v3900 = vadd.f32 %v3488, %v3898
    %s3901 = scalar_lea.vmem [#allocation4], 96
    %v3902 = vld [vmem:[%s3901] sm:$0xff]
    %v3903 = vld [vmem:[%s3901 + $0x8] sm:$0xff]
    %3905 = vset.pattern.permute.xlu0 0
    %3906 = vperm.xlu0 %3905, %v3902
    %v3907 = vpop.permute.xlu0 %3906
    %3910 = vset.pattern.permute.xlu0 0
    %3911 = vperm.xlu0 %3910, %v3903
    %v3912 = vpop.permute.xlu0 %3911
    %v3914 = vadd.f32 %v3899, %v3907
    %v3915 = vadd.f32 %v3900, %v3912
    %v3916 = vmax.f32 %v3914, 0.0
    %v3917 = vmax.f32 %v3915, 0.0
    %v3919 = vsel %vm76, %v3916, 0
    %v3922 = vsel %vm76, %v3917, 0
    %3924 = vmatprep.subr.mxu0 0.0
    %3925 = vmatpush1.msra.mxu0 0.0
    %3926 = vmatprep.subr.mxu0 0.0
    %3927 = vmatpush1.msra.mxu0 0.0
    %3928 = vmatprep.subr.mxu0 0.0
    %3929 = vmatpush1.msra.mxu0 0.0
    %3930 = vmatprep.subr.mxu0 0.0
    %3931 = vmatpush1.msra.mxu0 0.0
    %3932 = vmatprep.subr.mxu0 0.0
    %3933 = vmatpush1.msra.mxu0 0.0
    %3934 = vmatprep.subr.mxu0 0.0
    %3935 = vmatpush1.msra.mxu0 0.0
    %3936 = vmatprep.subr.mxu0 0.0
    %3937 = vmatpush1.msra.mxu0 0.0
    %3938 = vmatprep.subr.mxu0 0.0
    %3939 = vmatpush1.msra.mxu0 0.0
    %3940 = vmatprep.subr.mxu0 0.0
    %3941 = vmatpush1.msra.mxu0 0.0
    %3942 = vmatprep.subr.mxu0 0.0
    %3943 = vmatpush1.msra.mxu0 0.0
    %3944 = vmatprep.subr.mxu0 0.0
    %3945 = vmatpush1.msra.mxu0 0.0
    %3946 = vmatprep.subr.mxu0 0.0
    %3947 = vmatpush1.msra.mxu0 0.0
    %3948 = vmatprep.subr.mxu0 0.0
    %3949 = vmatpush1.msra.mxu0 %v1107
    %3950 = vmatprep.subr.mxu0 0.0
    %3951 = vmatpush1.msra.mxu0 %v1106
    %3952 = vmatprep.subr.mxu0 0.0
    %3953 = vmatpush1.msra.mxu0 %v1105
    %3954 = vmatprep.subr.mxu0 0.0
    %3955 = vmatpush1.msra.mxu0 %v1104
    %3956 = vmatprep.subr.mxu0 0.0
    %3957 = vmatpush2.msra.mxu0 0.0
    %3958 = vmatprep.subr.mxu0 0.0
    %3959 = vmatpush2.msra.mxu0 0.0
    %3960 = vmatprep.subr.mxu0 0.0
    %3961 = vmatpush2.msra.mxu0 0.0
    %3962 = vmatprep.subr.mxu0 0.0
    %3963 = vmatpush2.msra.mxu0 0.0
    %3964 = vmatprep.subr.mxu0 0.0
    %3965 = vmatpush2.msra.mxu0 0.0
    %3966 = vmatprep.subr.mxu0 0.0
    %3967 = vmatpush2.msra.mxu0 0.0
    %3968 = vmatprep.subr.mxu0 0.0
    %3969 = vmatpush2.msra.mxu0 0.0
    %3970 = vmatprep.subr.mxu0 0.0
    %3971 = vmatpush2.msra.mxu0 0.0
    %3972 = vmatprep.subr.mxu0 0.0
    %3973 = vmatpush2.msra.mxu0 0.0
    %3974 = vmatprep.subr.mxu0 0.0
    %3975 = vmatpush2.msra.mxu0 0.0
    %3976 = vmatprep.subr.mxu0 0.0
    %3977 = vmatpush2.msra.mxu0 0.0
    %3978 = vmatprep.subr.mxu0 0.0
    %3979 = vmatpush2.msra.mxu0 0.0
    %3980 = vmatprep.subr.mxu0 0.0
    %3981 = vmatpush2.msra.mxu0 0.0
    %3982 = vmatprep.subr.mxu0 0.0
    %3983 = vmatpush2.msra.mxu0 0.0
    %3984 = vmatprep.subr.mxu0 0.0
    %3985 = vmatpush2.msra.mxu0 0.0
    %3986 = vmatprep.subr.mxu0 0.0
    %3987 = vmatpush2.msra.mxu0 0.0
    %3988 = vmatprep.mubr.f32.mxu0 0.0
    %3989 = vmatmul.mubr.f32.gmra.mxu0 %v3919
    %v3990 = vpop.f32.mrf.mxu0
    %v3991 = vadd.f32 0.0, %v3990
    %v3992 = vpop.f32.mrf.mxu0
    %3993 = vmatprep.mubr.f32.mxu0 0.0
    %3994 = vmatmul.mubr.f32.gmra.mxu0 %v3922
    %v3995 = vpop.f32.mrf.mxu0
    %v3996 = vadd.f32 0.0, %v3995
    %v3997 = vpop.f32.mrf.mxu0
    %3998 = vdwg.mxu0
    %3999 = vmatprep.subr.mxu0 0.0
    %4000 = vmatpush1.msra.mxu0 0.0
    %4001 = vmatprep.subr.mxu0 0.0
    %4002 = vmatpush1.msra.mxu0 0.0
    %4003 = vmatprep.subr.mxu0 0.0
    %4004 = vmatpush1.msra.mxu0 0.0
    %4005 = vmatprep.subr.mxu0 0.0
    %4006 = vmatpush1.msra.mxu0 0.0
    %4007 = vmatprep.subr.mxu0 0.0
    %4008 = vmatpush1.msra.mxu0 0.0
    %4009 = vmatprep.subr.mxu0 0.0
    %4010 = vmatpush1.msra.mxu0 0.0
    %4011 = vmatprep.subr.mxu0 0.0
    %4012 = vmatpush1.msra.mxu0 0.0
    %4013 = vmatprep.subr.mxu0 0.0
    %4014 = vmatpush1.msra.mxu0 0.0
    %4015 = vmatprep.subr.mxu0 0.0
    %4016 = vmatpush1.msra.mxu0 0.0
    %4017 = vmatprep.subr.mxu0 0.0
    %4018 = vmatpush1.msra.mxu0 0.0
    %4019 = vmatprep.subr.mxu0 0.0
    %4020 = vmatpush1.msra.mxu0 0.0
    %4021 = vmatprep.subr.mxu0 0.0
    %4022 = vmatpush1.msra.mxu0 0.0
    %4023 = vmatprep.subr.mxu0 0.0
    %4024 = vmatpush1.msra.mxu0 %v1193
    %4025 = vmatprep.subr.mxu0 0.0
    %4026 = vmatpush1.msra.mxu0 %v1192
    %4027 = vmatprep.subr.mxu0 0.0
    %4028 = vmatpush1.msra.mxu0 %v1191
    %4029 = vmatprep.subr.mxu0 0.0
    %4030 = vmatpush1.msra.mxu0 %v1190
    %4031 = vmatprep.subr.mxu0 0.0
    %4032 = vmatpush2.msra.mxu0 0.0
    %4033 = vmatprep.subr.mxu0 0.0
    %4034 = vmatpush2.msra.mxu0 0.0
    %4035 = vmatprep.subr.mxu0 0.0
    %4036 = vmatpush2.msra.mxu0 0.0
    %4037 = vmatprep.subr.mxu0 0.0
    %4038 = vmatpush2.msra.mxu0 0.0
    %4039 = vmatprep.subr.mxu0 0.0
    %4040 = vmatpush2.msra.mxu0 0.0
    %4041 = vmatprep.subr.mxu0 0.0
    %4042 = vmatpush2.msra.mxu0 0.0
    %4043 = vmatprep.subr.mxu0 0.0
    %4044 = vmatpush2.msra.mxu0 0.0
    %4045 = vmatprep.subr.mxu0 0.0
    %4046 = vmatpush2.msra.mxu0 0.0
    %4047 = vmatprep.subr.mxu0 0.0
    %4048 = vmatpush2.msra.mxu0 0.0
    %4049 = vmatprep.subr.mxu0 0.0
    %4050 = vmatpush2.msra.mxu0 0.0
    %4051 = vmatprep.subr.mxu0 0.0
    %4052 = vmatpush2.msra.mxu0 0.0
    %4053 = vmatprep.subr.mxu0 0.0
    %4054 = vmatpush2.msra.mxu0 0.0
    %4055 = vmatprep.subr.mxu0 0.0
    %4056 = vmatpush2.msra.mxu0 0.0
    %4057 = vmatprep.subr.mxu0 0.0
    %4058 = vmatpush2.msra.mxu0 0.0
    %4059 = vmatprep.subr.mxu0 0.0
    %4060 = vmatpush2.msra.mxu0 0.0
    %4061 = vmatprep.subr.mxu0 0.0
    %4062 = vmatpush2.msra.mxu0 0.0
    %4063 = vmatprep.mubr.f32.mxu0 0.0
    %4064 = vmatmul.mubr.f32.gmra.mxu0 %v3919
    %v4065 = vpop.f32.mrf.mxu0
    %v4066 = vadd.f32 0.0, %v4065
    %v4067 = vpop.f32.mrf.mxu0
    %4068 = vmatprep.mubr.f32.mxu0 0.0
    %4069 = vmatmul.mubr.f32.gmra.mxu0 %v3922
    %v4070 = vpop.f32.mrf.mxu0
    %v4071 = vadd.f32 0.0, %v4070
    %v4072 = vpop.f32.mrf.mxu0
    %4073 = vdwg.mxu0
    %s4074 = scalar_lea.vmem [#allocation2], 384
    %v4075 = vld [vmem:[%s4074] sm:$0xff]
    %v4076 = vld [vmem:[%s4074 + $0x8] sm:$0xff]
    %s4077 = scalar_lea.vmem [#allocation2], 400
    %v4078 = vld [vmem:[%s4077] sm:$0xff]
    %v4079 = vld [vmem:[%s4077 + $0x8] sm:$0xff]
    %v4081 = vsel %vm243, %v4078, 0
    %v4084 = vsel %vm243, %v4079, 0
    %4086 = vmatprep.subr.mxu0 0.0
    %4087 = vmatpush1.msra.mxu0 0.0
    %4088 = vmatprep.subr.mxu0 0.0
    %4089 = vmatpush1.msra.mxu0 0.0
    %4090 = vmatprep.subr.mxu0 0.0
    %4091 = vmatpush1.msra.mxu0 0.0
    %4092 = vmatprep.subr.mxu0 0.0
    %4093 = vmatpush1.msra.mxu0 0.0
    %4094 = vmatprep.subr.mxu0 0.0
    %4095 = vmatpush1.msra.mxu0 0.0
    %4096 = vmatprep.subr.mxu0 0.0
    %4097 = vmatpush1.msra.mxu0 0.0
    %4098 = vmatprep.subr.mxu0 0.0
    %4099 = vmatpush1.msra.mxu0 0.0
    %4100 = vmatprep.subr.mxu0 0.0
    %4101 = vmatpush1.msra.mxu0 0.0
    %4102 = vmatprep.subr.mxu0 0.0
    %4103 = vmatpush1.msra.mxu0 0.0
    %4104 = vmatprep.subr.mxu0 0.0
    %4105 = vmatpush1.msra.mxu0 0.0
    %4106 = vmatprep.subr.mxu0 0.0
    %4107 = vmatpush1.msra.mxu0 0.0
    %4108 = vmatprep.subr.mxu0 0.0
    %4109 = vmatpush1.msra.mxu0 0.0
    %4110 = vmatprep.subr.mxu0 0.0
    %4111 = vmatpush1.msra.mxu0 0.0
    %4112 = vmatprep.subr.mxu0 0.0
    %4113 = vmatpush1.msra.mxu0 0.0
    %4114 = vmatprep.subr.mxu0 0.0
    %4115 = vmatpush1.msra.mxu0 %v3917
    %4116 = vmatprep.subr.mxu0 0.0
    %4117 = vmatpush1.msra.mxu0 %v3916
    %4118 = vmatprep.subr.mxu0 0.0
    %4119 = vmatpush2.msra.mxu0 0.0
    %4120 = vmatprep.subr.mxu0 0.0
    %4121 = vmatpush2.msra.mxu0 0.0
    %4122 = vmatprep.subr.mxu0 0.0
    %4123 = vmatpush2.msra.mxu0 0.0
    %4124 = vmatprep.subr.mxu0 0.0
    %4125 = vmatpush2.msra.mxu0 0.0
    %4126 = vmatprep.subr.mxu0 0.0
    %4127 = vmatpush2.msra.mxu0 0.0
    %4128 = vmatprep.subr.mxu0 0.0
    %4129 = vmatpush2.msra.mxu0 0.0
    %4130 = vmatprep.subr.mxu0 0.0
    %4131 = vmatpush2.msra.mxu0 0.0
    %4132 = vmatprep.subr.mxu0 0.0
    %4133 = vmatpush2.msra.mxu0 0.0
    %4134 = vmatprep.subr.mxu0 0.0
    %4135 = vmatpush2.msra.mxu0 0.0
    %4136 = vmatprep.subr.mxu0 0.0
    %4137 = vmatpush2.msra.mxu0 0.0
    %4138 = vmatprep.subr.mxu0 0.0
    %4139 = vmatpush2.msra.mxu0 0.0
    %4140 = vmatprep.subr.mxu0 0.0
    %4141 = vmatpush2.msra.mxu0 0.0
    %4142 = vmatprep.subr.mxu0 0.0
    %4143 = vmatpush2.msra.mxu0 0.0
    %4144 = vmatprep.subr.mxu0 0.0
    %4145 = vmatpush2.msra.mxu0 0.0
    %4146 = vmatprep.subr.mxu0 0.0
    %4147 = vmatpush2.msra.mxu0 0.0
    %4148 = vmatprep.subr.mxu0 0.0
    %4149 = vmatpush2.msra.mxu0 0.0
    %4150 = vmatprep.mubr.f32.mxu0 0.0
    %4151 = vmatmul.mubr.f32.gmra.mxu0 %v4081
    %v4152 = vpop.f32.mrf.mxu0
    %v4153 = vadd.f32 0.0, %v4152
    %v4154 = vpop.f32.mrf.mxu0
    %4155 = vmatprep.mubr.f32.mxu0 0.0
    %4156 = vmatmul.mubr.f32.gmra.mxu0 %v4084
    %v4157 = vpop.f32.mrf.mxu0
    %v4158 = vadd.f32 0.0, %v4157
    %v4159 = vpop.f32.mrf.mxu0
    %4160 = vdwg.mxu0
    %v4162 = vsel %vm243, %v4075, 0
    %v4165 = vsel %vm243, %v4076, 0
    %4167 = vmatprep.subr.mxu0 0.0
    %4168 = vmatpush1.msra.mxu0 0.0
    %4169 = vmatprep.subr.mxu0 0.0
    %4170 = vmatpush1.msra.mxu0 0.0
    %4171 = vmatprep.subr.mxu0 0.0
    %4172 = vmatpush1.msra.mxu0 0.0
    %4173 = vmatprep.subr.mxu0 0.0
    %4174 = vmatpush1.msra.mxu0 0.0
    %4175 = vmatprep.subr.mxu0 0.0
    %4176 = vmatpush1.msra.mxu0 0.0
    %4177 = vmatprep.subr.mxu0 0.0
    %4178 = vmatpush1.msra.mxu0 0.0
    %4179 = vmatprep.subr.mxu0 0.0
    %4180 = vmatpush1.msra.mxu0 0.0
    %4181 = vmatprep.subr.mxu0 0.0
    %4182 = vmatpush1.msra.mxu0 0.0
    %4183 = vmatprep.subr.mxu0 0.0
    %4184 = vmatpush1.msra.mxu0 0.0
    %4185 = vmatprep.subr.mxu0 0.0
    %4186 = vmatpush1.msra.mxu0 0.0
    %4187 = vmatprep.subr.mxu0 0.0
    %4188 = vmatpush1.msra.mxu0 0.0
    %4189 = vmatprep.subr.mxu0 0.0
    %4190 = vmatpush1.msra.mxu0 0.0
    %4191 = vmatprep.subr.mxu0 0.0
    %4192 = vmatpush1.msra.mxu0 0.0
    %4193 = vmatprep.subr.mxu0 0.0
    %4194 = vmatpush1.msra.mxu0 0.0
    %4195 = vmatprep.subr.mxu0 0.0
    %4196 = vmatpush1.msra.mxu0 %v3996
    %4197 = vmatprep.subr.mxu0 0.0
    %4198 = vmatpush1.msra.mxu0 %v3991
    %4199 = vmatprep.subr.mxu0 0.0
    %4200 = vmatpush2.msra.mxu0 0.0
    %4201 = vmatprep.subr.mxu0 0.0
    %4202 = vmatpush2.msra.mxu0 0.0
    %4203 = vmatprep.subr.mxu0 0.0
    %4204 = vmatpush2.msra.mxu0 0.0
    %4205 = vmatprep.subr.mxu0 0.0
    %4206 = vmatpush2.msra.mxu0 0.0
    %4207 = vmatprep.subr.mxu0 0.0
    %4208 = vmatpush2.msra.mxu0 0.0
    %4209 = vmatprep.subr.mxu0 0.0
    %4210 = vmatpush2.msra.mxu0 0.0
    %4211 = vmatprep.subr.mxu0 0.0
    %4212 = vmatpush2.msra.mxu0 0.0
    %4213 = vmatprep.subr.mxu0 0.0
    %4214 = vmatpush2.msra.mxu0 0.0
    %4215 = vmatprep.subr.mxu0 0.0
    %4216 = vmatpush2.msra.mxu0 0.0
    %4217 = vmatprep.subr.mxu0 0.0
    %4218 = vmatpush2.msra.mxu0 0.0
    %4219 = vmatprep.subr.mxu0 0.0
    %4220 = vmatpush2.msra.mxu0 0.0
    %4221 = vmatprep.subr.mxu0 0.0
    %4222 = vmatpush2.msra.mxu0 0.0
    %4223 = vmatprep.subr.mxu0 0.0
    %4224 = vmatpush2.msra.mxu0 0.0
    %4225 = vmatprep.subr.mxu0 0.0
    %4226 = vmatpush2.msra.mxu0 0.0
    %4227 = vmatprep.subr.mxu0 0.0
    %4228 = vmatpush2.msra.mxu0 0.0
    %4229 = vmatprep.subr.mxu0 0.0
    %4230 = vmatpush2.msra.mxu0 0.0
    %4231 = vmatprep.mubr.f32.mxu0 0.0
    %4232 = vmatmul.mubr.f32.gmra.mxu0 %v4162
    %v4233 = vpop.f32.mrf.mxu0
    %v4234 = vadd.f32 %v4153, %v4233
    %v4235 = vpop.f32.mrf.mxu0
    %4236 = vmatprep.mubr.f32.mxu0 0.0
    %4237 = vmatmul.mubr.f32.gmra.mxu0 %v4165
    %v4238 = vpop.f32.mrf.mxu0
    %v4239 = vadd.f32 %v4158, %v4238
    %v4240 = vpop.f32.mrf.mxu0
    %4241 = vdwg.mxu0
    %s4242 = scalar_lea.vmem [#allocation2], 416
    %v4243 = vld [vmem:[%s4242] sm:$0xff]
    %v4244 = vld [vmem:[%s4242 + $0x8] sm:$0xff]
    %v4246 = vsel %vm243, %v4243, 0
    %v4249 = vsel %vm243, %v4244, 0
    %4251 = vmatprep.subr.mxu0 0.0
    %4252 = vmatpush1.msra.mxu0 0.0
    %4253 = vmatprep.subr.mxu0 0.0
    %4254 = vmatpush1.msra.mxu0 0.0
    %4255 = vmatprep.subr.mxu0 0.0
    %4256 = vmatpush1.msra.mxu0 0.0
    %4257 = vmatprep.subr.mxu0 0.0
    %4258 = vmatpush1.msra.mxu0 0.0
    %4259 = vmatprep.subr.mxu0 0.0
    %4260 = vmatpush1.msra.mxu0 0.0
    %4261 = vmatprep.subr.mxu0 0.0
    %4262 = vmatpush1.msra.mxu0 0.0
    %4263 = vmatprep.subr.mxu0 0.0
    %4264 = vmatpush1.msra.mxu0 0.0
    %4265 = vmatprep.subr.mxu0 0.0
    %4266 = vmatpush1.msra.mxu0 0.0
    %4267 = vmatprep.subr.mxu0 0.0
    %4268 = vmatpush1.msra.mxu0 0.0
    %4269 = vmatprep.subr.mxu0 0.0
    %4270 = vmatpush1.msra.mxu0 0.0
    %4271 = vmatprep.subr.mxu0 0.0
    %4272 = vmatpush1.msra.mxu0 0.0
    %4273 = vmatprep.subr.mxu0 0.0
    %4274 = vmatpush1.msra.mxu0 0.0
    %4275 = vmatprep.subr.mxu0 0.0
    %4276 = vmatpush1.msra.mxu0 0.0
    %4277 = vmatprep.subr.mxu0 0.0
    %4278 = vmatpush1.msra.mxu0 0.0
    %4279 = vmatprep.subr.mxu0 0.0
    %4280 = vmatpush1.msra.mxu0 %v4071
    %4281 = vmatprep.subr.mxu0 0.0
    %4282 = vmatpush1.msra.mxu0 %v4066
    %4283 = vmatprep.subr.mxu0 0.0
    %4284 = vmatpush2.msra.mxu0 0.0
    %4285 = vmatprep.subr.mxu0 0.0
    %4286 = vmatpush2.msra.mxu0 0.0
    %4287 = vmatprep.subr.mxu0 0.0
    %4288 = vmatpush2.msra.mxu0 0.0
    %4289 = vmatprep.subr.mxu0 0.0
    %4290 = vmatpush2.msra.mxu0 0.0
    %4291 = vmatprep.subr.mxu0 0.0
    %4292 = vmatpush2.msra.mxu0 0.0
    %4293 = vmatprep.subr.mxu0 0.0
    %4294 = vmatpush2.msra.mxu0 0.0
    %4295 = vmatprep.subr.mxu0 0.0
    %4296 = vmatpush2.msra.mxu0 0.0
    %4297 = vmatprep.subr.mxu0 0.0
    %4298 = vmatpush2.msra.mxu0 0.0
    %4299 = vmatprep.subr.mxu0 0.0
    %4300 = vmatpush2.msra.mxu0 0.0
    %4301 = vmatprep.subr.mxu0 0.0
    %4302 = vmatpush2.msra.mxu0 0.0
    %4303 = vmatprep.subr.mxu0 0.0
    %4304 = vmatpush2.msra.mxu0 0.0
    %4305 = vmatprep.subr.mxu0 0.0
    %4306 = vmatpush2.msra.mxu0 0.0
    %4307 = vmatprep.subr.mxu0 0.0
    %4308 = vmatpush2.msra.mxu0 0.0
    %4309 = vmatprep.subr.mxu0 0.0
    %4310 = vmatpush2.msra.mxu0 0.0
    %4311 = vmatprep.subr.mxu0 0.0
    %4312 = vmatpush2.msra.mxu0 0.0
    %4313 = vmatprep.subr.mxu0 0.0
    %4314 = vmatpush2.msra.mxu0 0.0
    %4315 = vmatprep.mubr.f32.mxu0 0.0
    %4316 = vmatmul.mubr.f32.gmra.mxu0 %v4246
    %v4317 = vpop.f32.mrf.mxu0
    %v4318 = vadd.f32 0.0, %v4317
    %v4319 = vpop.f32.mrf.mxu0
    %4320 = vmatprep.mubr.f32.mxu0 0.0
    %4321 = vmatmul.mubr.f32.gmra.mxu0 %v4249
    %v4322 = vpop.f32.mrf.mxu0
    %v4323 = vadd.f32 0.0, %v4322
    %v4324 = vpop.f32.mrf.mxu0
    %4325 = vdwg.mxu0
    %v4326 = vadd.f32 %v4234, %v4318
    %v4327 = vadd.f32 %v4239, %v4323
    %s4328 = scalar_lea.vmem [#allocation4], 112
    %v4329 = vld [vmem:[%s4328] sm:$0xff]
    %v4330 = vld [vmem:[%s4328 + $0x8] sm:$0xff]
    %4332 = vset.pattern.permute.xlu0 0
    %4333 = vperm.xlu0 %4332, %v4329
    %v4334 = vpop.permute.xlu0 %4333
    %4337 = vset.pattern.permute.xlu0 0
    %4338 = vperm.xlu0 %4337, %v4330
    %v4339 = vpop.permute.xlu0 %4338
    %v4341 = vadd.f32 %v4326, %v4334
    %v4342 = vadd.f32 %v4327, %v4339
    %v4343 = vmax.f32 %v4341, 0.0
    %v4344 = vmax.f32 %v4342, 0.0
    %s4345 = scalar_lea.vmem [#allocation6], 352
    %v4346 = vld [vmem:[%s4345] sm:$0xff]
    %v4347 = vld [vmem:[%s4345 + $0x8] sm:$0xff]
    %v4348 = vld [vmem:[%s4345 + $0x10] sm:$0xff]
    %v4349 = vld [vmem:[%s4345 + $0x18] sm:$0xff]
    %v4351 = vsel %vm76, %v4343, 0
    %v4354 = vsel %vm76, %v4344, 0
    %4356 = vmatprep.subr.mxu0 0.0
    %4357 = vmatpush1.msra.mxu0 0.0
    %4358 = vmatprep.subr.mxu0 0.0
    %4359 = vmatpush1.msra.mxu0 0.0
    %4360 = vmatprep.subr.mxu0 0.0
    %4361 = vmatpush1.msra.mxu0 0.0
    %4362 = vmatprep.subr.mxu0 0.0
    %4363 = vmatpush1.msra.mxu0 0.0
    %4364 = vmatprep.subr.mxu0 0.0
    %4365 = vmatpush1.msra.mxu0 0.0
    %4366 = vmatprep.subr.mxu0 0.0
    %4367 = vmatpush1.msra.mxu0 0.0
    %4368 = vmatprep.subr.mxu0 0.0
    %4369 = vmatpush1.msra.mxu0 0.0
    %4370 = vmatprep.subr.mxu0 0.0
    %4371 = vmatpush1.msra.mxu0 0.0
    %4372 = vmatprep.subr.mxu0 0.0
    %4373 = vmatpush1.msra.mxu0 0.0
    %4374 = vmatprep.subr.mxu0 0.0
    %4375 = vmatpush1.msra.mxu0 0.0
    %4376 = vmatprep.subr.mxu0 0.0
    %4377 = vmatpush1.msra.mxu0 0.0
    %4378 = vmatprep.subr.mxu0 0.0
    %4379 = vmatpush1.msra.mxu0 0.0
    %4380 = vmatprep.subr.mxu0 0.0
    %4381 = vmatpush1.msra.mxu0 %v4349
    %4382 = vmatprep.subr.mxu0 0.0
    %4383 = vmatpush1.msra.mxu0 %v4348
    %4384 = vmatprep.subr.mxu0 0.0
    %4385 = vmatpush1.msra.mxu0 %v4347
    %4386 = vmatprep.subr.mxu0 0.0
    %4387 = vmatpush1.msra.mxu0 %v4346
    %4388 = vmatprep.subr.mxu0 0.0
    %4389 = vmatpush2.msra.mxu0 0.0
    %4390 = vmatprep.subr.mxu0 0.0
    %4391 = vmatpush2.msra.mxu0 0.0
    %4392 = vmatprep.subr.mxu0 0.0
    %4393 = vmatpush2.msra.mxu0 0.0
    %4394 = vmatprep.subr.mxu0 0.0
    %4395 = vmatpush2.msra.mxu0 0.0
    %4396 = vmatprep.subr.mxu0 0.0
    %4397 = vmatpush2.msra.mxu0 0.0
    %4398 = vmatprep.subr.mxu0 0.0
    %4399 = vmatpush2.msra.mxu0 0.0
    %4400 = vmatprep.subr.mxu0 0.0
    %4401 = vmatpush2.msra.mxu0 0.0
    %4402 = vmatprep.subr.mxu0 0.0
    %4403 = vmatpush2.msra.mxu0 0.0
    %4404 = vmatprep.subr.mxu0 0.0
    %4405 = vmatpush2.msra.mxu0 0.0
    %4406 = vmatprep.subr.mxu0 0.0
    %4407 = vmatpush2.msra.mxu0 0.0
    %4408 = vmatprep.subr.mxu0 0.0
    %4409 = vmatpush2.msra.mxu0 0.0
    %4410 = vmatprep.subr.mxu0 0.0
    %4411 = vmatpush2.msra.mxu0 0.0
    %4412 = vmatprep.subr.mxu0 0.0
    %4413 = vmatpush2.msra.mxu0 0.0
    %4414 = vmatprep.subr.mxu0 0.0
    %4415 = vmatpush2.msra.mxu0 0.0
    %4416 = vmatprep.subr.mxu0 0.0
    %4417 = vmatpush2.msra.mxu0 0.0
    %4418 = vmatprep.subr.mxu0 0.0
    %4419 = vmatpush2.msra.mxu0 0.0
    %4420 = vmatprep.mubr.f32.mxu0 0.0
    %4421 = vmatmul.mubr.f32.gmra.mxu0 %v4351
    %v4422 = vpop.f32.mrf.mxu0
    %v4423 = vadd.f32 0.0, %v4422
    %v4424 = vpop.f32.mrf.mxu0
    %4425 = vmatprep.mubr.f32.mxu0 0.0
    %4426 = vmatmul.mubr.f32.gmra.mxu0 %v4354
    %v4427 = vpop.f32.mrf.mxu0
    %v4428 = vadd.f32 0.0, %v4427
    %v4429 = vpop.f32.mrf.mxu0
    %4430 = vdwg.mxu0
    %4431 = vmatprep.subr.mxu0 0.0
    %4432 = vmatpush1.msra.mxu0 0.0
    %4433 = vmatprep.subr.mxu0 0.0
    %4434 = vmatpush1.msra.mxu0 0.0
    %4435 = vmatprep.subr.mxu0 0.0
    %4436 = vmatpush1.msra.mxu0 0.0
    %4437 = vmatprep.subr.mxu0 0.0
    %4438 = vmatpush1.msra.mxu0 0.0
    %4439 = vmatprep.subr.mxu0 0.0
    %4440 = vmatpush1.msra.mxu0 0.0
    %4441 = vmatprep.subr.mxu0 0.0
    %4442 = vmatpush1.msra.mxu0 0.0
    %4443 = vmatprep.subr.mxu0 0.0
    %4444 = vmatpush1.msra.mxu0 0.0
    %4445 = vmatprep.subr.mxu0 0.0
    %4446 = vmatpush1.msra.mxu0 0.0
    %4447 = vmatprep.subr.mxu0 0.0
    %4448 = vmatpush1.msra.mxu0 0.0
    %4449 = vmatprep.subr.mxu0 0.0
    %4450 = vmatpush1.msra.mxu0 0.0
    %4451 = vmatprep.subr.mxu0 0.0
    %4452 = vmatpush1.msra.mxu0 0.0
    %4453 = vmatprep.subr.mxu0 0.0
    %4454 = vmatpush1.msra.mxu0 0.0
    %4455 = vmatprep.subr.mxu0 0.0
    %4456 = vmatpush1.msra.mxu0 %v75
    %4457 = vmatprep.subr.mxu0 0.0
    %4458 = vmatpush1.msra.mxu0 %v74
    %4459 = vmatprep.subr.mxu0 0.0
    %4460 = vmatpush1.msra.mxu0 %v73
    %4461 = vmatprep.subr.mxu0 0.0
    %4462 = vmatpush1.msra.mxu0 %v72
    %4463 = vmatprep.subr.mxu0 0.0
    %4464 = vmatpush2.msra.mxu0 0.0
    %4465 = vmatprep.subr.mxu0 0.0
    %4466 = vmatpush2.msra.mxu0 0.0
    %4467 = vmatprep.subr.mxu0 0.0
    %4468 = vmatpush2.msra.mxu0 0.0
    %4469 = vmatprep.subr.mxu0 0.0
    %4470 = vmatpush2.msra.mxu0 0.0
    %4471 = vmatprep.subr.mxu0 0.0
    %4472 = vmatpush2.msra.mxu0 0.0
    %4473 = vmatprep.subr.mxu0 0.0
    %4474 = vmatpush2.msra.mxu0 0.0
    %4475 = vmatprep.subr.mxu0 0.0
    %4476 = vmatpush2.msra.mxu0 0.0
    %4477 = vmatprep.subr.mxu0 0.0
    %4478 = vmatpush2.msra.mxu0 0.0
    %4479 = vmatprep.subr.mxu0 0.0
    %4480 = vmatpush2.msra.mxu0 0.0
    %4481 = vmatprep.subr.mxu0 0.0
    %4482 = vmatpush2.msra.mxu0 0.0
    %4483 = vmatprep.subr.mxu0 0.0
    %4484 = vmatpush2.msra.mxu0 0.0
    %4485 = vmatprep.subr.mxu0 0.0
    %4486 = vmatpush2.msra.mxu0 0.0
    %4487 = vmatprep.subr.mxu0 0.0
    %4488 = vmatpush2.msra.mxu0 0.0
    %4489 = vmatprep.subr.mxu0 0.0
    %4490 = vmatpush2.msra.mxu0 0.0
    %4491 = vmatprep.subr.mxu0 0.0
    %4492 = vmatpush2.msra.mxu0 0.0
    %4493 = vmatprep.subr.mxu0 0.0
    %4494 = vmatpush2.msra.mxu0 0.0
    %4495 = vmatprep.mubr.f32.mxu0 0.0
    %4496 = vmatmul.mubr.f32.gmra.mxu0 %v941
    %v4497 = vpop.f32.mrf.mxu0
    %v4498 = vadd.f32 0.0, %v4497
    %v4499 = vpop.f32.mrf.mxu0
    %4500 = vmatprep.mubr.f32.mxu0 0.0
    %4501 = vmatmul.mubr.f32.gmra.mxu0 %v944
    %v4502 = vpop.f32.mrf.mxu0
    %v4503 = vadd.f32 0.0, %v4502
    %v4504 = vpop.f32.mrf.mxu0
    %4505 = vdwg.mxu0
    %4506 = vmatprep.subr.mxu0 0.0
    %4507 = vmatpush1.msra.mxu0 0.0
    %4508 = vmatprep.subr.mxu0 0.0
    %4509 = vmatpush1.msra.mxu0 0.0
    %4510 = vmatprep.subr.mxu0 0.0
    %4511 = vmatpush1.msra.mxu0 0.0
    %4512 = vmatprep.subr.mxu0 0.0
    %4513 = vmatpush1.msra.mxu0 0.0
    %4514 = vmatprep.subr.mxu0 0.0
    %4515 = vmatpush1.msra.mxu0 0.0
    %4516 = vmatprep.subr.mxu0 0.0
    %4517 = vmatpush1.msra.mxu0 0.0
    %4518 = vmatprep.subr.mxu0 0.0
    %4519 = vmatpush1.msra.mxu0 0.0
    %4520 = vmatprep.subr.mxu0 0.0
    %4521 = vmatpush1.msra.mxu0 0.0
    %4522 = vmatprep.subr.mxu0 0.0
    %4523 = vmatpush1.msra.mxu0 0.0
    %4524 = vmatprep.subr.mxu0 0.0
    %4525 = vmatpush1.msra.mxu0 0.0
    %4526 = vmatprep.subr.mxu0 0.0
    %4527 = vmatpush1.msra.mxu0 0.0
    %4528 = vmatprep.subr.mxu0 0.0
    %4529 = vmatpush1.msra.mxu0 0.0
    %4530 = vmatprep.subr.mxu0 0.0
    %4531 = vmatpush1.msra.mxu0 %v162
    %4532 = vmatprep.subr.mxu0 0.0
    %4533 = vmatpush1.msra.mxu0 %v161
    %4534 = vmatprep.subr.mxu0 0.0
    %4535 = vmatpush1.msra.mxu0 %v160
    %4536 = vmatprep.subr.mxu0 0.0
    %4537 = vmatpush1.msra.mxu0 %v159
    %4538 = vmatprep.subr.mxu0 0.0
    %4539 = vmatpush2.msra.mxu0 0.0
    %4540 = vmatprep.subr.mxu0 0.0
    %4541 = vmatpush2.msra.mxu0 0.0
    %4542 = vmatprep.subr.mxu0 0.0
    %4543 = vmatpush2.msra.mxu0 0.0
    %4544 = vmatprep.subr.mxu0 0.0
    %4545 = vmatpush2.msra.mxu0 0.0
    %4546 = vmatprep.subr.mxu0 0.0
    %4547 = vmatpush2.msra.mxu0 0.0
    %4548 = vmatprep.subr.mxu0 0.0
    %4549 = vmatpush2.msra.mxu0 0.0
    %4550 = vmatprep.subr.mxu0 0.0
    %4551 = vmatpush2.msra.mxu0 0.0
    %4552 = vmatprep.subr.mxu0 0.0
    %4553 = vmatpush2.msra.mxu0 0.0
    %4554 = vmatprep.subr.mxu0 0.0
    %4555 = vmatpush2.msra.mxu0 0.0
    %4556 = vmatprep.subr.mxu0 0.0
    %4557 = vmatpush2.msra.mxu0 0.0
    %4558 = vmatprep.subr.mxu0 0.0
    %4559 = vmatpush2.msra.mxu0 0.0
    %4560 = vmatprep.subr.mxu0 0.0
    %4561 = vmatpush2.msra.mxu0 0.0
    %4562 = vmatprep.subr.mxu0 0.0
    %4563 = vmatpush2.msra.mxu0 0.0
    %4564 = vmatprep.subr.mxu0 0.0
    %4565 = vmatpush2.msra.mxu0 0.0
    %4566 = vmatprep.subr.mxu0 0.0
    %4567 = vmatpush2.msra.mxu0 0.0
    %4568 = vmatprep.subr.mxu0 0.0
    %4569 = vmatpush2.msra.mxu0 0.0
    %4570 = vmatprep.mubr.f32.mxu0 0.0
    %4571 = vmatmul.mubr.f32.gmra.mxu0 %v941
    %v4572 = vpop.f32.mrf.mxu0
    %v4573 = vadd.f32 0.0, %v4572
    %v4574 = vpop.f32.mrf.mxu0
    %4575 = vmatprep.mubr.f32.mxu0 0.0
    %4576 = vmatmul.mubr.f32.gmra.mxu0 %v944
    %v4577 = vpop.f32.mrf.mxu0
    %v4578 = vadd.f32 0.0, %v4577
    %v4579 = vpop.f32.mrf.mxu0
    %4580 = vdwg.mxu0
    %s4581 = scalar_lea.vmem [#allocation2], 432
    %v4582 = vld [vmem:[%s4581] sm:$0xff]
    %v4583 = vld [vmem:[%s4581 + $0x8] sm:$0xff]
    %s4584 = scalar_lea.vmem [#allocation2], 448
    %v4585 = vld [vmem:[%s4584] sm:$0xff]
    %v4586 = vld [vmem:[%s4584 + $0x8] sm:$0xff]
    %v4588 = vsel %vm243, %v4585, 0
    %v4591 = vsel %vm243, %v4586, 0
    %4593 = vmatprep.subr.mxu0 0.0
    %4594 = vmatpush1.msra.mxu0 0.0
    %4595 = vmatprep.subr.mxu0 0.0
    %4596 = vmatpush1.msra.mxu0 0.0
    %4597 = vmatprep.subr.mxu0 0.0
    %4598 = vmatpush1.msra.mxu0 0.0
    %4599 = vmatprep.subr.mxu0 0.0
    %4600 = vmatpush1.msra.mxu0 0.0
    %4601 = vmatprep.subr.mxu0 0.0
    %4602 = vmatpush1.msra.mxu0 0.0
    %4603 = vmatprep.subr.mxu0 0.0
    %4604 = vmatpush1.msra.mxu0 0.0
    %4605 = vmatprep.subr.mxu0 0.0
    %4606 = vmatpush1.msra.mxu0 0.0
    %4607 = vmatprep.subr.mxu0 0.0
    %4608 = vmatpush1.msra.mxu0 0.0
    %4609 = vmatprep.subr.mxu0 0.0
    %4610 = vmatpush1.msra.mxu0 0.0
    %4611 = vmatprep.subr.mxu0 0.0
    %4612 = vmatpush1.msra.mxu0 0.0
    %4613 = vmatprep.subr.mxu0 0.0
    %4614 = vmatpush1.msra.mxu0 0.0
    %4615 = vmatprep.subr.mxu0 0.0
    %4616 = vmatpush1.msra.mxu0 0.0
    %4617 = vmatprep.subr.mxu0 0.0
    %4618 = vmatpush1.msra.mxu0 0.0
    %4619 = vmatprep.subr.mxu0 0.0
    %4620 = vmatpush1.msra.mxu0 0.0
    %4621 = vmatprep.subr.mxu0 0.0
    %4622 = vmatpush1.msra.mxu0 %v934
    %4623 = vmatprep.subr.mxu0 0.0
    %4624 = vmatpush1.msra.mxu0 %v933
    %4625 = vmatprep.subr.mxu0 0.0
    %4626 = vmatpush2.msra.mxu0 0.0
    %4627 = vmatprep.subr.mxu0 0.0
    %4628 = vmatpush2.msra.mxu0 0.0
    %4629 = vmatprep.subr.mxu0 0.0
    %4630 = vmatpush2.msra.mxu0 0.0
    %4631 = vmatprep.subr.mxu0 0.0
    %4632 = vmatpush2.msra.mxu0 0.0
    %4633 = vmatprep.subr.mxu0 0.0
    %4634 = vmatpush2.msra.mxu0 0.0
    %4635 = vmatprep.subr.mxu0 0.0
    %4636 = vmatpush2.msra.mxu0 0.0
    %4637 = vmatprep.subr.mxu0 0.0
    %4638 = vmatpush2.msra.mxu0 0.0
    %4639 = vmatprep.subr.mxu0 0.0
    %4640 = vmatpush2.msra.mxu0 0.0
    %4641 = vmatprep.subr.mxu0 0.0
    %4642 = vmatpush2.msra.mxu0 0.0
    %4643 = vmatprep.subr.mxu0 0.0
    %4644 = vmatpush2.msra.mxu0 0.0
    %4645 = vmatprep.subr.mxu0 0.0
    %4646 = vmatpush2.msra.mxu0 0.0
    %4647 = vmatprep.subr.mxu0 0.0
    %4648 = vmatpush2.msra.mxu0 0.0
    %4649 = vmatprep.subr.mxu0 0.0
    %4650 = vmatpush2.msra.mxu0 0.0
    %4651 = vmatprep.subr.mxu0 0.0
    %4652 = vmatpush2.msra.mxu0 0.0
    %4653 = vmatprep.subr.mxu0 0.0
    %4654 = vmatpush2.msra.mxu0 0.0
    %4655 = vmatprep.subr.mxu0 0.0
    %4656 = vmatpush2.msra.mxu0 0.0
    %4657 = vmatprep.mubr.f32.mxu0 0.0
    %4658 = vmatmul.mubr.f32.gmra.mxu0 %v4588
    %v4659 = vpop.f32.mrf.mxu0
    %v4660 = vadd.f32 0.0, %v4659
    %v4661 = vpop.f32.mrf.mxu0
    %4662 = vmatprep.mubr.f32.mxu0 0.0
    %4663 = vmatmul.mubr.f32.gmra.mxu0 %v4591
    %v4664 = vpop.f32.mrf.mxu0
    %v4665 = vadd.f32 0.0, %v4664
    %v4666 = vpop.f32.mrf.mxu0
    %4667 = vdwg.mxu0
    %v4669 = vsel %vm243, %v4582, 0
    %v4672 = vsel %vm243, %v4583, 0
    %4674 = vmatprep.subr.mxu0 0.0
    %4675 = vmatpush1.msra.mxu0 0.0
    %4676 = vmatprep.subr.mxu0 0.0
    %4677 = vmatpush1.msra.mxu0 0.0
    %4678 = vmatprep.subr.mxu0 0.0
    %4679 = vmatpush1.msra.mxu0 0.0
    %4680 = vmatprep.subr.mxu0 0.0
    %4681 = vmatpush1.msra.mxu0 0.0
    %4682 = vmatprep.subr.mxu0 0.0
    %4683 = vmatpush1.msra.mxu0 0.0
    %4684 = vmatprep.subr.mxu0 0.0
    %4685 = vmatpush1.msra.mxu0 0.0
    %4686 = vmatprep.subr.mxu0 0.0
    %4687 = vmatpush1.msra.mxu0 0.0
    %4688 = vmatprep.subr.mxu0 0.0
    %4689 = vmatpush1.msra.mxu0 0.0
    %4690 = vmatprep.subr.mxu0 0.0
    %4691 = vmatpush1.msra.mxu0 0.0
    %4692 = vmatprep.subr.mxu0 0.0
    %4693 = vmatpush1.msra.mxu0 0.0
    %4694 = vmatprep.subr.mxu0 0.0
    %4695 = vmatpush1.msra.mxu0 0.0
    %4696 = vmatprep.subr.mxu0 0.0
    %4697 = vmatpush1.msra.mxu0 0.0
    %4698 = vmatprep.subr.mxu0 0.0
    %4699 = vmatpush1.msra.mxu0 0.0
    %4700 = vmatprep.subr.mxu0 0.0
    %4701 = vmatpush1.msra.mxu0 0.0
    %4702 = vmatprep.subr.mxu0 0.0
    %4703 = vmatpush1.msra.mxu0 %v4503
    %4704 = vmatprep.subr.mxu0 0.0
    %4705 = vmatpush1.msra.mxu0 %v4498
    %4706 = vmatprep.subr.mxu0 0.0
    %4707 = vmatpush2.msra.mxu0 0.0
    %4708 = vmatprep.subr.mxu0 0.0
    %4709 = vmatpush2.msra.mxu0 0.0
    %4710 = vmatprep.subr.mxu0 0.0
    %4711 = vmatpush2.msra.mxu0 0.0
    %4712 = vmatprep.subr.mxu0 0.0
    %4713 = vmatpush2.msra.mxu0 0.0
    %4714 = vmatprep.subr.mxu0 0.0
    %4715 = vmatpush2.msra.mxu0 0.0
    %4716 = vmatprep.subr.mxu0 0.0
    %4717 = vmatpush2.msra.mxu0 0.0
    %4718 = vmatprep.subr.mxu0 0.0
    %4719 = vmatpush2.msra.mxu0 0.0
    %4720 = vmatprep.subr.mxu0 0.0
    %4721 = vmatpush2.msra.mxu0 0.0
    %4722 = vmatprep.subr.mxu0 0.0
    %4723 = vmatpush2.msra.mxu0 0.0
    %4724 = vmatprep.subr.mxu0 0.0
    %4725 = vmatpush2.msra.mxu0 0.0
    %4726 = vmatprep.subr.mxu0 0.0
    %4727 = vmatpush2.msra.mxu0 0.0
    %4728 = vmatprep.subr.mxu0 0.0
    %4729 = vmatpush2.msra.mxu0 0.0
    %4730 = vmatprep.subr.mxu0 0.0
    %4731 = vmatpush2.msra.mxu0 0.0
    %4732 = vmatprep.subr.mxu0 0.0
    %4733 = vmatpush2.msra.mxu0 0.0
    %4734 = vmatprep.subr.mxu0 0.0
    %4735 = vmatpush2.msra.mxu0 0.0
    %4736 = vmatprep.subr.mxu0 0.0
    %4737 = vmatpush2.msra.mxu0 0.0
    %4738 = vmatprep.mubr.f32.mxu0 0.0
    %4739 = vmatmul.mubr.f32.gmra.mxu0 %v4669
    %v4740 = vpop.f32.mrf.mxu0
    %v4741 = vadd.f32 %v4660, %v4740
    %v4742 = vpop.f32.mrf.mxu0
    %4743 = vmatprep.mubr.f32.mxu0 0.0
    %4744 = vmatmul.mubr.f32.gmra.mxu0 %v4672
    %v4745 = vpop.f32.mrf.mxu0
    %v4746 = vadd.f32 %v4665, %v4745
    %v4747 = vpop.f32.mrf.mxu0
    %4748 = vdwg.mxu0
    %s4749 = scalar_lea.vmem [#allocation2], 464
    %v4750 = vld [vmem:[%s4749] sm:$0xff]
    %v4751 = vld [vmem:[%s4749 + $0x8] sm:$0xff]
    %v4753 = vsel %vm243, %v4750, 0
    %v4756 = vsel %vm243, %v4751, 0
    %4758 = vmatprep.subr.mxu0 0.0
    %4759 = vmatpush1.msra.mxu0 0.0
    %4760 = vmatprep.subr.mxu0 0.0
    %4761 = vmatpush1.msra.mxu0 0.0
    %4762 = vmatprep.subr.mxu0 0.0
    %4763 = vmatpush1.msra.mxu0 0.0
    %4764 = vmatprep.subr.mxu0 0.0
    %4765 = vmatpush1.msra.mxu0 0.0
    %4766 = vmatprep.subr.mxu0 0.0
    %4767 = vmatpush1.msra.mxu0 0.0
    %4768 = vmatprep.subr.mxu0 0.0
    %4769 = vmatpush1.msra.mxu0 0.0
    %4770 = vmatprep.subr.mxu0 0.0
    %4771 = vmatpush1.msra.mxu0 0.0
    %4772 = vmatprep.subr.mxu0 0.0
    %4773 = vmatpush1.msra.mxu0 0.0
    %4774 = vmatprep.subr.mxu0 0.0
    %4775 = vmatpush1.msra.mxu0 0.0
    %4776 = vmatprep.subr.mxu0 0.0
    %4777 = vmatpush1.msra.mxu0 0.0
    %4778 = vmatprep.subr.mxu0 0.0
    %4779 = vmatpush1.msra.mxu0 0.0
    %4780 = vmatprep.subr.mxu0 0.0
    %4781 = vmatpush1.msra.mxu0 0.0
    %4782 = vmatprep.subr.mxu0 0.0
    %4783 = vmatpush1.msra.mxu0 0.0
    %4784 = vmatprep.subr.mxu0 0.0
    %4785 = vmatpush1.msra.mxu0 0.0
    %4786 = vmatprep.subr.mxu0 0.0
    %4787 = vmatpush1.msra.mxu0 %v4578
    %4788 = vmatprep.subr.mxu0 0.0
    %4789 = vmatpush1.msra.mxu0 %v4573
    %4790 = vmatprep.subr.mxu0 0.0
    %4791 = vmatpush2.msra.mxu0 0.0
    %4792 = vmatprep.subr.mxu0 0.0
    %4793 = vmatpush2.msra.mxu0 0.0
    %4794 = vmatprep.subr.mxu0 0.0
    %4795 = vmatpush2.msra.mxu0 0.0
    %4796 = vmatprep.subr.mxu0 0.0
    %4797 = vmatpush2.msra.mxu0 0.0
    %4798 = vmatprep.subr.mxu0 0.0
    %4799 = vmatpush2.msra.mxu0 0.0
    %4800 = vmatprep.subr.mxu0 0.0
    %4801 = vmatpush2.msra.mxu0 0.0
    %4802 = vmatprep.subr.mxu0 0.0
    %4803 = vmatpush2.msra.mxu0 0.0
    %4804 = vmatprep.subr.mxu0 0.0
    %4805 = vmatpush2.msra.mxu0 0.0
    %4806 = vmatprep.subr.mxu0 0.0
    %4807 = vmatpush2.msra.mxu0 0.0
    %4808 = vmatprep.subr.mxu0 0.0
    %4809 = vmatpush2.msra.mxu0 0.0
    %4810 = vmatprep.subr.mxu0 0.0
    %4811 = vmatpush2.msra.mxu0 0.0
    %4812 = vmatprep.subr.mxu0 0.0
    %4813 = vmatpush2.msra.mxu0 0.0
    %4814 = vmatprep.subr.mxu0 0.0
    %4815 = vmatpush2.msra.mxu0 0.0
    %4816 = vmatprep.subr.mxu0 0.0
    %4817 = vmatpush2.msra.mxu0 0.0
    %4818 = vmatprep.subr.mxu0 0.0
    %4819 = vmatpush2.msra.mxu0 0.0
    %4820 = vmatprep.subr.mxu0 0.0
    %4821 = vmatpush2.msra.mxu0 0.0
    %4822 = vmatprep.mubr.f32.mxu0 0.0
    %4823 = vmatmul.mubr.f32.gmra.mxu0 %v4753
    %v4824 = vpop.f32.mrf.mxu0
    %v4825 = vadd.f32 0.0, %v4824
    %v4826 = vpop.f32.mrf.mxu0
    %4827 = vmatprep.mubr.f32.mxu0 0.0
    %4828 = vmatmul.mubr.f32.gmra.mxu0 %v4756
    %v4829 = vpop.f32.mrf.mxu0
    %v4830 = vadd.f32 0.0, %v4829
    %v4831 = vpop.f32.mrf.mxu0
    %4832 = vdwg.mxu0
    %v4833 = vadd.f32 %v4741, %v4825
    %v4834 = vadd.f32 %v4746, %v4830
    %v4836 = vsel %vm76, %v4423, 0
    %v4839 = vsel %vm76, %v4428, 0
    %4841 = vmatprep.subr.mxu0 0.0
    %4842 = vmatpush1.msra.mxu0 0.0
    %4843 = vmatprep.subr.mxu0 0.0
    %4844 = vmatpush1.msra.mxu0 0.0
    %4845 = vmatprep.subr.mxu0 0.0
    %4846 = vmatpush1.msra.mxu0 0.0
    %4847 = vmatprep.subr.mxu0 0.0
    %4848 = vmatpush1.msra.mxu0 0.0
    %4849 = vmatprep.subr.mxu0 0.0
    %4850 = vmatpush1.msra.mxu0 0.0
    %4851 = vmatprep.subr.mxu0 0.0
    %4852 = vmatpush1.msra.mxu0 0.0
    %4853 = vmatprep.subr.mxu0 0.0
    %4854 = vmatpush1.msra.mxu0 0.0
    %4855 = vmatprep.subr.mxu0 0.0
    %4856 = vmatpush1.msra.mxu0 0.0
    %4857 = vmatprep.subr.mxu0 0.0
    %4858 = vmatpush1.msra.mxu0 0.0
    %4859 = vmatprep.subr.mxu0 0.0
    %4860 = vmatpush1.msra.mxu0 0.0
    %4861 = vmatprep.subr.mxu0 0.0
    %4862 = vmatpush1.msra.mxu0 0.0
    %4863 = vmatprep.subr.mxu0 0.0
    %4864 = vmatpush1.msra.mxu0 0.0
    %4865 = vmatprep.subr.mxu0 0.0
    %4866 = vmatpush1.msra.mxu0 %v75
    %4867 = vmatprep.subr.mxu0 0.0
    %4868 = vmatpush1.msra.mxu0 %v74
    %4869 = vmatprep.subr.mxu0 0.0
    %4870 = vmatpush1.msra.mxu0 %v73
    %4871 = vmatprep.subr.mxu0 0.0
    %4872 = vmatpush1.msra.mxu0 %v72
    %4873 = vmatprep.subr.mxu0 0.0
    %4874 = vmatpush2.msra.mxu0 0.0
    %4875 = vmatprep.subr.mxu0 0.0
    %4876 = vmatpush2.msra.mxu0 0.0
    %4877 = vmatprep.subr.mxu0 0.0
    %4878 = vmatpush2.msra.mxu0 0.0
    %4879 = vmatprep.subr.mxu0 0.0
    %4880 = vmatpush2.msra.mxu0 0.0
    %4881 = vmatprep.subr.mxu0 0.0
    %4882 = vmatpush2.msra.mxu0 0.0
    %4883 = vmatprep.subr.mxu0 0.0
    %4884 = vmatpush2.msra.mxu0 0.0
    %4885 = vmatprep.subr.mxu0 0.0
    %4886 = vmatpush2.msra.mxu0 0.0
    %4887 = vmatprep.subr.mxu0 0.0
    %4888 = vmatpush2.msra.mxu0 0.0
    %4889 = vmatprep.subr.mxu0 0.0
    %4890 = vmatpush2.msra.mxu0 0.0
    %4891 = vmatprep.subr.mxu0 0.0
    %4892 = vmatpush2.msra.mxu0 0.0
    %4893 = vmatprep.subr.mxu0 0.0
    %4894 = vmatpush2.msra.mxu0 0.0
    %4895 = vmatprep.subr.mxu0 0.0
    %4896 = vmatpush2.msra.mxu0 0.0
    %4897 = vmatprep.subr.mxu0 0.0
    %4898 = vmatpush2.msra.mxu0 0.0
    %4899 = vmatprep.subr.mxu0 0.0
    %4900 = vmatpush2.msra.mxu0 0.0
    %4901 = vmatprep.subr.mxu0 0.0
    %4902 = vmatpush2.msra.mxu0 0.0
    %4903 = vmatprep.subr.mxu0 0.0
    %4904 = vmatpush2.msra.mxu0 0.0
    %4905 = vmatprep.mubr.f32.mxu0 0.0
    %4906 = vmatmul.mubr.f32.gmra.mxu0 %v4836
    %v4907 = vpop.f32.mrf.mxu0
    %v4908 = vadd.f32 0.0, %v4907
    %v4909 = vpop.f32.mrf.mxu0
    %4910 = vmatprep.mubr.f32.mxu0 0.0
    %4911 = vmatmul.mubr.f32.gmra.mxu0 %v4839
    %v4912 = vpop.f32.mrf.mxu0
    %v4913 = vadd.f32 0.0, %v4912
    %v4914 = vpop.f32.mrf.mxu0
    %4915 = vdwg.mxu0
    %4916 = vmatprep.subr.mxu0 0.0
    %4917 = vmatpush1.msra.mxu0 0.0
    %4918 = vmatprep.subr.mxu0 0.0
    %4919 = vmatpush1.msra.mxu0 0.0
    %4920 = vmatprep.subr.mxu0 0.0
    %4921 = vmatpush1.msra.mxu0 0.0
    %4922 = vmatprep.subr.mxu0 0.0
    %4923 = vmatpush1.msra.mxu0 0.0
    %4924 = vmatprep.subr.mxu0 0.0
    %4925 = vmatpush1.msra.mxu0 0.0
    %4926 = vmatprep.subr.mxu0 0.0
    %4927 = vmatpush1.msra.mxu0 0.0
    %4928 = vmatprep.subr.mxu0 0.0
    %4929 = vmatpush1.msra.mxu0 0.0
    %4930 = vmatprep.subr.mxu0 0.0
    %4931 = vmatpush1.msra.mxu0 0.0
    %4932 = vmatprep.subr.mxu0 0.0
    %4933 = vmatpush1.msra.mxu0 0.0
    %4934 = vmatprep.subr.mxu0 0.0
    %4935 = vmatpush1.msra.mxu0 0.0
    %4936 = vmatprep.subr.mxu0 0.0
    %4937 = vmatpush1.msra.mxu0 0.0
    %4938 = vmatprep.subr.mxu0 0.0
    %4939 = vmatpush1.msra.mxu0 0.0
    %4940 = vmatprep.subr.mxu0 0.0
    %4941 = vmatpush1.msra.mxu0 %v162
    %4942 = vmatprep.subr.mxu0 0.0
    %4943 = vmatpush1.msra.mxu0 %v161
    %4944 = vmatprep.subr.mxu0 0.0
    %4945 = vmatpush1.msra.mxu0 %v160
    %4946 = vmatprep.subr.mxu0 0.0
    %4947 = vmatpush1.msra.mxu0 %v159
    %4948 = vmatprep.subr.mxu0 0.0
    %4949 = vmatpush2.msra.mxu0 0.0
    %4950 = vmatprep.subr.mxu0 0.0
    %4951 = vmatpush2.msra.mxu0 0.0
    %4952 = vmatprep.subr.mxu0 0.0
    %4953 = vmatpush2.msra.mxu0 0.0
    %4954 = vmatprep.subr.mxu0 0.0
    %4955 = vmatpush2.msra.mxu0 0.0
    %4956 = vmatprep.subr.mxu0 0.0
    %4957 = vmatpush2.msra.mxu0 0.0
    %4958 = vmatprep.subr.mxu0 0.0
    %4959 = vmatpush2.msra.mxu0 0.0
    %4960 = vmatprep.subr.mxu0 0.0
    %4961 = vmatpush2.msra.mxu0 0.0
    %4962 = vmatprep.subr.mxu0 0.0
    %4963 = vmatpush2.msra.mxu0 0.0
    %4964 = vmatprep.subr.mxu0 0.0
    %4965 = vmatpush2.msra.mxu0 0.0
    %4966 = vmatprep.subr.mxu0 0.0
    %4967 = vmatpush2.msra.mxu0 0.0
    %4968 = vmatprep.subr.mxu0 0.0
    %4969 = vmatpush2.msra.mxu0 0.0
    %4970 = vmatprep.subr.mxu0 0.0
    %4971 = vmatpush2.msra.mxu0 0.0
    %4972 = vmatprep.subr.mxu0 0.0
    %4973 = vmatpush2.msra.mxu0 0.0
    %4974 = vmatprep.subr.mxu0 0.0
    %4975 = vmatpush2.msra.mxu0 0.0
    %4976 = vmatprep.subr.mxu0 0.0
    %4977 = vmatpush2.msra.mxu0 0.0
    %4978 = vmatprep.subr.mxu0 0.0
    %4979 = vmatpush2.msra.mxu0 0.0
    %4980 = vmatprep.mubr.f32.mxu0 0.0
    %4981 = vmatmul.mubr.f32.gmra.mxu0 %v4836
    %v4982 = vpop.f32.mrf.mxu0
    %v4983 = vadd.f32 0.0, %v4982
    %v4984 = vpop.f32.mrf.mxu0
    %4985 = vmatprep.mubr.f32.mxu0 0.0
    %4986 = vmatmul.mubr.f32.gmra.mxu0 %v4839
    %v4987 = vpop.f32.mrf.mxu0
    %v4988 = vadd.f32 0.0, %v4987
    %v4989 = vpop.f32.mrf.mxu0
    %4990 = vdwg.mxu0
    %s4991 = scalar_lea.vmem [#allocation2], 480
    %v4992 = vld [vmem:[%s4991] sm:$0xff]
    %v4993 = vld [vmem:[%s4991 + $0x8] sm:$0xff]
    %s4994 = scalar_lea.vmem [#allocation2], 496
    %v4995 = vld [vmem:[%s4994] sm:$0xff]
    %v4996 = vld [vmem:[%s4994 + $0x8] sm:$0xff]
    %v4998 = vsel %vm243, %v4995, 0
    %v5001 = vsel %vm243, %v4996, 0
    %5003 = vmatprep.subr.mxu0 0.0
    %5004 = vmatpush1.msra.mxu0 0.0
    %5005 = vmatprep.subr.mxu0 0.0
    %5006 = vmatpush1.msra.mxu0 0.0
    %5007 = vmatprep.subr.mxu0 0.0
    %5008 = vmatpush1.msra.mxu0 0.0
    %5009 = vmatprep.subr.mxu0 0.0
    %5010 = vmatpush1.msra.mxu0 0.0
    %5011 = vmatprep.subr.mxu0 0.0
    %5012 = vmatpush1.msra.mxu0 0.0
    %5013 = vmatprep.subr.mxu0 0.0
    %5014 = vmatpush1.msra.mxu0 0.0
    %5015 = vmatprep.subr.mxu0 0.0
    %5016 = vmatpush1.msra.mxu0 0.0
    %5017 = vmatprep.subr.mxu0 0.0
    %5018 = vmatpush1.msra.mxu0 0.0
    %5019 = vmatprep.subr.mxu0 0.0
    %5020 = vmatpush1.msra.mxu0 0.0
    %5021 = vmatprep.subr.mxu0 0.0
    %5022 = vmatpush1.msra.mxu0 0.0
    %5023 = vmatprep.subr.mxu0 0.0
    %5024 = vmatpush1.msra.mxu0 0.0
    %5025 = vmatprep.subr.mxu0 0.0
    %5026 = vmatpush1.msra.mxu0 0.0
    %5027 = vmatprep.subr.mxu0 0.0
    %5028 = vmatpush1.msra.mxu0 0.0
    %5029 = vmatprep.subr.mxu0 0.0
    %5030 = vmatpush1.msra.mxu0 0.0
    %5031 = vmatprep.subr.mxu0 0.0
    %5032 = vmatpush1.msra.mxu0 %v4428
    %5033 = vmatprep.subr.mxu0 0.0
    %5034 = vmatpush1.msra.mxu0 %v4423
    %5035 = vmatprep.subr.mxu0 0.0
    %5036 = vmatpush2.msra.mxu0 0.0
    %5037 = vmatprep.subr.mxu0 0.0
    %5038 = vmatpush2.msra.mxu0 0.0
    %5039 = vmatprep.subr.mxu0 0.0
    %5040 = vmatpush2.msra.mxu0 0.0
    %5041 = vmatprep.subr.mxu0 0.0
    %5042 = vmatpush2.msra.mxu0 0.0
    %5043 = vmatprep.subr.mxu0 0.0
    %5044 = vmatpush2.msra.mxu0 0.0
    %5045 = vmatprep.subr.mxu0 0.0
    %5046 = vmatpush2.msra.mxu0 0.0
    %5047 = vmatprep.subr.mxu0 0.0
    %5048 = vmatpush2.msra.mxu0 0.0
    %5049 = vmatprep.subr.mxu0 0.0
    %5050 = vmatpush2.msra.mxu0 0.0
    %5051 = vmatprep.subr.mxu0 0.0
    %5052 = vmatpush2.msra.mxu0 0.0
    %5053 = vmatprep.subr.mxu0 0.0
    %5054 = vmatpush2.msra.mxu0 0.0
    %5055 = vmatprep.subr.mxu0 0.0
    %5056 = vmatpush2.msra.mxu0 0.0
    %5057 = vmatprep.subr.mxu0 0.0
    %5058 = vmatpush2.msra.mxu0 0.0
    %5059 = vmatprep.subr.mxu0 0.0
    %5060 = vmatpush2.msra.mxu0 0.0
    %5061 = vmatprep.subr.mxu0 0.0
    %5062 = vmatpush2.msra.mxu0 0.0
    %5063 = vmatprep.subr.mxu0 0.0
    %5064 = vmatpush2.msra.mxu0 0.0
    %5065 = vmatprep.subr.mxu0 0.0
    %5066 = vmatpush2.msra.mxu0 0.0
    %5067 = vmatprep.mubr.f32.mxu0 0.0
    %5068 = vmatmul.mubr.f32.gmra.mxu0 %v4998
    %v5069 = vpop.f32.mrf.mxu0
    %v5070 = vadd.f32 0.0, %v5069
    %v5071 = vpop.f32.mrf.mxu0
    %5072 = vmatprep.mubr.f32.mxu0 0.0
    %5073 = vmatmul.mubr.f32.gmra.mxu0 %v5001
    %v5074 = vpop.f32.mrf.mxu0
    %v5075 = vadd.f32 0.0, %v5074
    %v5076 = vpop.f32.mrf.mxu0
    %5077 = vdwg.mxu0
    %v5079 = vsel %vm243, %v4992, 0
    %v5082 = vsel %vm243, %v4993, 0
    %5084 = vmatprep.subr.mxu0 0.0
    %5085 = vmatpush1.msra.mxu0 0.0
    %5086 = vmatprep.subr.mxu0 0.0
    %5087 = vmatpush1.msra.mxu0 0.0
    %5088 = vmatprep.subr.mxu0 0.0
    %5089 = vmatpush1.msra.mxu0 0.0
    %5090 = vmatprep.subr.mxu0 0.0
    %5091 = vmatpush1.msra.mxu0 0.0
    %5092 = vmatprep.subr.mxu0 0.0
    %5093 = vmatpush1.msra.mxu0 0.0
    %5094 = vmatprep.subr.mxu0 0.0
    %5095 = vmatpush1.msra.mxu0 0.0
    %5096 = vmatprep.subr.mxu0 0.0
    %5097 = vmatpush1.msra.mxu0 0.0
    %5098 = vmatprep.subr.mxu0 0.0
    %5099 = vmatpush1.msra.mxu0 0.0
    %5100 = vmatprep.subr.mxu0 0.0
    %5101 = vmatpush1.msra.mxu0 0.0
    %5102 = vmatprep.subr.mxu0 0.0
    %5103 = vmatpush1.msra.mxu0 0.0
    %5104 = vmatprep.subr.mxu0 0.0
    %5105 = vmatpush1.msra.mxu0 0.0
    %5106 = vmatprep.subr.mxu0 0.0
    %5107 = vmatpush1.msra.mxu0 0.0
    %5108 = vmatprep.subr.mxu0 0.0
    %5109 = vmatpush1.msra.mxu0 0.0
    %5110 = vmatprep.subr.mxu0 0.0
    %5111 = vmatpush1.msra.mxu0 0.0
    %5112 = vmatprep.subr.mxu0 0.0
    %5113 = vmatpush1.msra.mxu0 %v4913
    %5114 = vmatprep.subr.mxu0 0.0
    %5115 = vmatpush1.msra.mxu0 %v4908
    %5116 = vmatprep.subr.mxu0 0.0
    %5117 = vmatpush2.msra.mxu0 0.0
    %5118 = vmatprep.subr.mxu0 0.0
    %5119 = vmatpush2.msra.mxu0 0.0
    %5120 = vmatprep.subr.mxu0 0.0
    %5121 = vmatpush2.msra.mxu0 0.0
    %5122 = vmatprep.subr.mxu0 0.0
    %5123 = vmatpush2.msra.mxu0 0.0
    %5124 = vmatprep.subr.mxu0 0.0
    %5125 = vmatpush2.msra.mxu0 0.0
    %5126 = vmatprep.subr.mxu0 0.0
    %5127 = vmatpush2.msra.mxu0 0.0
    %5128 = vmatprep.subr.mxu0 0.0
    %5129 = vmatpush2.msra.mxu0 0.0
    %5130 = vmatprep.subr.mxu0 0.0
    %5131 = vmatpush2.msra.mxu0 0.0
    %5132 = vmatprep.subr.mxu0 0.0
    %5133 = vmatpush2.msra.mxu0 0.0
    %5134 = vmatprep.subr.mxu0 0.0
    %5135 = vmatpush2.msra.mxu0 0.0
    %5136 = vmatprep.subr.mxu0 0.0
    %5137 = vmatpush2.msra.mxu0 0.0
    %5138 = vmatprep.subr.mxu0 0.0
    %5139 = vmatpush2.msra.mxu0 0.0
    %5140 = vmatprep.subr.mxu0 0.0
    %5141 = vmatpush2.msra.mxu0 0.0
    %5142 = vmatprep.subr.mxu0 0.0
    %5143 = vmatpush2.msra.mxu0 0.0
    %5144 = vmatprep.subr.mxu0 0.0
    %5145 = vmatpush2.msra.mxu0 0.0
    %5146 = vmatprep.subr.mxu0 0.0
    %5147 = vmatpush2.msra.mxu0 0.0
    %5148 = vmatprep.mubr.f32.mxu0 0.0
    %5149 = vmatmul.mubr.f32.gmra.mxu0 %v5079
    %v5150 = vpop.f32.mrf.mxu0
    %v5151 = vadd.f32 %v5070, %v5150
    %v5152 = vpop.f32.mrf.mxu0
    %5153 = vmatprep.mubr.f32.mxu0 0.0
    %5154 = vmatmul.mubr.f32.gmra.mxu0 %v5082
    %v5155 = vpop.f32.mrf.mxu0
    %v5156 = vadd.f32 %v5075, %v5155
    %v5157 = vpop.f32.mrf.mxu0
    %5158 = vdwg.mxu0
    %s5159 = scalar_lea.vmem [#allocation2], 512
    %v5160 = vld [vmem:[%s5159] sm:$0xff]
    %v5161 = vld [vmem:[%s5159 + $0x8] sm:$0xff]
    %v5163 = vsel %vm243, %v5160, 0
    %v5166 = vsel %vm243, %v5161, 0
    %5168 = vmatprep.subr.mxu0 0.0
    %5169 = vmatpush1.msra.mxu0 0.0
    %5170 = vmatprep.subr.mxu0 0.0
    %5171 = vmatpush1.msra.mxu0 0.0
    %5172 = vmatprep.subr.mxu0 0.0
    %5173 = vmatpush1.msra.mxu0 0.0
    %5174 = vmatprep.subr.mxu0 0.0
    %5175 = vmatpush1.msra.mxu0 0.0
    %5176 = vmatprep.subr.mxu0 0.0
    %5177 = vmatpush1.msra.mxu0 0.0
    %5178 = vmatprep.subr.mxu0 0.0
    %5179 = vmatpush1.msra.mxu0 0.0
    %5180 = vmatprep.subr.mxu0 0.0
    %5181 = vmatpush1.msra.mxu0 0.0
    %5182 = vmatprep.subr.mxu0 0.0
    %5183 = vmatpush1.msra.mxu0 0.0
    %5184 = vmatprep.subr.mxu0 0.0
    %5185 = vmatpush1.msra.mxu0 0.0
    %5186 = vmatprep.subr.mxu0 0.0
    %5187 = vmatpush1.msra.mxu0 0.0
    %5188 = vmatprep.subr.mxu0 0.0
    %5189 = vmatpush1.msra.mxu0 0.0
    %5190 = vmatprep.subr.mxu0 0.0
    %5191 = vmatpush1.msra.mxu0 0.0
    %5192 = vmatprep.subr.mxu0 0.0
    %5193 = vmatpush1.msra.mxu0 0.0
    %5194 = vmatprep.subr.mxu0 0.0
    %5195 = vmatpush1.msra.mxu0 0.0
    %5196 = vmatprep.subr.mxu0 0.0
    %5197 = vmatpush1.msra.mxu0 %v4988
    %5198 = vmatprep.subr.mxu0 0.0
    %5199 = vmatpush1.msra.mxu0 %v4983
    %5200 = vmatprep.subr.mxu0 0.0
    %5201 = vmatpush2.msra.mxu0 0.0
    %5202 = vmatprep.subr.mxu0 0.0
    %5203 = vmatpush2.msra.mxu0 0.0
    %5204 = vmatprep.subr.mxu0 0.0
    %5205 = vmatpush2.msra.mxu0 0.0
    %5206 = vmatprep.subr.mxu0 0.0
    %5207 = vmatpush2.msra.mxu0 0.0
    %5208 = vmatprep.subr.mxu0 0.0
    %5209 = vmatpush2.msra.mxu0 0.0
    %5210 = vmatprep.subr.mxu0 0.0
    %5211 = vmatpush2.msra.mxu0 0.0
    %5212 = vmatprep.subr.mxu0 0.0
    %5213 = vmatpush2.msra.mxu0 0.0
    %5214 = vmatprep.subr.mxu0 0.0
    %5215 = vmatpush2.msra.mxu0 0.0
    %5216 = vmatprep.subr.mxu0 0.0
    %5217 = vmatpush2.msra.mxu0 0.0
    %5218 = vmatprep.subr.mxu0 0.0
    %5219 = vmatpush2.msra.mxu0 0.0
    %5220 = vmatprep.subr.mxu0 0.0
    %5221 = vmatpush2.msra.mxu0 0.0
    %5222 = vmatprep.subr.mxu0 0.0
    %5223 = vmatpush2.msra.mxu0 0.0
    %5224 = vmatprep.subr.mxu0 0.0
    %5225 = vmatpush2.msra.mxu0 0.0
    %5226 = vmatprep.subr.mxu0 0.0
    %5227 = vmatpush2.msra.mxu0 0.0
    %5228 = vmatprep.subr.mxu0 0.0
    %5229 = vmatpush2.msra.mxu0 0.0
    %5230 = vmatprep.subr.mxu0 0.0
    %5231 = vmatpush2.msra.mxu0 0.0
    %5232 = vmatprep.mubr.f32.mxu0 0.0
    %5233 = vmatmul.mubr.f32.gmra.mxu0 %v5163
    %v5234 = vpop.f32.mrf.mxu0
    %v5235 = vadd.f32 0.0, %v5234
    %v5236 = vpop.f32.mrf.mxu0
    %5237 = vmatprep.mubr.f32.mxu0 0.0
    %5238 = vmatmul.mubr.f32.gmra.mxu0 %v5166
    %v5239 = vpop.f32.mrf.mxu0
    %v5240 = vadd.f32 0.0, %v5239
    %v5241 = vpop.f32.mrf.mxu0
    %5242 = vdwg.mxu0
    %v5243 = vadd.f32 %v5151, %v5235
    %v5244 = vadd.f32 %v5156, %v5240
    %v5245 = vadd.f32 %v4833, %v5243
    %v5246 = vadd.f32 %v4834, %v5244
    %s5247 = scalar_lea.vmem [#allocation4], 128
    %v5248 = vld [vmem:[%s5247] sm:$0xff]
    %v5249 = vld [vmem:[%s5247 + $0x8] sm:$0xff]
    %5251 = vset.pattern.permute.xlu0 0
    %5252 = vperm.xlu0 %5251, %v5248
    %v5253 = vpop.permute.xlu0 %5252
    %5256 = vset.pattern.permute.xlu0 0
    %5257 = vperm.xlu0 %5256, %v5249
    %v5258 = vpop.permute.xlu0 %5257
    %v5260 = vadd.f32 %v5245, %v5253
    %v5261 = vadd.f32 %v5246, %v5258
    %v5262 = vmax.f32 %v5260, 0.0
    %v5263 = vmax.f32 %v5261, 0.0
    %v5265 = vsel %vm76, %v5262, 0
    %v5268 = vsel %vm76, %v5263, 0
    %5270 = vmatprep.subr.mxu0 0.0
    %5271 = vmatpush1.msra.mxu0 0.0
    %5272 = vmatprep.subr.mxu0 0.0
    %5273 = vmatpush1.msra.mxu0 0.0
    %5274 = vmatprep.subr.mxu0 0.0
    %5275 = vmatpush1.msra.mxu0 0.0
    %5276 = vmatprep.subr.mxu0 0.0
    %5277 = vmatpush1.msra.mxu0 0.0
    %5278 = vmatprep.subr.mxu0 0.0
    %5279 = vmatpush1.msra.mxu0 0.0
    %5280 = vmatprep.subr.mxu0 0.0
    %5281 = vmatpush1.msra.mxu0 0.0
    %5282 = vmatprep.subr.mxu0 0.0
    %5283 = vmatpush1.msra.mxu0 0.0
    %5284 = vmatprep.subr.mxu0 0.0
    %5285 = vmatpush1.msra.mxu0 0.0
    %5286 = vmatprep.subr.mxu0 0.0
    %5287 = vmatpush1.msra.mxu0 0.0
    %5288 = vmatprep.subr.mxu0 0.0
    %5289 = vmatpush1.msra.mxu0 0.0
    %5290 = vmatprep.subr.mxu0 0.0
    %5291 = vmatpush1.msra.mxu0 0.0
    %5292 = vmatprep.subr.mxu0 0.0
    %5293 = vmatpush1.msra.mxu0 0.0
    %5294 = vmatprep.subr.mxu0 0.0
    %5295 = vmatpush1.msra.mxu0 %v75
    %5296 = vmatprep.subr.mxu0 0.0
    %5297 = vmatpush1.msra.mxu0 %v74
    %5298 = vmatprep.subr.mxu0 0.0
    %5299 = vmatpush1.msra.mxu0 %v73
    %5300 = vmatprep.subr.mxu0 0.0
    %5301 = vmatpush1.msra.mxu0 %v72
    %5302 = vmatprep.subr.mxu0 0.0
    %5303 = vmatpush2.msra.mxu0 0.0
    %5304 = vmatprep.subr.mxu0 0.0
    %5305 = vmatpush2.msra.mxu0 0.0
    %5306 = vmatprep.subr.mxu0 0.0
    %5307 = vmatpush2.msra.mxu0 0.0
    %5308 = vmatprep.subr.mxu0 0.0
    %5309 = vmatpush2.msra.mxu0 0.0
    %5310 = vmatprep.subr.mxu0 0.0
    %5311 = vmatpush2.msra.mxu0 0.0
    %5312 = vmatprep.subr.mxu0 0.0
    %5313 = vmatpush2.msra.mxu0 0.0
    %5314 = vmatprep.subr.mxu0 0.0
    %5315 = vmatpush2.msra.mxu0 0.0
    %5316 = vmatprep.subr.mxu0 0.0
    %5317 = vmatpush2.msra.mxu0 0.0
    %5318 = vmatprep.subr.mxu0 0.0
    %5319 = vmatpush2.msra.mxu0 0.0
    %5320 = vmatprep.subr.mxu0 0.0
    %5321 = vmatpush2.msra.mxu0 0.0
    %5322 = vmatprep.subr.mxu0 0.0
    %5323 = vmatpush2.msra.mxu0 0.0
    %5324 = vmatprep.subr.mxu0 0.0
    %5325 = vmatpush2.msra.mxu0 0.0
    %5326 = vmatprep.subr.mxu0 0.0
    %5327 = vmatpush2.msra.mxu0 0.0
    %5328 = vmatprep.subr.mxu0 0.0
    %5329 = vmatpush2.msra.mxu0 0.0
    %5330 = vmatprep.subr.mxu0 0.0
    %5331 = vmatpush2.msra.mxu0 0.0
    %5332 = vmatprep.subr.mxu0 0.0
    %5333 = vmatpush2.msra.mxu0 0.0
    %5334 = vmatprep.mubr.f32.mxu0 0.0
    %5335 = vmatmul.mubr.f32.gmra.mxu0 %v5265
    %v5336 = vpop.f32.mrf.mxu0
    %v5337 = vadd.f32 0.0, %v5336
    %v5338 = vpop.f32.mrf.mxu0
    %5339 = vmatprep.mubr.f32.mxu0 0.0
    %5340 = vmatmul.mubr.f32.gmra.mxu0 %v5268
    %v5341 = vpop.f32.mrf.mxu0
    %v5342 = vadd.f32 0.0, %v5341
    %v5343 = vpop.f32.mrf.mxu0
    %5344 = vdwg.mxu0
    %5345 = vmatprep.subr.mxu0 0.0
    %5346 = vmatpush1.msra.mxu0 0.0
    %5347 = vmatprep.subr.mxu0 0.0
    %5348 = vmatpush1.msra.mxu0 0.0
    %5349 = vmatprep.subr.mxu0 0.0
    %5350 = vmatpush1.msra.mxu0 0.0
    %5351 = vmatprep.subr.mxu0 0.0
    %5352 = vmatpush1.msra.mxu0 0.0
    %5353 = vmatprep.subr.mxu0 0.0
    %5354 = vmatpush1.msra.mxu0 0.0
    %5355 = vmatprep.subr.mxu0 0.0
    %5356 = vmatpush1.msra.mxu0 0.0
    %5357 = vmatprep.subr.mxu0 0.0
    %5358 = vmatpush1.msra.mxu0 0.0
    %5359 = vmatprep.subr.mxu0 0.0
    %5360 = vmatpush1.msra.mxu0 0.0
    %5361 = vmatprep.subr.mxu0 0.0
    %5362 = vmatpush1.msra.mxu0 0.0
    %5363 = vmatprep.subr.mxu0 0.0
    %5364 = vmatpush1.msra.mxu0 0.0
    %5365 = vmatprep.subr.mxu0 0.0
    %5366 = vmatpush1.msra.mxu0 0.0
    %5367 = vmatprep.subr.mxu0 0.0
    %5368 = vmatpush1.msra.mxu0 0.0
    %5369 = vmatprep.subr.mxu0 0.0
    %5370 = vmatpush1.msra.mxu0 %v162
    %5371 = vmatprep.subr.mxu0 0.0
    %5372 = vmatpush1.msra.mxu0 %v161
    %5373 = vmatprep.subr.mxu0 0.0
    %5374 = vmatpush1.msra.mxu0 %v160
    %5375 = vmatprep.subr.mxu0 0.0
    %5376 = vmatpush1.msra.mxu0 %v159
    %5377 = vmatprep.subr.mxu0 0.0
    %5378 = vmatpush2.msra.mxu0 0.0
    %5379 = vmatprep.subr.mxu0 0.0
    %5380 = vmatpush2.msra.mxu0 0.0
    %5381 = vmatprep.subr.mxu0 0.0
    %5382 = vmatpush2.msra.mxu0 0.0
    %5383 = vmatprep.subr.mxu0 0.0
    %5384 = vmatpush2.msra.mxu0 0.0
    %5385 = vmatprep.subr.mxu0 0.0
    %5386 = vmatpush2.msra.mxu0 0.0
    %5387 = vmatprep.subr.mxu0 0.0
    %5388 = vmatpush2.msra.mxu0 0.0
    %5389 = vmatprep.subr.mxu0 0.0
    %5390 = vmatpush2.msra.mxu0 0.0
    %5391 = vmatprep.subr.mxu0 0.0
    %5392 = vmatpush2.msra.mxu0 0.0
    %5393 = vmatprep.subr.mxu0 0.0
    %5394 = vmatpush2.msra.mxu0 0.0
    %5395 = vmatprep.subr.mxu0 0.0
    %5396 = vmatpush2.msra.mxu0 0.0
    %5397 = vmatprep.subr.mxu0 0.0
    %5398 = vmatpush2.msra.mxu0 0.0
    %5399 = vmatprep.subr.mxu0 0.0
    %5400 = vmatpush2.msra.mxu0 0.0
    %5401 = vmatprep.subr.mxu0 0.0
    %5402 = vmatpush2.msra.mxu0 0.0
    %5403 = vmatprep.subr.mxu0 0.0
    %5404 = vmatpush2.msra.mxu0 0.0
    %5405 = vmatprep.subr.mxu0 0.0
    %5406 = vmatpush2.msra.mxu0 0.0
    %5407 = vmatprep.subr.mxu0 0.0
    %5408 = vmatpush2.msra.mxu0 0.0
    %5409 = vmatprep.mubr.f32.mxu0 0.0
    %5410 = vmatmul.mubr.f32.gmra.mxu0 %v5265
    %v5411 = vpop.f32.mrf.mxu0
    %v5412 = vadd.f32 0.0, %v5411
    %v5413 = vpop.f32.mrf.mxu0
    %5414 = vmatprep.mubr.f32.mxu0 0.0
    %5415 = vmatmul.mubr.f32.gmra.mxu0 %v5268
    %v5416 = vpop.f32.mrf.mxu0
    %v5417 = vadd.f32 0.0, %v5416
    %v5418 = vpop.f32.mrf.mxu0
    %5419 = vdwg.mxu0
    %s5420 = scalar_lea.vmem [#allocation2], 528
    %v5421 = vld [vmem:[%s5420] sm:$0xff]
    %v5422 = vld [vmem:[%s5420 + $0x8] sm:$0xff]
    %s5423 = scalar_lea.vmem [#allocation2], 544
    %v5424 = vld [vmem:[%s5423] sm:$0xff]
    %v5425 = vld [vmem:[%s5423 + $0x8] sm:$0xff]
    %v5427 = vsel %vm243, %v5424, 0
    %v5430 = vsel %vm243, %v5425, 0
    %5432 = vmatprep.subr.mxu0 0.0
    %5433 = vmatpush1.msra.mxu0 0.0
    %5434 = vmatprep.subr.mxu0 0.0
    %5435 = vmatpush1.msra.mxu0 0.0
    %5436 = vmatprep.subr.mxu0 0.0
    %5437 = vmatpush1.msra.mxu0 0.0
    %5438 = vmatprep.subr.mxu0 0.0
    %5439 = vmatpush1.msra.mxu0 0.0
    %5440 = vmatprep.subr.mxu0 0.0
    %5441 = vmatpush1.msra.mxu0 0.0
    %5442 = vmatprep.subr.mxu0 0.0
    %5443 = vmatpush1.msra.mxu0 0.0
    %5444 = vmatprep.subr.mxu0 0.0
    %5445 = vmatpush1.msra.mxu0 0.0
    %5446 = vmatprep.subr.mxu0 0.0
    %5447 = vmatpush1.msra.mxu0 0.0
    %5448 = vmatprep.subr.mxu0 0.0
    %5449 = vmatpush1.msra.mxu0 0.0
    %5450 = vmatprep.subr.mxu0 0.0
    %5451 = vmatpush1.msra.mxu0 0.0
    %5452 = vmatprep.subr.mxu0 0.0
    %5453 = vmatpush1.msra.mxu0 0.0
    %5454 = vmatprep.subr.mxu0 0.0
    %5455 = vmatpush1.msra.mxu0 0.0
    %5456 = vmatprep.subr.mxu0 0.0
    %5457 = vmatpush1.msra.mxu0 0.0
    %5458 = vmatprep.subr.mxu0 0.0
    %5459 = vmatpush1.msra.mxu0 0.0
    %5460 = vmatprep.subr.mxu0 0.0
    %5461 = vmatpush1.msra.mxu0 %v5263
    %5462 = vmatprep.subr.mxu0 0.0
    %5463 = vmatpush1.msra.mxu0 %v5262
    %5464 = vmatprep.subr.mxu0 0.0
    %5465 = vmatpush2.msra.mxu0 0.0
    %5466 = vmatprep.subr.mxu0 0.0
    %5467 = vmatpush2.msra.mxu0 0.0
    %5468 = vmatprep.subr.mxu0 0.0
    %5469 = vmatpush2.msra.mxu0 0.0
    %5470 = vmatprep.subr.mxu0 0.0
    %5471 = vmatpush2.msra.mxu0 0.0
    %5472 = vmatprep.subr.mxu0 0.0
    %5473 = vmatpush2.msra.mxu0 0.0
    %5474 = vmatprep.subr.mxu0 0.0
    %5475 = vmatpush2.msra.mxu0 0.0
    %5476 = vmatprep.subr.mxu0 0.0
    %5477 = vmatpush2.msra.mxu0 0.0
    %5478 = vmatprep.subr.mxu0 0.0
    %5479 = vmatpush2.msra.mxu0 0.0
    %5480 = vmatprep.subr.mxu0 0.0
    %5481 = vmatpush2.msra.mxu0 0.0
    %5482 = vmatprep.subr.mxu0 0.0
    %5483 = vmatpush2.msra.mxu0 0.0
    %5484 = vmatprep.subr.mxu0 0.0
    %5485 = vmatpush2.msra.mxu0 0.0
    %5486 = vmatprep.subr.mxu0 0.0
    %5487 = vmatpush2.msra.mxu0 0.0
    %5488 = vmatprep.subr.mxu0 0.0
    %5489 = vmatpush2.msra.mxu0 0.0
    %5490 = vmatprep.subr.mxu0 0.0
    %5491 = vmatpush2.msra.mxu0 0.0
    %5492 = vmatprep.subr.mxu0 0.0
    %5493 = vmatpush2.msra.mxu0 0.0
    %5494 = vmatprep.subr.mxu0 0.0
    %5495 = vmatpush2.msra.mxu0 0.0
    %5496 = vmatprep.mubr.f32.mxu0 0.0
    %5497 = vmatmul.mubr.f32.gmra.mxu0 %v5427
    %v5498 = vpop.f32.mrf.mxu0
    %v5499 = vadd.f32 0.0, %v5498
    %v5500 = vpop.f32.mrf.mxu0
    %5501 = vmatprep.mubr.f32.mxu0 0.0
    %5502 = vmatmul.mubr.f32.gmra.mxu0 %v5430
    %v5503 = vpop.f32.mrf.mxu0
    %v5504 = vadd.f32 0.0, %v5503
    %v5505 = vpop.f32.mrf.mxu0
    %5506 = vdwg.mxu0
    %v5508 = vsel %vm243, %v5421, 0
    %v5511 = vsel %vm243, %v5422, 0
    %5513 = vmatprep.subr.mxu0 0.0
    %5514 = vmatpush1.msra.mxu0 0.0
    %5515 = vmatprep.subr.mxu0 0.0
    %5516 = vmatpush1.msra.mxu0 0.0
    %5517 = vmatprep.subr.mxu0 0.0
    %5518 = vmatpush1.msra.mxu0 0.0
    %5519 = vmatprep.subr.mxu0 0.0
    %5520 = vmatpush1.msra.mxu0 0.0
    %5521 = vmatprep.subr.mxu0 0.0
    %5522 = vmatpush1.msra.mxu0 0.0
    %5523 = vmatprep.subr.mxu0 0.0
    %5524 = vmatpush1.msra.mxu0 0.0
    %5525 = vmatprep.subr.mxu0 0.0
    %5526 = vmatpush1.msra.mxu0 0.0
    %5527 = vmatprep.subr.mxu0 0.0
    %5528 = vmatpush1.msra.mxu0 0.0
    %5529 = vmatprep.subr.mxu0 0.0
    %5530 = vmatpush1.msra.mxu0 0.0
    %5531 = vmatprep.subr.mxu0 0.0
    %5532 = vmatpush1.msra.mxu0 0.0
    %5533 = vmatprep.subr.mxu0 0.0
    %5534 = vmatpush1.msra.mxu0 0.0
    %5535 = vmatprep.subr.mxu0 0.0
    %5536 = vmatpush1.msra.mxu0 0.0
    %5537 = vmatprep.subr.mxu0 0.0
    %5538 = vmatpush1.msra.mxu0 0.0
    %5539 = vmatprep.subr.mxu0 0.0
    %5540 = vmatpush1.msra.mxu0 0.0
    %5541 = vmatprep.subr.mxu0 0.0
    %5542 = vmatpush1.msra.mxu0 %v5342
    %5543 = vmatprep.subr.mxu0 0.0
    %5544 = vmatpush1.msra.mxu0 %v5337
    %5545 = vmatprep.subr.mxu0 0.0
    %5546 = vmatpush2.msra.mxu0 0.0
    %5547 = vmatprep.subr.mxu0 0.0
    %5548 = vmatpush2.msra.mxu0 0.0
    %5549 = vmatprep.subr.mxu0 0.0
    %5550 = vmatpush2.msra.mxu0 0.0
    %5551 = vmatprep.subr.mxu0 0.0
    %5552 = vmatpush2.msra.mxu0 0.0
    %5553 = vmatprep.subr.mxu0 0.0
    %5554 = vmatpush2.msra.mxu0 0.0
    %5555 = vmatprep.subr.mxu0 0.0
    %5556 = vmatpush2.msra.mxu0 0.0
    %5557 = vmatprep.subr.mxu0 0.0
    %5558 = vmatpush2.msra.mxu0 0.0
    %5559 = vmatprep.subr.mxu0 0.0
    %5560 = vmatpush2.msra.mxu0 0.0
    %5561 = vmatprep.subr.mxu0 0.0
    %5562 = vmatpush2.msra.mxu0 0.0
    %5563 = vmatprep.subr.mxu0 0.0
    %5564 = vmatpush2.msra.mxu0 0.0
    %5565 = vmatprep.subr.mxu0 0.0
    %5566 = vmatpush2.msra.mxu0 0.0
    %5567 = vmatprep.subr.mxu0 0.0
    %5568 = vmatpush2.msra.mxu0 0.0
    %5569 = vmatprep.subr.mxu0 0.0
    %5570 = vmatpush2.msra.mxu0 0.0
    %5571 = vmatprep.subr.mxu0 0.0
    %5572 = vmatpush2.msra.mxu0 0.0
    %5573 = vmatprep.subr.mxu0 0.0
    %5574 = vmatpush2.msra.mxu0 0.0
    %5575 = vmatprep.subr.mxu0 0.0
    %5576 = vmatpush2.msra.mxu0 0.0
    %5577 = vmatprep.mubr.f32.mxu0 0.0
    %5578 = vmatmul.mubr.f32.gmra.mxu0 %v5508
    %v5579 = vpop.f32.mrf.mxu0
    %v5580 = vadd.f32 %v5499, %v5579
    %v5581 = vpop.f32.mrf.mxu0
    %5582 = vmatprep.mubr.f32.mxu0 0.0
    %5583 = vmatmul.mubr.f32.gmra.mxu0 %v5511
    %v5584 = vpop.f32.mrf.mxu0
    %v5585 = vadd.f32 %v5504, %v5584
    %v5586 = vpop.f32.mrf.mxu0
    %5587 = vdwg.mxu0
    %s5588 = scalar_lea.vmem [#allocation2], 560
    %v5589 = vld [vmem:[%s5588] sm:$0xff]
    %v5590 = vld [vmem:[%s5588 + $0x8] sm:$0xff]
    %v5592 = vsel %vm243, %v5589, 0
    %v5595 = vsel %vm243, %v5590, 0
    %5597 = vmatprep.subr.mxu0 0.0
    %5598 = vmatpush1.msra.mxu0 0.0
    %5599 = vmatprep.subr.mxu0 0.0
    %5600 = vmatpush1.msra.mxu0 0.0
    %5601 = vmatprep.subr.mxu0 0.0
    %5602 = vmatpush1.msra.mxu0 0.0
    %5603 = vmatprep.subr.mxu0 0.0
    %5604 = vmatpush1.msra.mxu0 0.0
    %5605 = vmatprep.subr.mxu0 0.0
    %5606 = vmatpush1.msra.mxu0 0.0
    %5607 = vmatprep.subr.mxu0 0.0
    %5608 = vmatpush1.msra.mxu0 0.0
    %5609 = vmatprep.subr.mxu0 0.0
    %5610 = vmatpush1.msra.mxu0 0.0
    %5611 = vmatprep.subr.mxu0 0.0
    %5612 = vmatpush1.msra.mxu0 0.0
    %5613 = vmatprep.subr.mxu0 0.0
    %5614 = vmatpush1.msra.mxu0 0.0
    %5615 = vmatprep.subr.mxu0 0.0
    %5616 = vmatpush1.msra.mxu0 0.0
    %5617 = vmatprep.subr.mxu0 0.0
    %5618 = vmatpush1.msra.mxu0 0.0
    %5619 = vmatprep.subr.mxu0 0.0
    %5620 = vmatpush1.msra.mxu0 0.0
    %5621 = vmatprep.subr.mxu0 0.0
    %5622 = vmatpush1.msra.mxu0 0.0
    %5623 = vmatprep.subr.mxu0 0.0
    %5624 = vmatpush1.msra.mxu0 0.0
    %5625 = vmatprep.subr.mxu0 0.0
    %5626 = vmatpush1.msra.mxu0 %v5417
    %5627 = vmatprep.subr.mxu0 0.0
    %5628 = vmatpush1.msra.mxu0 %v5412
    %5629 = vmatprep.subr.mxu0 0.0
    %5630 = vmatpush2.msra.mxu0 0.0
    %5631 = vmatprep.subr.mxu0 0.0
    %5632 = vmatpush2.msra.mxu0 0.0
    %5633 = vmatprep.subr.mxu0 0.0
    %5634 = vmatpush2.msra.mxu0 0.0
    %5635 = vmatprep.subr.mxu0 0.0
    %5636 = vmatpush2.msra.mxu0 0.0
    %5637 = vmatprep.subr.mxu0 0.0
    %5638 = vmatpush2.msra.mxu0 0.0
    %5639 = vmatprep.subr.mxu0 0.0
    %5640 = vmatpush2.msra.mxu0 0.0
    %5641 = vmatprep.subr.mxu0 0.0
    %5642 = vmatpush2.msra.mxu0 0.0
    %5643 = vmatprep.subr.mxu0 0.0
    %5644 = vmatpush2.msra.mxu0 0.0
    %5645 = vmatprep.subr.mxu0 0.0
    %5646 = vmatpush2.msra.mxu0 0.0
    %5647 = vmatprep.subr.mxu0 0.0
    %5648 = vmatpush2.msra.mxu0 0.0
    %5649 = vmatprep.subr.mxu0 0.0
    %5650 = vmatpush2.msra.mxu0 0.0
    %5651 = vmatprep.subr.mxu0 0.0
    %5652 = vmatpush2.msra.mxu0 0.0
    %5653 = vmatprep.subr.mxu0 0.0
    %5654 = vmatpush2.msra.mxu0 0.0
    %5655 = vmatprep.subr.mxu0 0.0
    %5656 = vmatpush2.msra.mxu0 0.0
    %5657 = vmatprep.subr.mxu0 0.0
    %5658 = vmatpush2.msra.mxu0 0.0
    %5659 = vmatprep.subr.mxu0 0.0
    %5660 = vmatpush2.msra.mxu0 0.0
    %5661 = vmatprep.mubr.f32.mxu0 0.0
    %5662 = vmatmul.mubr.f32.gmra.mxu0 %v5592
    %v5663 = vpop.f32.mrf.mxu0
    %v5664 = vadd.f32 0.0, %v5663
    %v5665 = vpop.f32.mrf.mxu0
    %5666 = vmatprep.mubr.f32.mxu0 0.0
    %5667 = vmatmul.mubr.f32.gmra.mxu0 %v5595
    %v5668 = vpop.f32.mrf.mxu0
    %v5669 = vadd.f32 0.0, %v5668
    %v5670 = vpop.f32.mrf.mxu0
    %5671 = vdwg.mxu0
    %v5672 = vadd.f32 %v5580, %v5664
    %v5673 = vadd.f32 %v5585, %v5669
    %s5674 = scalar_lea.vmem [#allocation4], 144
    %v5675 = vld [vmem:[%s5674] sm:$0xff]
    %v5676 = vld [vmem:[%s5674 + $0x8] sm:$0xff]
    %5678 = vset.pattern.permute.xlu0 0
    %5679 = vperm.xlu0 %5678, %v5675
    %v5680 = vpop.permute.xlu0 %5679
    %5683 = vset.pattern.permute.xlu0 0
    %5684 = vperm.xlu0 %5683, %v5676
    %v5685 = vpop.permute.xlu0 %5684
    %v5687 = vadd.f32 %v5672, %v5680
    %v5688 = vadd.f32 %v5673, %v5685
    %v5689 = vmax.f32 %v5687, 0.0
    %v5690 = vmax.f32 %v5688, 0.0
    %s5691 = scalar_lea.vmem [#allocation2], 576
    %v5692 = vld [vmem:[%s5691] sm:$0xff]
    %v5693 = vld [vmem:[%s5691 + $0x8] sm:$0xff]
    %s5694 = scalar_lea.vmem [#allocation4], 160
    %v5695 = vld [vmem:[%s5694] sm:$0xff]
    %v5696 = vld [vmem:[%s5694 + $0x8] sm:$0xff]
    %5698 = vset.pattern.permute.xlu0 0
    %5699 = vperm.xlu0 %5698, %v5695
    %v5700 = vpop.permute.xlu0 %5699
    %5703 = vset.pattern.permute.xlu0 0
    %5704 = vperm.xlu0 %5703, %v5696
    %v5705 = vpop.permute.xlu0 %5704
    %v5708 = vsel %vm243, %v5692, 0
    %v5711 = vsel %vm243, %v5693, 0
    %5713 = vmatprep.subr.mxu0 0.0
    %5714 = vmatpush1.msra.mxu0 0.0
    %5715 = vmatprep.subr.mxu0 0.0
    %5716 = vmatpush1.msra.mxu0 0.0
    %5717 = vmatprep.subr.mxu0 0.0
    %5718 = vmatpush1.msra.mxu0 0.0
    %5719 = vmatprep.subr.mxu0 0.0
    %5720 = vmatpush1.msra.mxu0 0.0
    %5721 = vmatprep.subr.mxu0 0.0
    %5722 = vmatpush1.msra.mxu0 0.0
    %5723 = vmatprep.subr.mxu0 0.0
    %5724 = vmatpush1.msra.mxu0 0.0
    %5725 = vmatprep.subr.mxu0 0.0
    %5726 = vmatpush1.msra.mxu0 0.0
    %5727 = vmatprep.subr.mxu0 0.0
    %5728 = vmatpush1.msra.mxu0 0.0
    %5729 = vmatprep.subr.mxu0 0.0
    %5730 = vmatpush1.msra.mxu0 0.0
    %5731 = vmatprep.subr.mxu0 0.0
    %5732 = vmatpush1.msra.mxu0 0.0
    %5733 = vmatprep.subr.mxu0 0.0
    %5734 = vmatpush1.msra.mxu0 0.0
    %5735 = vmatprep.subr.mxu0 0.0
    %5736 = vmatpush1.msra.mxu0 0.0
    %5737 = vmatprep.subr.mxu0 0.0
    %5738 = vmatpush1.msra.mxu0 0.0
    %5739 = vmatprep.subr.mxu0 0.0
    %5740 = vmatpush1.msra.mxu0 0.0
    %5741 = vmatprep.subr.mxu0 0.0
    %5742 = vmatpush1.msra.mxu0 %v5690
    %5743 = vmatprep.subr.mxu0 0.0
    %5744 = vmatpush1.msra.mxu0 %v5689
    %5745 = vmatprep.subr.mxu0 0.0
    %5746 = vmatpush2.msra.mxu0 0.0
    %5747 = vmatprep.subr.mxu0 0.0
    %5748 = vmatpush2.msra.mxu0 0.0
    %5749 = vmatprep.subr.mxu0 0.0
    %5750 = vmatpush2.msra.mxu0 0.0
    %5751 = vmatprep.subr.mxu0 0.0
    %5752 = vmatpush2.msra.mxu0 0.0
    %5753 = vmatprep.subr.mxu0 0.0
    %5754 = vmatpush2.msra.mxu0 0.0
    %5755 = vmatprep.subr.mxu0 0.0
    %5756 = vmatpush2.msra.mxu0 0.0
    %5757 = vmatprep.subr.mxu0 0.0
    %5758 = vmatpush2.msra.mxu0 0.0
    %5759 = vmatprep.subr.mxu0 0.0
    %5760 = vmatpush2.msra.mxu0 0.0
    %5761 = vmatprep.subr.mxu0 0.0
    %5762 = vmatpush2.msra.mxu0 0.0
    %5763 = vmatprep.subr.mxu0 0.0
    %5764 = vmatpush2.msra.mxu0 0.0
    %5765 = vmatprep.subr.mxu0 0.0
    %5766 = vmatpush2.msra.mxu0 0.0
    %5767 = vmatprep.subr.mxu0 0.0
    %5768 = vmatpush2.msra.mxu0 0.0
    %5769 = vmatprep.subr.mxu0 0.0
    %5770 = vmatpush2.msra.mxu0 0.0
    %5771 = vmatprep.subr.mxu0 0.0
    %5772 = vmatpush2.msra.mxu0 0.0
    %5773 = vmatprep.subr.mxu0 0.0
    %5774 = vmatpush2.msra.mxu0 0.0
    %5775 = vmatprep.subr.mxu0 0.0
    %5776 = vmatpush2.msra.mxu0 0.0
    %5777 = vmatprep.mubr.f32.mxu0 0.0
    %5778 = vmatmul.mubr.f32.gmra.mxu0 %v5708
    %v5779 = vpop.f32.mrf.mxu0
    %v5780 = vadd.f32 %v5700, %v5779
    %v5781 = vpop.f32.mrf.mxu0
    %5782 = vmatprep.mubr.f32.mxu0 0.0
    %5783 = vmatmul.mubr.f32.gmra.mxu0 %v5711
    %v5784 = vpop.f32.mrf.mxu0
    %v5785 = vadd.f32 %v5705, %v5784
    %v5786 = vpop.f32.mrf.mxu0
    %5787 = vdwg.mxu0
    %s5788 = scalar_lea.vmem [#allocation6], 384
    %v5789 = vld [vmem:[%s5788] sm:$0xff]
    %v5790 = vld [vmem:[%s5788 + $0x8] sm:$0xff]
    %v5791 = vld [vmem:[%s5788 + $0x10] sm:$0xff]
    %v5792 = vld [vmem:[%s5788 + $0x18] sm:$0xff]
    %v5794 = vsel %vm76, %v5780, 0
    %v5797 = vsel %vm76, %v5785, 0
    %5799 = vmatprep.subr.mxu0 0.0
    %5800 = vmatpush1.msra.mxu0 0.0
    %5801 = vmatprep.subr.mxu0 0.0
    %5802 = vmatpush1.msra.mxu0 0.0
    %5803 = vmatprep.subr.mxu0 0.0
    %5804 = vmatpush1.msra.mxu0 0.0
    %5805 = vmatprep.subr.mxu0 0.0
    %5806 = vmatpush1.msra.mxu0 0.0
    %5807 = vmatprep.subr.mxu0 0.0
    %5808 = vmatpush1.msra.mxu0 0.0
    %5809 = vmatprep.subr.mxu0 0.0
    %5810 = vmatpush1.msra.mxu0 0.0
    %5811 = vmatprep.subr.mxu0 0.0
    %5812 = vmatpush1.msra.mxu0 0.0
    %5813 = vmatprep.subr.mxu0 0.0
    %5814 = vmatpush1.msra.mxu0 0.0
    %5815 = vmatprep.subr.mxu0 0.0
    %5816 = vmatpush1.msra.mxu0 0.0
    %5817 = vmatprep.subr.mxu0 0.0
    %5818 = vmatpush1.msra.mxu0 0.0
    %5819 = vmatprep.subr.mxu0 0.0
    %5820 = vmatpush1.msra.mxu0 0.0
    %5821 = vmatprep.subr.mxu0 0.0
    %5822 = vmatpush1.msra.mxu0 0.0
    %5823 = vmatprep.subr.mxu0 0.0
    %5824 = vmatpush1.msra.mxu0 %v5792
    %5825 = vmatprep.subr.mxu0 0.0
    %5826 = vmatpush1.msra.mxu0 %v5791
    %5827 = vmatprep.subr.mxu0 0.0
    %5828 = vmatpush1.msra.mxu0 %v5790
    %5829 = vmatprep.subr.mxu0 0.0
    %5830 = vmatpush1.msra.mxu0 %v5789
    %5831 = vmatprep.subr.mxu0 0.0
    %5832 = vmatpush2.msra.mxu0 0.0
    %5833 = vmatprep.subr.mxu0 0.0
    %5834 = vmatpush2.msra.mxu0 0.0
    %5835 = vmatprep.subr.mxu0 0.0
    %5836 = vmatpush2.msra.mxu0 0.0
    %5837 = vmatprep.subr.mxu0 0.0
    %5838 = vmatpush2.msra.mxu0 0.0
    %5839 = vmatprep.subr.mxu0 0.0
    %5840 = vmatpush2.msra.mxu0 0.0
    %5841 = vmatprep.subr.mxu0 0.0
    %5842 = vmatpush2.msra.mxu0 0.0
    %5843 = vmatprep.subr.mxu0 0.0
    %5844 = vmatpush2.msra.mxu0 0.0
    %5845 = vmatprep.subr.mxu0 0.0
    %5846 = vmatpush2.msra.mxu0 0.0
    %5847 = vmatprep.subr.mxu0 0.0
    %5848 = vmatpush2.msra.mxu0 0.0
    %5849 = vmatprep.subr.mxu0 0.0
    %5850 = vmatpush2.msra.mxu0 0.0
    %5851 = vmatprep.subr.mxu0 0.0
    %5852 = vmatpush2.msra.mxu0 0.0
    %5853 = vmatprep.subr.mxu0 0.0
    %5854 = vmatpush2.msra.mxu0 0.0
    %5855 = vmatprep.subr.mxu0 0.0
    %5856 = vmatpush2.msra.mxu0 0.0
    %5857 = vmatprep.subr.mxu0 0.0
    %5858 = vmatpush2.msra.mxu0 0.0
    %5859 = vmatprep.subr.mxu0 0.0
    %5860 = vmatpush2.msra.mxu0 0.0
    %5861 = vmatprep.subr.mxu0 0.0
    %5862 = vmatpush2.msra.mxu0 0.0
    %5863 = vmatprep.mubr.f32.mxu0 0.0
    %5864 = vmatmul.mubr.f32.gmra.mxu0 %v5794
    %v5865 = vpop.f32.mrf.mxu0
    %v5866 = vadd.f32 0.0, %v5865
    %v5867 = vpop.f32.mrf.mxu0
    %5868 = vmatprep.mubr.f32.mxu0 0.0
    %5869 = vmatmul.mubr.f32.gmra.mxu0 %v5797
    %v5870 = vpop.f32.mrf.mxu0
    %v5871 = vadd.f32 0.0, %v5870
    %v5872 = vpop.f32.mrf.mxu0
    %5873 = vdwg.mxu0
    %s5874 = scalar_lea.vmem [#allocation6], 416
    %v5875 = vld [vmem:[%s5874] sm:$0xff]
    %v5876 = vld [vmem:[%s5874 + $0x8] sm:$0xff]
    %v5877 = vld [vmem:[%s5874 + $0x10] sm:$0xff]
    %v5878 = vld [vmem:[%s5874 + $0x18] sm:$0xff]
    %5879 = vmatprep.subr.mxu0 0.0
    %5880 = vmatpush1.msra.mxu0 0.0
    %5881 = vmatprep.subr.mxu0 0.0
    %5882 = vmatpush1.msra.mxu0 0.0
    %5883 = vmatprep.subr.mxu0 0.0
    %5884 = vmatpush1.msra.mxu0 0.0
    %5885 = vmatprep.subr.mxu0 0.0
    %5886 = vmatpush1.msra.mxu0 0.0
    %5887 = vmatprep.subr.mxu0 0.0
    %5888 = vmatpush1.msra.mxu0 0.0
    %5889 = vmatprep.subr.mxu0 0.0
    %5890 = vmatpush1.msra.mxu0 0.0
    %5891 = vmatprep.subr.mxu0 0.0
    %5892 = vmatpush1.msra.mxu0 0.0
    %5893 = vmatprep.subr.mxu0 0.0
    %5894 = vmatpush1.msra.mxu0 0.0
    %5895 = vmatprep.subr.mxu0 0.0
    %5896 = vmatpush1.msra.mxu0 0.0
    %5897 = vmatprep.subr.mxu0 0.0
    %5898 = vmatpush1.msra.mxu0 0.0
    %5899 = vmatprep.subr.mxu0 0.0
    %5900 = vmatpush1.msra.mxu0 0.0
    %5901 = vmatprep.subr.mxu0 0.0
    %5902 = vmatpush1.msra.mxu0 0.0
    %5903 = vmatprep.subr.mxu0 0.0
    %5904 = vmatpush1.msra.mxu0 %v5878
    %5905 = vmatprep.subr.mxu0 0.0
    %5906 = vmatpush1.msra.mxu0 %v5877
    %5907 = vmatprep.subr.mxu0 0.0
    %5908 = vmatpush1.msra.mxu0 %v5876
    %5909 = vmatprep.subr.mxu0 0.0
    %5910 = vmatpush1.msra.mxu0 %v5875
    %5911 = vmatprep.subr.mxu0 0.0
    %5912 = vmatpush2.msra.mxu0 0.0
    %5913 = vmatprep.subr.mxu0 0.0
    %5914 = vmatpush2.msra.mxu0 0.0
    %5915 = vmatprep.subr.mxu0 0.0
    %5916 = vmatpush2.msra.mxu0 0.0
    %5917 = vmatprep.subr.mxu0 0.0
    %5918 = vmatpush2.msra.mxu0 0.0
    %5919 = vmatprep.subr.mxu0 0.0
    %5920 = vmatpush2.msra.mxu0 0.0
    %5921 = vmatprep.subr.mxu0 0.0
    %5922 = vmatpush2.msra.mxu0 0.0
    %5923 = vmatprep.subr.mxu0 0.0
    %5924 = vmatpush2.msra.mxu0 0.0
    %5925 = vmatprep.subr.mxu0 0.0
    %5926 = vmatpush2.msra.mxu0 0.0
    %5927 = vmatprep.subr.mxu0 0.0
    %5928 = vmatpush2.msra.mxu0 0.0
    %5929 = vmatprep.subr.mxu0 0.0
    %5930 = vmatpush2.msra.mxu0 0.0
    %5931 = vmatprep.subr.mxu0 0.0
    %5932 = vmatpush2.msra.mxu0 0.0
    %5933 = vmatprep.subr.mxu0 0.0
    %5934 = vmatpush2.msra.mxu0 0.0
    %5935 = vmatprep.subr.mxu0 0.0
    %5936 = vmatpush2.msra.mxu0 0.0
    %5937 = vmatprep.subr.mxu0 0.0
    %5938 = vmatpush2.msra.mxu0 0.0
    %5939 = vmatprep.subr.mxu0 0.0
    %5940 = vmatpush2.msra.mxu0 0.0
    %5941 = vmatprep.subr.mxu0 0.0
    %5942 = vmatpush2.msra.mxu0 0.0
    %5943 = vmatprep.mubr.f32.mxu0 0.0
    %5944 = vmatmul.mubr.f32.gmra.mxu0 %v5794
    %v5945 = vpop.f32.mrf.mxu0
    %v5946 = vadd.f32 0.0, %v5945
    %v5947 = vpop.f32.mrf.mxu0
    %5948 = vmatprep.mubr.f32.mxu0 0.0
    %5949 = vmatmul.mubr.f32.gmra.mxu0 %v5797
    %v5950 = vpop.f32.mrf.mxu0
    %v5951 = vadd.f32 0.0, %v5950
    %v5952 = vpop.f32.mrf.mxu0
    %5953 = vdwg.mxu0
    %v5954 = vsub.f32 0.0, %v5946
    %v5955 = vsub.f32 0.0, %v5951
    %v5956 = vld [vmem:[%s4] sm:$0xff]
    %v5957 = vld [vmem:[%s4 + $0x8] sm:$0xff]
    %5958 = vst.msk [vmem:[%s7] sm:$0xff] %vm76, %v5780
    %5959 = vst.msk [vmem:[%s7 + $0x8] sm:$0xff] %vm76, %v5785
    %v5960 = vmul.f32 %v5866, %v5956
    %v5961 = vmul.f32 %v5871, %v5957
    %v5962 = vld [vmem:[%s5] sm:$0xff]
    %v5963 = vld [vmem:[%s5 + $0x8] sm:$0xff]
    %v5964 = vadd.f32 %v5960, %v5962
    %v5965 = vadd.f32 %v5961, %v5963
    %5966 = vst.msk [vmem:[%s8] sm:$0xff] %vm76, %v5964
    %5967 = vst.msk [vmem:[%s8 + $0x8] sm:$0xff] %vm76, %v5965
    %v5968 = vmul.f32 %v5954, %v5956
    %v5969 = vmul.f32 %v5955, %v5957
    %v5970 = vld [vmem:[%s6] sm:$0xff]
    %v5971 = vld [vmem:[%s6 + $0x8] sm:$0xff]
    %v5972 = vadd.f32 %v5968, %v5970
    %v5973 = vadd.f32 %v5969, %v5971
    %5974 = vst.msk [vmem:[%s9] sm:$0xff] %vm76, %v5972
    %5975 = vst.msk [vmem:[%s9 + $0x8] sm:$0xff] %vm76, %v5973
    // Predicated region
    $region42: #{_lambda_.1} parent=1 // pred_check
      _
    $region43: #{_lambda_.1} parent=1 // pred_check_branch
      %5977 = sbr.rel (0) target = $region45
    $region44: #{_lambda_.1} parent=1 // pred_region
      _
    $region45: #{_lambda_.1} parent=1 // pred_fallthru
      _
    // Predicated region
    $region46: #{_lambda_.1} parent=1 // pred_check
      _
    $region47: #{_lambda_.1} parent=1 // pred_check_branch
      %5979 = sbr.rel (0) target = $region49
    $region48: #{_lambda_.1} parent=1 // pred_region
      _
    $region49: #{_lambda_.1} parent=1 // pred_fallthru
      _
    // Predicated region
    $region50: #{_lambda_.1} parent=1 // pred_check
      _
    $region51: #{_lambda_.1} parent=1 // pred_check_branch
      %5981 = sbr.rel (0) target = $region53
    $region52: #{_lambda_.1} parent=1 // pred_region
      _
    $region53: #{_lambda_.1} parent=1 // pred_fallthru
      _
    // Predicated region
    $region54: #{_lambda_.1} parent=1 // pred_check
      _
    $region55: #{_lambda_.1} parent=1 // pred_check_branch
      %5983 = sbr.rel (0) target = $region57
    $region56: #{_lambda_.1} parent=1 // pred_region
      _
    $region57: #{_lambda_.1} parent=1 // pred_fallthru
      _
    // Predicated region
    $region58: #{_lambda_.1} parent=1 // pred_check
      _
    $region59: #{_lambda_.1} parent=1 // pred_check_branch
      %5985 = sbr.rel (0) target = $region61
    $region60: #{_lambda_.1} parent=1 // pred_region
      _
    $region61: #{_lambda_.1} parent=1 // pred_fallthru
      _
    // Predicated region
    $region62: #{_lambda_.1} parent=1 // pred_check
      _
    $region63: #{_lambda_.1} parent=1 // pred_check_branch
      %5987 = sbr.rel (0) target = $region65
    $region64: #{_lambda_.1} parent=1 // pred_region
      _
    $region65: #{_lambda_.1} parent=1 // pred_fallthru
      _
    %5988 = vsyncpa [#allocation3], 1
    %5989 = vsyncpa [#allocation5], 1

</llo_original>
